<compile_context>
chip_gen: v7x
topology: tpu7x:2x2x1
jax: 0.10.0
libtpu: 0.0.40
codegen_flags: <defaults>
</compile_context>

<pallas_src>
import jax
import jax.numpy as jnp
from jax.experimental import pallas as pl
from jax.experimental.pallas import tpu as pltpu

EPS = 1e-5                 # nn.BatchNorm2d default eps
LANE = 128                 # channel dims zero-padded to one lane width
TM_TARGET = 1024           # row tile for the (M, Cp) kernels (review: 1024-2048)
VMEM_LIMIT = 32 * 1024 * 1024   # safe on v7x (64 MiB phys); tiles here are tiny


# ------------------------------ small helpers --------------------------------

def _round_up(x, m):
    return ((x + m - 1) // m) * m


def _pick_tm(m, target=TM_TARGET):
    tm = min(target, m)
    while tm > 8 and m % tm != 0:
        tm //= 2
    return tm if m % tm == 0 else m


def _cparams(dims):
    return pltpu.CompilerParams(dimension_semantics=dims,
                                vmem_limit_bytes=VMEM_LIMIT)


def _mish_f32(z):
    # z * tanh(softplus(z)) with one EUP exp:
    #   tanh(log(1+e)) = ((1+e)^2 - 1) / ((1+e)^2 + 1),  e = exp(min(z, 20))
    e = jnp.exp(jnp.minimum(z, 20.0))
    sp2 = (1.0 + e) * (1.0 + e)
    return z * ((sp2 - 1.0) / (sp2 + 1.0))


def _affine_mish_f32(y, scsh):
    # scsh: (2, Cp) f32 = [scale, shift];  BN+Mish in f32 (v5e-safe), y may be bf16.
    z = y.astype(jnp.float32) * scsh[0:1, :] + scsh[1:2, :]
    return _mish_f32(z)


# ----------------------------- Pallas kernels --------------------------------

def _conv3x3_stats_kernel(x_ref, w_ref, y_ref, st_ref):
    """Whole-image 3x3/s1/p1 conv + per-image per-channel sum / sumsq.

    x_ref : (H, W, Cp)    bf16 unpadded feature map (halo built in-kernel)
    w_ref : (3, 3*Cp, Cp) bf16 weights, dx-packed along K
    y_ref : (H*W, Cp)     bf16 raw conv output
    st_ref: (2, Cp)       f32 [sum, sumsq] for this image (no accumulation)
    """
    h, w, cp = x_ref.shape
    x = x_ref[...]                                              # bf16
    zrow = jnp.zeros((1, w, cp), x.dtype)
    zcol = jnp.zeros((h + 2, 1, cp), x.dtype)
    xp = jnp.concatenate([zrow, x, zrow], axis=0)               # (H+2, W,   Cp)
    xp = jnp.concatenate([zcol, xp, zcol], axis=1)              # (H+2, W+2, Cp)

    acc = jnp.zeros((h * w, cp), jnp.float32)
    for dy in range(3):                                         # 3 MXU dots, K = 3*Cp
        r = xp[dy:dy + h]                                       # (H, W+2, Cp)
        lhs = jnp.concatenate(
            [r[:, 0:w, :], r[:, 1:w + 1, :], r[:, 2:w + 2, :]],
            axis=-1).reshape(h * w, 3 * cp)                     # (H*W, 3*Cp) bf16
        acc = acc + jnp.dot(lhs, w_ref[dy],
                            preferred_element_type=jnp.float32)

    y_ref[...] = acc.astype(y_ref.dtype)
    st_ref[0:1, :] = jnp.sum(acc, axis=0, keepdims=True)
    st_ref[1:2, :] = jnp.sum(acc * acc, axis=0, keepdims=True)


def _bn_mish_kernel(y_ref, ss_ref, x_ref):
    x_ref[...] = _affine_mish_f32(y_ref[...], ss_ref[...]).astype(x_ref.dtype)


def _bn_mish_route_kernel(y_ref, ss_ref, wr_ref, x_ref, xr_ref):
    # stage-1 epilogue: BN+Mish (f32 math) + fused route 1x1 conv (bf16 MXU).
    a = _affine_mish_f32(y_ref[...], ss_ref[...])
    ab = a.astype(jnp.bfloat16)
    x_ref[...] = ab
    xr_ref[...] = jnp.dot(ab, wr_ref[...],
                          preferred_element_type=jnp.float32).astype(xr_ref.dtype)


def _conv1x1_dual_stats_kernel(x2_ref, y3_ref, ss3_ref, wa_ref, wb_ref,
                               y4_ref, st_ref):
    # conv4 on cat([x2, x3]) == x2 @ W4a + x3 @ W4b; bn3+mish applied to the
    # raw y3 tile in-kernel (x3 never hits HBM).  Per-tile stats partials.
    x3 = _affine_mish_f32(y3_ref[...], ss3_ref[...]).astype(jnp.bfloat16)
    y = jnp.dot(x2_ref[...], wa_ref[...], preferred_element_type=jnp.float32)
    y = y + jnp.dot(x3, wb_ref[...], preferred_element_type=jnp.float32)
    y4_ref[...] = y.astype(y4_ref.dtype)
    st_ref[0:1, :] = jnp.sum(y, axis=0, keepdims=True)
    st_ref[1:2, :] = jnp.sum(y * y, axis=0, keepdims=True)


# ----------------------------- pallas_call wrappers ---------------------------

def conv3x3_stats(x_nhwc, w_packed, n, h, w, cp):
    """x_nhwc: (N, H, W, Cp) bf16; w_packed: (3, 3*Cp, Cp) bf16."""
    return pl.pallas_call(
        _conv3x3_stats_kernel,
        grid=(n,),
        in_specs=[pl.BlockSpec((None, h, w, cp), lambda ni: (ni, 0, 0, 0)),
                  pl.BlockSpec((3, 3 * cp, cp), lambda ni: (0, 0, 0))],
        out_specs=[pl.BlockSpec((None, h * w, cp), lambda ni: (ni, 0, 0)),
                   pl.BlockSpec((None, 2, cp), lambda ni: (ni, 0, 0))],
        out_shape=[jax.ShapeDtypeStruct((n, h * w, cp), jnp.bfloat16),
                   jax.ShapeDtypeStruct((n, 2, cp), jnp.float32)],
        compiler_params=_cparams(("parallel",)),
    )(x_nhwc, w_packed)


def bn_mish(y, scsh, tm, cp):
    m = y.shape[0]
    return pl.pallas_call(
        _bn_mish_kernel,
        grid=(m // tm,),
        in_specs=[pl.BlockSpec((tm, cp), lambda i: (i, 0)),
                  pl.BlockSpec((2, cp), lambda i: (0, 0))],
        out_specs=pl.BlockSpec((tm, cp), lambda i: (i, 0)),
        out_shape=jax.ShapeDtypeStruct((m, cp), jnp.bfloat16),
        compiler_params=_cparams(("parallel",)),
    )(y, scsh)


def bn_mish_route(y, scsh, w_route, tm, cp):
    m = y.shape[0]
    return pl.pallas_call(
        _bn_mish_route_kernel,
        grid=(m // tm,),
        in_specs=[pl.BlockSpec((tm, cp), lambda i: (i, 0)),
                  pl.BlockSpec((2, cp), lambda i: (0, 0)),
                  pl.BlockSpec((cp, cp), lambda i: (0, 0))],
        out_specs=[pl.BlockSpec((tm, cp), lambda i: (i, 0)),
                   pl.BlockSpec((tm, cp), lambda i: (i, 0))],
        out_shape=[jax.ShapeDtypeStruct((m, cp), jnp.bfloat16),
                   jax.ShapeDtypeStruct((m, cp), jnp.bfloat16)],
        compiler_params=_cparams(("parallel",)),
    )(y, scsh, w_route)


def conv1x1_dual_stats(x2, y3, scsh3, w4a, w4b, tm, cp):
    m = x2.shape[0]
    nt = m // tm
    return pl.pallas_call(
        _conv1x1_dual_stats_kernel,
        grid=(nt,),
        in_specs=[pl.BlockSpec((tm, cp), lambda i: (i, 0)),
                  pl.BlockSpec((tm, cp), lambda i: (i, 0)),
                  pl.BlockSpec((2, cp), lambda i: (0, 0)),
                  pl.BlockSpec((cp, cp), lambda i: (0, 0)),
                  pl.BlockSpec((cp, cp), lambda i: (0, 0))],
        out_specs=[pl.BlockSpec((tm, cp), lambda i: (i, 0)),
                   pl.BlockSpec((None, 2, cp), lambda i: (i, 0, 0))],
        out_shape=[jax.ShapeDtypeStruct((m, cp), jnp.bfloat16),
                   jax.ShapeDtypeStruct((nt, 2, cp), jnp.float32)],
        compiler_params=_cparams(("parallel",)),
    )(x2, y3, scsh3, w4a, w4b)


# ------------------------------ JAX-side glue ---------------------------------

def _pad_w3_packed(w, cp):
    # (O, I, 3, 3) OIHW -> (3, 3*Cp, Cp) bf16, K-packed over dx: [dy, (dx, ci), co]
    o, i = w.shape[0], w.shape[1]
    wt = jnp.transpose(w, (2, 3, 1, 0))                         # (3, 3, I, O)
    wt = jnp.pad(wt, ((0, 0), (0, 0), (0, cp - i), (0, cp - o)))
    return wt.reshape(3, 3 * cp, cp).astype(jnp.bfloat16)


def _pad_w1(w, cp):
    # (O, I, 1, 1) -> (Cp, Cp) bf16  [ci, co]
    o, i = w.shape[0], w.shape[1]
    return jnp.pad(w.reshape(o, i).T, ((0, cp - i), (0, cp - o))).astype(jnp.bfloat16)


def _finalize(stats, m, gamma, beta, cp):
    """Reduce partial [sum, sumsq] and fold BN into per-channel (scale, shift).

    NOTE: one-pass E[x^2]-E[x]^2 in f32; fine at these scales (values O(1)).
    """
    s = stats.reshape(-1, 2, cp).sum(axis=0)
    mean = s[0] / m
    var = jnp.maximum(s[1] / m - mean * mean, 0.0)              # biased batch var
    g = jnp.pad(gamma, (0, cp - gamma.shape[0]))
    b = jnp.pad(beta, (0, cp - beta.shape[0]))
    scale = g * jax.lax.rsqrt(var + EPS)
    shift = b - mean * scale
    return jnp.stack([scale, shift], axis=0)                    # (2, Cp) f32


def csp_forward(x_nchw, params, tm_target=TM_TARGET):
    n, cin, h, w = x_nchw.shape
    cout = params['route_w'].shape[0]
    assert cin == 2 * cout, "CSP requires num_input_features == 2 * output_feature"
    cp = _round_up(max(cin, cout), LANE)
    m = n * h * w
    tm = _pick_tm(m, tm_target)

    # NCHW -> NHWC, channel-pad to Cp lanes, cast bf16.  No spatial padding:
    # the conv kernels build the 1-px halo in VMEM.
    x0 = jnp.pad(jnp.transpose(x_nchw, (0, 2, 3, 1)),
                 ((0, 0), (0, 0), (0, 0), (0, cp - cin))).astype(jnp.bfloat16)

    # --- stage 1: conv1 (3x3) + stats, then fused bn1+mish+route ---------------
    y1, s1 = conv3x3_stats(x0, _pad_w3_packed(params['conv1_w'], cp), n, h, w, cp)
    ss1 = _finalize(s1, m, params['bn1_g'], params['bn1_b'], cp)
    x1, xr = bn_mish_route(y1.reshape(m, cp), ss1,
                           _pad_w1(params['route_w'], cp), tm, cp)

    # --- stage 2: conv2 (3x3) + stats, bn2+mish --------------------------------
    y2, s2 = conv3x3_stats(xr.reshape(n, h, w, cp),
                           _pad_w3_packed(params['conv2_w'], cp), n, h, w, cp)
    ss2 = _finalize(s2, m, params['bn2_g'], params['bn2_b'], cp)
    x2 = bn_mish(y2.reshape(m, cp), ss2, tm, cp)

    # --- stage 3: conv3 (3x3) + stats (bn3+mish fused into the conv4 kernel) ---
    y3, s3 = conv3x3_stats(x2.reshape(n, h, w, cp),
                           _pad_w3_packed(params['conv3_w'], cp), n, h, w, cp)
    ss3 = _finalize(s3, m, params['bn3_g'], params['bn3_b'], cp)

    # --- stage 4: conv4 (1x1 on cat[x2, x3]) as two row-split matmuls ----------
    cin4 = params['conv4_w'].shape[0]
    w4t = params['conv4_w'].reshape(cin4, cin4).T               # (in, out)
    w4a = jnp.pad(w4t[:cout], ((0, cp - cout), (0, cp - cin4))).astype(jnp.bfloat16)
    w4b = jnp.pad(w4t[cout:], ((0, cp - cout), (0, cp - cin4))).astype(jnp.bfloat16)
    y4, s4 = conv1x1_dual_stats(x2, y3.reshape(m, cp), ss3, w4a, w4b, tm, cp)
    ss4 = _finalize(s4, m, params['bn4_g'], params['bn4_b'], cp)
    x4 = bn_mish(y4, ss4, tm, cp)

    # --- output: cat([x1, x4], channel), back to NCHW at the module boundary ---
    out = jnp.concatenate([x1[:, :cin], x4[:, :cin]], axis=1).astype(jnp.float32)
    return out.reshape(n, h, w, 2 * cin).transpose(0, 3, 1, 2)


# ----------------------------- pure-JAX reference -----------------------------

def ref_forward(x, params):
    def conv(x, w, pad):
        return jax.lax.conv_general_dilated(
            x, w, window_strides=(1, 1), padding=[(pad, pad), (pad, pad)],
            dimension_numbers=('NCHW', 'OIHW', 'NCHW'),
            precision=jax.lax.Precision.HIGHEST)

    def bn_mish_ref(x, g, b):
        mean = x.mean(axis=(0, 2, 3), keepdims=True)
        var = ((x - mean) ** 2).mean(axis=(0, 2, 3), keepdims=True)
        z = (x - mean) * jax.lax.rsqrt(var + EPS) * g.reshape(1, -1, 1, 1) \
            + b.reshape(1, -1, 1, 1)
        return z * jnp.tanh(jax.nn.softplus(z))

    x1 = bn_mish_ref(conv(x, params['conv1_w'], 1), params['bn1_g'], params['bn1_b'])
    xr = conv(x1, params['route_w'], 0)
    x2 = bn_mish_ref(conv(xr, params['conv2_w'], 1), params['bn2_g'], params['bn2_b'])
    x3 = bn_mish_ref(conv(x2, params['conv3_w'], 1), params['bn3_g'], params['bn3_b'])
    x4 = bn_mish_ref(conv(jnp.concatenate([x2, x3], axis=1), params['conv4_w'], 0),
                     params['bn4_g'], params['bn4_b'])
    return jnp.concatenate([x1, x4], axis=1)


# ----------------------------------- main --------------------------------------

if __name__ == "__main__":
    # conv4 is Conv2d(num_input_features, num_input_features) applied to
    # cat([x2, x3]) (2*output_feature channels) => num_input_features == 2*output_feature.
    Cin, Cout = 4, 2
    N, H, W = 2, 16, 16

    key = jax.random.PRNGKey(0)
    ks = jax.random.split(key, 14)
    f32 = jnp.float32
    params = {
        'conv1_w': 0.2 * jax.random.normal(ks[0], (Cin, Cin, 3, 3), f32),
        'bn1_g': 1.0 + 0.1 * jax.random.normal(ks[1], (Cin,), f32),
        'bn1_b': 0.1 * jax.random.normal(ks[2], (Cin,), f32),
        'route_w': 0.3 * jax.random.normal(ks[3], (Cout, Cin, 1, 1), f32),
        'conv2_w': 0.2 * jax.random.normal(ks[4], (Cout, Cout, 3, 3), f32),
        'bn2_g': 1.0 + 0.1 * jax.random.normal(ks[5], (Cout,), f32),
        'bn2_b': 0.1 * jax.random.normal(ks[6], (Cout,), f32),
        'conv3_w': 0.2 * jax.random.normal(ks[7], (Cout, Cout, 3, 3), f32),
        'bn3_g': 1.0 + 0.1 * jax.random.normal(ks[8], (Cout,), f32),
        'bn3_b': 0.1 * jax.random.normal(ks[9], (Cout,), f32),
        'conv4_w': 0.3 * jax.random.normal(ks[10], (Cin, Cin, 1, 1), f32),
        'bn4_g': 1.0 + 0.1 * jax.random.normal(ks[11], (Cin,), f32),
        'bn4_b': 0.1 * jax.random.normal(ks[12], (Cin,), f32),
    }
    x = jax.random.normal(ks[13], (N, Cin, H, W), f32)

    out = jax.jit(csp_forward)(x, params)
    out = jax.block_until_ready(out)

    ref = ref_forward(x, params)
    assert out.shape == (N, 2 * Cin, H, W), out.shape
    max_err = float(jnp.max(jnp.abs(out - ref)))
    # bf16 MXU operands + bf16 activation slabs (per perf review) => bf16-level
    # tolerance vs the f32 HIGHEST-precision reference.
    assert jnp.allclose(out, ref, atol=5e-2, rtol=5e-2), f"max_err={max_err}"
    print("KERNEL_OK")
</pallas_src>

<mosaic_0001>
module attributes {stable_mosaic.version = 11 : i64} {
  func.func @_bn_mish_route_kernel(%arg0: i32, %arg1: memref<512x128xbf16, #tpu.memory_space<vmem>>, %arg2: memref<2x128xf32, #tpu.memory_space<vmem>>, %arg3: memref<128x128xbf16, #tpu.memory_space<vmem>>, %arg4: memref<512x128xbf16, #tpu.memory_space<vmem>>, %arg5: memref<512x128xbf16, #tpu.memory_space<vmem>>) attributes {dimension_semantics = [#tpu.dimension_semantics<parallel>], iteration_bounds = array<i64: 1>, scalar_prefetch = 0 : i64, scratch_operands = 0 : i64, tpu.core_type = #tpu.core_type<tc>, window_params = [{transform_indices = @transform_0, window_bounds = array<i64: 512, 128>}, {pipeline_mode = #tpu.pipeline_mode<synchronous>, transform_indices = @transform_1, window_bounds = array<i64: 2, 128>}, {pipeline_mode = #tpu.pipeline_mode<synchronous>, transform_indices = @transform_2, window_bounds = array<i64: 128, 128>}, {transform_indices = @transform_3, window_bounds = array<i64: 512, 128>}, {transform_indices = @transform_4, window_bounds = array<i64: 512, 128>}]} {
    %c0 = arith.constant 0 : index
    %c0_0 = arith.constant 0 : index
    %0 = vector.load %arg1[%c0, %c0_0] : memref<512x128xbf16, #tpu.memory_space<vmem>>, vector<512x128xbf16>
    %c0_1 = arith.constant 0 : index
    %c0_2 = arith.constant 0 : index
    %1 = vector.load %arg2[%c0_1, %c0_2] : memref<2x128xf32, #tpu.memory_space<vmem>>, vector<2x128xf32>
    %2 = arith.extf %0 : vector<512x128xbf16> to vector<512x128xf32>
    %3 = vector.extract_strided_slice %1 {offsets = [0, 0], sizes = [1, 128], strides = [1, 1]} : vector<2x128xf32> to vector<1x128xf32>
    %4 = vector.broadcast %3 : vector<1x128xf32> to vector<512x128xf32>
    %5 = arith.mulf %2, %4 : vector<512x128xf32>
    %6 = vector.extract_strided_slice %1 {offsets = [1, 0], sizes = [1, 128], strides = [1, 1]} : vector<2x128xf32> to vector<1x128xf32>
    %7 = vector.broadcast %6 : vector<1x128xf32> to vector<512x128xf32>
    %8 = arith.addf %5, %7 : vector<512x128xf32>
    %cst = arith.constant 2.000000e+01 : f32
    %9 = vector.broadcast %cst : f32 to vector<512x128xf32>
    %10 = arith.minimumf %8, %9 : vector<512x128xf32>
    %11 = math.exp %10 : vector<512x128xf32>
    %cst_3 = arith.constant 1.000000e+00 : f32
    %12 = vector.broadcast %cst_3 : f32 to vector<512x128xf32>
    %13 = arith.addf %12, %11 : vector<512x128xf32>
    %cst_4 = arith.constant 1.000000e+00 : f32
    %14 = vector.broadcast %cst_4 : f32 to vector<512x128xf32>
    %15 = arith.addf %14, %11 : vector<512x128xf32>
    %16 = arith.mulf %13, %15 : vector<512x128xf32>
    %cst_5 = arith.constant 1.000000e+00 : f32
    %17 = vector.broadcast %cst_5 : f32 to vector<512x128xf32>
    %18 = arith.subf %16, %17 : vector<512x128xf32>
    %cst_6 = arith.constant 1.000000e+00 : f32
    %19 = vector.broadcast %cst_6 : f32 to vector<512x128xf32>
    %20 = arith.addf %16, %19 : vector<512x128xf32>
    %21 = arith.divf %18, %20 : vector<512x128xf32>
    %22 = arith.mulf %8, %21 : vector<512x128xf32>
    %23 = arith.truncf %22 : vector<512x128xf32> to vector<512x128xbf16>
    %c0_7 = arith.constant 0 : index
    %c0_8 = arith.constant 0 : index
    %24 = vector.load %arg4[%c0_7, %c0_8] : memref<512x128xbf16, #tpu.memory_space<vmem>>, vector<512x128xbf16>
    tpu.vector_store %arg4[%c0_7, %c0_8], %23 {strides = array<i32>} : memref<512x128xbf16, #tpu.memory_space<vmem>>, vector<512x128xbf16>,
    %c0_9 = arith.constant 0 : index
    %c0_10 = arith.constant 0 : index
    %25 = vector.load %arg3[%c0_9, %c0_10] : memref<128x128xbf16, #tpu.memory_space<vmem>>, vector<128x128xbf16>
    %cst_11 = arith.constant dense<0.000000e+00> : vector<512x128xf32>
    %26 = tpu.matmul %23, %25, %cst_11 {dimension_numbers = #tpu.dot_dimension_numbers<[1], [0], [0], [1], [0, 0, 1, 1], [], []>} : vector<512x128xbf16>, vector<128x128xbf16>, vector<512x128xf32> -> vector<512x128xf32>
    %27 = arith.truncf %26 : vector<512x128xf32> to vector<512x128xbf16>
    %c0_12 = arith.constant 0 : index
    %c0_13 = arith.constant 0 : index
    %28 = vector.load %arg5[%c0_12, %c0_13] : memref<512x128xbf16, #tpu.memory_space<vmem>>, vector<512x128xbf16>
    tpu.vector_store %arg5[%c0_12, %c0_13], %27 {strides = array<i32>} : memref<512x128xbf16, #tpu.memory_space<vmem>>, vector<512x128xbf16>,
    return
  }
  func.func @transform_0(%arg0: i32) -> (i32, i32) {
    %c0_i32 = arith.constant 0 : i32
    %c0_i32_0 = arith.constant 0 : i32
    return %arg0, %c0_i32 : i32, i32
  }
  func.func @transform_1(%arg0: i32) -> (i32, i32) {
    %c0_i32 = arith.constant 0 : i32
    %c0_i32_0 = arith.constant 0 : i32
    %c0_i32_1 = arith.constant 0 : i32
    return %c0_i32, %c0_i32_0 : i32, i32
  }
  func.func @transform_2(%arg0: i32) -> (i32, i32) {
    %c0_i32 = arith.constant 0 : i32
    %c0_i32_0 = arith.constant 0 : i32
    %c0_i32_1 = arith.constant 0 : i32
    return %c0_i32, %c0_i32_0 : i32, i32
  }
  func.func @transform_3(%arg0: i32) -> (i32, i32) {
    %c0_i32 = arith.constant 0 : i32
    %c0_i32_0 = arith.constant 0 : i32
    return %arg0, %c0_i32 : i32, i32
  }
  func.func @transform_4(%arg0: i32) -> (i32, i32) {
    %c0_i32 = arith.constant 0 : i32
    %c0_i32_0 = arith.constant 0 : i32
    return %arg0, %c0_i32 : i32, i32
  }
}

module attributes {stable_mosaic.version = 11 : i64} {
  func.func @_conv3x3_stats_kernel(%arg0: i32, %arg1: memref<1x16x16x128xbf16, #tpu.memory_space<vmem>>, %arg2: memref<3x384x128xbf16, #tpu.memory_space<vmem>>, %arg3: memref<1x256x128xbf16, #tpu.memory_space<vmem>>, %arg4: memref<1x2x128xf32, #tpu.memory_space<vmem>>) attributes {dimension_semantics = [#tpu.dimension_semantics<parallel>], iteration_bounds = array<i64: 2>, scalar_prefetch = 0 : i64, scratch_operands = 0 : i64, tpu.core_type = #tpu.core_type<tc>, window_params = [{transform_indices = @transform_0, window_bounds = array<i64: 1, 16, 16, 128>}, {pipeline_mode = #tpu.pipeline_mode<synchronous>, transform_indices = @transform_1, window_bounds = array<i64: 3, 384, 128>}, {transform_indices = @transform_2, window_bounds = array<i64: 1, 256, 128>}, {transform_indices = @transform_3, window_bounds = array<i64: 1, 2, 128>}]} {
    %c0 = arith.constant 0 : index
    %c0_0 = arith.constant 0 : index
    %c0_1 = arith.constant 0 : index
    %c0_2 = arith.constant 0 : index
    %0 = vector.load %arg1[%c0, %c0_0, %c0_1, %c0_2] : memref<1x16x16x128xbf16, #tpu.memory_space<vmem>>, vector<1x16x16x128xbf16>
    %1 = vector.shape_cast %0 : vector<1x16x16x128xbf16> to vector<16x16x128xbf16>
    %cst = arith.constant 0.000000e+00 : bf16
    %2 = vector.broadcast %cst : bf16 to vector<1x16x128xbf16>
    %cst_3 = arith.constant 0.000000e+00 : bf16
    %3 = vector.broadcast %cst_3 : bf16 to vector<18x1x128xbf16>
    %4 = tpu.concatenate %2, %1, %2 in 0 : vector<1x16x128xbf16>, vector<16x16x128xbf16>, vector<1x16x128xbf16> -> vector<18x16x128xbf16>
    %5 = tpu.concatenate %3, %4, %3 in 1 : vector<18x1x128xbf16>, vector<18x16x128xbf16>, vector<18x1x128xbf16> -> vector<18x18x128xbf16>
    %cst_4 = arith.constant 0.000000e+00 : f32
    %6 = vector.broadcast %cst_4 : f32 to vector<256x128xf32>
    %7 = vector.extract_strided_slice %5 {offsets = [0, 0, 0], sizes = [16, 18, 128], strides = [1, 1, 1]} : vector<18x18x128xbf16> to vector<16x18x128xbf16>
    %8 = vector.extract_strided_slice %7 {offsets = [0, 0, 0], sizes = [16, 16, 128], strides = [1, 1, 1]} : vector<16x18x128xbf16> to vector<16x16x128xbf16>
    %9 = vector.extract_strided_slice %7 {offsets = [0, 1, 0], sizes = [16, 16, 128], strides = [1, 1, 1]} : vector<16x18x128xbf16> to vector<16x16x128xbf16>
    %10 = vector.extract_strided_slice %7 {offsets = [0, 2, 0], sizes = [16, 16, 128], strides = [1, 1, 1]} : vector<16x18x128xbf16> to vector<16x16x128xbf16>
    %11 = tpu.concatenate %8, %9, %10 in 2 : vector<16x16x128xbf16>, vector<16x16x128xbf16>, vector<16x16x128xbf16> -> vector<16x16x384xbf16>
    %12 = vector.shape_cast %11 : vector<16x16x384xbf16> to vector<256x384xbf16>
    %c0_5 = arith.constant 0 : index
    %c0_6 = arith.constant 0 : index
    %c0_7 = arith.constant 0 : index
    %13 = vector.load %arg2[%c0_5, %c0_6, %c0_7] : memref<3x384x128xbf16, #tpu.memory_space<vmem>>, vector<1x384x128xbf16>
    %14 = vector.shape_cast %13 : vector<1x384x128xbf16> to vector<384x128xbf16>
    %cst_8 = arith.constant dense<0.000000e+00> : vector<256x128xf32>
    %15 = tpu.matmul %12, %14, %cst_8 {dimension_numbers = #tpu.dot_dimension_numbers<[1], [0], [0], [1], [0, 0, 1, 1], [], []>} : vector<256x384xbf16>, vector<384x128xbf16>, vector<256x128xf32> -> vector<256x128xf32>
    %16 = arith.addf %6, %15 : vector<256x128xf32>
    %17 = vector.extract_strided_slice %5 {offsets = [1, 0, 0], sizes = [16, 18, 128], strides = [1, 1, 1]} : vector<18x18x128xbf16> to vector<16x18x128xbf16>
    %18 = vector.extract_strided_slice %17 {offsets = [0, 0, 0], sizes = [16, 16, 128], strides = [1, 1, 1]} : vector<16x18x128xbf16> to vector<16x16x128xbf16>
    %19 = vector.extract_strided_slice %17 {offsets = [0, 1, 0], sizes = [16, 16, 128], strides = [1, 1, 1]} : vector<16x18x128xbf16> to vector<16x16x128xbf16>
    %20 = vector.extract_strided_slice %17 {offsets = [0, 2, 0], sizes = [16, 16, 128], strides = [1, 1, 1]} : vector<16x18x128xbf16> to vector<16x16x128xbf16>
    %21 = tpu.concatenate %18, %19, %20 in 2 : vector<16x16x128xbf16>, vector<16x16x128xbf16>, vector<16x16x128xbf16> -> vector<16x16x384xbf16>
    %22 = vector.shape_cast %21 : vector<16x16x384xbf16> to vector<256x384xbf16>
    %c1 = arith.constant 1 : index
    %c0_9 = arith.constant 0 : index
    %c0_10 = arith.constant 0 : index
    %23 = vector.load %arg2[%c1, %c0_9, %c0_10] : memref<3x384x128xbf16, #tpu.memory_space<vmem>>, vector<1x384x128xbf16>
    %24 = vector.shape_cast %23 : vector<1x384x128xbf16> to vector<384x128xbf16>
    %cst_11 = arith.constant dense<0.000000e+00> : vector<256x128xf32>
    %25 = tpu.matmul %22, %24, %cst_11 {dimension_numbers = #tpu.dot_dimension_numbers<[1], [0], [0], [1], [0, 0, 1, 1], [], []>} : vector<256x384xbf16>, vector<384x128xbf16>, vector<256x128xf32> -> vector<256x128xf32>
    %26 = arith.addf %16, %25 : vector<256x128xf32>
    %27 = vector.extract_strided_slice %5 {offsets = [2, 0, 0], sizes = [16, 18, 128], strides = [1, 1, 1]} : vector<18x18x128xbf16> to vector<16x18x128xbf16>
    %28 = vector.extract_strided_slice %27 {offsets = [0, 0, 0], sizes = [16, 16, 128], strides = [1, 1, 1]} : vector<16x18x128xbf16> to vector<16x16x128xbf16>
    %29 = vector.extract_strided_slice %27 {offsets = [0, 1, 0], sizes = [16, 16, 128], strides = [1, 1, 1]} : vector<16x18x128xbf16> to vector<16x16x128xbf16>
    %30 = vector.extract_strided_slice %27 {offsets = [0, 2, 0], sizes = [16, 16, 128], strides = [1, 1, 1]} : vector<16x18x128xbf16> to vector<16x16x128xbf16>
    %31 = tpu.concatenate %28, %29, %30 in 2 : vector<16x16x128xbf16>, vector<16x16x128xbf16>, vector<16x16x128xbf16> -> vector<16x16x384xbf16>
    %32 = vector.shape_cast %31 : vector<16x16x384xbf16> to vector<256x384xbf16>
    %c2 = arith.constant 2 : index
    %c0_12 = arith.constant 0 : index
    %c0_13 = arith.constant 0 : index
    %33 = vector.load %arg2[%c2, %c0_12, %c0_13] : memref<3x384x128xbf16, #tpu.memory_space<vmem>>, vector<1x384x128xbf16>
    %34 = vector.shape_cast %33 : vector<1x384x128xbf16> to vector<384x128xbf16>
    %cst_14 = arith.constant dense<0.000000e+00> : vector<256x128xf32>
    %35 = tpu.matmul %32, %34, %cst_14 {dimension_numbers = #tpu.dot_dimension_numbers<[1], [0], [0], [1], [0, 0, 1, 1], [], []>} : vector<256x384xbf16>, vector<384x128xbf16>, vector<256x128xf32> -> vector<256x128xf32>
    %36 = arith.addf %26, %35 : vector<256x128xf32>
    %37 = arith.truncf %36 : vector<256x128xf32> to vector<256x128xbf16>
    %c0_15 = arith.constant 0 : index
    %c0_16 = arith.constant 0 : index
    %c0_17 = arith.constant 0 : index
    %38 = vector.load %arg3[%c0_15, %c0_16, %c0_17] : memref<1x256x128xbf16, #tpu.memory_space<vmem>>, vector<1x256x128xbf16>
    %39 = vector.shape_cast %38 : vector<1x256x128xbf16> to vector<256x128xbf16>
    %40 = vector.shape_cast %37 : vector<256x128xbf16> to vector<1x256x128xbf16>
    tpu.vector_store %arg3[%c0_15, %c0_16, %c0_17], %40 {strides = array<i32>} : memref<1x256x128xbf16, #tpu.memory_space<vmem>>, vector<1x256x128xbf16>,
    %cst_18 = arith.constant dense<0.000000e+00> : vector<128xf32>
    %41 = vector.multi_reduction <add>, %36, %cst_18 [0] : vector<256x128xf32> to vector<128xf32>
    %42 = vector.shape_cast %41 : vector<128xf32> to vector<1x128xf32>
    %c0_19 = arith.constant 0 : index
    %c0_20 = arith.constant 0 : index
    %c0_21 = arith.constant 0 : index
    %43 = vector.load %arg4[%c0_19, %c0_20, %c0_21] : memref<1x2x128xf32, #tpu.memory_space<vmem>>, vector<1x1x128xf32>
    %44 = vector.shape_cast %43 : vector<1x1x128xf32> to vector<1x128xf32>
    %45 = vector.shape_cast %42 : vector<1x128xf32> to vector<1x1x128xf32>
    tpu.vector_store %arg4[%c0_19, %c0_20, %c0_21], %45 {strides = array<i32>} : memref<1x2x128xf32, #tpu.memory_space<vmem>>, vector<1x1x128xf32>,
    %46 = arith.mulf %36, %36 : vector<256x128xf32>
    %cst_22 = arith.constant dense<0.000000e+00> : vector<128xf32>
    %47 = vector.multi_reduction <add>, %46, %cst_22 [0] : vector<256x128xf32> to vector<128xf32>
    %48 = vector.shape_cast %47 : vector<128xf32> to vector<1x128xf32>
    %c0_23 = arith.constant 0 : index
    %c1_24 = arith.constant 1 : index
    %c0_25 = arith.constant 0 : index
    %49 = vector.load %arg4[%c0_23, %c1_24, %c0_25] : memref<1x2x128xf32, #tpu.memory_space<vmem>>, vector<1x1x128xf32>
    %50 = vector.shape_cast %49 : vector<1x1x128xf32> to vector<1x128xf32>
    %51 = vector.shape_cast %48 : vector<1x128xf32> to vector<1x1x128xf32>
    tpu.vector_store %arg4[%c0_23, %c1_24, %c0_25], %51 {strides = array<i32>} : memref<1x2x128xf32, #tpu.memory_space<vmem>>, vector<1x1x128xf32>,
    return
  }
  func.func @transform_0(%arg0: i32) -> (i32, i32, i32, i32) {
    %c0_i32 = arith.constant 0 : i32
    %c0_i32_0 = arith.constant 0 : i32
    %c0_i32_1 = arith.constant 0 : i32
    %c0_i32_2 = arith.constant 0 : i32
    return %arg0, %c0_i32, %c0_i32_0, %c0_i32_1 : i32, i32, i32, i32
  }
  func.func @transform_1(%arg0: i32) -> (i32, i32, i32) {
    %c0_i32 = arith.constant 0 : i32
    %c0_i32_0 = arith.constant 0 : i32
    %c0_i32_1 = arith.constant 0 : i32
    %c0_i32_2 = arith.constant 0 : i32
    return %c0_i32, %c0_i32_0, %c0_i32_1 : i32, i32, i32
  }
  func.func @transform_2(%arg0: i32) -> (i32, i32, i32) {
    %c0_i32 = arith.constant 0 : i32
    %c0_i32_0 = arith.constant 0 : i32
    %c0_i32_1 = arith.constant 0 : i32
    return %arg0, %c0_i32, %c0_i32_0 : i32, i32, i32
  }
  func.func @transform_3(%arg0: i32) -> (i32, i32, i32) {
    %c0_i32 = arith.constant 0 : i32
    %c0_i32_0 = arith.constant 0 : i32
    %c0_i32_1 = arith.constant 0 : i32
    return %arg0, %c0_i32, %c0_i32_0 : i32, i32, i32
  }
}

module attributes {stable_mosaic.version = 11 : i64} {
  func.func @_bn_mish_kernel(%arg0: i32, %arg1: memref<512x128xbf16, #tpu.memory_space<vmem>>, %arg2: memref<2x128xf32, #tpu.memory_space<vmem>>, %arg3: memref<512x128xbf16, #tpu.memory_space<vmem>>) attributes {dimension_semantics = [#tpu.dimension_semantics<parallel>], iteration_bounds = array<i64: 1>, scalar_prefetch = 0 : i64, scratch_operands = 0 : i64, tpu.core_type = #tpu.core_type<tc>, window_params = [{transform_indices = @transform_0, window_bounds = array<i64: 512, 128>}, {pipeline_mode = #tpu.pipeline_mode<synchronous>, transform_indices = @transform_1, window_bounds = array<i64: 2, 128>}, {transform_indices = @transform_2, window_bounds = array<i64: 512, 128>}]} {
    %c0 = arith.constant 0 : index
    %c0_0 = arith.constant 0 : index
    %0 = vector.load %arg1[%c0, %c0_0] : memref<512x128xbf16, #tpu.memory_space<vmem>>, vector<512x128xbf16>
    %c0_1 = arith.constant 0 : index
    %c0_2 = arith.constant 0 : index
    %1 = vector.load %arg2[%c0_1, %c0_2] : memref<2x128xf32, #tpu.memory_space<vmem>>, vector<2x128xf32>
    %2 = arith.extf %0 : vector<512x128xbf16> to vector<512x128xf32>
    %3 = vector.extract_strided_slice %1 {offsets = [0, 0], sizes = [1, 128], strides = [1, 1]} : vector<2x128xf32> to vector<1x128xf32>
    %4 = vector.broadcast %3 : vector<1x128xf32> to vector<512x128xf32>
    %5 = arith.mulf %2, %4 : vector<512x128xf32>
    %6 = vector.extract_strided_slice %1 {offsets = [1, 0], sizes = [1, 128], strides = [1, 1]} : vector<2x128xf32> to vector<1x128xf32>
    %7 = vector.broadcast %6 : vector<1x128xf32> to vector<512x128xf32>
    %8 = arith.addf %5, %7 : vector<512x128xf32>
    %cst = arith.constant 2.000000e+01 : f32
    %9 = vector.broadcast %cst : f32 to vector<512x128xf32>
    %10 = arith.minimumf %8, %9 : vector<512x128xf32>
    %11 = math.exp %10 : vector<512x128xf32>
    %cst_3 = arith.constant 1.000000e+00 : f32
    %12 = vector.broadcast %cst_3 : f32 to vector<512x128xf32>
    %13 = arith.addf %12, %11 : vector<512x128xf32>
    %cst_4 = arith.constant 1.000000e+00 : f32
    %14 = vector.broadcast %cst_4 : f32 to vector<512x128xf32>
    %15 = arith.addf %14, %11 : vector<512x128xf32>
    %16 = arith.mulf %13, %15 : vector<512x128xf32>
    %cst_5 = arith.constant 1.000000e+00 : f32
    %17 = vector.broadcast %cst_5 : f32 to vector<512x128xf32>
    %18 = arith.subf %16, %17 : vector<512x128xf32>
    %cst_6 = arith.constant 1.000000e+00 : f32
    %19 = vector.broadcast %cst_6 : f32 to vector<512x128xf32>
    %20 = arith.addf %16, %19 : vector<512x128xf32>
    %21 = arith.divf %18, %20 : vector<512x128xf32>
    %22 = arith.mulf %8, %21 : vector<512x128xf32>
    %23 = arith.truncf %22 : vector<512x128xf32> to vector<512x128xbf16>
    %c0_7 = arith.constant 0 : index
    %c0_8 = arith.constant 0 : index
    %24 = vector.load %arg3[%c0_7, %c0_8] : memref<512x128xbf16, #tpu.memory_space<vmem>>, vector<512x128xbf16>
    tpu.vector_store %arg3[%c0_7, %c0_8], %23 {strides = array<i32>} : memref<512x128xbf16, #tpu.memory_space<vmem>>, vector<512x128xbf16>,
    return
  }
  func.func @transform_0(%arg0: i32) -> (i32, i32) {
    %c0_i32 = arith.constant 0 : i32
    %c0_i32_0 = arith.constant 0 : i32
    return %arg0, %c0_i32 : i32, i32
  }
  func.func @transform_1(%arg0: i32) -> (i32, i32) {
    %c0_i32 = arith.constant 0 : i32
    %c0_i32_0 = arith.constant 0 : i32
    %c0_i32_1 = arith.constant 0 : i32
    return %c0_i32, %c0_i32_0 : i32, i32
  }
  func.func @transform_2(%arg0: i32) -> (i32, i32) {
    %c0_i32 = arith.constant 0 : i32
    %c0_i32_0 = arith.constant 0 : i32
    return %arg0, %c0_i32 : i32, i32
  }
}

module attributes {stable_mosaic.version = 11 : i64} {
  func.func @_conv1x1_dual_stats_kernel(%arg0: i32, %arg1: memref<512x128xbf16, #tpu.memory_space<vmem>>, %arg2: memref<512x128xbf16, #tpu.memory_space<vmem>>, %arg3: memref<2x128xf32, #tpu.memory_space<vmem>>, %arg4: memref<128x128xbf16, #tpu.memory_space<vmem>>, %arg5: memref<128x128xbf16, #tpu.memory_space<vmem>>, %arg6: memref<512x128xbf16, #tpu.memory_space<vmem>>, %arg7: memref<1x2x128xf32, #tpu.memory_space<vmem>>) attributes {dimension_semantics = [#tpu.dimension_semantics<parallel>], iteration_bounds = array<i64: 1>, scalar_prefetch = 0 : i64, scratch_operands = 0 : i64, tpu.core_type = #tpu.core_type<tc>, window_params = [{transform_indices = @transform_0, window_bounds = array<i64: 512, 128>}, {transform_indices = @transform_1, window_bounds = array<i64: 512, 128>}, {pipeline_mode = #tpu.pipeline_mode<synchronous>, transform_indices = @transform_2, window_bounds = array<i64: 2, 128>}, {pipeline_mode = #tpu.pipeline_mode<synchronous>, transform_indices = @transform_3, window_bounds = array<i64: 128, 128>}, {pipeline_mode = #tpu.pipeline_mode<synchronous>, transform_indices = @transform_4, window_bounds = array<i64: 128, 128>}, {transform_indices = @transform_5, window_bounds = array<i64: 512, 128>}, {transform_indices = @transform_6, window_bounds = array<i64: 1, 2, 128>}]} {
    %c0 = arith.constant 0 : index
    %c0_0 = arith.constant 0 : index
    %0 = vector.load %arg2[%c0, %c0_0] : memref<512x128xbf16, #tpu.memory_space<vmem>>, vector<512x128xbf16>
    %c0_1 = arith.constant 0 : index
    %c0_2 = arith.constant 0 : index
    %1 = vector.load %arg3[%c0_1, %c0_2] : memref<2x128xf32, #tpu.memory_space<vmem>>, vector<2x128xf32>
    %2 = arith.extf %0 : vector<512x128xbf16> to vector<512x128xf32>
    %3 = vector.extract_strided_slice %1 {offsets = [0, 0], sizes = [1, 128], strides = [1, 1]} : vector<2x128xf32> to vector<1x128xf32>
    %4 = vector.broadcast %3 : vector<1x128xf32> to vector<512x128xf32>
    %5 = arith.mulf %2, %4 : vector<512x128xf32>
    %6 = vector.extract_strided_slice %1 {offsets = [1, 0], sizes = [1, 128], strides = [1, 1]} : vector<2x128xf32> to vector<1x128xf32>
    %7 = vector.broadcast %6 : vector<1x128xf32> to vector<512x128xf32>
    %8 = arith.addf %5, %7 : vector<512x128xf32>
    %cst = arith.constant 2.000000e+01 : f32
    %9 = vector.broadcast %cst : f32 to vector<512x128xf32>
    %10 = arith.minimumf %8, %9 : vector<512x128xf32>
    %11 = math.exp %10 : vector<512x128xf32>
    %cst_3 = arith.constant 1.000000e+00 : f32
    %12 = vector.broadcast %cst_3 : f32 to vector<512x128xf32>
    %13 = arith.addf %12, %11 : vector<512x128xf32>
    %cst_4 = arith.constant 1.000000e+00 : f32
    %14 = vector.broadcast %cst_4 : f32 to vector<512x128xf32>
    %15 = arith.addf %14, %11 : vector<512x128xf32>
    %16 = arith.mulf %13, %15 : vector<512x128xf32>
    %cst_5 = arith.constant 1.000000e+00 : f32
    %17 = vector.broadcast %cst_5 : f32 to vector<512x128xf32>
    %18 = arith.subf %16, %17 : vector<512x128xf32>
    %cst_6 = arith.constant 1.000000e+00 : f32
    %19 = vector.broadcast %cst_6 : f32 to vector<512x128xf32>
    %20 = arith.addf %16, %19 : vector<512x128xf32>
    %21 = arith.divf %18, %20 : vector<512x128xf32>
    %22 = arith.mulf %8, %21 : vector<512x128xf32>
    %23 = arith.truncf %22 : vector<512x128xf32> to vector<512x128xbf16>
    %c0_7 = arith.constant 0 : index
    %c0_8 = arith.constant 0 : index
    %24 = vector.load %arg1[%c0_7, %c0_8] : memref<512x128xbf16, #tpu.memory_space<vmem>>, vector<512x128xbf16>
    %c0_9 = arith.constant 0 : index
    %c0_10 = arith.constant 0 : index
    %25 = vector.load %arg4[%c0_9, %c0_10] : memref<128x128xbf16, #tpu.memory_space<vmem>>, vector<128x128xbf16>
    %cst_11 = arith.constant dense<0.000000e+00> : vector<512x128xf32>
    %26 = tpu.matmul %24, %25, %cst_11 {dimension_numbers = #tpu.dot_dimension_numbers<[1], [0], [0], [1], [0, 0, 1, 1], [], []>} : vector<512x128xbf16>, vector<128x128xbf16>, vector<512x128xf32> -> vector<512x128xf32>
    %c0_12 = arith.constant 0 : index
    %c0_13 = arith.constant 0 : index
    %27 = vector.load %arg5[%c0_12, %c0_13] : memref<128x128xbf16, #tpu.memory_space<vmem>>, vector<128x128xbf16>
    %cst_14 = arith.constant dense<0.000000e+00> : vector<512x128xf32>
    %28 = tpu.matmul %23, %27, %cst_14 {dimension_numbers = #tpu.dot_dimension_numbers<[1], [0], [0], [1], [0, 0, 1, 1], [], []>} : vector<512x128xbf16>, vector<128x128xbf16>, vector<512x128xf32> -> vector<512x128xf32>
    %29 = arith.addf %26, %28 : vector<512x128xf32>
    %30 = arith.truncf %29 : vector<512x128xf32> to vector<512x128xbf16>
    %c0_15 = arith.constant 0 : index
    %c0_16 = arith.constant 0 : index
    %31 = vector.load %arg6[%c0_15, %c0_16] : memref<512x128xbf16, #tpu.memory_space<vmem>>, vector<512x128xbf16>
    tpu.vector_store %arg6[%c0_15, %c0_16], %30 {strides = array<i32>} : memref<512x128xbf16, #tpu.memory_space<vmem>>, vector<512x128xbf16>,
    %cst_17 = arith.constant dense<0.000000e+00> : vector<128xf32>
    %32 = vector.multi_reduction <add>, %29, %cst_17 [0] : vector<512x128xf32> to vector<128xf32>
    %33 = vector.shape_cast %32 : vector<128xf32> to vector<1x128xf32>
    %c0_18 = arith.constant 0 : index
    %c0_19 = arith.constant 0 : index
    %c0_20 = arith.constant 0 : index
    %34 = vector.load %arg7[%c0_18, %c0_19, %c0_20] : memref<1x2x128xf32, #tpu.memory_space<vmem>>, vector<1x1x128xf32>
    %35 = vector.shape_cast %34 : vector<1x1x128xf32> to vector<1x128xf32>
    %36 = vector.shape_cast %33 : vector<1x128xf32> to vector<1x1x128xf32>
    tpu.vector_store %arg7[%c0_18, %c0_19, %c0_20], %36 {strides = array<i32>} : memref<1x2x128xf32, #tpu.memory_space<vmem>>, vector<1x1x128xf32>,
    %37 = arith.mulf %29, %29 : vector<512x128xf32>
    %cst_21 = arith.constant dense<0.000000e+00> : vector<128xf32>
    %38 = vector.multi_reduction <add>, %37, %cst_21 [0] : vector<512x128xf32> to vector<128xf32>
    %39 = vector.shape_cast %38 : vector<128xf32> to vector<1x128xf32>
    %c0_22 = arith.constant 0 : index
    %c1 = arith.constant 1 : index
    %c0_23 = arith.constant 0 : index
    %40 = vector.load %arg7[%c0_22, %c1, %c0_23] : memref<1x2x128xf32, #tpu.memory_space<vmem>>, vector<1x1x128xf32>
    %41 = vector.shape_cast %40 : vector<1x1x128xf32> to vector<1x128xf32>
    %42 = vector.shape_cast %39 : vector<1x128xf32> to vector<1x1x128xf32>
    tpu.vector_store %arg7[%c0_22, %c1, %c0_23], %42 {strides = array<i32>} : memref<1x2x128xf32, #tpu.memory_space<vmem>>, vector<1x1x128xf32>,
    return
  }
  func.func @transform_0(%arg0: i32) -> (i32, i32) {
    %c0_i32 = arith.constant 0 : i32
    %c0_i32_0 = arith.constant 0 : i32
    return %arg0, %c0_i32 : i32, i32
  }
  func.func @transform_1(%arg0: i32) -> (i32, i32) {
    %c0_i32 = arith.constant 0 : i32
    %c0_i32_0 = arith.constant 0 : i32
    return %arg0, %c0_i32 : i32, i32
  }
  func.func @transform_2(%arg0: i32) -> (i32, i32) {
    %c0_i32 = arith.constant 0 : i32
    %c0_i32_0 = arith.constant 0 : i32
    %c0_i32_1 = arith.constant 0 : i32
    return %c0_i32, %c0_i32_0 : i32, i32
  }
  func.func @transform_3(%arg0: i32) -> (i32, i32) {
    %c0_i32 = arith.constant 0 : i32
    %c0_i32_0 = arith.constant 0 : i32
    %c0_i32_1 = arith.constant 0 : i32
    return %c0_i32, %c0_i32_0 : i32, i32
  }
  func.func @transform_4(%arg0: i32) -> (i32, i32) {
    %c0_i32 = arith.constant 0 : i32
    %c0_i32_0 = arith.constant 0 : i32
    %c0_i32_1 = arith.constant 0 : i32
    return %c0_i32, %c0_i32_0 : i32, i32
  }
  func.func @transform_5(%arg0: i32) -> (i32, i32) {
    %c0_i32 = arith.constant 0 : i32
    %c0_i32_0 = arith.constant 0 : i32
    return %arg0, %c0_i32 : i32, i32
  }
  func.func @transform_6(%arg0: i32) -> (i32, i32, i32) {
    %c0_i32 = arith.constant 0 : i32
    %c0_i32_0 = arith.constant 0 : i32
    %c0_i32_1 = arith.constant 0 : i32
    return %arg0, %c0_i32, %c0_i32_0 : i32, i32, i32
  }
}

</mosaic_0001>

<llo_original>
// kernel: csp_forward.10
$region0: #{csp_forward.10}
  #allocation0 [shape = 'u32[]', space=smem, size = 0x4, offset = 0x4, fixed_abs, tag = 'smem constant byte address 0x4 - core index']
  #allocation1 [shape = 'u32[144,128]{1,0:T(1,128)}', space=vmem, size = 0x12000, scoped, tag = 'internal scratch']
  %s0 = inlined_call_operand.vmem [shape: bf16[512,128], index: 0, kind: input, shape index: {}]
  %s1 = inlined_call_operand.vmem [shape: f32[2,128], index: 1, kind: input, shape index: {}]
  %s2 = inlined_call_operand.vmem [shape: bf16[512,128], index: 2, kind: output, shape index: {}]
  %s3 = sld [smem:[#allocation0]]
  $region18: #{csp_forward.10} parent=0
    _
  %s5 = ssub.s32 1, %s3
  %s6 = scalar_select 0, %s5, %s3
  // Predicated region
  $region2: #{csp_forward.10} parent=0 // pred_check
    _
  $region3: #{csp_forward.10} parent=0 // pred_check_branch
    %8 = sbr.rel (0) target = $region5
  $region4: #{csp_forward.10} parent=0 // pred_region
    _
  $region5: #{csp_forward.10} parent=0 // pred_fallthru
    _
  // Predicated region
  $region6: #{csp_forward.10} parent=0 // pred_check
    _
  $region7: #{csp_forward.10} parent=0 // pred_check_branch
    %10 = sbr.rel (0) target = $region9
  $region8: #{csp_forward.10} parent=0 // pred_region
    _
  $region9: #{csp_forward.10} parent=0 // pred_fallthru
    _
  %v11 = vld [vmem:[%s0] sm:$0xf]
  %v12 = vld [vmem:[%s0 + $0x4] sm:$0xf]
  %v13 = vld [vmem:[%s0 + $0x8] sm:$0xf]
  %v14 = vld [vmem:[%s0 + $0xc] sm:$0xf]
  %v15 = vld [vmem:[%s0 + $0x10] sm:$0xf]
  %v16 = vld [vmem:[%s0 + $0x14] sm:$0xf]
  %v17 = vld [vmem:[%s0 + $0x18] sm:$0xf]
  %v18 = vld [vmem:[%s0 + $0x1c] sm:$0xf]
  %v19 = vld [vmem:[%s0 + $0x20] sm:$0xf]
  %v20 = vld [vmem:[%s0 + $0x24] sm:$0xf]
  %v21 = vld [vmem:[%s0 + $0x28] sm:$0xf]
  %v22 = vld [vmem:[%s0 + $0x2c] sm:$0xf]
  %v23 = vld [vmem:[%s0 + $0x30] sm:$0xf]
  %v24 = vld [vmem:[%s0 + $0x34] sm:$0xf]
  %v25 = vld [vmem:[%s0 + $0x38] sm:$0xf]
  %v26 = vld [vmem:[%s0 + $0x3c] sm:$0xf]
  %v27 = vld [vmem:[%s0 + $0x40] sm:$0xf]
  %v28 = vld [vmem:[%s0 + $0x44] sm:$0xf]
  %v29 = vld [vmem:[%s0 + $0x48] sm:$0xf]
  %v30 = vld [vmem:[%s0 + $0x4c] sm:$0xf]
  %v31 = vld [vmem:[%s0 + $0x50] sm:$0xf]
  %v32 = vld [vmem:[%s0 + $0x54] sm:$0xf]
  %v33 = vld [vmem:[%s0 + $0x58] sm:$0xf]
  %v34 = vld [vmem:[%s0 + $0x5c] sm:$0xf]
  %v35 = vld [vmem:[%s0 + $0x60] sm:$0xf]
  %v36 = vld [vmem:[%s0 + $0x64] sm:$0xf]
  %v37 = vld [vmem:[%s0 + $0x68] sm:$0xf]
  %v38 = vld [vmem:[%s0 + $0x6c] sm:$0xf]
  %v39 = vld [vmem:[%s0 + $0x70] sm:$0xf]
  %v40 = vld [vmem:[%s0 + $0x74] sm:$0xf]
  %v41 = vld [vmem:[%s0 + $0x78] sm:$0xf]
  %v42 = vld [vmem:[%s0 + $0x7c] sm:$0xf]
  %v43 = vld [vmem:[%s0 + $0x80] sm:$0xf]
  %v44 = vld [vmem:[%s0 + $0x84] sm:$0xf]
  %v45 = vld [vmem:[%s0 + $0x88] sm:$0xf]
  %v46 = vld [vmem:[%s0 + $0x8c] sm:$0xf]
  %v47 = vld [vmem:[%s0 + $0x90] sm:$0xf]
  %v48 = vld [vmem:[%s0 + $0x94] sm:$0xf]
  %v49 = vld [vmem:[%s0 + $0x98] sm:$0xf]
  %v50 = vld [vmem:[%s0 + $0x9c] sm:$0xf]
  %v51 = vld [vmem:[%s0 + $0xa0] sm:$0xf]
  %v52 = vld [vmem:[%s0 + $0xa4] sm:$0xf]
  %v53 = vld [vmem:[%s0 + $0xa8] sm:$0xf]
  %v54 = vld [vmem:[%s0 + $0xac] sm:$0xf]
  %v55 = vld [vmem:[%s0 + $0xb0] sm:$0xf]
  %v56 = vld [vmem:[%s0 + $0xb4] sm:$0xf]
  %v57 = vld [vmem:[%s0 + $0xb8] sm:$0xf]
  %v58 = vld [vmem:[%s0 + $0xbc] sm:$0xf]
  %v59 = vld [vmem:[%s0 + $0xc0] sm:$0xf]
  %v60 = vld [vmem:[%s0 + $0xc4] sm:$0xf]
  %v61 = vld [vmem:[%s0 + $0xc8] sm:$0xf]
  %v62 = vld [vmem:[%s0 + $0xcc] sm:$0xf]
  %v63 = vld [vmem:[%s0 + $0xd0] sm:$0xf]
  %v64 = vld [vmem:[%s0 + $0xd4] sm:$0xf]
  %v65 = vld [vmem:[%s0 + $0xd8] sm:$0xf]
  %v66 = vld [vmem:[%s0 + $0xdc] sm:$0xf]
  %v67 = vld [vmem:[%s0 + $0xe0] sm:$0xf]
  %v68 = vld [vmem:[%s0 + $0xe4] sm:$0xf]
  %v69 = vld [vmem:[%s0 + $0xe8] sm:$0xf]
  %v70 = vld [vmem:[%s0 + $0xec] sm:$0xf]
  %v71 = vld [vmem:[%s0 + $0xf0] sm:$0xf]
  %v72 = vld [vmem:[%s0 + $0xf4] sm:$0xf]
  %v73 = vld [vmem:[%s0 + $0xf8] sm:$0xf]
  %v74 = vld [vmem:[%s0 + $0xfc] sm:$0xf]
  %v75 = vld [vmem:[%s1] sm:$0x3]
  %v76 = vunpack.c.l.bf16 %v11
  %v77 = vunpack.c.l.bf16 %v12
  %v78 = vunpack.c.l.bf16 %v13
  %v79 = vunpack.c.l.bf16 %v14
  %v80 = vunpack.c.l.bf16 %v15
  %v81 = vunpack.c.l.bf16 %v16
  %v82 = vunpack.c.l.bf16 %v17
  %v83 = vunpack.c.l.bf16 %v18
  %v84 = vunpack.c.l.bf16 %v19
  %v85 = vunpack.c.l.bf16 %v20
  %v86 = vunpack.c.l.bf16 %v21
  %v87 = vunpack.c.l.bf16 %v22
  %v88 = vunpack.c.l.bf16 %v23
  %v89 = vunpack.c.l.bf16 %v24
  %v90 = vunpack.c.l.bf16 %v25
  %v91 = vunpack.c.l.bf16 %v26
  %v92 = vunpack.c.l.bf16 %v27
  %v93 = vunpack.c.l.bf16 %v28
  %v94 = vunpack.c.l.bf16 %v29
  %v95 = vunpack.c.l.bf16 %v30
  %v96 = vunpack.c.l.bf16 %v31
  %v97 = vunpack.c.l.bf16 %v32
  %v98 = vunpack.c.l.bf16 %v33
  %v99 = vunpack.c.l.bf16 %v34
  %v100 = vunpack.c.l.bf16 %v35
  %v101 = vunpack.c.l.bf16 %v36
  %v102 = vunpack.c.l.bf16 %v37
  %v103 = vunpack.c.l.bf16 %v38
  %v104 = vunpack.c.l.bf16 %v39
  %v105 = vunpack.c.l.bf16 %v40
  %v106 = vunpack.c.l.bf16 %v41
  %v107 = vunpack.c.l.bf16 %v42
  %v108 = vunpack.c.l.bf16 %v43
  %v109 = vunpack.c.l.bf16 %v44
  %v110 = vunpack.c.l.bf16 %v45
  %v111 = vunpack.c.l.bf16 %v46
  %v112 = vunpack.c.l.bf16 %v47
  %v113 = vunpack.c.l.bf16 %v48
  %v114 = vunpack.c.l.bf16 %v49
  %v115 = vunpack.c.l.bf16 %v50
  %v116 = vunpack.c.l.bf16 %v51
  %v117 = vunpack.c.l.bf16 %v52
  %v118 = vunpack.c.l.bf16 %v53
  %v119 = vunpack.c.l.bf16 %v54
  %v120 = vunpack.c.l.bf16 %v55
  %v121 = vunpack.c.l.bf16 %v56
  %v122 = vunpack.c.l.bf16 %v57
  %v123 = vunpack.c.l.bf16 %v58
  %v124 = vunpack.c.l.bf16 %v59
  %v125 = vunpack.c.l.bf16 %v60
  %v126 = vunpack.c.l.bf16 %v61
  %v127 = vunpack.c.l.bf16 %v62
  %v128 = vunpack.c.l.bf16 %v63
  %v129 = vunpack.c.l.bf16 %v64
  %v130 = vunpack.c.l.bf16 %v65
  %v131 = vunpack.c.l.bf16 %v66
  %v132 = vunpack.c.l.bf16 %v67
  %v133 = vunpack.c.l.bf16 %v68
  %v134 = vunpack.c.l.bf16 %v69
  %v135 = vunpack.c.l.bf16 %v70
  %v136 = vunpack.c.l.bf16 %v71
  %v137 = vunpack.c.l.bf16 %v72
  %v138 = vunpack.c.l.bf16 %v73
  %v139 = vunpack.c.l.bf16 %v74
  %v140 = vlaneseq
  %v141 = vshrl.u32 %v140, 7
  %v142 = vsub.s32 0, %v141
  %v143 = vrot.slane %v75, %v142
  %v144 = vmul.f32 %v76, %v143
  %v145 = vmul.f32 %v77, %v143
  %v146 = vmul.f32 %v78, %v143
  %v147 = vmul.f32 %v79, %v143
  %v148 = vmul.f32 %v80, %v143
  %v149 = vmul.f32 %v81, %v143
  %v150 = vmul.f32 %v82, %v143
  %v151 = vmul.f32 %v83, %v143
  %v152 = vmul.f32 %v84, %v143
  %v153 = vmul.f32 %v85, %v143
  %v154 = vmul.f32 %v86, %v143
  %v155 = vmul.f32 %v87, %v143
  %v156 = vmul.f32 %v88, %v143
  %v157 = vmul.f32 %v89, %v143
  %v158 = vmul.f32 %v90, %v143
  %v159 = vmul.f32 %v91, %v143
  %v160 = vmul.f32 %v92, %v143
  %v161 = vmul.f32 %v93, %v143
  %v162 = vmul.f32 %v94, %v143
  %v163 = vmul.f32 %v95, %v143
  %v164 = vmul.f32 %v96, %v143
  %v165 = vmul.f32 %v97, %v143
  %v166 = vmul.f32 %v98, %v143
  %v167 = vmul.f32 %v99, %v143
  %v168 = vmul.f32 %v100, %v143
  %v169 = vmul.f32 %v101, %v143
  %v170 = vmul.f32 %v102, %v143
  %v171 = vmul.f32 %v103, %v143
  %v172 = vmul.f32 %v104, %v143
  %v173 = vmul.f32 %v105, %v143
  %v174 = vmul.f32 %v106, %v143
  %v175 = vmul.f32 %v107, %v143
  %v176 = vmul.f32 %v108, %v143
  %v177 = vmul.f32 %v109, %v143
  %v178 = vmul.f32 %v110, %v143
  %v179 = vmul.f32 %v111, %v143
  %v180 = vmul.f32 %v112, %v143
  %v181 = vmul.f32 %v113, %v143
  %v182 = vmul.f32 %v114, %v143
  %v183 = vmul.f32 %v115, %v143
  %v184 = vmul.f32 %v116, %v143
  %v185 = vmul.f32 %v117, %v143
  %v186 = vmul.f32 %v118, %v143
  %v187 = vmul.f32 %v119, %v143
  %v188 = vmul.f32 %v120, %v143
  %v189 = vmul.f32 %v121, %v143
  %v190 = vmul.f32 %v122, %v143
  %v191 = vmul.f32 %v123, %v143
  %v192 = vmul.f32 %v124, %v143
  %v193 = vmul.f32 %v125, %v143
  %v194 = vmul.f32 %v126, %v143
  %v195 = vmul.f32 %v127, %v143
  %v196 = vmul.f32 %v128, %v143
  %v197 = vmul.f32 %v129, %v143
  %v198 = vmul.f32 %v130, %v143
  %v199 = vmul.f32 %v131, %v143
  %v200 = vmul.f32 %v132, %v143
  %v201 = vmul.f32 %v133, %v143
  %v202 = vmul.f32 %v134, %v143
  %v203 = vmul.f32 %v135, %v143
  %v204 = vmul.f32 %v136, %v143
  %v205 = vmul.f32 %v137, %v143
  %v206 = vmul.f32 %v138, %v143
  %v207 = vmul.f32 %v139, %v143
  %v208 = vlaneseq
  %v209 = vshrl.u32 %v208, 7
  %v210 = vsub.s32 1, %v209
  %v211 = vrot.slane %v75, %v210
  %v212 = vadd.f32 %v144, %v211
  %v213 = vadd.f32 %v145, %v211
  %v214 = vadd.f32 %v146, %v211
  %v215 = vadd.f32 %v147, %v211
  %v216 = vadd.f32 %v148, %v211
  %v217 = vadd.f32 %v149, %v211
  %v218 = vadd.f32 %v150, %v211
  %v219 = vadd.f32 %v151, %v211
  %v220 = vadd.f32 %v152, %v211
  %v221 = vadd.f32 %v153, %v211
  %v222 = vadd.f32 %v154, %v211
  %v223 = vadd.f32 %v155, %v211
  %v224 = vadd.f32 %v156, %v211
  %v225 = vadd.f32 %v157, %v211
  %v226 = vadd.f32 %v158, %v211
  %v227 = vadd.f32 %v159, %v211
  %v228 = vadd.f32 %v160, %v211
  %v229 = vadd.f32 %v161, %v211
  %v230 = vadd.f32 %v162, %v211
  %v231 = vadd.f32 %v163, %v211
  %v232 = vadd.f32 %v164, %v211
  %v233 = vadd.f32 %v165, %v211
  %v234 = vadd.f32 %v166, %v211
  %v235 = vadd.f32 %v167, %v211
  %v236 = vadd.f32 %v168, %v211
  %v237 = vadd.f32 %v169, %v211
  %v238 = vadd.f32 %v170, %v211
  %v239 = vadd.f32 %v171, %v211
  %v240 = vadd.f32 %v172, %v211
  %v241 = vadd.f32 %v173, %v211
  %v242 = vadd.f32 %v174, %v211
  %v243 = vadd.f32 %v175, %v211
  %v244 = vadd.f32 %v176, %v211
  %v245 = vadd.f32 %v177, %v211
  %v246 = vadd.f32 %v178, %v211
  %v247 = vadd.f32 %v179, %v211
  %v248 = vadd.f32 %v180, %v211
  %v249 = vadd.f32 %v181, %v211
  %v250 = vadd.f32 %v182, %v211
  %v251 = vadd.f32 %v183, %v211
  %v252 = vadd.f32 %v184, %v211
  %v253 = vadd.f32 %v185, %v211
  %v254 = vadd.f32 %v186, %v211
  %v255 = vadd.f32 %v187, %v211
  %v256 = vadd.f32 %v188, %v211
  %v257 = vadd.f32 %v189, %v211
  %v258 = vadd.f32 %v190, %v211
  %v259 = vadd.f32 %v191, %v211
  %v260 = vadd.f32 %v192, %v211
  %v261 = vadd.f32 %v193, %v211
  %v262 = vadd.f32 %v194, %v211
  %v263 = vadd.f32 %v195, %v211
  %v264 = vadd.f32 %v196, %v211
  %v265 = vadd.f32 %v197, %v211
  %v266 = vadd.f32 %v198, %v211
  %v267 = vadd.f32 %v199, %v211
  %v268 = vadd.f32 %v200, %v211
  %v269 = vadd.f32 %v201, %v211
  %v270 = vadd.f32 %v202, %v211
  %v271 = vadd.f32 %v203, %v211
  %v272 = vadd.f32 %v204, %v211
  %v273 = vadd.f32 %v205, %v211
  %v274 = vadd.f32 %v206, %v211
  %v275 = vadd.f32 %v207, %v211
  %v276 = vmin.f32 %v212, 20.0
  %v277 = vmin.f32 %v213, 20.0
  %v278 = vmin.f32 %v214, 20.0
  %v279 = vmin.f32 %v215, 20.0
  %v280 = vmin.f32 %v216, 20.0
  %v281 = vmin.f32 %v217, 20.0
  %v282 = vmin.f32 %v218, 20.0
  %v283 = vmin.f32 %v219, 20.0
  %v284 = vmin.f32 %v220, 20.0
  %v285 = vmin.f32 %v221, 20.0
  %v286 = vmin.f32 %v222, 20.0
  %v287 = vmin.f32 %v223, 20.0
  %v288 = vmin.f32 %v224, 20.0
  %v289 = vmin.f32 %v225, 20.0
  %v290 = vmin.f32 %v226, 20.0
  %v291 = vmin.f32 %v227, 20.0
  %v292 = vmin.f32 %v228, 20.0
  %v293 = vmin.f32 %v229, 20.0
  %v294 = vmin.f32 %v230, 20.0
  %v295 = vmin.f32 %v231, 20.0
  %v296 = vmin.f32 %v232, 20.0
  %v297 = vmin.f32 %v233, 20.0
  %v298 = vmin.f32 %v234, 20.0
  %v299 = vmin.f32 %v235, 20.0
  %v300 = vmin.f32 %v236, 20.0
  %v301 = vmin.f32 %v237, 20.0
  %v302 = vmin.f32 %v238, 20.0
  %v303 = vmin.f32 %v239, 20.0
  %v304 = vmin.f32 %v240, 20.0
  %v305 = vmin.f32 %v241, 20.0
  %v306 = vmin.f32 %v242, 20.0
  %v307 = vmin.f32 %v243, 20.0
  %v308 = vmin.f32 %v244, 20.0
  %v309 = vmin.f32 %v245, 20.0
  %v310 = vmin.f32 %v246, 20.0
  %v311 = vmin.f32 %v247, 20.0
  %v312 = vmin.f32 %v248, 20.0
  %v313 = vmin.f32 %v249, 20.0
  %v314 = vmin.f32 %v250, 20.0
  %v315 = vmin.f32 %v251, 20.0
  %v316 = vmin.f32 %v252, 20.0
  %v317 = vmin.f32 %v253, 20.0
  %v318 = vmin.f32 %v254, 20.0
  %v319 = vmin.f32 %v255, 20.0
  %v320 = vmin.f32 %v256, 20.0
  %v321 = vmin.f32 %v257, 20.0
  %v322 = vmin.f32 %v258, 20.0
  %v323 = vmin.f32 %v259, 20.0
  %v324 = vmin.f32 %v260, 20.0
  %v325 = vmin.f32 %v261, 20.0
  %v326 = vmin.f32 %v262, 20.0
  %v327 = vmin.f32 %v263, 20.0
  %v328 = vmin.f32 %v264, 20.0
  %v329 = vmin.f32 %v265, 20.0
  %v330 = vmin.f32 %v266, 20.0
  %v331 = vmin.f32 %v267, 20.0
  %v332 = vmin.f32 %v268, 20.0
  %v333 = vmin.f32 %v269, 20.0
  %v334 = vmin.f32 %v270, 20.0
  %v335 = vmin.f32 %v271, 20.0
  %v336 = vmin.f32 %v272, 20.0
  %v337 = vmin.f32 %v273, 20.0
  %v338 = vmin.f32 %v274, 20.0
  %v339 = vmin.f32 %v275, 20.0
  %v340 = vmul.f32 %v276, 1.442695
  %v341 = vpow.pop %v340
  %v342 = vmul.f32 %v277, 1.442695
  %v343 = vpow.pop %v342
  %v344 = vmul.f32 %v278, 1.442695
  %v345 = vpow.pop %v344
  %v346 = vmul.f32 %v279, 1.442695
  %v347 = vpow.pop %v346
  %v348 = vmul.f32 %v280, 1.442695
  %v349 = vpow.pop %v348
  %v350 = vmul.f32 %v281, 1.442695
  %v351 = vpow.pop %v350
  %v352 = vmul.f32 %v282, 1.442695
  %v353 = vpow.pop %v352
  %v354 = vmul.f32 %v283, 1.442695
  %v355 = vpow.pop %v354
  %v356 = vmul.f32 %v284, 1.442695
  %v357 = vpow.pop %v356
  %v358 = vmul.f32 %v285, 1.442695
  %v359 = vpow.pop %v358
  %v360 = vmul.f32 %v286, 1.442695
  %v361 = vpow.pop %v360
  %v362 = vmul.f32 %v287, 1.442695
  %v363 = vpow.pop %v362
  %v364 = vmul.f32 %v288, 1.442695
  %v365 = vpow.pop %v364
  %v366 = vmul.f32 %v289, 1.442695
  %v367 = vpow.pop %v366
  %v368 = vmul.f32 %v290, 1.442695
  %v369 = vpow.pop %v368
  %v370 = vmul.f32 %v291, 1.442695
  %v371 = vpow.pop %v370
  %v372 = vmul.f32 %v292, 1.442695
  %v373 = vpow.pop %v372
  %v374 = vmul.f32 %v293, 1.442695
  %v375 = vpow.pop %v374
  %v376 = vmul.f32 %v294, 1.442695
  %v377 = vpow.pop %v376
  %v378 = vmul.f32 %v295, 1.442695
  %v379 = vpow.pop %v378
  %v380 = vmul.f32 %v296, 1.442695
  %v381 = vpow.pop %v380
  %v382 = vmul.f32 %v297, 1.442695
  %v383 = vpow.pop %v382
  %v384 = vmul.f32 %v298, 1.442695
  %v385 = vpow.pop %v384
  %v386 = vmul.f32 %v299, 1.442695
  %v387 = vpow.pop %v386
  %v388 = vmul.f32 %v300, 1.442695
  %v389 = vpow.pop %v388
  %v390 = vmul.f32 %v301, 1.442695
  %v391 = vpow.pop %v390
  %v392 = vmul.f32 %v302, 1.442695
  %v393 = vpow.pop %v392
  %v394 = vmul.f32 %v303, 1.442695
  %v395 = vpow.pop %v394
  %v396 = vmul.f32 %v304, 1.442695
  %v397 = vpow.pop %v396
  %v398 = vmul.f32 %v305, 1.442695
  %v399 = vpow.pop %v398
  %v400 = vmul.f32 %v306, 1.442695
  %v401 = vpow.pop %v400
  %v402 = vmul.f32 %v307, 1.442695
  %v403 = vpow.pop %v402
  %v404 = vmul.f32 %v308, 1.442695
  %v405 = vpow.pop %v404
  %v406 = vmul.f32 %v309, 1.442695
  %v407 = vpow.pop %v406
  %v408 = vmul.f32 %v310, 1.442695
  %v409 = vpow.pop %v408
  %v410 = vmul.f32 %v311, 1.442695
  %v411 = vpow.pop %v410
  %v412 = vmul.f32 %v312, 1.442695
  %v413 = vpow.pop %v412
  %v414 = vmul.f32 %v313, 1.442695
  %v415 = vpow.pop %v414
  %v416 = vmul.f32 %v314, 1.442695
  %v417 = vpow.pop %v416
  %v418 = vmul.f32 %v315, 1.442695
  %v419 = vpow.pop %v418
  %v420 = vmul.f32 %v316, 1.442695
  %v421 = vpow.pop %v420
  %v422 = vmul.f32 %v317, 1.442695
  %v423 = vpow.pop %v422
  %v424 = vmul.f32 %v318, 1.442695
  %v425 = vpow.pop %v424
  %v426 = vmul.f32 %v319, 1.442695
  %v427 = vpow.pop %v426
  %v428 = vmul.f32 %v320, 1.442695
  %v429 = vpow.pop %v428
  %v430 = vmul.f32 %v321, 1.442695
  %v431 = vpow.pop %v430
  %v432 = vmul.f32 %v322, 1.442695
  %v433 = vpow.pop %v432
  %v434 = vmul.f32 %v323, 1.442695
  %v435 = vpow.pop %v434
  %v436 = vmul.f32 %v324, 1.442695
  %v437 = vpow.pop %v436
  %v438 = vmul.f32 %v325, 1.442695
  %v439 = vpow.pop %v438
  %v440 = vmul.f32 %v326, 1.442695
  %v441 = vpow.pop %v440
  %v442 = vmul.f32 %v327, 1.442695
  %v443 = vpow.pop %v442
  %v444 = vmul.f32 %v328, 1.442695
  %v445 = vpow.pop %v444
  %v446 = vmul.f32 %v329, 1.442695
  %v447 = vpow.pop %v446
  %v448 = vmul.f32 %v330, 1.442695
  %v449 = vpow.pop %v448
  %v450 = vmul.f32 %v331, 1.442695
  %v451 = vpow.pop %v450
  %v452 = vmul.f32 %v332, 1.442695
  %v453 = vpow.pop %v452
  %v454 = vmul.f32 %v333, 1.442695
  %v455 = vpow.pop %v454
  %v456 = vmul.f32 %v334, 1.442695
  %v457 = vpow.pop %v456
  %v458 = vmul.f32 %v335, 1.442695
  %v459 = vpow.pop %v458
  %v460 = vmul.f32 %v336, 1.442695
  %v461 = vpow.pop %v460
  %v462 = vmul.f32 %v337, 1.442695
  %v463 = vpow.pop %v462
  %v464 = vmul.f32 %v338, 1.442695
  %v465 = vpow.pop %v464
  %v466 = vmul.f32 %v339, 1.442695
  %v467 = vpow.pop %v466
  %v468 = vadd.f32 %v341, 1.0
  %v469 = vadd.f32 %v343, 1.0
  %v470 = vadd.f32 %v345, 1.0
  %v471 = vadd.f32 %v347, 1.0
  %v472 = vadd.f32 %v349, 1.0
  %v473 = vadd.f32 %v351, 1.0
  %v474 = vadd.f32 %v353, 1.0
  %v475 = vadd.f32 %v355, 1.0
  %v476 = vadd.f32 %v357, 1.0
  %v477 = vadd.f32 %v359, 1.0
  %v478 = vadd.f32 %v361, 1.0
  %v479 = vadd.f32 %v363, 1.0
  %v480 = vadd.f32 %v365, 1.0
  %v481 = vadd.f32 %v367, 1.0
  %v482 = vadd.f32 %v369, 1.0
  %v483 = vadd.f32 %v371, 1.0
  %v484 = vadd.f32 %v373, 1.0
  %v485 = vadd.f32 %v375, 1.0
  %v486 = vadd.f32 %v377, 1.0
  %v487 = vadd.f32 %v379, 1.0
  %v488 = vadd.f32 %v381, 1.0
  %v489 = vadd.f32 %v383, 1.0
  %v490 = vadd.f32 %v385, 1.0
  %v491 = vadd.f32 %v387, 1.0
  %v492 = vadd.f32 %v389, 1.0
  %v493 = vadd.f32 %v391, 1.0
  %v494 = vadd.f32 %v393, 1.0
  %v495 = vadd.f32 %v395, 1.0
  %v496 = vadd.f32 %v397, 1.0
  %v497 = vadd.f32 %v399, 1.0
  %v498 = vadd.f32 %v401, 1.0
  %v499 = vadd.f32 %v403, 1.0
  %v500 = vadd.f32 %v405, 1.0
  %v501 = vadd.f32 %v407, 1.0
  %v502 = vadd.f32 %v409, 1.0
  %v503 = vadd.f32 %v411, 1.0
  %v504 = vadd.f32 %v413, 1.0
  %v505 = vadd.f32 %v415, 1.0
  %v506 = vadd.f32 %v417, 1.0
  %v507 = vadd.f32 %v419, 1.0
  %v508 = vadd.f32 %v421, 1.0
  %v509 = vadd.f32 %v423, 1.0
  %v510 = vadd.f32 %v425, 1.0
  %v511 = vadd.f32 %v427, 1.0
  %v512 = vadd.f32 %v429, 1.0
  %v513 = vadd.f32 %v431, 1.0
  %v514 = vadd.f32 %v433, 1.0
  %v515 = vadd.f32 %v435, 1.0
  %v516 = vadd.f32 %v437, 1.0
  %v517 = vadd.f32 %v439, 1.0
  %v518 = vadd.f32 %v441, 1.0
  %v519 = vadd.f32 %v443, 1.0
  %v520 = vadd.f32 %v445, 1.0
  %v521 = vadd.f32 %v447, 1.0
  %v522 = vadd.f32 %v449, 1.0
  %v523 = vadd.f32 %v451, 1.0
  %v524 = vadd.f32 %v453, 1.0
  %v525 = vadd.f32 %v455, 1.0
  %v526 = vadd.f32 %v457, 1.0
  %v527 = vadd.f32 %v459, 1.0
  %v528 = vadd.f32 %v461, 1.0
  %v529 = vadd.f32 %v463, 1.0
  %v530 = vadd.f32 %v465, 1.0
  %v531 = vadd.f32 %v467, 1.0
  %v532 = vmul.f32 %v468, %v468
  %v533 = vmul.f32 %v469, %v469
  %v534 = vmul.f32 %v470, %v470
  %v535 = vmul.f32 %v471, %v471
  %v536 = vmul.f32 %v472, %v472
  %v537 = vmul.f32 %v473, %v473
  %v538 = vmul.f32 %v474, %v474
  %v539 = vmul.f32 %v475, %v475
  %v540 = vmul.f32 %v476, %v476
  %v541 = vmul.f32 %v477, %v477
  %v542 = vmul.f32 %v478, %v478
  %v543 = vmul.f32 %v479, %v479
  %v544 = vmul.f32 %v480, %v480
  %v545 = vmul.f32 %v481, %v481
  %v546 = vmul.f32 %v482, %v482
  %v547 = vmul.f32 %v483, %v483
  %v548 = vmul.f32 %v484, %v484
  %v549 = vmul.f32 %v485, %v485
  %v550 = vmul.f32 %v486, %v486
  %v551 = vmul.f32 %v487, %v487
  %v552 = vmul.f32 %v488, %v488
  %v553 = vmul.f32 %v489, %v489
  %v554 = vmul.f32 %v490, %v490
  %v555 = vmul.f32 %v491, %v491
  %v556 = vmul.f32 %v492, %v492
  %v557 = vmul.f32 %v493, %v493
  %v558 = vmul.f32 %v494, %v494
  %v559 = vmul.f32 %v495, %v495
  %v560 = vmul.f32 %v496, %v496
  %v561 = vmul.f32 %v497, %v497
  %v562 = vmul.f32 %v498, %v498
  %v563 = vmul.f32 %v499, %v499
  %v564 = vmul.f32 %v500, %v500
  %v565 = vmul.f32 %v501, %v501
  %v566 = vmul.f32 %v502, %v502
  %v567 = vmul.f32 %v503, %v503
  %v568 = vmul.f32 %v504, %v504
  %v569 = vmul.f32 %v505, %v505
  %v570 = vmul.f32 %v506, %v506
  %v571 = vmul.f32 %v507, %v507
  %v572 = vmul.f32 %v508, %v508
  %v573 = vmul.f32 %v509, %v509
  %v574 = vmul.f32 %v510, %v510
  %v575 = vmul.f32 %v511, %v511
  %v576 = vmul.f32 %v512, %v512
  %v577 = vmul.f32 %v513, %v513
  %v578 = vmul.f32 %v514, %v514
  %v579 = vmul.f32 %v515, %v515
  %v580 = vmul.f32 %v516, %v516
  %v581 = vmul.f32 %v517, %v517
  %v582 = vmul.f32 %v518, %v518
  %v583 = vmul.f32 %v519, %v519
  %v584 = vmul.f32 %v520, %v520
  %v585 = vmul.f32 %v521, %v521
  %v586 = vmul.f32 %v522, %v522
  %v587 = vmul.f32 %v523, %v523
  %v588 = vmul.f32 %v524, %v524
  %v589 = vmul.f32 %v525, %v525
  %v590 = vmul.f32 %v526, %v526
  %v591 = vmul.f32 %v527, %v527
  %v592 = vmul.f32 %v528, %v528
  %v593 = vmul.f32 %v529, %v529
  %v594 = vmul.f32 %v530, %v530
  %v595 = vmul.f32 %v531, %v531
  %v596 = vsub.f32 %v532, 1.0
  %v597 = vsub.f32 %v533, 1.0
  %v598 = vsub.f32 %v534, 1.0
  %v599 = vsub.f32 %v535, 1.0
  %v600 = vsub.f32 %v536, 1.0
  %v601 = vsub.f32 %v537, 1.0
  %v602 = vsub.f32 %v538, 1.0
  %v603 = vsub.f32 %v539, 1.0
  %v604 = vsub.f32 %v540, 1.0
  %v605 = vsub.f32 %v541, 1.0
  %v606 = vsub.f32 %v542, 1.0
  %v607 = vsub.f32 %v543, 1.0
  %v608 = vsub.f32 %v544, 1.0
  %v609 = vsub.f32 %v545, 1.0
  %v610 = vsub.f32 %v546, 1.0
  %v611 = vsub.f32 %v547, 1.0
  %v612 = vsub.f32 %v548, 1.0
  %v613 = vsub.f32 %v549, 1.0
  %v614 = vsub.f32 %v550, 1.0
  %v615 = vsub.f32 %v551, 1.0
  %v616 = vsub.f32 %v552, 1.0
  %v617 = vsub.f32 %v553, 1.0
  %v618 = vsub.f32 %v554, 1.0
  %v619 = vsub.f32 %v555, 1.0
  %v620 = vsub.f32 %v556, 1.0
  %v621 = vsub.f32 %v557, 1.0
  %v622 = vsub.f32 %v558, 1.0
  %v623 = vsub.f32 %v559, 1.0
  %v624 = vsub.f32 %v560, 1.0
  %v625 = vsub.f32 %v561, 1.0
  %v626 = vsub.f32 %v562, 1.0
  %v627 = vsub.f32 %v563, 1.0
  %v628 = vsub.f32 %v564, 1.0
  %v629 = vsub.f32 %v565, 1.0
  %v630 = vsub.f32 %v566, 1.0
  %v631 = vsub.f32 %v567, 1.0
  %v632 = vsub.f32 %v568, 1.0
  %v633 = vsub.f32 %v569, 1.0
  %v634 = vsub.f32 %v570, 1.0
  %v635 = vsub.f32 %v571, 1.0
  %v636 = vsub.f32 %v572, 1.0
  %v637 = vsub.f32 %v573, 1.0
  %v638 = vsub.f32 %v574, 1.0
  %v639 = vsub.f32 %v575, 1.0
  %v640 = vsub.f32 %v576, 1.0
  %v641 = vsub.f32 %v577, 1.0
  %v642 = vsub.f32 %v578, 1.0
  %v643 = vsub.f32 %v579, 1.0
  %v644 = vsub.f32 %v580, 1.0
  %v645 = vsub.f32 %v581, 1.0
  %v646 = vsub.f32 %v582, 1.0
  %v647 = vsub.f32 %v583, 1.0
  %v648 = vsub.f32 %v584, 1.0
  %v649 = vsub.f32 %v585, 1.0
  %v650 = vsub.f32 %v586, 1.0
  %v651 = vsub.f32 %v587, 1.0
  %v652 = vsub.f32 %v588, 1.0
  %v653 = vsub.f32 %v589, 1.0
  %v654 = vsub.f32 %v590, 1.0
  %v655 = vsub.f32 %v591, 1.0
  %v656 = vsub.f32 %v592, 1.0
  %v657 = vsub.f32 %v593, 1.0
  %v658 = vsub.f32 %v594, 1.0
  %v659 = vsub.f32 %v595, 1.0
  %v660 = vadd.f32 %v532, 1.0
  %v661 = vadd.f32 %v533, 1.0
  %v662 = vadd.f32 %v534, 1.0
  %v663 = vadd.f32 %v535, 1.0
  %v664 = vadd.f32 %v536, 1.0
  %v665 = vadd.f32 %v537, 1.0
  %v666 = vadd.f32 %v538, 1.0
  %v667 = vadd.f32 %v539, 1.0
  %v668 = vadd.f32 %v540, 1.0
  %v669 = vadd.f32 %v541, 1.0
  %v670 = vadd.f32 %v542, 1.0
  %v671 = vadd.f32 %v543, 1.0
  %v672 = vadd.f32 %v544, 1.0
  %v673 = vadd.f32 %v545, 1.0
  %v674 = vadd.f32 %v546, 1.0
  %v675 = vadd.f32 %v547, 1.0
  %v676 = vadd.f32 %v548, 1.0
  %v677 = vadd.f32 %v549, 1.0
  %v678 = vadd.f32 %v550, 1.0
  %v679 = vadd.f32 %v551, 1.0
  %v680 = vadd.f32 %v552, 1.0
  %v681 = vadd.f32 %v553, 1.0
  %v682 = vadd.f32 %v554, 1.0
  %v683 = vadd.f32 %v555, 1.0
  %v684 = vadd.f32 %v556, 1.0
  %v685 = vadd.f32 %v557, 1.0
  %v686 = vadd.f32 %v558, 1.0
  %v687 = vadd.f32 %v559, 1.0
  %v688 = vadd.f32 %v560, 1.0
  %v689 = vadd.f32 %v561, 1.0
  %v690 = vadd.f32 %v562, 1.0
  %v691 = vadd.f32 %v563, 1.0
  %v692 = vadd.f32 %v564, 1.0
  %v693 = vadd.f32 %v565, 1.0
  %v694 = vadd.f32 %v566, 1.0
  %v695 = vadd.f32 %v567, 1.0
  %v696 = vadd.f32 %v568, 1.0
  %v697 = vadd.f32 %v569, 1.0
  %v698 = vadd.f32 %v570, 1.0
  %v699 = vadd.f32 %v571, 1.0
  %v700 = vadd.f32 %v572, 1.0
  %v701 = vadd.f32 %v573, 1.0
  %v702 = vadd.f32 %v574, 1.0
  %v703 = vadd.f32 %v575, 1.0
  %v704 = vadd.f32 %v576, 1.0
  %v705 = vadd.f32 %v577, 1.0
  %v706 = vadd.f32 %v578, 1.0
  %v707 = vadd.f32 %v579, 1.0
  %v708 = vadd.f32 %v580, 1.0
  %v709 = vadd.f32 %v581, 1.0
  %v710 = vadd.f32 %v582, 1.0
  %v711 = vadd.f32 %v583, 1.0
  %v712 = vadd.f32 %v584, 1.0
  %v713 = vadd.f32 %v585, 1.0
  %v714 = vadd.f32 %v586, 1.0
  %v715 = vadd.f32 %v587, 1.0
  %v716 = vadd.f32 %v588, 1.0
  %v717 = vadd.f32 %v589, 1.0
  %v718 = vadd.f32 %v590, 1.0
  %v719 = vadd.f32 %v591, 1.0
  %v720 = vadd.f32 %v592, 1.0
  %v721 = vadd.f32 %v593, 1.0
  %v722 = vadd.f32 %v594, 1.0
  %v723 = vadd.f32 %v595, 1.0
  %v724 = vrcp.pop %v660
  %v725 = vmul.f32 %v596, %v724
  %v726 = vrcp.pop %v661
  %v727 = vmul.f32 %v597, %v726
  %v728 = vrcp.pop %v662
  %v729 = vmul.f32 %v598, %v728
  %v730 = vrcp.pop %v663
  %v731 = vmul.f32 %v599, %v730
  %v732 = vrcp.pop %v664
  %v733 = vmul.f32 %v600, %v732
  %v734 = vrcp.pop %v665
  %v735 = vmul.f32 %v601, %v734
  %v736 = vrcp.pop %v666
  %v737 = vmul.f32 %v602, %v736
  %v738 = vrcp.pop %v667
  %v739 = vmul.f32 %v603, %v738
  %v740 = vrcp.pop %v668
  %v741 = vmul.f32 %v604, %v740
  %v742 = vrcp.pop %v669
  %v743 = vmul.f32 %v605, %v742
  %v744 = vrcp.pop %v670
  %v745 = vmul.f32 %v606, %v744
  %v746 = vrcp.pop %v671
  %v747 = vmul.f32 %v607, %v746
  %v748 = vrcp.pop %v672
  %v749 = vmul.f32 %v608, %v748
  %v750 = vrcp.pop %v673
  %v751 = vmul.f32 %v609, %v750
  %v752 = vrcp.pop %v674
  %v753 = vmul.f32 %v610, %v752
  %v754 = vrcp.pop %v675
  %v755 = vmul.f32 %v611, %v754
  %v756 = vrcp.pop %v676
  %v757 = vmul.f32 %v612, %v756
  %v758 = vrcp.pop %v677
  %v759 = vmul.f32 %v613, %v758
  %v760 = vrcp.pop %v678
  %v761 = vmul.f32 %v614, %v760
  %v762 = vrcp.pop %v679
  %v763 = vmul.f32 %v615, %v762
  %v764 = vrcp.pop %v680
  %v765 = vmul.f32 %v616, %v764
  %v766 = vrcp.pop %v681
  %v767 = vmul.f32 %v617, %v766
  %v768 = vrcp.pop %v682
  %v769 = vmul.f32 %v618, %v768
  %v770 = vrcp.pop %v683
  %v771 = vmul.f32 %v619, %v770
  %v772 = vrcp.pop %v684
  %v773 = vmul.f32 %v620, %v772
  %v774 = vrcp.pop %v685
  %v775 = vmul.f32 %v621, %v774
  %v776 = vrcp.pop %v686
  %v777 = vmul.f32 %v622, %v776
  %v778 = vrcp.pop %v687
  %v779 = vmul.f32 %v623, %v778
  %v780 = vrcp.pop %v688
  %v781 = vmul.f32 %v624, %v780
  %v782 = vrcp.pop %v689
  %v783 = vmul.f32 %v625, %v782
  %v784 = vrcp.pop %v690
  %v785 = vmul.f32 %v626, %v784
  %v786 = vrcp.pop %v691
  %v787 = vmul.f32 %v627, %v786
  %v788 = vrcp.pop %v692
  %v789 = vmul.f32 %v628, %v788
  %v790 = vrcp.pop %v693
  %v791 = vmul.f32 %v629, %v790
  %v792 = vrcp.pop %v694
  %v793 = vmul.f32 %v630, %v792
  %v794 = vrcp.pop %v695
  %v795 = vmul.f32 %v631, %v794
  %v796 = vrcp.pop %v696
  %v797 = vmul.f32 %v632, %v796
  %v798 = vrcp.pop %v697
  %v799 = vmul.f32 %v633, %v798
  %v800 = vrcp.pop %v698
  %v801 = vmul.f32 %v634, %v800
  %v802 = vrcp.pop %v699
  %v803 = vmul.f32 %v635, %v802
  %v804 = vrcp.pop %v700
  %v805 = vmul.f32 %v636, %v804
  %v806 = vrcp.pop %v701
  %v807 = vmul.f32 %v637, %v806
  %v808 = vrcp.pop %v702
  %v809 = vmul.f32 %v638, %v808
  %v810 = vrcp.pop %v703
  %v811 = vmul.f32 %v639, %v810
  %v812 = vrcp.pop %v704
  %v813 = vmul.f32 %v640, %v812
  %v814 = vrcp.pop %v705
  %v815 = vmul.f32 %v641, %v814
  %v816 = vrcp.pop %v706
  %v817 = vmul.f32 %v642, %v816
  %v818 = vrcp.pop %v707
  %v819 = vmul.f32 %v643, %v818
  %v820 = vrcp.pop %v708
  %v821 = vmul.f32 %v644, %v820
  %v822 = vrcp.pop %v709
  %v823 = vmul.f32 %v645, %v822
  %v824 = vrcp.pop %v710
  %v825 = vmul.f32 %v646, %v824
  %v826 = vrcp.pop %v711
  %v827 = vmul.f32 %v647, %v826
  %v828 = vrcp.pop %v712
  %v829 = vmul.f32 %v648, %v828
  %v830 = vrcp.pop %v713
  %v831 = vmul.f32 %v649, %v830
  %v832 = vrcp.pop %v714
  %v833 = vmul.f32 %v650, %v832
  %v834 = vrcp.pop %v715
  %v835 = vmul.f32 %v651, %v834
  %v836 = vrcp.pop %v716
  %v837 = vmul.f32 %v652, %v836
  %v838 = vrcp.pop %v717
  %v839 = vmul.f32 %v653, %v838
  %v840 = vrcp.pop %v718
  %v841 = vmul.f32 %v654, %v840
  %v842 = vrcp.pop %v719
  %v843 = vmul.f32 %v655, %v842
  %v844 = vrcp.pop %v720
  %v845 = vmul.f32 %v656, %v844
  %v846 = vrcp.pop %v721
  %v847 = vmul.f32 %v657, %v846
  %v848 = vrcp.pop %v722
  %v849 = vmul.f32 %v658, %v848
  %v850 = vrcp.pop %v723
  %v851 = vmul.f32 %v659, %v850
  %v852 = vmul.f32 %v212, %v725
  %v853 = vmul.f32 %v213, %v727
  %v854 = vmul.f32 %v214, %v729
  %v855 = vmul.f32 %v215, %v731
  %v856 = vmul.f32 %v216, %v733
  %v857 = vmul.f32 %v217, %v735
  %v858 = vmul.f32 %v218, %v737
  %v859 = vmul.f32 %v219, %v739
  %v860 = vmul.f32 %v220, %v741
  %v861 = vmul.f32 %v221, %v743
  %v862 = vmul.f32 %v222, %v745
  %v863 = vmul.f32 %v223, %v747
  %v864 = vmul.f32 %v224, %v749
  %v865 = vmul.f32 %v225, %v751
  %v866 = vmul.f32 %v226, %v753
  %v867 = vmul.f32 %v227, %v755
  %v868 = vmul.f32 %v228, %v757
  %v869 = vmul.f32 %v229, %v759
  %v870 = vmul.f32 %v230, %v761
  %v871 = vmul.f32 %v231, %v763
  %v872 = vmul.f32 %v232, %v765
  %v873 = vmul.f32 %v233, %v767
  %v874 = vmul.f32 %v234, %v769
  %v875 = vmul.f32 %v235, %v771
  %v876 = vmul.f32 %v236, %v773
  %v877 = vmul.f32 %v237, %v775
  %v878 = vmul.f32 %v238, %v777
  %v879 = vmul.f32 %v239, %v779
  %v880 = vmul.f32 %v240, %v781
  %v881 = vmul.f32 %v241, %v783
  %v882 = vmul.f32 %v242, %v785
  %v883 = vmul.f32 %v243, %v787
  %v884 = vmul.f32 %v244, %v789
  %v885 = vmul.f32 %v245, %v791
  %v886 = vmul.f32 %v246, %v793
  %v887 = vmul.f32 %v247, %v795
  %v888 = vmul.f32 %v248, %v797
  %v889 = vmul.f32 %v249, %v799
  %v890 = vmul.f32 %v250, %v801
  %v891 = vmul.f32 %v251, %v803
  %v892 = vmul.f32 %v252, %v805
  %v893 = vmul.f32 %v253, %v807
  %v894 = vmul.f32 %v254, %v809
  %v895 = vmul.f32 %v255, %v811
  %v896 = vmul.f32 %v256, %v813
  %v897 = vmul.f32 %v257, %v815
  %v898 = vmul.f32 %v258, %v817
  %v899 = vmul.f32 %v259, %v819
  %v900 = vmul.f32 %v260, %v821
  %v901 = vmul.f32 %v261, %v823
  %v902 = vmul.f32 %v262, %v825
  %v903 = vmul.f32 %v263, %v827
  %v904 = vmul.f32 %v264, %v829
  %v905 = vmul.f32 %v265, %v831
  %v906 = vmul.f32 %v266, %v833
  %v907 = vmul.f32 %v267, %v835
  %v908 = vmul.f32 %v268, %v837
  %v909 = vmul.f32 %v269, %v839
  %v910 = vmul.f32 %v270, %v841
  %v911 = vmul.f32 %v271, %v843
  %v912 = vmul.f32 %v272, %v845
  %v913 = vmul.f32 %v273, %v847
  %v914 = vmul.f32 %v274, %v849
  %v915 = vmul.f32 %v275, %v851
  %v916 = vpack.c.bf16 %v853, %v852
  %v917 = vpack.c.bf16 %v855, %v854
  %v918 = vpack.c.bf16 %v857, %v856
  %v919 = vpack.c.bf16 %v859, %v858
  %v920 = vpack.c.bf16 %v861, %v860
  %v921 = vpack.c.bf16 %v863, %v862
  %v922 = vpack.c.bf16 %v865, %v864
  %v923 = vpack.c.bf16 %v867, %v866
  %v924 = vpack.c.bf16 %v869, %v868
  %v925 = vpack.c.bf16 %v871, %v870
  %v926 = vpack.c.bf16 %v873, %v872
  %v927 = vpack.c.bf16 %v875, %v874
  %v928 = vpack.c.bf16 %v877, %v876
  %v929 = vpack.c.bf16 %v879, %v878
  %v930 = vpack.c.bf16 %v881, %v880
  %v931 = vpack.c.bf16 %v883, %v882
  %v932 = vpack.c.bf16 %v885, %v884
  %v933 = vpack.c.bf16 %v887, %v886
  %v934 = vpack.c.bf16 %v889, %v888
  %v935 = vpack.c.bf16 %v891, %v890
  %v936 = vpack.c.bf16 %v893, %v892
  %v937 = vpack.c.bf16 %v895, %v894
  %v938 = vpack.c.bf16 %v897, %v896
  %v939 = vpack.c.bf16 %v899, %v898
  %v940 = vpack.c.bf16 %v901, %v900
  %v941 = vpack.c.bf16 %v903, %v902
  %v942 = vpack.c.bf16 %v905, %v904
  %v943 = vpack.c.bf16 %v907, %v906
  %v944 = vpack.c.bf16 %v909, %v908
  %v945 = vpack.c.bf16 %v911, %v910
  %v946 = vpack.c.bf16 %v913, %v912
  %v947 = vpack.c.bf16 %v915, %v914
  %v980 = vunpack.c.l.b16 %v916
  %v981 = vunpack.c.h.b16 %v916
  %v982 = vunpack.c.l.b16 %v917
  %v983 = vunpack.c.h.b16 %v917
  %v984 = vunpack.c.l.b16 %v918
  %v985 = vunpack.c.h.b16 %v918
  %v986 = vunpack.c.l.b16 %v919
  %v987 = vunpack.c.h.b16 %v919
  %v988 = vunpack.c.l.b16 %v920
  %v989 = vunpack.c.h.b16 %v920
  %v990 = vunpack.c.l.b16 %v921
  %v991 = vunpack.c.h.b16 %v921
  %v992 = vunpack.c.l.b16 %v922
  %v993 = vunpack.c.h.b16 %v922
  %v994 = vunpack.c.l.b16 %v923
  %v995 = vunpack.c.h.b16 %v923
  %v996 = vunpack.c.l.b16 %v924
  %v997 = vunpack.c.h.b16 %v924
  %v998 = vunpack.c.l.b16 %v925
  %v999 = vunpack.c.h.b16 %v925
  %v1000 = vunpack.c.l.b16 %v926
  %v1001 = vunpack.c.h.b16 %v926
  %v1002 = vunpack.c.l.b16 %v927
  %v1003 = vunpack.c.h.b16 %v927
  %v1004 = vunpack.c.l.b16 %v928
  %v1005 = vunpack.c.h.b16 %v928
  %v1006 = vunpack.c.l.b16 %v929
  %v1007 = vunpack.c.h.b16 %v929
  %v1008 = vunpack.c.l.b16 %v930
  %v1009 = vunpack.c.h.b16 %v930
  %v1010 = vunpack.c.l.b16 %v931
  %v1011 = vunpack.c.h.b16 %v931
  %v1012 = vunpack.c.l.b16 %v932
  %v1013 = vunpack.c.h.b16 %v932
  %v1014 = vunpack.c.l.b16 %v933
  %v1015 = vunpack.c.h.b16 %v933
  %v1016 = vunpack.c.l.b16 %v934
  %v1017 = vunpack.c.h.b16 %v934
  %v1018 = vunpack.c.l.b16 %v935
  %v1019 = vunpack.c.h.b16 %v935
  %v1020 = vunpack.c.l.b16 %v936
  %v1021 = vunpack.c.h.b16 %v936
  %v1022 = vunpack.c.l.b16 %v937
  %v1023 = vunpack.c.h.b16 %v937
  %v1024 = vunpack.c.l.b16 %v938
  %v1025 = vunpack.c.h.b16 %v938
  %v1026 = vunpack.c.l.b16 %v939
  %v1027 = vunpack.c.h.b16 %v939
  %v1028 = vunpack.c.l.b16 %v940
  %v1029 = vunpack.c.h.b16 %v940
  %v1030 = vunpack.c.l.b16 %v941
  %v1031 = vunpack.c.h.b16 %v941
  %v1032 = vunpack.c.l.b16 %v942
  %v1033 = vunpack.c.h.b16 %v942
  %v1034 = vunpack.c.l.b16 %v943
  %v1035 = vunpack.c.h.b16 %v943
  %v1036 = vunpack.c.l.b16 %v944
  %v1037 = vunpack.c.h.b16 %v944
  %v1038 = vunpack.c.l.b16 %v945
  %v1039 = vunpack.c.h.b16 %v945
  %v1040 = vunpack.c.l.b16 %v946
  %v1041 = vunpack.c.h.b16 %v946
  %v1042 = vunpack.c.l.b16 %v947
  %v1043 = vunpack.c.h.b16 %v947
  %v1044 = vpack.c.b16 %v980, %v980
  %v1045 = vpack.c.b16 %v981, %v981
  %v1046 = vpack.c.b16 %v982, %v982
  %v1047 = vpack.c.b16 %v983, %v983
  %v1048 = vpack.c.b16 %v984, %v984
  %v1049 = vpack.c.b16 %v985, %v985
  %v1050 = vpack.c.b16 %v986, %v986
  %v1051 = vpack.c.b16 %v987, %v987
  %v1052 = vpack.c.b16 %v988, %v988
  %v1053 = vpack.c.b16 %v989, %v989
  %v1054 = vpack.c.b16 %v990, %v990
  %v1055 = vpack.c.b16 %v991, %v991
  %v1056 = vpack.c.b16 %v992, %v992
  %v1057 = vpack.c.b16 %v993, %v993
  %v1058 = vpack.c.b16 %v994, %v994
  %v1059 = vpack.c.b16 %v995, %v995
  %v1060 = vpack.c.b16 %v996, %v996
  %v1061 = vpack.c.b16 %v997, %v997
  %v1062 = vpack.c.b16 %v998, %v998
  %v1063 = vpack.c.b16 %v999, %v999
  %v1064 = vpack.c.b16 %v1000, %v1000
  %v1065 = vpack.c.b16 %v1001, %v1001
  %v1066 = vpack.c.b16 %v1002, %v1002
  %v1067 = vpack.c.b16 %v1003, %v1003
  %v1068 = vpack.c.b16 %v1004, %v1004
  %v1069 = vpack.c.b16 %v1005, %v1005
  %v1070 = vpack.c.b16 %v1006, %v1006
  %v1071 = vpack.c.b16 %v1007, %v1007
  %v1072 = vpack.c.b16 %v1008, %v1008
  %v1073 = vpack.c.b16 %v1009, %v1009
  %v1074 = vpack.c.b16 %v1010, %v1010
  %v1075 = vpack.c.b16 %v1011, %v1011
  %v1076 = vpack.c.b16 %v1012, %v1012
  %v1077 = vpack.c.b16 %v1013, %v1013
  %v1078 = vpack.c.b16 %v1014, %v1014
  %v1079 = vpack.c.b16 %v1015, %v1015
  %v1080 = vpack.c.b16 %v1016, %v1016
  %v1081 = vpack.c.b16 %v1017, %v1017
  %v1082 = vpack.c.b16 %v1018, %v1018
  %v1083 = vpack.c.b16 %v1019, %v1019
  %v1084 = vpack.c.b16 %v1020, %v1020
  %v1085 = vpack.c.b16 %v1021, %v1021
  %v1086 = vpack.c.b16 %v1022, %v1022
  %v1087 = vpack.c.b16 %v1023, %v1023
  %v1088 = vpack.c.b16 %v1024, %v1024
  %v1089 = vpack.c.b16 %v1025, %v1025
  %v1090 = vpack.c.b16 %v1026, %v1026
  %v1091 = vpack.c.b16 %v1027, %v1027
  %v1092 = vpack.c.b16 %v1028, %v1028
  %v1093 = vpack.c.b16 %v1029, %v1029
  %v1094 = vpack.c.b16 %v1030, %v1030
  %v1095 = vpack.c.b16 %v1031, %v1031
  %v1096 = vpack.c.b16 %v1032, %v1032
  %v1097 = vpack.c.b16 %v1033, %v1033
  %v1098 = vpack.c.b16 %v1034, %v1034
  %v1099 = vpack.c.b16 %v1035, %v1035
  %v1100 = vpack.c.b16 %v1036, %v1036
  %v1101 = vpack.c.b16 %v1037, %v1037
  %v1102 = vpack.c.b16 %v1038, %v1038
  %v1103 = vpack.c.b16 %v1039, %v1039
  %v1104 = vpack.c.b16 %v1040, %v1040
  %v1105 = vpack.c.b16 %v1041, %v1041
  %v1106 = vpack.c.b16 %v1042, %v1042
  %v1107 = vpack.c.b16 %v1043, %v1043
  %1172 = vst [vmem:[%s2] sm:$0xf] %v1044
  %1173 = vst [vmem:[%s2 + $0x4] sm:$0xf] %v1045
  %1174 = vst [vmem:[%s2 + $0x8] sm:$0xf] %v1046
  %1175 = vst [vmem:[%s2 + $0xc] sm:$0xf] %v1047
  %1176 = vst [vmem:[%s2 + $0x10] sm:$0xf] %v1048
  %1177 = vst [vmem:[%s2 + $0x14] sm:$0xf] %v1049
  %1178 = vst [vmem:[%s2 + $0x18] sm:$0xf] %v1050
  %1179 = vst [vmem:[%s2 + $0x1c] sm:$0xf] %v1051
  %1180 = vst [vmem:[%s2 + $0x20] sm:$0xf] %v1052
  %1181 = vst [vmem:[%s2 + $0x24] sm:$0xf] %v1053
  %1182 = vst [vmem:[%s2 + $0x28] sm:$0xf] %v1054
  %1183 = vst [vmem:[%s2 + $0x2c] sm:$0xf] %v1055
  %1184 = vst [vmem:[%s2 + $0x30] sm:$0xf] %v1056
  %1185 = vst [vmem:[%s2 + $0x34] sm:$0xf] %v1057
  %1186 = vst [vmem:[%s2 + $0x38] sm:$0xf] %v1058
  %1187 = vst [vmem:[%s2 + $0x3c] sm:$0xf] %v1059
  %1188 = vst [vmem:[%s2 + $0x40] sm:$0xf] %v1060
  %1189 = vst [vmem:[%s2 + $0x44] sm:$0xf] %v1061
  %1190 = vst [vmem:[%s2 + $0x48] sm:$0xf] %v1062
  %1191 = vst [vmem:[%s2 + $0x4c] sm:$0xf] %v1063
  %1192 = vst [vmem:[%s2 + $0x50] sm:$0xf] %v1064
  %1193 = vst [vmem:[%s2 + $0x54] sm:$0xf] %v1065
  %1194 = vst [vmem:[%s2 + $0x58] sm:$0xf] %v1066
  %1195 = vst [vmem:[%s2 + $0x5c] sm:$0xf] %v1067
  %1196 = vst [vmem:[%s2 + $0x60] sm:$0xf] %v1068
  %1197 = vst [vmem:[%s2 + $0x64] sm:$0xf] %v1069
  %1198 = vst [vmem:[%s2 + $0x68] sm:$0xf] %v1070
  %1199 = vst [vmem:[%s2 + $0x6c] sm:$0xf] %v1071
  %1200 = vst [vmem:[%s2 + $0x70] sm:$0xf] %v1072
  %1201 = vst [vmem:[%s2 + $0x74] sm:$0xf] %v1073
  %1202 = vst [vmem:[%s2 + $0x78] sm:$0xf] %v1074
  %1203 = vst [vmem:[%s2 + $0x7c] sm:$0xf] %v1075
  %1204 = vst [vmem:[%s2 + $0x80] sm:$0xf] %v1076
  %1205 = vst [vmem:[%s2 + $0x84] sm:$0xf] %v1077
  %1206 = vst [vmem:[%s2 + $0x88] sm:$0xf] %v1078
  %1207 = vst [vmem:[%s2 + $0x8c] sm:$0xf] %v1079
  %1208 = vst [vmem:[%s2 + $0x90] sm:$0xf] %v1080
  %1209 = vst [vmem:[%s2 + $0x94] sm:$0xf] %v1081
  %1210 = vst [vmem:[%s2 + $0x98] sm:$0xf] %v1082
  %1211 = vst [vmem:[%s2 + $0x9c] sm:$0xf] %v1083
  %1212 = vst [vmem:[%s2 + $0xa0] sm:$0xf] %v1084
  %1213 = vst [vmem:[%s2 + $0xa4] sm:$0xf] %v1085
  %1214 = vst [vmem:[%s2 + $0xa8] sm:$0xf] %v1086
  %1215 = vst [vmem:[%s2 + $0xac] sm:$0xf] %v1087
  %1216 = vst [vmem:[%s2 + $0xb0] sm:$0xf] %v1088
  %1217 = vst [vmem:[%s2 + $0xb4] sm:$0xf] %v1089
  %1218 = vst [vmem:[%s2 + $0xb8] sm:$0xf] %v1090
  %1219 = vst [vmem:[%s2 + $0xbc] sm:$0xf] %v1091
  %1220 = vst [vmem:[%s2 + $0xc0] sm:$0xf] %v1092
  %1221 = vst [vmem:[%s2 + $0xc4] sm:$0xf] %v1093
  %1222 = vst [vmem:[%s2 + $0xc8] sm:$0xf] %v1094
  %1223 = vst [vmem:[%s2 + $0xcc] sm:$0xf] %v1095
  %1224 = vst [vmem:[%s2 + $0xd0] sm:$0xf] %v1096
  %1225 = vst [vmem:[%s2 + $0xd4] sm:$0xf] %v1097
  %1226 = vst [vmem:[%s2 + $0xd8] sm:$0xf] %v1098
  %1227 = vst [vmem:[%s2 + $0xdc] sm:$0xf] %v1099
  %1228 = vst [vmem:[%s2 + $0xe0] sm:$0xf] %v1100
  %1229 = vst [vmem:[%s2 + $0xe4] sm:$0xf] %v1101
  %1230 = vst [vmem:[%s2 + $0xe8] sm:$0xf] %v1102
  %1231 = vst [vmem:[%s2 + $0xec] sm:$0xf] %v1103
  %1232 = vst [vmem:[%s2 + $0xf0] sm:$0xf] %v1104
  %1233 = vst [vmem:[%s2 + $0xf4] sm:$0xf] %v1105
  %1234 = vst [vmem:[%s2 + $0xf8] sm:$0xf] %v1106
  %1235 = vst [vmem:[%s2 + $0xfc] sm:$0xf] %v1107
  // Predicated region
  $region10: #{csp_forward.10} parent=0 // pred_check
    _
  $region11: #{csp_forward.10} parent=0 // pred_check_branch
    %1237 = sbr.rel (0) target = $region13
  $region12: #{csp_forward.10} parent=0 // pred_region
    _
  $region13: #{csp_forward.10} parent=0 // pred_fallthru
    _
  // Predicated region
  $region14: #{csp_forward.10} parent=0 // pred_check
    _
  $region15: #{csp_forward.10} parent=0 // pred_check_branch
    %1239 = sbr.rel (0) target = $region17
  $region16: #{csp_forward.10} parent=0 // pred_region
    _
  $region17: #{csp_forward.10} parent=0 // pred_fallthru
    _

// kernel: csp_forward.8
$region0: #{csp_forward.8}
  #allocation0 [shape = 'u32[]', space=smem, size = 0x4, offset = 0x4, fixed_abs, tag = 'smem constant byte address 0x4 - core index']
  #allocation1 [shape = 'u32[144,128]{1,0:T(1,128)}', space=vmem, size = 0x12000, scoped, tag = 'internal scratch']
  %s0 = inlined_call_operand.vmem [shape: bf16[512,128], index: 0, kind: input, shape index: {}]
  %s1 = inlined_call_operand.vmem [shape: f32[2,128], index: 1, kind: input, shape index: {}]
  %s2 = inlined_call_operand.vmem [shape: bf16[128,128], index: 2, kind: input, shape index: {}]
  %s3 = inlined_call_operand.vmem [shape: bf16[512,128], index: 3, kind: output, shape index: {0}]
  %s4 = inlined_call_operand.vmem [shape: bf16[512,128], index: 4, kind: output, shape index: {1}]
  %5 = xla_tuple %s3, %s4
  %s6 = sld [smem:[#allocation0]]
  $region30: #{csp_forward.8} parent=0
    _
  %s8 = ssub.s32 1, %s6
  %s9 = scalar_select 0, %s8, %s6
  // Predicated region
  $region2: #{csp_forward.8} parent=0 // pred_check
    _
  $region3: #{csp_forward.8} parent=0 // pred_check_branch
    %11 = sbr.rel (0) target = $region5
  $region4: #{csp_forward.8} parent=0 // pred_region
    _
  $region5: #{csp_forward.8} parent=0 // pred_fallthru
    _
  // Predicated region
  $region6: #{csp_forward.8} parent=0 // pred_check
    _
  $region7: #{csp_forward.8} parent=0 // pred_check_branch
    %13 = sbr.rel (0) target = $region9
  $region8: #{csp_forward.8} parent=0 // pred_region
    _
  $region9: #{csp_forward.8} parent=0 // pred_fallthru
    _
  // Predicated region
  $region10: #{csp_forward.8} parent=0 // pred_check
    _
  $region11: #{csp_forward.8} parent=0 // pred_check_branch
    %15 = sbr.rel (0) target = $region13
  $region12: #{csp_forward.8} parent=0 // pred_region
    _
  $region13: #{csp_forward.8} parent=0 // pred_fallthru
    _
  %v17 = vld [vmem:[%s0] sm:$0xf]
  %v18 = vld [vmem:[%s0 + $0x4] sm:$0xf]
  %v19 = vld [vmem:[%s0 + $0x8] sm:$0xf]
  %v20 = vld [vmem:[%s0 + $0xc] sm:$0xf]
  %v21 = vld [vmem:[%s0 + $0x10] sm:$0xf]
  %v22 = vld [vmem:[%s0 + $0x14] sm:$0xf]
  %v23 = vld [vmem:[%s0 + $0x18] sm:$0xf]
  %v24 = vld [vmem:[%s0 + $0x1c] sm:$0xf]
  %v25 = vld [vmem:[%s0 + $0x20] sm:$0xf]
  %v26 = vld [vmem:[%s0 + $0x24] sm:$0xf]
  %v27 = vld [vmem:[%s0 + $0x28] sm:$0xf]
  %v28 = vld [vmem:[%s0 + $0x2c] sm:$0xf]
  %v29 = vld [vmem:[%s0 + $0x30] sm:$0xf]
  %v30 = vld [vmem:[%s0 + $0x34] sm:$0xf]
  %v31 = vld [vmem:[%s0 + $0x38] sm:$0xf]
  %v32 = vld [vmem:[%s0 + $0x3c] sm:$0xf]
  %v33 = vld [vmem:[%s0 + $0x40] sm:$0xf]
  %v34 = vld [vmem:[%s0 + $0x44] sm:$0xf]
  %v35 = vld [vmem:[%s0 + $0x48] sm:$0xf]
  %v36 = vld [vmem:[%s0 + $0x4c] sm:$0xf]
  %v37 = vld [vmem:[%s0 + $0x50] sm:$0xf]
  %v38 = vld [vmem:[%s0 + $0x54] sm:$0xf]
  %v39 = vld [vmem:[%s0 + $0x58] sm:$0xf]
  %v40 = vld [vmem:[%s0 + $0x5c] sm:$0xf]
  %v41 = vld [vmem:[%s0 + $0x60] sm:$0xf]
  %v42 = vld [vmem:[%s0 + $0x64] sm:$0xf]
  %v43 = vld [vmem:[%s0 + $0x68] sm:$0xf]
  %v44 = vld [vmem:[%s0 + $0x6c] sm:$0xf]
  %v45 = vld [vmem:[%s0 + $0x70] sm:$0xf]
  %v46 = vld [vmem:[%s0 + $0x74] sm:$0xf]
  %v47 = vld [vmem:[%s0 + $0x78] sm:$0xf]
  %v48 = vld [vmem:[%s0 + $0x7c] sm:$0xf]
  %v49 = vld [vmem:[%s0 + $0x80] sm:$0xf]
  %v50 = vld [vmem:[%s0 + $0x84] sm:$0xf]
  %v51 = vld [vmem:[%s0 + $0x88] sm:$0xf]
  %v52 = vld [vmem:[%s0 + $0x8c] sm:$0xf]
  %v53 = vld [vmem:[%s0 + $0x90] sm:$0xf]
  %v54 = vld [vmem:[%s0 + $0x94] sm:$0xf]
  %v55 = vld [vmem:[%s0 + $0x98] sm:$0xf]
  %v56 = vld [vmem:[%s0 + $0x9c] sm:$0xf]
  %v57 = vld [vmem:[%s0 + $0xa0] sm:$0xf]
  %v58 = vld [vmem:[%s0 + $0xa4] sm:$0xf]
  %v59 = vld [vmem:[%s0 + $0xa8] sm:$0xf]
  %v60 = vld [vmem:[%s0 + $0xac] sm:$0xf]
  %v61 = vld [vmem:[%s0 + $0xb0] sm:$0xf]
  %v62 = vld [vmem:[%s0 + $0xb4] sm:$0xf]
  %v63 = vld [vmem:[%s0 + $0xb8] sm:$0xf]
  %v64 = vld [vmem:[%s0 + $0xbc] sm:$0xf]
  %v65 = vld [vmem:[%s0 + $0xc0] sm:$0xf]
  %v66 = vld [vmem:[%s0 + $0xc4] sm:$0xf]
  %v67 = vld [vmem:[%s0 + $0xc8] sm:$0xf]
  %v68 = vld [vmem:[%s0 + $0xcc] sm:$0xf]
  %v69 = vld [vmem:[%s0 + $0xd0] sm:$0xf]
  %v70 = vld [vmem:[%s0 + $0xd4] sm:$0xf]
  %v71 = vld [vmem:[%s0 + $0xd8] sm:$0xf]
  %v72 = vld [vmem:[%s0 + $0xdc] sm:$0xf]
  %v73 = vld [vmem:[%s0 + $0xe0] sm:$0xf]
  %v74 = vld [vmem:[%s0 + $0xe4] sm:$0xf]
  %v75 = vld [vmem:[%s0 + $0xe8] sm:$0xf]
  %v76 = vld [vmem:[%s0 + $0xec] sm:$0xf]
  %v77 = vld [vmem:[%s0 + $0xf0] sm:$0xf]
  %v78 = vld [vmem:[%s0 + $0xf4] sm:$0xf]
  %v79 = vld [vmem:[%s0 + $0xf8] sm:$0xf]
  %v80 = vld [vmem:[%s0 + $0xfc] sm:$0xf]
  %v81 = vld [vmem:[%s1] sm:$0x3]
  %v82 = vunpack.c.l.bf16 %v17
  %v83 = vunpack.c.l.bf16 %v18
  %v84 = vunpack.c.l.bf16 %v19
  %v85 = vunpack.c.l.bf16 %v20
  %v86 = vunpack.c.l.bf16 %v21
  %v87 = vunpack.c.l.bf16 %v22
  %v88 = vunpack.c.l.bf16 %v23
  %v89 = vunpack.c.l.bf16 %v24
  %v90 = vunpack.c.l.bf16 %v25
  %v91 = vunpack.c.l.bf16 %v26
  %v92 = vunpack.c.l.bf16 %v27
  %v93 = vunpack.c.l.bf16 %v28
  %v94 = vunpack.c.l.bf16 %v29
  %v95 = vunpack.c.l.bf16 %v30
  %v96 = vunpack.c.l.bf16 %v31
  %v97 = vunpack.c.l.bf16 %v32
  %v98 = vunpack.c.l.bf16 %v33
  %v99 = vunpack.c.l.bf16 %v34
  %v100 = vunpack.c.l.bf16 %v35
  %v101 = vunpack.c.l.bf16 %v36
  %v102 = vunpack.c.l.bf16 %v37
  %v103 = vunpack.c.l.bf16 %v38
  %v104 = vunpack.c.l.bf16 %v39
  %v105 = vunpack.c.l.bf16 %v40
  %v106 = vunpack.c.l.bf16 %v41
  %v107 = vunpack.c.l.bf16 %v42
  %v108 = vunpack.c.l.bf16 %v43
  %v109 = vunpack.c.l.bf16 %v44
  %v110 = vunpack.c.l.bf16 %v45
  %v111 = vunpack.c.l.bf16 %v46
  %v112 = vunpack.c.l.bf16 %v47
  %v113 = vunpack.c.l.bf16 %v48
  %v114 = vunpack.c.l.bf16 %v49
  %v115 = vunpack.c.l.bf16 %v50
  %v116 = vunpack.c.l.bf16 %v51
  %v117 = vunpack.c.l.bf16 %v52
  %v118 = vunpack.c.l.bf16 %v53
  %v119 = vunpack.c.l.bf16 %v54
  %v120 = vunpack.c.l.bf16 %v55
  %v121 = vunpack.c.l.bf16 %v56
  %v122 = vunpack.c.l.bf16 %v57
  %v123 = vunpack.c.l.bf16 %v58
  %v124 = vunpack.c.l.bf16 %v59
  %v125 = vunpack.c.l.bf16 %v60
  %v126 = vunpack.c.l.bf16 %v61
  %v127 = vunpack.c.l.bf16 %v62
  %v128 = vunpack.c.l.bf16 %v63
  %v129 = vunpack.c.l.bf16 %v64
  %v130 = vunpack.c.l.bf16 %v65
  %v131 = vunpack.c.l.bf16 %v66
  %v132 = vunpack.c.l.bf16 %v67
  %v133 = vunpack.c.l.bf16 %v68
  %v134 = vunpack.c.l.bf16 %v69
  %v135 = vunpack.c.l.bf16 %v70
  %v136 = vunpack.c.l.bf16 %v71
  %v137 = vunpack.c.l.bf16 %v72
  %v138 = vunpack.c.l.bf16 %v73
  %v139 = vunpack.c.l.bf16 %v74
  %v140 = vunpack.c.l.bf16 %v75
  %v141 = vunpack.c.l.bf16 %v76
  %v142 = vunpack.c.l.bf16 %v77
  %v143 = vunpack.c.l.bf16 %v78
  %v144 = vunpack.c.l.bf16 %v79
  %v145 = vunpack.c.l.bf16 %v80
  %v146 = vlaneseq
  %v147 = vshrl.u32 %v146, 7
  %v148 = vsub.s32 0, %v147
  %v149 = vrot.slane %v81, %v148
  %v150 = vmul.f32 %v82, %v149
  %v151 = vmul.f32 %v83, %v149
  %v152 = vmul.f32 %v84, %v149
  %v153 = vmul.f32 %v85, %v149
  %v154 = vmul.f32 %v86, %v149
  %v155 = vmul.f32 %v87, %v149
  %v156 = vmul.f32 %v88, %v149
  %v157 = vmul.f32 %v89, %v149
  %v158 = vmul.f32 %v90, %v149
  %v159 = vmul.f32 %v91, %v149
  %v160 = vmul.f32 %v92, %v149
  %v161 = vmul.f32 %v93, %v149
  %v162 = vmul.f32 %v94, %v149
  %v163 = vmul.f32 %v95, %v149
  %v164 = vmul.f32 %v96, %v149
  %v165 = vmul.f32 %v97, %v149
  %v166 = vmul.f32 %v98, %v149
  %v167 = vmul.f32 %v99, %v149
  %v168 = vmul.f32 %v100, %v149
  %v169 = vmul.f32 %v101, %v149
  %v170 = vmul.f32 %v102, %v149
  %v171 = vmul.f32 %v103, %v149
  %v172 = vmul.f32 %v104, %v149
  %v173 = vmul.f32 %v105, %v149
  %v174 = vmul.f32 %v106, %v149
  %v175 = vmul.f32 %v107, %v149
  %v176 = vmul.f32 %v108, %v149
  %v177 = vmul.f32 %v109, %v149
  %v178 = vmul.f32 %v110, %v149
  %v179 = vmul.f32 %v111, %v149
  %v180 = vmul.f32 %v112, %v149
  %v181 = vmul.f32 %v113, %v149
  %v182 = vmul.f32 %v114, %v149
  %v183 = vmul.f32 %v115, %v149
  %v184 = vmul.f32 %v116, %v149
  %v185 = vmul.f32 %v117, %v149
  %v186 = vmul.f32 %v118, %v149
  %v187 = vmul.f32 %v119, %v149
  %v188 = vmul.f32 %v120, %v149
  %v189 = vmul.f32 %v121, %v149
  %v190 = vmul.f32 %v122, %v149
  %v191 = vmul.f32 %v123, %v149
  %v192 = vmul.f32 %v124, %v149
  %v193 = vmul.f32 %v125, %v149
  %v194 = vmul.f32 %v126, %v149
  %v195 = vmul.f32 %v127, %v149
  %v196 = vmul.f32 %v128, %v149
  %v197 = vmul.f32 %v129, %v149
  %v198 = vmul.f32 %v130, %v149
  %v199 = vmul.f32 %v131, %v149
  %v200 = vmul.f32 %v132, %v149
  %v201 = vmul.f32 %v133, %v149
  %v202 = vmul.f32 %v134, %v149
  %v203 = vmul.f32 %v135, %v149
  %v204 = vmul.f32 %v136, %v149
  %v205 = vmul.f32 %v137, %v149
  %v206 = vmul.f32 %v138, %v149
  %v207 = vmul.f32 %v139, %v149
  %v208 = vmul.f32 %v140, %v149
  %v209 = vmul.f32 %v141, %v149
  %v210 = vmul.f32 %v142, %v149
  %v211 = vmul.f32 %v143, %v149
  %v212 = vmul.f32 %v144, %v149
  %v213 = vmul.f32 %v145, %v149
  %v214 = vlaneseq
  %v215 = vshrl.u32 %v214, 7
  %v216 = vsub.s32 1, %v215
  %v217 = vrot.slane %v81, %v216
  %v218 = vadd.f32 %v150, %v217
  %v219 = vadd.f32 %v151, %v217
  %v220 = vadd.f32 %v152, %v217
  %v221 = vadd.f32 %v153, %v217
  %v222 = vadd.f32 %v154, %v217
  %v223 = vadd.f32 %v155, %v217
  %v224 = vadd.f32 %v156, %v217
  %v225 = vadd.f32 %v157, %v217
  %v226 = vadd.f32 %v158, %v217
  %v227 = vadd.f32 %v159, %v217
  %v228 = vadd.f32 %v160, %v217
  %v229 = vadd.f32 %v161, %v217
  %v230 = vadd.f32 %v162, %v217
  %v231 = vadd.f32 %v163, %v217
  %v232 = vadd.f32 %v164, %v217
  %v233 = vadd.f32 %v165, %v217
  %v234 = vadd.f32 %v166, %v217
  %v235 = vadd.f32 %v167, %v217
  %v236 = vadd.f32 %v168, %v217
  %v237 = vadd.f32 %v169, %v217
  %v238 = vadd.f32 %v170, %v217
  %v239 = vadd.f32 %v171, %v217
  %v240 = vadd.f32 %v172, %v217
  %v241 = vadd.f32 %v173, %v217
  %v242 = vadd.f32 %v174, %v217
  %v243 = vadd.f32 %v175, %v217
  %v244 = vadd.f32 %v176, %v217
  %v245 = vadd.f32 %v177, %v217
  %v246 = vadd.f32 %v178, %v217
  %v247 = vadd.f32 %v179, %v217
  %v248 = vadd.f32 %v180, %v217
  %v249 = vadd.f32 %v181, %v217
  %v250 = vadd.f32 %v182, %v217
  %v251 = vadd.f32 %v183, %v217
  %v252 = vadd.f32 %v184, %v217
  %v253 = vadd.f32 %v185, %v217
  %v254 = vadd.f32 %v186, %v217
  %v255 = vadd.f32 %v187, %v217
  %v256 = vadd.f32 %v188, %v217
  %v257 = vadd.f32 %v189, %v217
  %v258 = vadd.f32 %v190, %v217
  %v259 = vadd.f32 %v191, %v217
  %v260 = vadd.f32 %v192, %v217
  %v261 = vadd.f32 %v193, %v217
  %v262 = vadd.f32 %v194, %v217
  %v263 = vadd.f32 %v195, %v217
  %v264 = vadd.f32 %v196, %v217
  %v265 = vadd.f32 %v197, %v217
  %v266 = vadd.f32 %v198, %v217
  %v267 = vadd.f32 %v199, %v217
  %v268 = vadd.f32 %v200, %v217
  %v269 = vadd.f32 %v201, %v217
  %v270 = vadd.f32 %v202, %v217
  %v271 = vadd.f32 %v203, %v217
  %v272 = vadd.f32 %v204, %v217
  %v273 = vadd.f32 %v205, %v217
  %v274 = vadd.f32 %v206, %v217
  %v275 = vadd.f32 %v207, %v217
  %v276 = vadd.f32 %v208, %v217
  %v277 = vadd.f32 %v209, %v217
  %v278 = vadd.f32 %v210, %v217
  %v279 = vadd.f32 %v211, %v217
  %v280 = vadd.f32 %v212, %v217
  %v281 = vadd.f32 %v213, %v217
  %v282 = vmin.f32 %v218, 20.0
  %v283 = vmin.f32 %v219, 20.0
  %v284 = vmin.f32 %v220, 20.0
  %v285 = vmin.f32 %v221, 20.0
  %v286 = vmin.f32 %v222, 20.0
  %v287 = vmin.f32 %v223, 20.0
  %v288 = vmin.f32 %v224, 20.0
  %v289 = vmin.f32 %v225, 20.0
  %v290 = vmin.f32 %v226, 20.0
  %v291 = vmin.f32 %v227, 20.0
  %v292 = vmin.f32 %v228, 20.0
  %v293 = vmin.f32 %v229, 20.0
  %v294 = vmin.f32 %v230, 20.0
  %v295 = vmin.f32 %v231, 20.0
  %v296 = vmin.f32 %v232, 20.0
  %v297 = vmin.f32 %v233, 20.0
  %v298 = vmin.f32 %v234, 20.0
  %v299 = vmin.f32 %v235, 20.0
  %v300 = vmin.f32 %v236, 20.0
  %v301 = vmin.f32 %v237, 20.0
  %v302 = vmin.f32 %v238, 20.0
  %v303 = vmin.f32 %v239, 20.0
  %v304 = vmin.f32 %v240, 20.0
  %v305 = vmin.f32 %v241, 20.0
  %v306 = vmin.f32 %v242, 20.0
  %v307 = vmin.f32 %v243, 20.0
  %v308 = vmin.f32 %v244, 20.0
  %v309 = vmin.f32 %v245, 20.0
  %v310 = vmin.f32 %v246, 20.0
  %v311 = vmin.f32 %v247, 20.0
  %v312 = vmin.f32 %v248, 20.0
  %v313 = vmin.f32 %v249, 20.0
  %v314 = vmin.f32 %v250, 20.0
  %v315 = vmin.f32 %v251, 20.0
  %v316 = vmin.f32 %v252, 20.0
  %v317 = vmin.f32 %v253, 20.0
  %v318 = vmin.f32 %v254, 20.0
  %v319 = vmin.f32 %v255, 20.0
  %v320 = vmin.f32 %v256, 20.0
  %v321 = vmin.f32 %v257, 20.0
  %v322 = vmin.f32 %v258, 20.0
  %v323 = vmin.f32 %v259, 20.0
  %v324 = vmin.f32 %v260, 20.0
  %v325 = vmin.f32 %v261, 20.0
  %v326 = vmin.f32 %v262, 20.0
  %v327 = vmin.f32 %v263, 20.0
  %v328 = vmin.f32 %v264, 20.0
  %v329 = vmin.f32 %v265, 20.0
  %v330 = vmin.f32 %v266, 20.0
  %v331 = vmin.f32 %v267, 20.0
  %v332 = vmin.f32 %v268, 20.0
  %v333 = vmin.f32 %v269, 20.0
  %v334 = vmin.f32 %v270, 20.0
  %v335 = vmin.f32 %v271, 20.0
  %v336 = vmin.f32 %v272, 20.0
  %v337 = vmin.f32 %v273, 20.0
  %v338 = vmin.f32 %v274, 20.0
  %v339 = vmin.f32 %v275, 20.0
  %v340 = vmin.f32 %v276, 20.0
  %v341 = vmin.f32 %v277, 20.0
  %v342 = vmin.f32 %v278, 20.0
  %v343 = vmin.f32 %v279, 20.0
  %v344 = vmin.f32 %v280, 20.0
  %v345 = vmin.f32 %v281, 20.0
  %v346 = vmul.f32 %v282, 1.442695
  %v347 = vpow.pop %v346
  %v348 = vmul.f32 %v283, 1.442695
  %v349 = vpow.pop %v348
  %v350 = vmul.f32 %v284, 1.442695
  %v351 = vpow.pop %v350
  %v352 = vmul.f32 %v285, 1.442695
  %v353 = vpow.pop %v352
  %v354 = vmul.f32 %v286, 1.442695
  %v355 = vpow.pop %v354
  %v356 = vmul.f32 %v287, 1.442695
  %v357 = vpow.pop %v356
  %v358 = vmul.f32 %v288, 1.442695
  %v359 = vpow.pop %v358
  %v360 = vmul.f32 %v289, 1.442695
  %v361 = vpow.pop %v360
  %v362 = vmul.f32 %v290, 1.442695
  %v363 = vpow.pop %v362
  %v364 = vmul.f32 %v291, 1.442695
  %v365 = vpow.pop %v364
  %v366 = vmul.f32 %v292, 1.442695
  %v367 = vpow.pop %v366
  %v368 = vmul.f32 %v293, 1.442695
  %v369 = vpow.pop %v368
  %v370 = vmul.f32 %v294, 1.442695
  %v371 = vpow.pop %v370
  %v372 = vmul.f32 %v295, 1.442695
  %v373 = vpow.pop %v372
  %v374 = vmul.f32 %v296, 1.442695
  %v375 = vpow.pop %v374
  %v376 = vmul.f32 %v297, 1.442695
  %v377 = vpow.pop %v376
  %v378 = vmul.f32 %v298, 1.442695
  %v379 = vpow.pop %v378
  %v380 = vmul.f32 %v299, 1.442695
  %v381 = vpow.pop %v380
  %v382 = vmul.f32 %v300, 1.442695
  %v383 = vpow.pop %v382
  %v384 = vmul.f32 %v301, 1.442695
  %v385 = vpow.pop %v384
  %v386 = vmul.f32 %v302, 1.442695
  %v387 = vpow.pop %v386
  %v388 = vmul.f32 %v303, 1.442695
  %v389 = vpow.pop %v388
  %v390 = vmul.f32 %v304, 1.442695
  %v391 = vpow.pop %v390
  %v392 = vmul.f32 %v305, 1.442695
  %v393 = vpow.pop %v392
  %v394 = vmul.f32 %v306, 1.442695
  %v395 = vpow.pop %v394
  %v396 = vmul.f32 %v307, 1.442695
  %v397 = vpow.pop %v396
  %v398 = vmul.f32 %v308, 1.442695
  %v399 = vpow.pop %v398
  %v400 = vmul.f32 %v309, 1.442695
  %v401 = vpow.pop %v400
  %v402 = vmul.f32 %v310, 1.442695
  %v403 = vpow.pop %v402
  %v404 = vmul.f32 %v311, 1.442695
  %v405 = vpow.pop %v404
  %v406 = vmul.f32 %v312, 1.442695
  %v407 = vpow.pop %v406
  %v408 = vmul.f32 %v313, 1.442695
  %v409 = vpow.pop %v408
  %v410 = vmul.f32 %v314, 1.442695
  %v411 = vpow.pop %v410
  %v412 = vmul.f32 %v315, 1.442695
  %v413 = vpow.pop %v412
  %v414 = vmul.f32 %v316, 1.442695
  %v415 = vpow.pop %v414
  %v416 = vmul.f32 %v317, 1.442695
  %v417 = vpow.pop %v416
  %v418 = vmul.f32 %v318, 1.442695
  %v419 = vpow.pop %v418
  %v420 = vmul.f32 %v319, 1.442695
  %v421 = vpow.pop %v420
  %v422 = vmul.f32 %v320, 1.442695
  %v423 = vpow.pop %v422
  %v424 = vmul.f32 %v321, 1.442695
  %v425 = vpow.pop %v424
  %v426 = vmul.f32 %v322, 1.442695
  %v427 = vpow.pop %v426
  %v428 = vmul.f32 %v323, 1.442695
  %v429 = vpow.pop %v428
  %v430 = vmul.f32 %v324, 1.442695
  %v431 = vpow.pop %v430
  %v432 = vmul.f32 %v325, 1.442695
  %v433 = vpow.pop %v432
  %v434 = vmul.f32 %v326, 1.442695
  %v435 = vpow.pop %v434
  %v436 = vmul.f32 %v327, 1.442695
  %v437 = vpow.pop %v436
  %v438 = vmul.f32 %v328, 1.442695
  %v439 = vpow.pop %v438
  %v440 = vmul.f32 %v329, 1.442695
  %v441 = vpow.pop %v440
  %v442 = vmul.f32 %v330, 1.442695
  %v443 = vpow.pop %v442
  %v444 = vmul.f32 %v331, 1.442695
  %v445 = vpow.pop %v444
  %v446 = vmul.f32 %v332, 1.442695
  %v447 = vpow.pop %v446
  %v448 = vmul.f32 %v333, 1.442695
  %v449 = vpow.pop %v448
  %v450 = vmul.f32 %v334, 1.442695
  %v451 = vpow.pop %v450
  %v452 = vmul.f32 %v335, 1.442695
  %v453 = vpow.pop %v452
  %v454 = vmul.f32 %v336, 1.442695
  %v455 = vpow.pop %v454
  %v456 = vmul.f32 %v337, 1.442695
  %v457 = vpow.pop %v456
  %v458 = vmul.f32 %v338, 1.442695
  %v459 = vpow.pop %v458
  %v460 = vmul.f32 %v339, 1.442695
  %v461 = vpow.pop %v460
  %v462 = vmul.f32 %v340, 1.442695
  %v463 = vpow.pop %v462
  %v464 = vmul.f32 %v341, 1.442695
  %v465 = vpow.pop %v464
  %v466 = vmul.f32 %v342, 1.442695
  %v467 = vpow.pop %v466
  %v468 = vmul.f32 %v343, 1.442695
  %v469 = vpow.pop %v468
  %v470 = vmul.f32 %v344, 1.442695
  %v471 = vpow.pop %v470
  %v472 = vmul.f32 %v345, 1.442695
  %v473 = vpow.pop %v472
  %v474 = vadd.f32 %v347, 1.0
  %v475 = vadd.f32 %v349, 1.0
  %v476 = vadd.f32 %v351, 1.0
  %v477 = vadd.f32 %v353, 1.0
  %v478 = vadd.f32 %v355, 1.0
  %v479 = vadd.f32 %v357, 1.0
  %v480 = vadd.f32 %v359, 1.0
  %v481 = vadd.f32 %v361, 1.0
  %v482 = vadd.f32 %v363, 1.0
  %v483 = vadd.f32 %v365, 1.0
  %v484 = vadd.f32 %v367, 1.0
  %v485 = vadd.f32 %v369, 1.0
  %v486 = vadd.f32 %v371, 1.0
  %v487 = vadd.f32 %v373, 1.0
  %v488 = vadd.f32 %v375, 1.0
  %v489 = vadd.f32 %v377, 1.0
  %v490 = vadd.f32 %v379, 1.0
  %v491 = vadd.f32 %v381, 1.0
  %v492 = vadd.f32 %v383, 1.0
  %v493 = vadd.f32 %v385, 1.0
  %v494 = vadd.f32 %v387, 1.0
  %v495 = vadd.f32 %v389, 1.0
  %v496 = vadd.f32 %v391, 1.0
  %v497 = vadd.f32 %v393, 1.0
  %v498 = vadd.f32 %v395, 1.0
  %v499 = vadd.f32 %v397, 1.0
  %v500 = vadd.f32 %v399, 1.0
  %v501 = vadd.f32 %v401, 1.0
  %v502 = vadd.f32 %v403, 1.0
  %v503 = vadd.f32 %v405, 1.0
  %v504 = vadd.f32 %v407, 1.0
  %v505 = vadd.f32 %v409, 1.0
  %v506 = vadd.f32 %v411, 1.0
  %v507 = vadd.f32 %v413, 1.0
  %v508 = vadd.f32 %v415, 1.0
  %v509 = vadd.f32 %v417, 1.0
  %v510 = vadd.f32 %v419, 1.0
  %v511 = vadd.f32 %v421, 1.0
  %v512 = vadd.f32 %v423, 1.0
  %v513 = vadd.f32 %v425, 1.0
  %v514 = vadd.f32 %v427, 1.0
  %v515 = vadd.f32 %v429, 1.0
  %v516 = vadd.f32 %v431, 1.0
  %v517 = vadd.f32 %v433, 1.0
  %v518 = vadd.f32 %v435, 1.0
  %v519 = vadd.f32 %v437, 1.0
  %v520 = vadd.f32 %v439, 1.0
  %v521 = vadd.f32 %v441, 1.0
  %v522 = vadd.f32 %v443, 1.0
  %v523 = vadd.f32 %v445, 1.0
  %v524 = vadd.f32 %v447, 1.0
  %v525 = vadd.f32 %v449, 1.0
  %v526 = vadd.f32 %v451, 1.0
  %v527 = vadd.f32 %v453, 1.0
  %v528 = vadd.f32 %v455, 1.0
  %v529 = vadd.f32 %v457, 1.0
  %v530 = vadd.f32 %v459, 1.0
  %v531 = vadd.f32 %v461, 1.0
  %v532 = vadd.f32 %v463, 1.0
  %v533 = vadd.f32 %v465, 1.0
  %v534 = vadd.f32 %v467, 1.0
  %v535 = vadd.f32 %v469, 1.0
  %v536 = vadd.f32 %v471, 1.0
  %v537 = vadd.f32 %v473, 1.0
  %v538 = vmul.f32 %v474, %v474
  %v539 = vmul.f32 %v475, %v475
  %v540 = vmul.f32 %v476, %v476
  %v541 = vmul.f32 %v477, %v477
  %v542 = vmul.f32 %v478, %v478
  %v543 = vmul.f32 %v479, %v479
  %v544 = vmul.f32 %v480, %v480
  %v545 = vmul.f32 %v481, %v481
  %v546 = vmul.f32 %v482, %v482
  %v547 = vmul.f32 %v483, %v483
  %v548 = vmul.f32 %v484, %v484
  %v549 = vmul.f32 %v485, %v485
  %v550 = vmul.f32 %v486, %v486
  %v551 = vmul.f32 %v487, %v487
  %v552 = vmul.f32 %v488, %v488
  %v553 = vmul.f32 %v489, %v489
  %v554 = vmul.f32 %v490, %v490
  %v555 = vmul.f32 %v491, %v491
  %v556 = vmul.f32 %v492, %v492
  %v557 = vmul.f32 %v493, %v493
  %v558 = vmul.f32 %v494, %v494
  %v559 = vmul.f32 %v495, %v495
  %v560 = vmul.f32 %v496, %v496
  %v561 = vmul.f32 %v497, %v497
  %v562 = vmul.f32 %v498, %v498
  %v563 = vmul.f32 %v499, %v499
  %v564 = vmul.f32 %v500, %v500
  %v565 = vmul.f32 %v501, %v501
  %v566 = vmul.f32 %v502, %v502
  %v567 = vmul.f32 %v503, %v503
  %v568 = vmul.f32 %v504, %v504
  %v569 = vmul.f32 %v505, %v505
  %v570 = vmul.f32 %v506, %v506
  %v571 = vmul.f32 %v507, %v507
  %v572 = vmul.f32 %v508, %v508
  %v573 = vmul.f32 %v509, %v509
  %v574 = vmul.f32 %v510, %v510
  %v575 = vmul.f32 %v511, %v511
  %v576 = vmul.f32 %v512, %v512
  %v577 = vmul.f32 %v513, %v513
  %v578 = vmul.f32 %v514, %v514
  %v579 = vmul.f32 %v515, %v515
  %v580 = vmul.f32 %v516, %v516
  %v581 = vmul.f32 %v517, %v517
  %v582 = vmul.f32 %v518, %v518
  %v583 = vmul.f32 %v519, %v519
  %v584 = vmul.f32 %v520, %v520
  %v585 = vmul.f32 %v521, %v521
  %v586 = vmul.f32 %v522, %v522
  %v587 = vmul.f32 %v523, %v523
  %v588 = vmul.f32 %v524, %v524
  %v589 = vmul.f32 %v525, %v525
  %v590 = vmul.f32 %v526, %v526
  %v591 = vmul.f32 %v527, %v527
  %v592 = vmul.f32 %v528, %v528
  %v593 = vmul.f32 %v529, %v529
  %v594 = vmul.f32 %v530, %v530
  %v595 = vmul.f32 %v531, %v531
  %v596 = vmul.f32 %v532, %v532
  %v597 = vmul.f32 %v533, %v533
  %v598 = vmul.f32 %v534, %v534
  %v599 = vmul.f32 %v535, %v535
  %v600 = vmul.f32 %v536, %v536
  %v601 = vmul.f32 %v537, %v537
  %v602 = vsub.f32 %v538, 1.0
  %v603 = vsub.f32 %v539, 1.0
  %v604 = vsub.f32 %v540, 1.0
  %v605 = vsub.f32 %v541, 1.0
  %v606 = vsub.f32 %v542, 1.0
  %v607 = vsub.f32 %v543, 1.0
  %v608 = vsub.f32 %v544, 1.0
  %v609 = vsub.f32 %v545, 1.0
  %v610 = vsub.f32 %v546, 1.0
  %v611 = vsub.f32 %v547, 1.0
  %v612 = vsub.f32 %v548, 1.0
  %v613 = vsub.f32 %v549, 1.0
  %v614 = vsub.f32 %v550, 1.0
  %v615 = vsub.f32 %v551, 1.0
  %v616 = vsub.f32 %v552, 1.0
  %v617 = vsub.f32 %v553, 1.0
  %v618 = vsub.f32 %v554, 1.0
  %v619 = vsub.f32 %v555, 1.0
  %v620 = vsub.f32 %v556, 1.0
  %v621 = vsub.f32 %v557, 1.0
  %v622 = vsub.f32 %v558, 1.0
  %v623 = vsub.f32 %v559, 1.0
  %v624 = vsub.f32 %v560, 1.0
  %v625 = vsub.f32 %v561, 1.0
  %v626 = vsub.f32 %v562, 1.0
  %v627 = vsub.f32 %v563, 1.0
  %v628 = vsub.f32 %v564, 1.0
  %v629 = vsub.f32 %v565, 1.0
  %v630 = vsub.f32 %v566, 1.0
  %v631 = vsub.f32 %v567, 1.0
  %v632 = vsub.f32 %v568, 1.0
  %v633 = vsub.f32 %v569, 1.0
  %v634 = vsub.f32 %v570, 1.0
  %v635 = vsub.f32 %v571, 1.0
  %v636 = vsub.f32 %v572, 1.0
  %v637 = vsub.f32 %v573, 1.0
  %v638 = vsub.f32 %v574, 1.0
  %v639 = vsub.f32 %v575, 1.0
  %v640 = vsub.f32 %v576, 1.0
  %v641 = vsub.f32 %v577, 1.0
  %v642 = vsub.f32 %v578, 1.0
  %v643 = vsub.f32 %v579, 1.0
  %v644 = vsub.f32 %v580, 1.0
  %v645 = vsub.f32 %v581, 1.0
  %v646 = vsub.f32 %v582, 1.0
  %v647 = vsub.f32 %v583, 1.0
  %v648 = vsub.f32 %v584, 1.0
  %v649 = vsub.f32 %v585, 1.0
  %v650 = vsub.f32 %v586, 1.0
  %v651 = vsub.f32 %v587, 1.0
  %v652 = vsub.f32 %v588, 1.0
  %v653 = vsub.f32 %v589, 1.0
  %v654 = vsub.f32 %v590, 1.0
  %v655 = vsub.f32 %v591, 1.0
  %v656 = vsub.f32 %v592, 1.0
  %v657 = vsub.f32 %v593, 1.0
  %v658 = vsub.f32 %v594, 1.0
  %v659 = vsub.f32 %v595, 1.0
  %v660 = vsub.f32 %v596, 1.0
  %v661 = vsub.f32 %v597, 1.0
  %v662 = vsub.f32 %v598, 1.0
  %v663 = vsub.f32 %v599, 1.0
  %v664 = vsub.f32 %v600, 1.0
  %v665 = vsub.f32 %v601, 1.0
  %v666 = vadd.f32 %v538, 1.0
  %v667 = vadd.f32 %v539, 1.0
  %v668 = vadd.f32 %v540, 1.0
  %v669 = vadd.f32 %v541, 1.0
  %v670 = vadd.f32 %v542, 1.0
  %v671 = vadd.f32 %v543, 1.0
  %v672 = vadd.f32 %v544, 1.0
  %v673 = vadd.f32 %v545, 1.0
  %v674 = vadd.f32 %v546, 1.0
  %v675 = vadd.f32 %v547, 1.0
  %v676 = vadd.f32 %v548, 1.0
  %v677 = vadd.f32 %v549, 1.0
  %v678 = vadd.f32 %v550, 1.0
  %v679 = vadd.f32 %v551, 1.0
  %v680 = vadd.f32 %v552, 1.0
  %v681 = vadd.f32 %v553, 1.0
  %v682 = vadd.f32 %v554, 1.0
  %v683 = vadd.f32 %v555, 1.0
  %v684 = vadd.f32 %v556, 1.0
  %v685 = vadd.f32 %v557, 1.0
  %v686 = vadd.f32 %v558, 1.0
  %v687 = vadd.f32 %v559, 1.0
  %v688 = vadd.f32 %v560, 1.0
  %v689 = vadd.f32 %v561, 1.0
  %v690 = vadd.f32 %v562, 1.0
  %v691 = vadd.f32 %v563, 1.0
  %v692 = vadd.f32 %v564, 1.0
  %v693 = vadd.f32 %v565, 1.0
  %v694 = vadd.f32 %v566, 1.0
  %v695 = vadd.f32 %v567, 1.0
  %v696 = vadd.f32 %v568, 1.0
  %v697 = vadd.f32 %v569, 1.0
  %v698 = vadd.f32 %v570, 1.0
  %v699 = vadd.f32 %v571, 1.0
  %v700 = vadd.f32 %v572, 1.0
  %v701 = vadd.f32 %v573, 1.0
  %v702 = vadd.f32 %v574, 1.0
  %v703 = vadd.f32 %v575, 1.0
  %v704 = vadd.f32 %v576, 1.0
  %v705 = vadd.f32 %v577, 1.0
  %v706 = vadd.f32 %v578, 1.0
  %v707 = vadd.f32 %v579, 1.0
  %v708 = vadd.f32 %v580, 1.0
  %v709 = vadd.f32 %v581, 1.0
  %v710 = vadd.f32 %v582, 1.0
  %v711 = vadd.f32 %v583, 1.0
  %v712 = vadd.f32 %v584, 1.0
  %v713 = vadd.f32 %v585, 1.0
  %v714 = vadd.f32 %v586, 1.0
  %v715 = vadd.f32 %v587, 1.0
  %v716 = vadd.f32 %v588, 1.0
  %v717 = vadd.f32 %v589, 1.0
  %v718 = vadd.f32 %v590, 1.0
  %v719 = vadd.f32 %v591, 1.0
  %v720 = vadd.f32 %v592, 1.0
  %v721 = vadd.f32 %v593, 1.0
  %v722 = vadd.f32 %v594, 1.0
  %v723 = vadd.f32 %v595, 1.0
  %v724 = vadd.f32 %v596, 1.0
  %v725 = vadd.f32 %v597, 1.0
  %v726 = vadd.f32 %v598, 1.0
  %v727 = vadd.f32 %v599, 1.0
  %v728 = vadd.f32 %v600, 1.0
  %v729 = vadd.f32 %v601, 1.0
  %v730 = vrcp.pop %v666
  %v731 = vmul.f32 %v602, %v730
  %v732 = vrcp.pop %v667
  %v733 = vmul.f32 %v603, %v732
  %v734 = vrcp.pop %v668
  %v735 = vmul.f32 %v604, %v734
  %v736 = vrcp.pop %v669
  %v737 = vmul.f32 %v605, %v736
  %v738 = vrcp.pop %v670
  %v739 = vmul.f32 %v606, %v738
  %v740 = vrcp.pop %v671
  %v741 = vmul.f32 %v607, %v740
  %v742 = vrcp.pop %v672
  %v743 = vmul.f32 %v608, %v742
  %v744 = vrcp.pop %v673
  %v745 = vmul.f32 %v609, %v744
  %v746 = vrcp.pop %v674
  %v747 = vmul.f32 %v610, %v746
  %v748 = vrcp.pop %v675
  %v749 = vmul.f32 %v611, %v748
  %v750 = vrcp.pop %v676
  %v751 = vmul.f32 %v612, %v750
  %v752 = vrcp.pop %v677
  %v753 = vmul.f32 %v613, %v752
  %v754 = vrcp.pop %v678
  %v755 = vmul.f32 %v614, %v754
  %v756 = vrcp.pop %v679
  %v757 = vmul.f32 %v615, %v756
  %v758 = vrcp.pop %v680
  %v759 = vmul.f32 %v616, %v758
  %v760 = vrcp.pop %v681
  %v761 = vmul.f32 %v617, %v760
  %v762 = vrcp.pop %v682
  %v763 = vmul.f32 %v618, %v762
  %v764 = vrcp.pop %v683
  %v765 = vmul.f32 %v619, %v764
  %v766 = vrcp.pop %v684
  %v767 = vmul.f32 %v620, %v766
  %v768 = vrcp.pop %v685
  %v769 = vmul.f32 %v621, %v768
  %v770 = vrcp.pop %v686
  %v771 = vmul.f32 %v622, %v770
  %v772 = vrcp.pop %v687
  %v773 = vmul.f32 %v623, %v772
  %v774 = vrcp.pop %v688
  %v775 = vmul.f32 %v624, %v774
  %v776 = vrcp.pop %v689
  %v777 = vmul.f32 %v625, %v776
  %v778 = vrcp.pop %v690
  %v779 = vmul.f32 %v626, %v778
  %v780 = vrcp.pop %v691
  %v781 = vmul.f32 %v627, %v780
  %v782 = vrcp.pop %v692
  %v783 = vmul.f32 %v628, %v782
  %v784 = vrcp.pop %v693
  %v785 = vmul.f32 %v629, %v784
  %v786 = vrcp.pop %v694
  %v787 = vmul.f32 %v630, %v786
  %v788 = vrcp.pop %v695
  %v789 = vmul.f32 %v631, %v788
  %v790 = vrcp.pop %v696
  %v791 = vmul.f32 %v632, %v790
  %v792 = vrcp.pop %v697
  %v793 = vmul.f32 %v633, %v792
  %v794 = vrcp.pop %v698
  %v795 = vmul.f32 %v634, %v794
  %v796 = vrcp.pop %v699
  %v797 = vmul.f32 %v635, %v796
  %v798 = vrcp.pop %v700
  %v799 = vmul.f32 %v636, %v798
  %v800 = vrcp.pop %v701
  %v801 = vmul.f32 %v637, %v800
  %v802 = vrcp.pop %v702
  %v803 = vmul.f32 %v638, %v802
  %v804 = vrcp.pop %v703
  %v805 = vmul.f32 %v639, %v804
  %v806 = vrcp.pop %v704
  %v807 = vmul.f32 %v640, %v806
  %v808 = vrcp.pop %v705
  %v809 = vmul.f32 %v641, %v808
  %v810 = vrcp.pop %v706
  %v811 = vmul.f32 %v642, %v810
  %v812 = vrcp.pop %v707
  %v813 = vmul.f32 %v643, %v812
  %v814 = vrcp.pop %v708
  %v815 = vmul.f32 %v644, %v814
  %v816 = vrcp.pop %v709
  %v817 = vmul.f32 %v645, %v816
  %v818 = vrcp.pop %v710
  %v819 = vmul.f32 %v646, %v818
  %v820 = vrcp.pop %v711
  %v821 = vmul.f32 %v647, %v820
  %v822 = vrcp.pop %v712
  %v823 = vmul.f32 %v648, %v822
  %v824 = vrcp.pop %v713
  %v825 = vmul.f32 %v649, %v824
  %v826 = vrcp.pop %v714
  %v827 = vmul.f32 %v650, %v826
  %v828 = vrcp.pop %v715
  %v829 = vmul.f32 %v651, %v828
  %v830 = vrcp.pop %v716
  %v831 = vmul.f32 %v652, %v830
  %v832 = vrcp.pop %v717
  %v833 = vmul.f32 %v653, %v832
  %v834 = vrcp.pop %v718
  %v835 = vmul.f32 %v654, %v834
  %v836 = vrcp.pop %v719
  %v837 = vmul.f32 %v655, %v836
  %v838 = vrcp.pop %v720
  %v839 = vmul.f32 %v656, %v838
  %v840 = vrcp.pop %v721
  %v841 = vmul.f32 %v657, %v840
  %v842 = vrcp.pop %v722
  %v843 = vmul.f32 %v658, %v842
  %v844 = vrcp.pop %v723
  %v845 = vmul.f32 %v659, %v844
  %v846 = vrcp.pop %v724
  %v847 = vmul.f32 %v660, %v846
  %v848 = vrcp.pop %v725
  %v849 = vmul.f32 %v661, %v848
  %v850 = vrcp.pop %v726
  %v851 = vmul.f32 %v662, %v850
  %v852 = vrcp.pop %v727
  %v853 = vmul.f32 %v663, %v852
  %v854 = vrcp.pop %v728
  %v855 = vmul.f32 %v664, %v854
  %v856 = vrcp.pop %v729
  %v857 = vmul.f32 %v665, %v856
  %v858 = vmul.f32 %v218, %v731
  %v859 = vmul.f32 %v219, %v733
  %v860 = vmul.f32 %v220, %v735
  %v861 = vmul.f32 %v221, %v737
  %v862 = vmul.f32 %v222, %v739
  %v863 = vmul.f32 %v223, %v741
  %v864 = vmul.f32 %v224, %v743
  %v865 = vmul.f32 %v225, %v745
  %v866 = vmul.f32 %v226, %v747
  %v867 = vmul.f32 %v227, %v749
  %v868 = vmul.f32 %v228, %v751
  %v869 = vmul.f32 %v229, %v753
  %v870 = vmul.f32 %v230, %v755
  %v871 = vmul.f32 %v231, %v757
  %v872 = vmul.f32 %v232, %v759
  %v873 = vmul.f32 %v233, %v761
  %v874 = vmul.f32 %v234, %v763
  %v875 = vmul.f32 %v235, %v765
  %v876 = vmul.f32 %v236, %v767
  %v877 = vmul.f32 %v237, %v769
  %v878 = vmul.f32 %v238, %v771
  %v879 = vmul.f32 %v239, %v773
  %v880 = vmul.f32 %v240, %v775
  %v881 = vmul.f32 %v241, %v777
  %v882 = vmul.f32 %v242, %v779
  %v883 = vmul.f32 %v243, %v781
  %v884 = vmul.f32 %v244, %v783
  %v885 = vmul.f32 %v245, %v785
  %v886 = vmul.f32 %v246, %v787
  %v887 = vmul.f32 %v247, %v789
  %v888 = vmul.f32 %v248, %v791
  %v889 = vmul.f32 %v249, %v793
  %v890 = vmul.f32 %v250, %v795
  %v891 = vmul.f32 %v251, %v797
  %v892 = vmul.f32 %v252, %v799
  %v893 = vmul.f32 %v253, %v801
  %v894 = vmul.f32 %v254, %v803
  %v895 = vmul.f32 %v255, %v805
  %v896 = vmul.f32 %v256, %v807
  %v897 = vmul.f32 %v257, %v809
  %v898 = vmul.f32 %v258, %v811
  %v899 = vmul.f32 %v259, %v813
  %v900 = vmul.f32 %v260, %v815
  %v901 = vmul.f32 %v261, %v817
  %v902 = vmul.f32 %v262, %v819
  %v903 = vmul.f32 %v263, %v821
  %v904 = vmul.f32 %v264, %v823
  %v905 = vmul.f32 %v265, %v825
  %v906 = vmul.f32 %v266, %v827
  %v907 = vmul.f32 %v267, %v829
  %v908 = vmul.f32 %v268, %v831
  %v909 = vmul.f32 %v269, %v833
  %v910 = vmul.f32 %v270, %v835
  %v911 = vmul.f32 %v271, %v837
  %v912 = vmul.f32 %v272, %v839
  %v913 = vmul.f32 %v273, %v841
  %v914 = vmul.f32 %v274, %v843
  %v915 = vmul.f32 %v275, %v845
  %v916 = vmul.f32 %v276, %v847
  %v917 = vmul.f32 %v277, %v849
  %v918 = vmul.f32 %v278, %v851
  %v919 = vmul.f32 %v279, %v853
  %v920 = vmul.f32 %v280, %v855
  %v921 = vmul.f32 %v281, %v857
  %v922 = vpack.c.bf16 %v859, %v858
  %v923 = vpack.c.bf16 %v861, %v860
  %v924 = vpack.c.bf16 %v863, %v862
  %v925 = vpack.c.bf16 %v865, %v864
  %v926 = vpack.c.bf16 %v867, %v866
  %v927 = vpack.c.bf16 %v869, %v868
  %v928 = vpack.c.bf16 %v871, %v870
  %v929 = vpack.c.bf16 %v873, %v872
  %v930 = vpack.c.bf16 %v875, %v874
  %v931 = vpack.c.bf16 %v877, %v876
  %v932 = vpack.c.bf16 %v879, %v878
  %v933 = vpack.c.bf16 %v881, %v880
  %v934 = vpack.c.bf16 %v883, %v882
  %v935 = vpack.c.bf16 %v885, %v884
  %v936 = vpack.c.bf16 %v887, %v886
  %v937 = vpack.c.bf16 %v889, %v888
  %v938 = vpack.c.bf16 %v891, %v890
  %v939 = vpack.c.bf16 %v893, %v892
  %v940 = vpack.c.bf16 %v895, %v894
  %v941 = vpack.c.bf16 %v897, %v896
  %v942 = vpack.c.bf16 %v899, %v898
  %v943 = vpack.c.bf16 %v901, %v900
  %v944 = vpack.c.bf16 %v903, %v902
  %v945 = vpack.c.bf16 %v905, %v904
  %v946 = vpack.c.bf16 %v907, %v906
  %v947 = vpack.c.bf16 %v909, %v908
  %v948 = vpack.c.bf16 %v911, %v910
  %v949 = vpack.c.bf16 %v913, %v912
  %v950 = vpack.c.bf16 %v915, %v914
  %v951 = vpack.c.bf16 %v917, %v916
  %v952 = vpack.c.bf16 %v919, %v918
  %v953 = vpack.c.bf16 %v921, %v920
  %v986 = vunpack.c.l.b16 %v922
  %v987 = vunpack.c.h.b16 %v922
  %v988 = vunpack.c.l.b16 %v923
  %v989 = vunpack.c.h.b16 %v923
  %v990 = vunpack.c.l.b16 %v924
  %v991 = vunpack.c.h.b16 %v924
  %v992 = vunpack.c.l.b16 %v925
  %v993 = vunpack.c.h.b16 %v925
  %v994 = vunpack.c.l.b16 %v926
  %v995 = vunpack.c.h.b16 %v926
  %v996 = vunpack.c.l.b16 %v927
  %v997 = vunpack.c.h.b16 %v927
  %v998 = vunpack.c.l.b16 %v928
  %v999 = vunpack.c.h.b16 %v928
  %v1000 = vunpack.c.l.b16 %v929
  %v1001 = vunpack.c.h.b16 %v929
  %v1002 = vunpack.c.l.b16 %v930
  %v1003 = vunpack.c.h.b16 %v930
  %v1004 = vunpack.c.l.b16 %v931
  %v1005 = vunpack.c.h.b16 %v931
  %v1006 = vunpack.c.l.b16 %v932
  %v1007 = vunpack.c.h.b16 %v932
  %v1008 = vunpack.c.l.b16 %v933
  %v1009 = vunpack.c.h.b16 %v933
  %v1010 = vunpack.c.l.b16 %v934
  %v1011 = vunpack.c.h.b16 %v934
  %v1012 = vunpack.c.l.b16 %v935
  %v1013 = vunpack.c.h.b16 %v935
  %v1014 = vunpack.c.l.b16 %v936
  %v1015 = vunpack.c.h.b16 %v936
  %v1016 = vunpack.c.l.b16 %v937
  %v1017 = vunpack.c.h.b16 %v937
  %v1018 = vunpack.c.l.b16 %v938
  %v1019 = vunpack.c.h.b16 %v938
  %v1020 = vunpack.c.l.b16 %v939
  %v1021 = vunpack.c.h.b16 %v939
  %v1022 = vunpack.c.l.b16 %v940
  %v1023 = vunpack.c.h.b16 %v940
  %v1024 = vunpack.c.l.b16 %v941
  %v1025 = vunpack.c.h.b16 %v941
  %v1026 = vunpack.c.l.b16 %v942
  %v1027 = vunpack.c.h.b16 %v942
  %v1028 = vunpack.c.l.b16 %v943
  %v1029 = vunpack.c.h.b16 %v943
  %v1030 = vunpack.c.l.b16 %v944
  %v1031 = vunpack.c.h.b16 %v944
  %v1032 = vunpack.c.l.b16 %v945
  %v1033 = vunpack.c.h.b16 %v945
  %v1034 = vunpack.c.l.b16 %v946
  %v1035 = vunpack.c.h.b16 %v946
  %v1036 = vunpack.c.l.b16 %v947
  %v1037 = vunpack.c.h.b16 %v947
  %v1038 = vunpack.c.l.b16 %v948
  %v1039 = vunpack.c.h.b16 %v948
  %v1040 = vunpack.c.l.b16 %v949
  %v1041 = vunpack.c.h.b16 %v949
  %v1042 = vunpack.c.l.b16 %v950
  %v1043 = vunpack.c.h.b16 %v950
  %v1044 = vunpack.c.l.b16 %v951
  %v1045 = vunpack.c.h.b16 %v951
  %v1046 = vunpack.c.l.b16 %v952
  %v1047 = vunpack.c.h.b16 %v952
  %v1048 = vunpack.c.l.b16 %v953
  %v1049 = vunpack.c.h.b16 %v953
  %v1050 = vpack.c.b16 %v986, %v986
  %v1051 = vpack.c.b16 %v987, %v987
  %v1052 = vpack.c.b16 %v988, %v988
  %v1053 = vpack.c.b16 %v989, %v989
  %v1054 = vpack.c.b16 %v990, %v990
  %v1055 = vpack.c.b16 %v991, %v991
  %v1056 = vpack.c.b16 %v992, %v992
  %v1057 = vpack.c.b16 %v993, %v993
  %v1058 = vpack.c.b16 %v994, %v994
  %v1059 = vpack.c.b16 %v995, %v995
  %v1060 = vpack.c.b16 %v996, %v996
  %v1061 = vpack.c.b16 %v997, %v997
  %v1062 = vpack.c.b16 %v998, %v998
  %v1063 = vpack.c.b16 %v999, %v999
  %v1064 = vpack.c.b16 %v1000, %v1000
  %v1065 = vpack.c.b16 %v1001, %v1001
  %v1066 = vpack.c.b16 %v1002, %v1002
  %v1067 = vpack.c.b16 %v1003, %v1003
  %v1068 = vpack.c.b16 %v1004, %v1004
  %v1069 = vpack.c.b16 %v1005, %v1005
  %v1070 = vpack.c.b16 %v1006, %v1006
  %v1071 = vpack.c.b16 %v1007, %v1007
  %v1072 = vpack.c.b16 %v1008, %v1008
  %v1073 = vpack.c.b16 %v1009, %v1009
  %v1074 = vpack.c.b16 %v1010, %v1010
  %v1075 = vpack.c.b16 %v1011, %v1011
  %v1076 = vpack.c.b16 %v1012, %v1012
  %v1077 = vpack.c.b16 %v1013, %v1013
  %v1078 = vpack.c.b16 %v1014, %v1014
  %v1079 = vpack.c.b16 %v1015, %v1015
  %v1080 = vpack.c.b16 %v1016, %v1016
  %v1081 = vpack.c.b16 %v1017, %v1017
  %v1082 = vpack.c.b16 %v1018, %v1018
  %v1083 = vpack.c.b16 %v1019, %v1019
  %v1084 = vpack.c.b16 %v1020, %v1020
  %v1085 = vpack.c.b16 %v1021, %v1021
  %v1086 = vpack.c.b16 %v1022, %v1022
  %v1087 = vpack.c.b16 %v1023, %v1023
  %v1088 = vpack.c.b16 %v1024, %v1024
  %v1089 = vpack.c.b16 %v1025, %v1025
  %v1090 = vpack.c.b16 %v1026, %v1026
  %v1091 = vpack.c.b16 %v1027, %v1027
  %v1092 = vpack.c.b16 %v1028, %v1028
  %v1093 = vpack.c.b16 %v1029, %v1029
  %v1094 = vpack.c.b16 %v1030, %v1030
  %v1095 = vpack.c.b16 %v1031, %v1031
  %v1096 = vpack.c.b16 %v1032, %v1032
  %v1097 = vpack.c.b16 %v1033, %v1033
  %v1098 = vpack.c.b16 %v1034, %v1034
  %v1099 = vpack.c.b16 %v1035, %v1035
  %v1100 = vpack.c.b16 %v1036, %v1036
  %v1101 = vpack.c.b16 %v1037, %v1037
  %v1102 = vpack.c.b16 %v1038, %v1038
  %v1103 = vpack.c.b16 %v1039, %v1039
  %v1104 = vpack.c.b16 %v1040, %v1040
  %v1105 = vpack.c.b16 %v1041, %v1041
  %v1106 = vpack.c.b16 %v1042, %v1042
  %v1107 = vpack.c.b16 %v1043, %v1043
  %v1108 = vpack.c.b16 %v1044, %v1044
  %v1109 = vpack.c.b16 %v1045, %v1045
  %v1110 = vpack.c.b16 %v1046, %v1046
  %v1111 = vpack.c.b16 %v1047, %v1047
  %v1112 = vpack.c.b16 %v1048, %v1048
  %v1113 = vpack.c.b16 %v1049, %v1049
  %1178 = vst [vmem:[%s3] sm:$0xf] %v1050
  %1179 = vst [vmem:[%s3 + $0x4] sm:$0xf] %v1051
  %1180 = vst [vmem:[%s3 + $0x8] sm:$0xf] %v1052
  %1181 = vst [vmem:[%s3 + $0xc] sm:$0xf] %v1053
  %1182 = vst [vmem:[%s3 + $0x10] sm:$0xf] %v1054
  %1183 = vst [vmem:[%s3 + $0x14] sm:$0xf] %v1055
  %1184 = vst [vmem:[%s3 + $0x18] sm:$0xf] %v1056
  %1185 = vst [vmem:[%s3 + $0x1c] sm:$0xf] %v1057
  %1186 = vst [vmem:[%s3 + $0x20] sm:$0xf] %v1058
  %1187 = vst [vmem:[%s3 + $0x24] sm:$0xf] %v1059
  %1188 = vst [vmem:[%s3 + $0x28] sm:$0xf] %v1060
  %1189 = vst [vmem:[%s3 + $0x2c] sm:$0xf] %v1061
  %1190 = vst [vmem:[%s3 + $0x30] sm:$0xf] %v1062
  %1191 = vst [vmem:[%s3 + $0x34] sm:$0xf] %v1063
  %1192 = vst [vmem:[%s3 + $0x38] sm:$0xf] %v1064
  %1193 = vst [vmem:[%s3 + $0x3c] sm:$0xf] %v1065
  %1194 = vst [vmem:[%s3 + $0x40] sm:$0xf] %v1066
  %1195 = vst [vmem:[%s3 + $0x44] sm:$0xf] %v1067
  %1196 = vst [vmem:[%s3 + $0x48] sm:$0xf] %v1068
  %1197 = vst [vmem:[%s3 + $0x4c] sm:$0xf] %v1069
  %1198 = vst [vmem:[%s3 + $0x50] sm:$0xf] %v1070
  %1199 = vst [vmem:[%s3 + $0x54] sm:$0xf] %v1071
  %1200 = vst [vmem:[%s3 + $0x58] sm:$0xf] %v1072
  %1201 = vst [vmem:[%s3 + $0x5c] sm:$0xf] %v1073
  %1202 = vst [vmem:[%s3 + $0x60] sm:$0xf] %v1074
  %1203 = vst [vmem:[%s3 + $0x64] sm:$0xf] %v1075
  %1204 = vst [vmem:[%s3 + $0x68] sm:$0xf] %v1076
  %1205 = vst [vmem:[%s3 + $0x6c] sm:$0xf] %v1077
  %1206 = vst [vmem:[%s3 + $0x70] sm:$0xf] %v1078
  %1207 = vst [vmem:[%s3 + $0x74] sm:$0xf] %v1079
  %1208 = vst [vmem:[%s3 + $0x78] sm:$0xf] %v1080
  %1209 = vst [vmem:[%s3 + $0x7c] sm:$0xf] %v1081
  %1210 = vst [vmem:[%s3 + $0x80] sm:$0xf] %v1082
  %1211 = vst [vmem:[%s3 + $0x84] sm:$0xf] %v1083
  %1212 = vst [vmem:[%s3 + $0x88] sm:$0xf] %v1084
  %1213 = vst [vmem:[%s3 + $0x8c] sm:$0xf] %v1085
  %1214 = vst [vmem:[%s3 + $0x90] sm:$0xf] %v1086
  %1215 = vst [vmem:[%s3 + $0x94] sm:$0xf] %v1087
  %1216 = vst [vmem:[%s3 + $0x98] sm:$0xf] %v1088
  %1217 = vst [vmem:[%s3 + $0x9c] sm:$0xf] %v1089
  %1218 = vst [vmem:[%s3 + $0xa0] sm:$0xf] %v1090
  %1219 = vst [vmem:[%s3 + $0xa4] sm:$0xf] %v1091
  %1220 = vst [vmem:[%s3 + $0xa8] sm:$0xf] %v1092
  %1221 = vst [vmem:[%s3 + $0xac] sm:$0xf] %v1093
  %1222 = vst [vmem:[%s3 + $0xb0] sm:$0xf] %v1094
  %1223 = vst [vmem:[%s3 + $0xb4] sm:$0xf] %v1095
  %1224 = vst [vmem:[%s3 + $0xb8] sm:$0xf] %v1096
  %1225 = vst [vmem:[%s3 + $0xbc] sm:$0xf] %v1097
  %1226 = vst [vmem:[%s3 + $0xc0] sm:$0xf] %v1098
  %1227 = vst [vmem:[%s3 + $0xc4] sm:$0xf] %v1099
  %1228 = vst [vmem:[%s3 + $0xc8] sm:$0xf] %v1100
  %1229 = vst [vmem:[%s3 + $0xcc] sm:$0xf] %v1101
  %1230 = vst [vmem:[%s3 + $0xd0] sm:$0xf] %v1102
  %1231 = vst [vmem:[%s3 + $0xd4] sm:$0xf] %v1103
  %1232 = vst [vmem:[%s3 + $0xd8] sm:$0xf] %v1104
  %1233 = vst [vmem:[%s3 + $0xdc] sm:$0xf] %v1105
  %1234 = vst [vmem:[%s3 + $0xe0] sm:$0xf] %v1106
  %1235 = vst [vmem:[%s3 + $0xe4] sm:$0xf] %v1107
  %1236 = vst [vmem:[%s3 + $0xe8] sm:$0xf] %v1108
  %1237 = vst [vmem:[%s3 + $0xec] sm:$0xf] %v1109
  %1238 = vst [vmem:[%s3 + $0xf0] sm:$0xf] %v1110
  %1239 = vst [vmem:[%s3 + $0xf4] sm:$0xf] %v1111
  %1240 = vst [vmem:[%s3 + $0xf8] sm:$0xf] %v1112
  %1241 = vst [vmem:[%s3 + $0xfc] sm:$0xf] %v1113
  %v1242 = vld [vmem:[%s2] sm:$0xf]
  %v1243 = vld [vmem:[%s2 + $0x4] sm:$0xf]
  %v1244 = vld [vmem:[%s2 + $0x8] sm:$0xf]
  %v1245 = vld [vmem:[%s2 + $0xc] sm:$0xf]
  %v1246 = vld [vmem:[%s2 + $0x10] sm:$0xf]
  %v1247 = vld [vmem:[%s2 + $0x14] sm:$0xf]
  %v1248 = vld [vmem:[%s2 + $0x18] sm:$0xf]
  %v1249 = vld [vmem:[%s2 + $0x1c] sm:$0xf]
  %v1250 = vld [vmem:[%s2 + $0x20] sm:$0xf]
  %v1251 = vld [vmem:[%s2 + $0x24] sm:$0xf]
  %v1252 = vld [vmem:[%s2 + $0x28] sm:$0xf]
  %v1253 = vld [vmem:[%s2 + $0x2c] sm:$0xf]
  %v1254 = vld [vmem:[%s2 + $0x30] sm:$0xf]
  %v1255 = vld [vmem:[%s2 + $0x34] sm:$0xf]
  %v1256 = vld [vmem:[%s2 + $0x38] sm:$0xf]
  %v1257 = vld [vmem:[%s2 + $0x3c] sm:$0xf]
  %v1274 = vunpack.c.l.b16 %v1242
  %v1275 = vunpack.c.l.b16 %v1243
  %v1276 = vunpack.c.l.b16 %v1244
  %v1277 = vunpack.c.l.b16 %v1245
  %v1278 = vunpack.c.l.b16 %v1246
  %v1279 = vunpack.c.l.b16 %v1247
  %v1280 = vunpack.c.l.b16 %v1248
  %v1281 = vunpack.c.l.b16 %v1249
  %v1282 = vunpack.c.l.b16 %v1250
  %v1283 = vunpack.c.l.b16 %v1251
  %v1284 = vunpack.c.l.b16 %v1252
  %v1285 = vunpack.c.l.b16 %v1253
  %v1286 = vunpack.c.l.b16 %v1254
  %v1287 = vunpack.c.l.b16 %v1255
  %v1288 = vunpack.c.l.b16 %v1256
  %v1289 = vunpack.c.l.b16 %v1257
  %v1290 = vpack.c.b16 %v1275, %v1274
  %v1291 = vpack.c.b16 %v1277, %v1276
  %v1292 = vpack.c.b16 %v1279, %v1278
  %v1293 = vpack.c.b16 %v1281, %v1280
  %v1294 = vpack.c.b16 %v1283, %v1282
  %v1295 = vpack.c.b16 %v1285, %v1284
  %v1296 = vpack.c.b16 %v1287, %v1286
  %v1297 = vpack.c.b16 %v1289, %v1288
  %1306 = vmatprep.subr.bf16.mxu0 0
  %1307 = vmatpush1.bf16.msra.mxu0 %v1290
  %1308 = vmatprep.subr.bf16.mxu0 0
  %1309 = vmatpush1.bf16.msra.mxu0 %v1291
  %1310 = vmatprep.subr.bf16.mxu0 0
  %1311 = vmatpush1.bf16.msra.mxu0 %v1292
  %1312 = vmatprep.subr.bf16.mxu0 0
  %1313 = vmatpush1.bf16.msra.mxu0 %v1293
  %1314 = vmatprep.subr.bf16.mxu0 0
  %1315 = vmatpush1.bf16.msra.mxu0 %v1294
  %1316 = vmatprep.subr.bf16.mxu0 0
  %1317 = vmatpush1.bf16.msra.mxu0 %v1295
  %1318 = vmatprep.subr.bf16.mxu0 0
  %1319 = vmatpush1.bf16.msra.mxu0 %v1296
  %1320 = vmatprep.subr.bf16.mxu0 0
  %1321 = vmatpush1.bf16.msra.mxu0 %v1297
  %1322 = vmatprep.subr.bf16.mxu0 0
  %1323 = vmatpush1.bf16.msra.mxu0 0
  %1324 = vmatprep.subr.bf16.mxu0 0
  %1325 = vmatpush1.bf16.msra.mxu0 0
  %1326 = vmatprep.subr.bf16.mxu0 0
  %1327 = vmatpush1.bf16.msra.mxu0 0
  %1328 = vmatprep.subr.bf16.mxu0 0
  %1329 = vmatpush1.bf16.msra.mxu0 0
  %1330 = vmatprep.subr.bf16.mxu0 0
  %1331 = vmatpush1.bf16.msra.mxu0 0
  %1332 = vmatprep.subr.bf16.mxu0 0
  %1333 = vmatpush1.bf16.msra.mxu0 0
  %1334 = vmatprep.subr.bf16.mxu0 0
  %1335 = vmatpush1.bf16.msra.mxu0 0
  %1336 = vmatprep.subr.bf16.mxu0 0
  %1337 = vmatpush1.bf16.msra.mxu0 0
  %1338 = vmatprep.mubr.bf16.mxu0 0
  %1339 = vmatmul.mubr.bf16.gmra.mrb[0].mxu0 %v922
  %v1340 = vpop.f32.mrb[0].mxu0
  %v1341 = vadd.f32 0.0, %v1340
  %v1342 = vpop.f32.mrb[0].mxu0
  %v1343 = vpop.f32.mrb[0].mxu0
  %v1344 = vadd.f32 0.0, %v1343
  %v1345 = vpop.f32.mrb[0].mxu0
  %1346 = vmatprep.mubr.bf16.mxu0 0
  %1347 = vmatmul.mubr.bf16.gmra.mrb[0].mxu0 %v923
  %v1348 = vpop.f32.mrb[0].mxu0
  %v1349 = vadd.f32 0.0, %v1348
  %v1350 = vpop.f32.mrb[0].mxu0
  %v1351 = vpop.f32.mrb[0].mxu0
  %v1352 = vadd.f32 0.0, %v1351
  %v1353 = vpop.f32.mrb[0].mxu0
  %1354 = vmatprep.mubr.bf16.mxu0 0
  %1355 = vmatmul.mubr.bf16.gmra.mrb[0].mxu0 %v924
  %v1356 = vpop.f32.mrb[0].mxu0
  %v1357 = vadd.f32 0.0, %v1356
  %v1358 = vpop.f32.mrb[0].mxu0
  %v1359 = vpop.f32.mrb[0].mxu0
  %v1360 = vadd.f32 0.0, %v1359
  %v1361 = vpop.f32.mrb[0].mxu0
  %1362 = vmatprep.mubr.bf16.mxu0 0
  %1363 = vmatmul.mubr.bf16.gmra.mrb[0].mxu0 %v925
  %v1364 = vpop.f32.mrb[0].mxu0
  %v1365 = vadd.f32 0.0, %v1364
  %v1366 = vpop.f32.mrb[0].mxu0
  %v1367 = vpop.f32.mrb[0].mxu0
  %v1368 = vadd.f32 0.0, %v1367
  %v1369 = vpop.f32.mrb[0].mxu0
  %1370 = vmatprep.mubr.bf16.mxu0 0
  %1371 = vmatmul.mubr.bf16.gmra.mrb[0].mxu0 %v926
  %v1372 = vpop.f32.mrb[0].mxu0
  %v1373 = vadd.f32 0.0, %v1372
  %v1374 = vpop.f32.mrb[0].mxu0
  %v1375 = vpop.f32.mrb[0].mxu0
  %v1376 = vadd.f32 0.0, %v1375
  %v1377 = vpop.f32.mrb[0].mxu0
  %1378 = vmatprep.mubr.bf16.mxu0 0
  %1379 = vmatmul.mubr.bf16.gmra.mrb[0].mxu0 %v927
  %v1380 = vpop.f32.mrb[0].mxu0
  %v1381 = vadd.f32 0.0, %v1380
  %v1382 = vpop.f32.mrb[0].mxu0
  %v1383 = vpop.f32.mrb[0].mxu0
  %v1384 = vadd.f32 0.0, %v1383
  %v1385 = vpop.f32.mrb[0].mxu0
  %1386 = vmatprep.mubr.bf16.mxu0 0
  %1387 = vmatmul.mubr.bf16.gmra.mrb[0].mxu0 %v928
  %v1388 = vpop.f32.mrb[0].mxu0
  %v1389 = vadd.f32 0.0, %v1388
  %v1390 = vpop.f32.mrb[0].mxu0
  %v1391 = vpop.f32.mrb[0].mxu0
  %v1392 = vadd.f32 0.0, %v1391
  %v1393 = vpop.f32.mrb[0].mxu0
  %1394 = vmatprep.mubr.bf16.mxu0 0
  %1395 = vmatmul.mubr.bf16.gmra.mrb[0].mxu0 %v929
  %v1396 = vpop.f32.mrb[0].mxu0
  %v1397 = vadd.f32 0.0, %v1396
  %v1398 = vpop.f32.mrb[0].mxu0
  %v1399 = vpop.f32.mrb[0].mxu0
  %v1400 = vadd.f32 0.0, %v1399
  %v1401 = vpop.f32.mrb[0].mxu0
  %1402 = vmatprep.mubr.bf16.mxu0 0
  %1403 = vmatmul.mubr.bf16.gmra.mrb[0].mxu0 %v930
  %v1404 = vpop.f32.mrb[0].mxu0
  %v1405 = vadd.f32 0.0, %v1404
  %v1406 = vpop.f32.mrb[0].mxu0
  %v1407 = vpop.f32.mrb[0].mxu0
  %v1408 = vadd.f32 0.0, %v1407
  %v1409 = vpop.f32.mrb[0].mxu0
  %1410 = vmatprep.mubr.bf16.mxu0 0
  %1411 = vmatmul.mubr.bf16.gmra.mrb[0].mxu0 %v931
  %v1412 = vpop.f32.mrb[0].mxu0
  %v1413 = vadd.f32 0.0, %v1412
  %v1414 = vpop.f32.mrb[0].mxu0
  %v1415 = vpop.f32.mrb[0].mxu0
  %v1416 = vadd.f32 0.0, %v1415
  %v1417 = vpop.f32.mrb[0].mxu0
  %1418 = vmatprep.mubr.bf16.mxu0 0
  %1419 = vmatmul.mubr.bf16.gmra.mrb[0].mxu0 %v932
  %v1420 = vpop.f32.mrb[0].mxu0
  %v1421 = vadd.f32 0.0, %v1420
  %v1422 = vpop.f32.mrb[0].mxu0
  %v1423 = vpop.f32.mrb[0].mxu0
  %v1424 = vadd.f32 0.0, %v1423
  %v1425 = vpop.f32.mrb[0].mxu0
  %1426 = vmatprep.mubr.bf16.mxu0 0
  %1427 = vmatmul.mubr.bf16.gmra.mrb[0].mxu0 %v933
  %v1428 = vpop.f32.mrb[0].mxu0
  %v1429 = vadd.f32 0.0, %v1428
  %v1430 = vpop.f32.mrb[0].mxu0
  %v1431 = vpop.f32.mrb[0].mxu0
  %v1432 = vadd.f32 0.0, %v1431
  %v1433 = vpop.f32.mrb[0].mxu0
  %1434 = vmatprep.mubr.bf16.mxu0 0
  %1435 = vmatmul.mubr.bf16.gmra.mrb[0].mxu0 %v934
  %v1436 = vpop.f32.mrb[0].mxu0
  %v1437 = vadd.f32 0.0, %v1436
  %v1438 = vpop.f32.mrb[0].mxu0
  %v1439 = vpop.f32.mrb[0].mxu0
  %v1440 = vadd.f32 0.0, %v1439
  %v1441 = vpop.f32.mrb[0].mxu0
  %1442 = vmatprep.mubr.bf16.mxu0 0
  %1443 = vmatmul.mubr.bf16.gmra.mrb[0].mxu0 %v935
  %v1444 = vpop.f32.mrb[0].mxu0
  %v1445 = vadd.f32 0.0, %v1444
  %v1446 = vpop.f32.mrb[0].mxu0
  %v1447 = vpop.f32.mrb[0].mxu0
  %v1448 = vadd.f32 0.0, %v1447
  %v1449 = vpop.f32.mrb[0].mxu0
  %1450 = vmatprep.mubr.bf16.mxu0 0
  %1451 = vmatmul.mubr.bf16.gmra.mrb[0].mxu0 %v936
  %v1452 = vpop.f32.mrb[0].mxu0
  %v1453 = vadd.f32 0.0, %v1452
  %v1454 = vpop.f32.mrb[0].mxu0
  %v1455 = vpop.f32.mrb[0].mxu0
  %v1456 = vadd.f32 0.0, %v1455
  %v1457 = vpop.f32.mrb[0].mxu0
  %1458 = vmatprep.mubr.bf16.mxu0 0
  %1459 = vmatmul.mubr.bf16.gmra.mrb[0].mxu0 %v937
  %v1460 = vpop.f32.mrb[0].mxu0
  %v1461 = vadd.f32 0.0, %v1460
  %v1462 = vpop.f32.mrb[0].mxu0
  %v1463 = vpop.f32.mrb[0].mxu0
  %v1464 = vadd.f32 0.0, %v1463
  %v1465 = vpop.f32.mrb[0].mxu0
  %1466 = vmatprep.mubr.bf16.mxu0 0
  %1467 = vmatmul.mubr.bf16.gmra.mrb[0].mxu0 %v938
  %v1468 = vpop.f32.mrb[0].mxu0
  %v1469 = vadd.f32 0.0, %v1468
  %v1470 = vpop.f32.mrb[0].mxu0
  %v1471 = vpop.f32.mrb[0].mxu0
  %v1472 = vadd.f32 0.0, %v1471
  %v1473 = vpop.f32.mrb[0].mxu0
  %1474 = vmatprep.mubr.bf16.mxu0 0
  %1475 = vmatmul.mubr.bf16.gmra.mrb[0].mxu0 %v939
  %v1476 = vpop.f32.mrb[0].mxu0
  %v1477 = vadd.f32 0.0, %v1476
  %v1478 = vpop.f32.mrb[0].mxu0
  %v1479 = vpop.f32.mrb[0].mxu0
  %v1480 = vadd.f32 0.0, %v1479
  %v1481 = vpop.f32.mrb[0].mxu0
  %1482 = vmatprep.mubr.bf16.mxu0 0
  %1483 = vmatmul.mubr.bf16.gmra.mrb[0].mxu0 %v940
  %v1484 = vpop.f32.mrb[0].mxu0
  %v1485 = vadd.f32 0.0, %v1484
  %v1486 = vpop.f32.mrb[0].mxu0
  %v1487 = vpop.f32.mrb[0].mxu0
  %v1488 = vadd.f32 0.0, %v1487
  %v1489 = vpop.f32.mrb[0].mxu0
  %1490 = vmatprep.mubr.bf16.mxu0 0
  %1491 = vmatmul.mubr.bf16.gmra.mrb[0].mxu0 %v941
  %v1492 = vpop.f32.mrb[0].mxu0
  %v1493 = vadd.f32 0.0, %v1492
  %v1494 = vpop.f32.mrb[0].mxu0
  %v1495 = vpop.f32.mrb[0].mxu0
  %v1496 = vadd.f32 0.0, %v1495
  %v1497 = vpop.f32.mrb[0].mxu0
  %1498 = vmatprep.mubr.bf16.mxu0 0
  %1499 = vmatmul.mubr.bf16.gmra.mrb[0].mxu0 %v942
  %v1500 = vpop.f32.mrb[0].mxu0
  %v1501 = vadd.f32 0.0, %v1500
  %v1502 = vpop.f32.mrb[0].mxu0
  %v1503 = vpop.f32.mrb[0].mxu0
  %v1504 = vadd.f32 0.0, %v1503
  %v1505 = vpop.f32.mrb[0].mxu0
  %1506 = vmatprep.mubr.bf16.mxu0 0
  %1507 = vmatmul.mubr.bf16.gmra.mrb[0].mxu0 %v943
  %v1508 = vpop.f32.mrb[0].mxu0
  %v1509 = vadd.f32 0.0, %v1508
  %v1510 = vpop.f32.mrb[0].mxu0
  %v1511 = vpop.f32.mrb[0].mxu0
  %v1512 = vadd.f32 0.0, %v1511
  %v1513 = vpop.f32.mrb[0].mxu0
  %1514 = vmatprep.mubr.bf16.mxu0 0
  %1515 = vmatmul.mubr.bf16.gmra.mrb[0].mxu0 %v944
  %v1516 = vpop.f32.mrb[0].mxu0
  %v1517 = vadd.f32 0.0, %v1516
  %v1518 = vpop.f32.mrb[0].mxu0
  %v1519 = vpop.f32.mrb[0].mxu0
  %v1520 = vadd.f32 0.0, %v1519
  %v1521 = vpop.f32.mrb[0].mxu0
  %1522 = vmatprep.mubr.bf16.mxu0 0
  %1523 = vmatmul.mubr.bf16.gmra.mrb[0].mxu0 %v945
  %v1524 = vpop.f32.mrb[0].mxu0
  %v1525 = vadd.f32 0.0, %v1524
  %v1526 = vpop.f32.mrb[0].mxu0
  %v1527 = vpop.f32.mrb[0].mxu0
  %v1528 = vadd.f32 0.0, %v1527
  %v1529 = vpop.f32.mrb[0].mxu0
  %1530 = vmatprep.mubr.bf16.mxu0 0
  %1531 = vmatmul.mubr.bf16.gmra.mrb[0].mxu0 %v946
  %v1532 = vpop.f32.mrb[0].mxu0
  %v1533 = vadd.f32 0.0, %v1532
  %v1534 = vpop.f32.mrb[0].mxu0
  %v1535 = vpop.f32.mrb[0].mxu0
  %v1536 = vadd.f32 0.0, %v1535
  %v1537 = vpop.f32.mrb[0].mxu0
  %1538 = vmatprep.mubr.bf16.mxu0 0
  %1539 = vmatmul.mubr.bf16.gmra.mrb[0].mxu0 %v947
  %v1540 = vpop.f32.mrb[0].mxu0
  %v1541 = vadd.f32 0.0, %v1540
  %v1542 = vpop.f32.mrb[0].mxu0
  %v1543 = vpop.f32.mrb[0].mxu0
  %v1544 = vadd.f32 0.0, %v1543
  %v1545 = vpop.f32.mrb[0].mxu0
  %1546 = vmatprep.mubr.bf16.mxu0 0
  %1547 = vmatmul.mubr.bf16.gmra.mrb[0].mxu0 %v948
  %v1548 = vpop.f32.mrb[0].mxu0
  %v1549 = vadd.f32 0.0, %v1548
  %v1550 = vpop.f32.mrb[0].mxu0
  %v1551 = vpop.f32.mrb[0].mxu0
  %v1552 = vadd.f32 0.0, %v1551
  %v1553 = vpop.f32.mrb[0].mxu0
  %1554 = vmatprep.mubr.bf16.mxu0 0
  %1555 = vmatmul.mubr.bf16.gmra.mrb[0].mxu0 %v949
  %v1556 = vpop.f32.mrb[0].mxu0
  %v1557 = vadd.f32 0.0, %v1556
  %v1558 = vpop.f32.mrb[0].mxu0
  %v1559 = vpop.f32.mrb[0].mxu0
  %v1560 = vadd.f32 0.0, %v1559
  %v1561 = vpop.f32.mrb[0].mxu0
  %1562 = vmatprep.mubr.bf16.mxu0 0
  %1563 = vmatmul.mubr.bf16.gmra.mrb[0].mxu0 %v950
  %v1564 = vpop.f32.mrb[0].mxu0
  %v1565 = vadd.f32 0.0, %v1564
  %v1566 = vpop.f32.mrb[0].mxu0
  %v1567 = vpop.f32.mrb[0].mxu0
  %v1568 = vadd.f32 0.0, %v1567
  %v1569 = vpop.f32.mrb[0].mxu0
  %1570 = vmatprep.mubr.bf16.mxu0 0
  %1571 = vmatmul.mubr.bf16.gmra.mrb[0].mxu0 %v951
  %v1572 = vpop.f32.mrb[0].mxu0
  %v1573 = vadd.f32 0.0, %v1572
  %v1574 = vpop.f32.mrb[0].mxu0
  %v1575 = vpop.f32.mrb[0].mxu0
  %v1576 = vadd.f32 0.0, %v1575
  %v1577 = vpop.f32.mrb[0].mxu0
  %1578 = vmatprep.mubr.bf16.mxu0 0
  %1579 = vmatmul.mubr.bf16.gmra.mrb[0].mxu0 %v952
  %v1580 = vpop.f32.mrb[0].mxu0
  %v1581 = vadd.f32 0.0, %v1580
  %v1582 = vpop.f32.mrb[0].mxu0
  %v1583 = vpop.f32.mrb[0].mxu0
  %v1584 = vadd.f32 0.0, %v1583
  %v1585 = vpop.f32.mrb[0].mxu0
  %1586 = vmatprep.mubr.bf16.mxu0 0
  %1587 = vmatmul.mubr.bf16.gmra.mrb[0].mxu0 %v953
  %v1588 = vpop.f32.mrb[0].mxu0
  %v1589 = vadd.f32 0.0, %v1588
  %v1590 = vpop.f32.mrb[0].mxu0
  %v1591 = vpop.f32.mrb[0].mxu0
  %v1592 = vadd.f32 0.0, %v1591
  %v1593 = vpop.f32.mrb[0].mxu0
  %1594 = vdwg.mxu0
  %v1595 = vpack.c.bf16 %v1344, %v1341
  %v1596 = vpack.c.bf16 %v1352, %v1349
  %v1597 = vpack.c.bf16 %v1360, %v1357
  %v1598 = vpack.c.bf16 %v1368, %v1365
  %v1599 = vpack.c.bf16 %v1376, %v1373
  %v1600 = vpack.c.bf16 %v1384, %v1381
  %v1601 = vpack.c.bf16 %v1392, %v1389
  %v1602 = vpack.c.bf16 %v1400, %v1397
  %v1603 = vpack.c.bf16 %v1408, %v1405
  %v1604 = vpack.c.bf16 %v1416, %v1413
  %v1605 = vpack.c.bf16 %v1424, %v1421
  %v1606 = vpack.c.bf16 %v1432, %v1429
  %v1607 = vpack.c.bf16 %v1440, %v1437
  %v1608 = vpack.c.bf16 %v1448, %v1445
  %v1609 = vpack.c.bf16 %v1456, %v1453
  %v1610 = vpack.c.bf16 %v1464, %v1461
  %v1611 = vpack.c.bf16 %v1472, %v1469
  %v1612 = vpack.c.bf16 %v1480, %v1477
  %v1613 = vpack.c.bf16 %v1488, %v1485
  %v1614 = vpack.c.bf16 %v1496, %v1493
  %v1615 = vpack.c.bf16 %v1504, %v1501
  %v1616 = vpack.c.bf16 %v1512, %v1509
  %v1617 = vpack.c.bf16 %v1520, %v1517
  %v1618 = vpack.c.bf16 %v1528, %v1525
  %v1619 = vpack.c.bf16 %v1536, %v1533
  %v1620 = vpack.c.bf16 %v1544, %v1541
  %v1621 = vpack.c.bf16 %v1552, %v1549
  %v1622 = vpack.c.bf16 %v1560, %v1557
  %v1623 = vpack.c.bf16 %v1568, %v1565
  %v1624 = vpack.c.bf16 %v1576, %v1573
  %v1625 = vpack.c.bf16 %v1584, %v1581
  %v1626 = vpack.c.bf16 %v1592, %v1589
  %v1659 = vunpack.c.l.b16 %v1595
  %v1660 = vunpack.c.h.b16 %v1595
  %v1661 = vunpack.c.l.b16 %v1596
  %v1662 = vunpack.c.h.b16 %v1596
  %v1663 = vunpack.c.l.b16 %v1597
  %v1664 = vunpack.c.h.b16 %v1597
  %v1665 = vunpack.c.l.b16 %v1598
  %v1666 = vunpack.c.h.b16 %v1598
  %v1667 = vunpack.c.l.b16 %v1599
  %v1668 = vunpack.c.h.b16 %v1599
  %v1669 = vunpack.c.l.b16 %v1600
  %v1670 = vunpack.c.h.b16 %v1600
  %v1671 = vunpack.c.l.b16 %v1601
  %v1672 = vunpack.c.h.b16 %v1601
  %v1673 = vunpack.c.l.b16 %v1602
  %v1674 = vunpack.c.h.b16 %v1602
  %v1675 = vunpack.c.l.b16 %v1603
  %v1676 = vunpack.c.h.b16 %v1603
  %v1677 = vunpack.c.l.b16 %v1604
  %v1678 = vunpack.c.h.b16 %v1604
  %v1679 = vunpack.c.l.b16 %v1605
  %v1680 = vunpack.c.h.b16 %v1605
  %v1681 = vunpack.c.l.b16 %v1606
  %v1682 = vunpack.c.h.b16 %v1606
  %v1683 = vunpack.c.l.b16 %v1607
  %v1684 = vunpack.c.h.b16 %v1607
  %v1685 = vunpack.c.l.b16 %v1608
  %v1686 = vunpack.c.h.b16 %v1608
  %v1687 = vunpack.c.l.b16 %v1609
  %v1688 = vunpack.c.h.b16 %v1609
  %v1689 = vunpack.c.l.b16 %v1610
  %v1690 = vunpack.c.h.b16 %v1610
  %v1691 = vunpack.c.l.b16 %v1611
  %v1692 = vunpack.c.h.b16 %v1611
  %v1693 = vunpack.c.l.b16 %v1612
  %v1694 = vunpack.c.h.b16 %v1612
  %v1695 = vunpack.c.l.b16 %v1613
  %v1696 = vunpack.c.h.b16 %v1613
  %v1697 = vunpack.c.l.b16 %v1614
  %v1698 = vunpack.c.h.b16 %v1614
  %v1699 = vunpack.c.l.b16 %v1615
  %v1700 = vunpack.c.h.b16 %v1615
  %v1701 = vunpack.c.l.b16 %v1616
  %v1702 = vunpack.c.h.b16 %v1616
  %v1703 = vunpack.c.l.b16 %v1617
  %v1704 = vunpack.c.h.b16 %v1617
  %v1705 = vunpack.c.l.b16 %v1618
  %v1706 = vunpack.c.h.b16 %v1618
  %v1707 = vunpack.c.l.b16 %v1619
  %v1708 = vunpack.c.h.b16 %v1619
  %v1709 = vunpack.c.l.b16 %v1620
  %v1710 = vunpack.c.h.b16 %v1620
  %v1711 = vunpack.c.l.b16 %v1621
  %v1712 = vunpack.c.h.b16 %v1621
  %v1713 = vunpack.c.l.b16 %v1622
  %v1714 = vunpack.c.h.b16 %v1622
  %v1715 = vunpack.c.l.b16 %v1623
  %v1716 = vunpack.c.h.b16 %v1623
  %v1717 = vunpack.c.l.b16 %v1624
  %v1718 = vunpack.c.h.b16 %v1624
  %v1719 = vunpack.c.l.b16 %v1625
  %v1720 = vunpack.c.h.b16 %v1625
  %v1721 = vunpack.c.l.b16 %v1626
  %v1722 = vunpack.c.h.b16 %v1626
  %v1723 = vpack.c.b16 %v1659, %v1659
  %v1724 = vpack.c.b16 %v1660, %v1660
  %v1725 = vpack.c.b16 %v1661, %v1661
  %v1726 = vpack.c.b16 %v1662, %v1662
  %v1727 = vpack.c.b16 %v1663, %v1663
  %v1728 = vpack.c.b16 %v1664, %v1664
  %v1729 = vpack.c.b16 %v1665, %v1665
  %v1730 = vpack.c.b16 %v1666, %v1666
  %v1731 = vpack.c.b16 %v1667, %v1667
  %v1732 = vpack.c.b16 %v1668, %v1668
  %v1733 = vpack.c.b16 %v1669, %v1669
  %v1734 = vpack.c.b16 %v1670, %v1670
  %v1735 = vpack.c.b16 %v1671, %v1671
  %v1736 = vpack.c.b16 %v1672, %v1672
  %v1737 = vpack.c.b16 %v1673, %v1673
  %v1738 = vpack.c.b16 %v1674, %v1674
  %v1739 = vpack.c.b16 %v1675, %v1675
  %v1740 = vpack.c.b16 %v1676, %v1676
  %v1741 = vpack.c.b16 %v1677, %v1677
  %v1742 = vpack.c.b16 %v1678, %v1678
  %v1743 = vpack.c.b16 %v1679, %v1679
  %v1744 = vpack.c.b16 %v1680, %v1680
  %v1745 = vpack.c.b16 %v1681, %v1681
  %v1746 = vpack.c.b16 %v1682, %v1682
  %v1747 = vpack.c.b16 %v1683, %v1683
  %v1748 = vpack.c.b16 %v1684, %v1684
  %v1749 = vpack.c.b16 %v1685, %v1685
  %v1750 = vpack.c.b16 %v1686, %v1686
  %v1751 = vpack.c.b16 %v1687, %v1687
  %v1752 = vpack.c.b16 %v1688, %v1688
  %v1753 = vpack.c.b16 %v1689, %v1689
  %v1754 = vpack.c.b16 %v1690, %v1690
  %v1755 = vpack.c.b16 %v1691, %v1691
  %v1756 = vpack.c.b16 %v1692, %v1692
  %v1757 = vpack.c.b16 %v1693, %v1693
  %v1758 = vpack.c.b16 %v1694, %v1694
  %v1759 = vpack.c.b16 %v1695, %v1695
  %v1760 = vpack.c.b16 %v1696, %v1696
  %v1761 = vpack.c.b16 %v1697, %v1697
  %v1762 = vpack.c.b16 %v1698, %v1698
  %v1763 = vpack.c.b16 %v1699, %v1699
  %v1764 = vpack.c.b16 %v1700, %v1700
  %v1765 = vpack.c.b16 %v1701, %v1701
  %v1766 = vpack.c.b16 %v1702, %v1702
  %v1767 = vpack.c.b16 %v1703, %v1703
  %v1768 = vpack.c.b16 %v1704, %v1704
  %v1769 = vpack.c.b16 %v1705, %v1705
  %v1770 = vpack.c.b16 %v1706, %v1706
  %v1771 = vpack.c.b16 %v1707, %v1707
  %v1772 = vpack.c.b16 %v1708, %v1708
  %v1773 = vpack.c.b16 %v1709, %v1709
  %v1774 = vpack.c.b16 %v1710, %v1710
  %v1775 = vpack.c.b16 %v1711, %v1711
  %v1776 = vpack.c.b16 %v1712, %v1712
  %v1777 = vpack.c.b16 %v1713, %v1713
  %v1778 = vpack.c.b16 %v1714, %v1714
  %v1779 = vpack.c.b16 %v1715, %v1715
  %v1780 = vpack.c.b16 %v1716, %v1716
  %v1781 = vpack.c.b16 %v1717, %v1717
  %v1782 = vpack.c.b16 %v1718, %v1718
  %v1783 = vpack.c.b16 %v1719, %v1719
  %v1784 = vpack.c.b16 %v1720, %v1720
  %v1785 = vpack.c.b16 %v1721, %v1721
  %v1786 = vpack.c.b16 %v1722, %v1722
  %1851 = vst [vmem:[%s4] sm:$0xf] %v1723
  %1852 = vst [vmem:[%s4 + $0x4] sm:$0xf] %v1724
  %1853 = vst [vmem:[%s4 + $0x8] sm:$0xf] %v1725
  %1854 = vst [vmem:[%s4 + $0xc] sm:$0xf] %v1726
  %1855 = vst [vmem:[%s4 + $0x10] sm:$0xf] %v1727
  %1856 = vst [vmem:[%s4 + $0x14] sm:$0xf] %v1728
  %1857 = vst [vmem:[%s4 + $0x18] sm:$0xf] %v1729
  %1858 = vst [vmem:[%s4 + $0x1c] sm:$0xf] %v1730
  %1859 = vst [vmem:[%s4 + $0x20] sm:$0xf] %v1731
  %1860 = vst [vmem:[%s4 + $0x24] sm:$0xf] %v1732
  %1861 = vst [vmem:[%s4 + $0x28] sm:$0xf] %v1733
  %1862 = vst [vmem:[%s4 + $0x2c] sm:$0xf] %v1734
  %1863 = vst [vmem:[%s4 + $0x30] sm:$0xf] %v1735
  %1864 = vst [vmem:[%s4 + $0x34] sm:$0xf] %v1736
  %1865 = vst [vmem:[%s4 + $0x38] sm:$0xf] %v1737
  %1866 = vst [vmem:[%s4 + $0x3c] sm:$0xf] %v1738
  %1867 = vst [vmem:[%s4 + $0x40] sm:$0xf] %v1739
  %1868 = vst [vmem:[%s4 + $0x44] sm:$0xf] %v1740
  %1869 = vst [vmem:[%s4 + $0x48] sm:$0xf] %v1741
  %1870 = vst [vmem:[%s4 + $0x4c] sm:$0xf] %v1742
  %1871 = vst [vmem:[%s4 + $0x50] sm:$0xf] %v1743
  %1872 = vst [vmem:[%s4 + $0x54] sm:$0xf] %v1744
  %1873 = vst [vmem:[%s4 + $0x58] sm:$0xf] %v1745
  %1874 = vst [vmem:[%s4 + $0x5c] sm:$0xf] %v1746
  %1875 = vst [vmem:[%s4 + $0x60] sm:$0xf] %v1747
  %1876 = vst [vmem:[%s4 + $0x64] sm:$0xf] %v1748
  %1877 = vst [vmem:[%s4 + $0x68] sm:$0xf] %v1749
  %1878 = vst [vmem:[%s4 + $0x6c] sm:$0xf] %v1750
  %1879 = vst [vmem:[%s4 + $0x70] sm:$0xf] %v1751
  %1880 = vst [vmem:[%s4 + $0x74] sm:$0xf] %v1752
  %1881 = vst [vmem:[%s4 + $0x78] sm:$0xf] %v1753
  %1882 = vst [vmem:[%s4 + $0x7c] sm:$0xf] %v1754
  %1883 = vst [vmem:[%s4 + $0x80] sm:$0xf] %v1755
  %1884 = vst [vmem:[%s4 + $0x84] sm:$0xf] %v1756
  %1885 = vst [vmem:[%s4 + $0x88] sm:$0xf] %v1757
  %1886 = vst [vmem:[%s4 + $0x8c] sm:$0xf] %v1758
  %1887 = vst [vmem:[%s4 + $0x90] sm:$0xf] %v1759
  %1888 = vst [vmem:[%s4 + $0x94] sm:$0xf] %v1760
  %1889 = vst [vmem:[%s4 + $0x98] sm:$0xf] %v1761
  %1890 = vst [vmem:[%s4 + $0x9c] sm:$0xf] %v1762
  %1891 = vst [vmem:[%s4 + $0xa0] sm:$0xf] %v1763
  %1892 = vst [vmem:[%s4 + $0xa4] sm:$0xf] %v1764
  %1893 = vst [vmem:[%s4 + $0xa8] sm:$0xf] %v1765
  %1894 = vst [vmem:[%s4 + $0xac] sm:$0xf] %v1766
  %1895 = vst [vmem:[%s4 + $0xb0] sm:$0xf] %v1767
  %1896 = vst [vmem:[%s4 + $0xb4] sm:$0xf] %v1768
  %1897 = vst [vmem:[%s4 + $0xb8] sm:$0xf] %v1769
  %1898 = vst [vmem:[%s4 + $0xbc] sm:$0xf] %v1770
  %1899 = vst [vmem:[%s4 + $0xc0] sm:$0xf] %v1771
  %1900 = vst [vmem:[%s4 + $0xc4] sm:$0xf] %v1772
  %1901 = vst [vmem:[%s4 + $0xc8] sm:$0xf] %v1773
  %1902 = vst [vmem:[%s4 + $0xcc] sm:$0xf] %v1774
  %1903 = vst [vmem:[%s4 + $0xd0] sm:$0xf] %v1775
  %1904 = vst [vmem:[%s4 + $0xd4] sm:$0xf] %v1776
  %1905 = vst [vmem:[%s4 + $0xd8] sm:$0xf] %v1777
  %1906 = vst [vmem:[%s4 + $0xdc] sm:$0xf] %v1778
  %1907 = vst [vmem:[%s4 + $0xe0] sm:$0xf] %v1779
  %1908 = vst [vmem:[%s4 + $0xe4] sm:$0xf] %v1780
  %1909 = vst [vmem:[%s4 + $0xe8] sm:$0xf] %v1781
  %1910 = vst [vmem:[%s4 + $0xec] sm:$0xf] %v1782
  %1911 = vst [vmem:[%s4 + $0xf0] sm:$0xf] %v1783
  %1912 = vst [vmem:[%s4 + $0xf4] sm:$0xf] %v1784
  %1913 = vst [vmem:[%s4 + $0xf8] sm:$0xf] %v1785
  %1914 = vst [vmem:[%s4 + $0xfc] sm:$0xf] %v1786
  // Predicated region
  $region14: #{csp_forward.8} parent=0 // pred_check
    _
  $region15: #{csp_forward.8} parent=0 // pred_check_branch
    %1916 = sbr.rel (0) target = $region17
  $region16: #{csp_forward.8} parent=0 // pred_region
    _
  $region17: #{csp_forward.8} parent=0 // pred_fallthru
    _
  // Predicated region
  $region18: #{csp_forward.8} parent=0 // pred_check
    _
  $region19: #{csp_forward.8} parent=0 // pred_check_branch
    %1918 = sbr.rel (0) target = $region21
  $region20: #{csp_forward.8} parent=0 // pred_region
    _
  $region21: #{csp_forward.8} parent=0 // pred_fallthru
    _
  // Predicated region
  $region22: #{csp_forward.8} parent=0 // pred_check
    _
  $region23: #{csp_forward.8} parent=0 // pred_check_branch
    %1920 = sbr.rel (0) target = $region25
  $region24: #{csp_forward.8} parent=0 // pred_region
    _
  $region25: #{csp_forward.8} parent=0 // pred_fallthru
    _
  // Predicated region
  $region26: #{csp_forward.8} parent=0 // pred_check
    _
  $region27: #{csp_forward.8} parent=0 // pred_check_branch
    %1922 = sbr.rel (0) target = $region29
  $region28: #{csp_forward.8} parent=0 // pred_region
    _
  $region29: #{csp_forward.8} parent=0 // pred_fallthru
    _

// kernel: csp_forward.12
$region0: #{csp_forward.12}
  #allocation0 [shape = 'u32[]', space=smem, size = 0x4, offset = 0x4, fixed_abs, tag = 'smem constant byte address 0x4 - core index']
  #allocation1 [shape = 'u32[144,128]{1,0:T(1,128)}', space=vmem, size = 0x12000, scoped, tag = 'internal scratch']
  %s0 = inlined_call_operand.vmem [shape: bf16[512,128], index: 0, kind: input, shape index: {}]
  %s1 = inlined_call_operand.vmem [shape: bf16[512,128], index: 1, kind: input, shape index: {}]
  %s2 = inlined_call_operand.vmem [shape: f32[2,128], index: 2, kind: input, shape index: {}]
  %s3 = inlined_call_operand.vmem [shape: bf16[128,128], index: 3, kind: input, shape index: {}]
  %s4 = inlined_call_operand.vmem [shape: bf16[128,128], index: 4, kind: input, shape index: {}]
  %s5 = inlined_call_operand.vmem [shape: bf16[512,128], index: 5, kind: output, shape index: {0}]
  %s6 = inlined_call_operand.vmem [shape: f32[1,2,128], index: 6, kind: output, shape index: {1}]
  %7 = xla_tuple %s5, %s6
  %s8 = sld [smem:[#allocation0]]
  $region38: #{csp_forward.12} parent=0
    _
  %s10 = ssub.s32 1, %s8
  %s11 = scalar_select 0, %s10, %s8
  // Predicated region
  $region2: #{csp_forward.12} parent=0 // pred_check
    _
  $region3: #{csp_forward.12} parent=0 // pred_check_branch
    %13 = sbr.rel (0) target = $region5
  $region4: #{csp_forward.12} parent=0 // pred_region
    _
  $region5: #{csp_forward.12} parent=0 // pred_fallthru
    _
  // Predicated region
  $region6: #{csp_forward.12} parent=0 // pred_check
    _
  $region7: #{csp_forward.12} parent=0 // pred_check_branch
    %15 = sbr.rel (0) target = $region9
  $region8: #{csp_forward.12} parent=0 // pred_region
    _
  $region9: #{csp_forward.12} parent=0 // pred_fallthru
    _
  // Predicated region
  $region10: #{csp_forward.12} parent=0 // pred_check
    _
  $region11: #{csp_forward.12} parent=0 // pred_check_branch
    %17 = sbr.rel (0) target = $region13
  $region12: #{csp_forward.12} parent=0 // pred_region
    _
  $region13: #{csp_forward.12} parent=0 // pred_fallthru
    _
  // Predicated region
  $region14: #{csp_forward.12} parent=0 // pred_check
    _
  $region15: #{csp_forward.12} parent=0 // pred_check_branch
    %19 = sbr.rel (0) target = $region17
  $region16: #{csp_forward.12} parent=0 // pred_region
    _
  $region17: #{csp_forward.12} parent=0 // pred_fallthru
    _
  // Predicated region
  $region18: #{csp_forward.12} parent=0 // pred_check
    _
  $region19: #{csp_forward.12} parent=0 // pred_check_branch
    %21 = sbr.rel (0) target = $region21
  $region20: #{csp_forward.12} parent=0 // pred_region
    _
  $region21: #{csp_forward.12} parent=0 // pred_fallthru
    _
  %v23 = vld [vmem:[%s1] sm:$0xf]
  %v24 = vld [vmem:[%s1 + $0x4] sm:$0xf]
  %v25 = vld [vmem:[%s1 + $0x8] sm:$0xf]
  %v26 = vld [vmem:[%s1 + $0xc] sm:$0xf]
  %v27 = vld [vmem:[%s1 + $0x10] sm:$0xf]
  %v28 = vld [vmem:[%s1 + $0x14] sm:$0xf]
  %v29 = vld [vmem:[%s1 + $0x18] sm:$0xf]
  %v30 = vld [vmem:[%s1 + $0x1c] sm:$0xf]
  %v31 = vld [vmem:[%s1 + $0x20] sm:$0xf]
  %v32 = vld [vmem:[%s1 + $0x24] sm:$0xf]
  %v33 = vld [vmem:[%s1 + $0x28] sm:$0xf]
  %v34 = vld [vmem:[%s1 + $0x2c] sm:$0xf]
  %v35 = vld [vmem:[%s1 + $0x30] sm:$0xf]
  %v36 = vld [vmem:[%s1 + $0x34] sm:$0xf]
  %v37 = vld [vmem:[%s1 + $0x38] sm:$0xf]
  %v38 = vld [vmem:[%s1 + $0x3c] sm:$0xf]
  %v39 = vld [vmem:[%s1 + $0x40] sm:$0xf]
  %v40 = vld [vmem:[%s1 + $0x44] sm:$0xf]
  %v41 = vld [vmem:[%s1 + $0x48] sm:$0xf]
  %v42 = vld [vmem:[%s1 + $0x4c] sm:$0xf]
  %v43 = vld [vmem:[%s1 + $0x50] sm:$0xf]
  %v44 = vld [vmem:[%s1 + $0x54] sm:$0xf]
  %v45 = vld [vmem:[%s1 + $0x58] sm:$0xf]
  %v46 = vld [vmem:[%s1 + $0x5c] sm:$0xf]
  %v47 = vld [vmem:[%s1 + $0x60] sm:$0xf]
  %v48 = vld [vmem:[%s1 + $0x64] sm:$0xf]
  %v49 = vld [vmem:[%s1 + $0x68] sm:$0xf]
  %v50 = vld [vmem:[%s1 + $0x6c] sm:$0xf]
  %v51 = vld [vmem:[%s1 + $0x70] sm:$0xf]
  %v52 = vld [vmem:[%s1 + $0x74] sm:$0xf]
  %v53 = vld [vmem:[%s1 + $0x78] sm:$0xf]
  %v54 = vld [vmem:[%s1 + $0x7c] sm:$0xf]
  %v55 = vld [vmem:[%s1 + $0x80] sm:$0xf]
  %v56 = vld [vmem:[%s1 + $0x84] sm:$0xf]
  %v57 = vld [vmem:[%s1 + $0x88] sm:$0xf]
  %v58 = vld [vmem:[%s1 + $0x8c] sm:$0xf]
  %v59 = vld [vmem:[%s1 + $0x90] sm:$0xf]
  %v60 = vld [vmem:[%s1 + $0x94] sm:$0xf]
  %v61 = vld [vmem:[%s1 + $0x98] sm:$0xf]
  %v62 = vld [vmem:[%s1 + $0x9c] sm:$0xf]
  %v63 = vld [vmem:[%s1 + $0xa0] sm:$0xf]
  %v64 = vld [vmem:[%s1 + $0xa4] sm:$0xf]
  %v65 = vld [vmem:[%s1 + $0xa8] sm:$0xf]
  %v66 = vld [vmem:[%s1 + $0xac] sm:$0xf]
  %v67 = vld [vmem:[%s1 + $0xb0] sm:$0xf]
  %v68 = vld [vmem:[%s1 + $0xb4] sm:$0xf]
  %v69 = vld [vmem:[%s1 + $0xb8] sm:$0xf]
  %v70 = vld [vmem:[%s1 + $0xbc] sm:$0xf]
  %v71 = vld [vmem:[%s1 + $0xc0] sm:$0xf]
  %v72 = vld [vmem:[%s1 + $0xc4] sm:$0xf]
  %v73 = vld [vmem:[%s1 + $0xc8] sm:$0xf]
  %v74 = vld [vmem:[%s1 + $0xcc] sm:$0xf]
  %v75 = vld [vmem:[%s1 + $0xd0] sm:$0xf]
  %v76 = vld [vmem:[%s1 + $0xd4] sm:$0xf]
  %v77 = vld [vmem:[%s1 + $0xd8] sm:$0xf]
  %v78 = vld [vmem:[%s1 + $0xdc] sm:$0xf]
  %v79 = vld [vmem:[%s1 + $0xe0] sm:$0xf]
  %v80 = vld [vmem:[%s1 + $0xe4] sm:$0xf]
  %v81 = vld [vmem:[%s1 + $0xe8] sm:$0xf]
  %v82 = vld [vmem:[%s1 + $0xec] sm:$0xf]
  %v83 = vld [vmem:[%s1 + $0xf0] sm:$0xf]
  %v84 = vld [vmem:[%s1 + $0xf4] sm:$0xf]
  %v85 = vld [vmem:[%s1 + $0xf8] sm:$0xf]
  %v86 = vld [vmem:[%s1 + $0xfc] sm:$0xf]
  %v87 = vld [vmem:[%s2] sm:$0x3]
  %v88 = vunpack.c.l.bf16 %v23
  %v89 = vunpack.c.l.bf16 %v24
  %v90 = vunpack.c.l.bf16 %v25
  %v91 = vunpack.c.l.bf16 %v26
  %v92 = vunpack.c.l.bf16 %v27
  %v93 = vunpack.c.l.bf16 %v28
  %v94 = vunpack.c.l.bf16 %v29
  %v95 = vunpack.c.l.bf16 %v30
  %v96 = vunpack.c.l.bf16 %v31
  %v97 = vunpack.c.l.bf16 %v32
  %v98 = vunpack.c.l.bf16 %v33
  %v99 = vunpack.c.l.bf16 %v34
  %v100 = vunpack.c.l.bf16 %v35
  %v101 = vunpack.c.l.bf16 %v36
  %v102 = vunpack.c.l.bf16 %v37
  %v103 = vunpack.c.l.bf16 %v38
  %v104 = vunpack.c.l.bf16 %v39
  %v105 = vunpack.c.l.bf16 %v40
  %v106 = vunpack.c.l.bf16 %v41
  %v107 = vunpack.c.l.bf16 %v42
  %v108 = vunpack.c.l.bf16 %v43
  %v109 = vunpack.c.l.bf16 %v44
  %v110 = vunpack.c.l.bf16 %v45
  %v111 = vunpack.c.l.bf16 %v46
  %v112 = vunpack.c.l.bf16 %v47
  %v113 = vunpack.c.l.bf16 %v48
  %v114 = vunpack.c.l.bf16 %v49
  %v115 = vunpack.c.l.bf16 %v50
  %v116 = vunpack.c.l.bf16 %v51
  %v117 = vunpack.c.l.bf16 %v52
  %v118 = vunpack.c.l.bf16 %v53
  %v119 = vunpack.c.l.bf16 %v54
  %v120 = vunpack.c.l.bf16 %v55
  %v121 = vunpack.c.l.bf16 %v56
  %v122 = vunpack.c.l.bf16 %v57
  %v123 = vunpack.c.l.bf16 %v58
  %v124 = vunpack.c.l.bf16 %v59
  %v125 = vunpack.c.l.bf16 %v60
  %v126 = vunpack.c.l.bf16 %v61
  %v127 = vunpack.c.l.bf16 %v62
  %v128 = vunpack.c.l.bf16 %v63
  %v129 = vunpack.c.l.bf16 %v64
  %v130 = vunpack.c.l.bf16 %v65
  %v131 = vunpack.c.l.bf16 %v66
  %v132 = vunpack.c.l.bf16 %v67
  %v133 = vunpack.c.l.bf16 %v68
  %v134 = vunpack.c.l.bf16 %v69
  %v135 = vunpack.c.l.bf16 %v70
  %v136 = vunpack.c.l.bf16 %v71
  %v137 = vunpack.c.l.bf16 %v72
  %v138 = vunpack.c.l.bf16 %v73
  %v139 = vunpack.c.l.bf16 %v74
  %v140 = vunpack.c.l.bf16 %v75
  %v141 = vunpack.c.l.bf16 %v76
  %v142 = vunpack.c.l.bf16 %v77
  %v143 = vunpack.c.l.bf16 %v78
  %v144 = vunpack.c.l.bf16 %v79
  %v145 = vunpack.c.l.bf16 %v80
  %v146 = vunpack.c.l.bf16 %v81
  %v147 = vunpack.c.l.bf16 %v82
  %v148 = vunpack.c.l.bf16 %v83
  %v149 = vunpack.c.l.bf16 %v84
  %v150 = vunpack.c.l.bf16 %v85
  %v151 = vunpack.c.l.bf16 %v86
  %v152 = vlaneseq
  %v153 = vshrl.u32 %v152, 7
  %v154 = vsub.s32 0, %v153
  %v155 = vrot.slane %v87, %v154
  %v156 = vmul.f32 %v88, %v155
  %v157 = vmul.f32 %v89, %v155
  %v158 = vmul.f32 %v90, %v155
  %v159 = vmul.f32 %v91, %v155
  %v160 = vmul.f32 %v92, %v155
  %v161 = vmul.f32 %v93, %v155
  %v162 = vmul.f32 %v94, %v155
  %v163 = vmul.f32 %v95, %v155
  %v164 = vmul.f32 %v96, %v155
  %v165 = vmul.f32 %v97, %v155
  %v166 = vmul.f32 %v98, %v155
  %v167 = vmul.f32 %v99, %v155
  %v168 = vmul.f32 %v100, %v155
  %v169 = vmul.f32 %v101, %v155
  %v170 = vmul.f32 %v102, %v155
  %v171 = vmul.f32 %v103, %v155
  %v172 = vmul.f32 %v104, %v155
  %v173 = vmul.f32 %v105, %v155
  %v174 = vmul.f32 %v106, %v155
  %v175 = vmul.f32 %v107, %v155
  %v176 = vmul.f32 %v108, %v155
  %v177 = vmul.f32 %v109, %v155
  %v178 = vmul.f32 %v110, %v155
  %v179 = vmul.f32 %v111, %v155
  %v180 = vmul.f32 %v112, %v155
  %v181 = vmul.f32 %v113, %v155
  %v182 = vmul.f32 %v114, %v155
  %v183 = vmul.f32 %v115, %v155
  %v184 = vmul.f32 %v116, %v155
  %v185 = vmul.f32 %v117, %v155
  %v186 = vmul.f32 %v118, %v155
  %v187 = vmul.f32 %v119, %v155
  %v188 = vmul.f32 %v120, %v155
  %v189 = vmul.f32 %v121, %v155
  %v190 = vmul.f32 %v122, %v155
  %v191 = vmul.f32 %v123, %v155
  %v192 = vmul.f32 %v124, %v155
  %v193 = vmul.f32 %v125, %v155
  %v194 = vmul.f32 %v126, %v155
  %v195 = vmul.f32 %v127, %v155
  %v196 = vmul.f32 %v128, %v155
  %v197 = vmul.f32 %v129, %v155
  %v198 = vmul.f32 %v130, %v155
  %v199 = vmul.f32 %v131, %v155
  %v200 = vmul.f32 %v132, %v155
  %v201 = vmul.f32 %v133, %v155
  %v202 = vmul.f32 %v134, %v155
  %v203 = vmul.f32 %v135, %v155
  %v204 = vmul.f32 %v136, %v155
  %v205 = vmul.f32 %v137, %v155
  %v206 = vmul.f32 %v138, %v155
  %v207 = vmul.f32 %v139, %v155
  %v208 = vmul.f32 %v140, %v155
  %v209 = vmul.f32 %v141, %v155
  %v210 = vmul.f32 %v142, %v155
  %v211 = vmul.f32 %v143, %v155
  %v212 = vmul.f32 %v144, %v155
  %v213 = vmul.f32 %v145, %v155
  %v214 = vmul.f32 %v146, %v155
  %v215 = vmul.f32 %v147, %v155
  %v216 = vmul.f32 %v148, %v155
  %v217 = vmul.f32 %v149, %v155
  %v218 = vmul.f32 %v150, %v155
  %v219 = vmul.f32 %v151, %v155
  %v220 = vlaneseq
  %v221 = vshrl.u32 %v220, 7
  %v222 = vsub.s32 1, %v221
  %v223 = vrot.slane %v87, %v222
  %v224 = vadd.f32 %v156, %v223
  %v225 = vadd.f32 %v157, %v223
  %v226 = vadd.f32 %v158, %v223
  %v227 = vadd.f32 %v159, %v223
  %v228 = vadd.f32 %v160, %v223
  %v229 = vadd.f32 %v161, %v223
  %v230 = vadd.f32 %v162, %v223
  %v231 = vadd.f32 %v163, %v223
  %v232 = vadd.f32 %v164, %v223
  %v233 = vadd.f32 %v165, %v223
  %v234 = vadd.f32 %v166, %v223
  %v235 = vadd.f32 %v167, %v223
  %v236 = vadd.f32 %v168, %v223
  %v237 = vadd.f32 %v169, %v223
  %v238 = vadd.f32 %v170, %v223
  %v239 = vadd.f32 %v171, %v223
  %v240 = vadd.f32 %v172, %v223
  %v241 = vadd.f32 %v173, %v223
  %v242 = vadd.f32 %v174, %v223
  %v243 = vadd.f32 %v175, %v223
  %v244 = vadd.f32 %v176, %v223
  %v245 = vadd.f32 %v177, %v223
  %v246 = vadd.f32 %v178, %v223
  %v247 = vadd.f32 %v179, %v223
  %v248 = vadd.f32 %v180, %v223
  %v249 = vadd.f32 %v181, %v223
  %v250 = vadd.f32 %v182, %v223
  %v251 = vadd.f32 %v183, %v223
  %v252 = vadd.f32 %v184, %v223
  %v253 = vadd.f32 %v185, %v223
  %v254 = vadd.f32 %v186, %v223
  %v255 = vadd.f32 %v187, %v223
  %v256 = vadd.f32 %v188, %v223
  %v257 = vadd.f32 %v189, %v223
  %v258 = vadd.f32 %v190, %v223
  %v259 = vadd.f32 %v191, %v223
  %v260 = vadd.f32 %v192, %v223
  %v261 = vadd.f32 %v193, %v223
  %v262 = vadd.f32 %v194, %v223
  %v263 = vadd.f32 %v195, %v223
  %v264 = vadd.f32 %v196, %v223
  %v265 = vadd.f32 %v197, %v223
  %v266 = vadd.f32 %v198, %v223
  %v267 = vadd.f32 %v199, %v223
  %v268 = vadd.f32 %v200, %v223
  %v269 = vadd.f32 %v201, %v223
  %v270 = vadd.f32 %v202, %v223
  %v271 = vadd.f32 %v203, %v223
  %v272 = vadd.f32 %v204, %v223
  %v273 = vadd.f32 %v205, %v223
  %v274 = vadd.f32 %v206, %v223
  %v275 = vadd.f32 %v207, %v223
  %v276 = vadd.f32 %v208, %v223
  %v277 = vadd.f32 %v209, %v223
  %v278 = vadd.f32 %v210, %v223
  %v279 = vadd.f32 %v211, %v223
  %v280 = vadd.f32 %v212, %v223
  %v281 = vadd.f32 %v213, %v223
  %v282 = vadd.f32 %v214, %v223
  %v283 = vadd.f32 %v215, %v223
  %v284 = vadd.f32 %v216, %v223
  %v285 = vadd.f32 %v217, %v223
  %v286 = vadd.f32 %v218, %v223
  %v287 = vadd.f32 %v219, %v223
  %v288 = vmin.f32 %v224, 20.0
  %v289 = vmin.f32 %v225, 20.0
  %v290 = vmin.f32 %v226, 20.0
  %v291 = vmin.f32 %v227, 20.0
  %v292 = vmin.f32 %v228, 20.0
  %v293 = vmin.f32 %v229, 20.0
  %v294 = vmin.f32 %v230, 20.0
  %v295 = vmin.f32 %v231, 20.0
  %v296 = vmin.f32 %v232, 20.0
  %v297 = vmin.f32 %v233, 20.0
  %v298 = vmin.f32 %v234, 20.0
  %v299 = vmin.f32 %v235, 20.0
  %v300 = vmin.f32 %v236, 20.0
  %v301 = vmin.f32 %v237, 20.0
  %v302 = vmin.f32 %v238, 20.0
  %v303 = vmin.f32 %v239, 20.0
  %v304 = vmin.f32 %v240, 20.0
  %v305 = vmin.f32 %v241, 20.0
  %v306 = vmin.f32 %v242, 20.0
  %v307 = vmin.f32 %v243, 20.0
  %v308 = vmin.f32 %v244, 20.0
  %v309 = vmin.f32 %v245, 20.0
  %v310 = vmin.f32 %v246, 20.0
  %v311 = vmin.f32 %v247, 20.0
  %v312 = vmin.f32 %v248, 20.0
  %v313 = vmin.f32 %v249, 20.0
  %v314 = vmin.f32 %v250, 20.0
  %v315 = vmin.f32 %v251, 20.0
  %v316 = vmin.f32 %v252, 20.0
  %v317 = vmin.f32 %v253, 20.0
  %v318 = vmin.f32 %v254, 20.0
  %v319 = vmin.f32 %v255, 20.0
  %v320 = vmin.f32 %v256, 20.0
  %v321 = vmin.f32 %v257, 20.0
  %v322 = vmin.f32 %v258, 20.0
  %v323 = vmin.f32 %v259, 20.0
  %v324 = vmin.f32 %v260, 20.0
  %v325 = vmin.f32 %v261, 20.0
  %v326 = vmin.f32 %v262, 20.0
  %v327 = vmin.f32 %v263, 20.0
  %v328 = vmin.f32 %v264, 20.0
  %v329 = vmin.f32 %v265, 20.0
  %v330 = vmin.f32 %v266, 20.0
  %v331 = vmin.f32 %v267, 20.0
  %v332 = vmin.f32 %v268, 20.0
  %v333 = vmin.f32 %v269, 20.0
  %v334 = vmin.f32 %v270, 20.0
  %v335 = vmin.f32 %v271, 20.0
  %v336 = vmin.f32 %v272, 20.0
  %v337 = vmin.f32 %v273, 20.0
  %v338 = vmin.f32 %v274, 20.0
  %v339 = vmin.f32 %v275, 20.0
  %v340 = vmin.f32 %v276, 20.0
  %v341 = vmin.f32 %v277, 20.0
  %v342 = vmin.f32 %v278, 20.0
  %v343 = vmin.f32 %v279, 20.0
  %v344 = vmin.f32 %v280, 20.0
  %v345 = vmin.f32 %v281, 20.0
  %v346 = vmin.f32 %v282, 20.0
  %v347 = vmin.f32 %v283, 20.0
  %v348 = vmin.f32 %v284, 20.0
  %v349 = vmin.f32 %v285, 20.0
  %v350 = vmin.f32 %v286, 20.0
  %v351 = vmin.f32 %v287, 20.0
  %v352 = vmul.f32 %v288, 1.442695
  %v353 = vpow.pop %v352
  %v354 = vmul.f32 %v289, 1.442695
  %v355 = vpow.pop %v354
  %v356 = vmul.f32 %v290, 1.442695
  %v357 = vpow.pop %v356
  %v358 = vmul.f32 %v291, 1.442695
  %v359 = vpow.pop %v358
  %v360 = vmul.f32 %v292, 1.442695
  %v361 = vpow.pop %v360
  %v362 = vmul.f32 %v293, 1.442695
  %v363 = vpow.pop %v362
  %v364 = vmul.f32 %v294, 1.442695
  %v365 = vpow.pop %v364
  %v366 = vmul.f32 %v295, 1.442695
  %v367 = vpow.pop %v366
  %v368 = vmul.f32 %v296, 1.442695
  %v369 = vpow.pop %v368
  %v370 = vmul.f32 %v297, 1.442695
  %v371 = vpow.pop %v370
  %v372 = vmul.f32 %v298, 1.442695
  %v373 = vpow.pop %v372
  %v374 = vmul.f32 %v299, 1.442695
  %v375 = vpow.pop %v374
  %v376 = vmul.f32 %v300, 1.442695
  %v377 = vpow.pop %v376
  %v378 = vmul.f32 %v301, 1.442695
  %v379 = vpow.pop %v378
  %v380 = vmul.f32 %v302, 1.442695
  %v381 = vpow.pop %v380
  %v382 = vmul.f32 %v303, 1.442695
  %v383 = vpow.pop %v382
  %v384 = vmul.f32 %v304, 1.442695
  %v385 = vpow.pop %v384
  %v386 = vmul.f32 %v305, 1.442695
  %v387 = vpow.pop %v386
  %v388 = vmul.f32 %v306, 1.442695
  %v389 = vpow.pop %v388
  %v390 = vmul.f32 %v307, 1.442695
  %v391 = vpow.pop %v390
  %v392 = vmul.f32 %v308, 1.442695
  %v393 = vpow.pop %v392
  %v394 = vmul.f32 %v309, 1.442695
  %v395 = vpow.pop %v394
  %v396 = vmul.f32 %v310, 1.442695
  %v397 = vpow.pop %v396
  %v398 = vmul.f32 %v311, 1.442695
  %v399 = vpow.pop %v398
  %v400 = vmul.f32 %v312, 1.442695
  %v401 = vpow.pop %v400
  %v402 = vmul.f32 %v313, 1.442695
  %v403 = vpow.pop %v402
  %v404 = vmul.f32 %v314, 1.442695
  %v405 = vpow.pop %v404
  %v406 = vmul.f32 %v315, 1.442695
  %v407 = vpow.pop %v406
  %v408 = vmul.f32 %v316, 1.442695
  %v409 = vpow.pop %v408
  %v410 = vmul.f32 %v317, 1.442695
  %v411 = vpow.pop %v410
  %v412 = vmul.f32 %v318, 1.442695
  %v413 = vpow.pop %v412
  %v414 = vmul.f32 %v319, 1.442695
  %v415 = vpow.pop %v414
  %v416 = vmul.f32 %v320, 1.442695
  %v417 = vpow.pop %v416
  %v418 = vmul.f32 %v321, 1.442695
  %v419 = vpow.pop %v418
  %v420 = vmul.f32 %v322, 1.442695
  %v421 = vpow.pop %v420
  %v422 = vmul.f32 %v323, 1.442695
  %v423 = vpow.pop %v422
  %v424 = vmul.f32 %v324, 1.442695
  %v425 = vpow.pop %v424
  %v426 = vmul.f32 %v325, 1.442695
  %v427 = vpow.pop %v426
  %v428 = vmul.f32 %v326, 1.442695
  %v429 = vpow.pop %v428
  %v430 = vmul.f32 %v327, 1.442695
  %v431 = vpow.pop %v430
  %v432 = vmul.f32 %v328, 1.442695
  %v433 = vpow.pop %v432
  %v434 = vmul.f32 %v329, 1.442695
  %v435 = vpow.pop %v434
  %v436 = vmul.f32 %v330, 1.442695
  %v437 = vpow.pop %v436
  %v438 = vmul.f32 %v331, 1.442695
  %v439 = vpow.pop %v438
  %v440 = vmul.f32 %v332, 1.442695
  %v441 = vpow.pop %v440
  %v442 = vmul.f32 %v333, 1.442695
  %v443 = vpow.pop %v442
  %v444 = vmul.f32 %v334, 1.442695
  %v445 = vpow.pop %v444
  %v446 = vmul.f32 %v335, 1.442695
  %v447 = vpow.pop %v446
  %v448 = vmul.f32 %v336, 1.442695
  %v449 = vpow.pop %v448
  %v450 = vmul.f32 %v337, 1.442695
  %v451 = vpow.pop %v450
  %v452 = vmul.f32 %v338, 1.442695
  %v453 = vpow.pop %v452
  %v454 = vmul.f32 %v339, 1.442695
  %v455 = vpow.pop %v454
  %v456 = vmul.f32 %v340, 1.442695
  %v457 = vpow.pop %v456
  %v458 = vmul.f32 %v341, 1.442695
  %v459 = vpow.pop %v458
  %v460 = vmul.f32 %v342, 1.442695
  %v461 = vpow.pop %v460
  %v462 = vmul.f32 %v343, 1.442695
  %v463 = vpow.pop %v462
  %v464 = vmul.f32 %v344, 1.442695
  %v465 = vpow.pop %v464
  %v466 = vmul.f32 %v345, 1.442695
  %v467 = vpow.pop %v466
  %v468 = vmul.f32 %v346, 1.442695
  %v469 = vpow.pop %v468
  %v470 = vmul.f32 %v347, 1.442695
  %v471 = vpow.pop %v470
  %v472 = vmul.f32 %v348, 1.442695
  %v473 = vpow.pop %v472
  %v474 = vmul.f32 %v349, 1.442695
  %v475 = vpow.pop %v474
  %v476 = vmul.f32 %v350, 1.442695
  %v477 = vpow.pop %v476
  %v478 = vmul.f32 %v351, 1.442695
  %v479 = vpow.pop %v478
  %v480 = vadd.f32 %v353, 1.0
  %v481 = vadd.f32 %v355, 1.0
  %v482 = vadd.f32 %v357, 1.0
  %v483 = vadd.f32 %v359, 1.0
  %v484 = vadd.f32 %v361, 1.0
  %v485 = vadd.f32 %v363, 1.0
  %v486 = vadd.f32 %v365, 1.0
  %v487 = vadd.f32 %v367, 1.0
  %v488 = vadd.f32 %v369, 1.0
  %v489 = vadd.f32 %v371, 1.0
  %v490 = vadd.f32 %v373, 1.0
  %v491 = vadd.f32 %v375, 1.0
  %v492 = vadd.f32 %v377, 1.0
  %v493 = vadd.f32 %v379, 1.0
  %v494 = vadd.f32 %v381, 1.0
  %v495 = vadd.f32 %v383, 1.0
  %v496 = vadd.f32 %v385, 1.0
  %v497 = vadd.f32 %v387, 1.0
  %v498 = vadd.f32 %v389, 1.0
  %v499 = vadd.f32 %v391, 1.0
  %v500 = vadd.f32 %v393, 1.0
  %v501 = vadd.f32 %v395, 1.0
  %v502 = vadd.f32 %v397, 1.0
  %v503 = vadd.f32 %v399, 1.0
  %v504 = vadd.f32 %v401, 1.0
  %v505 = vadd.f32 %v403, 1.0
  %v506 = vadd.f32 %v405, 1.0
  %v507 = vadd.f32 %v407, 1.0
  %v508 = vadd.f32 %v409, 1.0
  %v509 = vadd.f32 %v411, 1.0
  %v510 = vadd.f32 %v413, 1.0
  %v511 = vadd.f32 %v415, 1.0
  %v512 = vadd.f32 %v417, 1.0
  %v513 = vadd.f32 %v419, 1.0
  %v514 = vadd.f32 %v421, 1.0
  %v515 = vadd.f32 %v423, 1.0
  %v516 = vadd.f32 %v425, 1.0
  %v517 = vadd.f32 %v427, 1.0
  %v518 = vadd.f32 %v429, 1.0
  %v519 = vadd.f32 %v431, 1.0
  %v520 = vadd.f32 %v433, 1.0
  %v521 = vadd.f32 %v435, 1.0
  %v522 = vadd.f32 %v437, 1.0
  %v523 = vadd.f32 %v439, 1.0
  %v524 = vadd.f32 %v441, 1.0
  %v525 = vadd.f32 %v443, 1.0
  %v526 = vadd.f32 %v445, 1.0
  %v527 = vadd.f32 %v447, 1.0
  %v528 = vadd.f32 %v449, 1.0
  %v529 = vadd.f32 %v451, 1.0
  %v530 = vadd.f32 %v453, 1.0
  %v531 = vadd.f32 %v455, 1.0
  %v532 = vadd.f32 %v457, 1.0
  %v533 = vadd.f32 %v459, 1.0
  %v534 = vadd.f32 %v461, 1.0
  %v535 = vadd.f32 %v463, 1.0
  %v536 = vadd.f32 %v465, 1.0
  %v537 = vadd.f32 %v467, 1.0
  %v538 = vadd.f32 %v469, 1.0
  %v539 = vadd.f32 %v471, 1.0
  %v540 = vadd.f32 %v473, 1.0
  %v541 = vadd.f32 %v475, 1.0
  %v542 = vadd.f32 %v477, 1.0
  %v543 = vadd.f32 %v479, 1.0
  %v544 = vmul.f32 %v480, %v480
  %v545 = vmul.f32 %v481, %v481
  %v546 = vmul.f32 %v482, %v482
  %v547 = vmul.f32 %v483, %v483
  %v548 = vmul.f32 %v484, %v484
  %v549 = vmul.f32 %v485, %v485
  %v550 = vmul.f32 %v486, %v486
  %v551 = vmul.f32 %v487, %v487
  %v552 = vmul.f32 %v488, %v488
  %v553 = vmul.f32 %v489, %v489
  %v554 = vmul.f32 %v490, %v490
  %v555 = vmul.f32 %v491, %v491
  %v556 = vmul.f32 %v492, %v492
  %v557 = vmul.f32 %v493, %v493
  %v558 = vmul.f32 %v494, %v494
  %v559 = vmul.f32 %v495, %v495
  %v560 = vmul.f32 %v496, %v496
  %v561 = vmul.f32 %v497, %v497
  %v562 = vmul.f32 %v498, %v498
  %v563 = vmul.f32 %v499, %v499
  %v564 = vmul.f32 %v500, %v500
  %v565 = vmul.f32 %v501, %v501
  %v566 = vmul.f32 %v502, %v502
  %v567 = vmul.f32 %v503, %v503
  %v568 = vmul.f32 %v504, %v504
  %v569 = vmul.f32 %v505, %v505
  %v570 = vmul.f32 %v506, %v506
  %v571 = vmul.f32 %v507, %v507
  %v572 = vmul.f32 %v508, %v508
  %v573 = vmul.f32 %v509, %v509
  %v574 = vmul.f32 %v510, %v510
  %v575 = vmul.f32 %v511, %v511
  %v576 = vmul.f32 %v512, %v512
  %v577 = vmul.f32 %v513, %v513
  %v578 = vmul.f32 %v514, %v514
  %v579 = vmul.f32 %v515, %v515
  %v580 = vmul.f32 %v516, %v516
  %v581 = vmul.f32 %v517, %v517
  %v582 = vmul.f32 %v518, %v518
  %v583 = vmul.f32 %v519, %v519
  %v584 = vmul.f32 %v520, %v520
  %v585 = vmul.f32 %v521, %v521
  %v586 = vmul.f32 %v522, %v522
  %v587 = vmul.f32 %v523, %v523
  %v588 = vmul.f32 %v524, %v524
  %v589 = vmul.f32 %v525, %v525
  %v590 = vmul.f32 %v526, %v526
  %v591 = vmul.f32 %v527, %v527
  %v592 = vmul.f32 %v528, %v528
  %v593 = vmul.f32 %v529, %v529
  %v594 = vmul.f32 %v530, %v530
  %v595 = vmul.f32 %v531, %v531
  %v596 = vmul.f32 %v532, %v532
  %v597 = vmul.f32 %v533, %v533
  %v598 = vmul.f32 %v534, %v534
  %v599 = vmul.f32 %v535, %v535
  %v600 = vmul.f32 %v536, %v536
  %v601 = vmul.f32 %v537, %v537
  %v602 = vmul.f32 %v538, %v538
  %v603 = vmul.f32 %v539, %v539
  %v604 = vmul.f32 %v540, %v540
  %v605 = vmul.f32 %v541, %v541
  %v606 = vmul.f32 %v542, %v542
  %v607 = vmul.f32 %v543, %v543
  %v608 = vsub.f32 %v544, 1.0
  %v609 = vsub.f32 %v545, 1.0
  %v610 = vsub.f32 %v546, 1.0
  %v611 = vsub.f32 %v547, 1.0
  %v612 = vsub.f32 %v548, 1.0
  %v613 = vsub.f32 %v549, 1.0
  %v614 = vsub.f32 %v550, 1.0
  %v615 = vsub.f32 %v551, 1.0
  %v616 = vsub.f32 %v552, 1.0
  %v617 = vsub.f32 %v553, 1.0
  %v618 = vsub.f32 %v554, 1.0
  %v619 = vsub.f32 %v555, 1.0
  %v620 = vsub.f32 %v556, 1.0
  %v621 = vsub.f32 %v557, 1.0
  %v622 = vsub.f32 %v558, 1.0
  %v623 = vsub.f32 %v559, 1.0
  %v624 = vsub.f32 %v560, 1.0
  %v625 = vsub.f32 %v561, 1.0
  %v626 = vsub.f32 %v562, 1.0
  %v627 = vsub.f32 %v563, 1.0
  %v628 = vsub.f32 %v564, 1.0
  %v629 = vsub.f32 %v565, 1.0
  %v630 = vsub.f32 %v566, 1.0
  %v631 = vsub.f32 %v567, 1.0
  %v632 = vsub.f32 %v568, 1.0
  %v633 = vsub.f32 %v569, 1.0
  %v634 = vsub.f32 %v570, 1.0
  %v635 = vsub.f32 %v571, 1.0
  %v636 = vsub.f32 %v572, 1.0
  %v637 = vsub.f32 %v573, 1.0
  %v638 = vsub.f32 %v574, 1.0
  %v639 = vsub.f32 %v575, 1.0
  %v640 = vsub.f32 %v576, 1.0
  %v641 = vsub.f32 %v577, 1.0
  %v642 = vsub.f32 %v578, 1.0
  %v643 = vsub.f32 %v579, 1.0
  %v644 = vsub.f32 %v580, 1.0
  %v645 = vsub.f32 %v581, 1.0
  %v646 = vsub.f32 %v582, 1.0
  %v647 = vsub.f32 %v583, 1.0
  %v648 = vsub.f32 %v584, 1.0
  %v649 = vsub.f32 %v585, 1.0
  %v650 = vsub.f32 %v586, 1.0
  %v651 = vsub.f32 %v587, 1.0
  %v652 = vsub.f32 %v588, 1.0
  %v653 = vsub.f32 %v589, 1.0
  %v654 = vsub.f32 %v590, 1.0
  %v655 = vsub.f32 %v591, 1.0
  %v656 = vsub.f32 %v592, 1.0
  %v657 = vsub.f32 %v593, 1.0
  %v658 = vsub.f32 %v594, 1.0
  %v659 = vsub.f32 %v595, 1.0
  %v660 = vsub.f32 %v596, 1.0
  %v661 = vsub.f32 %v597, 1.0
  %v662 = vsub.f32 %v598, 1.0
  %v663 = vsub.f32 %v599, 1.0
  %v664 = vsub.f32 %v600, 1.0
  %v665 = vsub.f32 %v601, 1.0
  %v666 = vsub.f32 %v602, 1.0
  %v667 = vsub.f32 %v603, 1.0
  %v668 = vsub.f32 %v604, 1.0
  %v669 = vsub.f32 %v605, 1.0
  %v670 = vsub.f32 %v606, 1.0
  %v671 = vsub.f32 %v607, 1.0
  %v672 = vadd.f32 %v544, 1.0
  %v673 = vadd.f32 %v545, 1.0
  %v674 = vadd.f32 %v546, 1.0
  %v675 = vadd.f32 %v547, 1.0
  %v676 = vadd.f32 %v548, 1.0
  %v677 = vadd.f32 %v549, 1.0
  %v678 = vadd.f32 %v550, 1.0
  %v679 = vadd.f32 %v551, 1.0
  %v680 = vadd.f32 %v552, 1.0
  %v681 = vadd.f32 %v553, 1.0
  %v682 = vadd.f32 %v554, 1.0
  %v683 = vadd.f32 %v555, 1.0
  %v684 = vadd.f32 %v556, 1.0
  %v685 = vadd.f32 %v557, 1.0
  %v686 = vadd.f32 %v558, 1.0
  %v687 = vadd.f32 %v559, 1.0
  %v688 = vadd.f32 %v560, 1.0
  %v689 = vadd.f32 %v561, 1.0
  %v690 = vadd.f32 %v562, 1.0
  %v691 = vadd.f32 %v563, 1.0
  %v692 = vadd.f32 %v564, 1.0
  %v693 = vadd.f32 %v565, 1.0
  %v694 = vadd.f32 %v566, 1.0
  %v695 = vadd.f32 %v567, 1.0
  %v696 = vadd.f32 %v568, 1.0
  %v697 = vadd.f32 %v569, 1.0
  %v698 = vadd.f32 %v570, 1.0
  %v699 = vadd.f32 %v571, 1.0
  %v700 = vadd.f32 %v572, 1.0
  %v701 = vadd.f32 %v573, 1.0
  %v702 = vadd.f32 %v574, 1.0
  %v703 = vadd.f32 %v575, 1.0
  %v704 = vadd.f32 %v576, 1.0
  %v705 = vadd.f32 %v577, 1.0
  %v706 = vadd.f32 %v578, 1.0
  %v707 = vadd.f32 %v579, 1.0
  %v708 = vadd.f32 %v580, 1.0
  %v709 = vadd.f32 %v581, 1.0
  %v710 = vadd.f32 %v582, 1.0
  %v711 = vadd.f32 %v583, 1.0
  %v712 = vadd.f32 %v584, 1.0
  %v713 = vadd.f32 %v585, 1.0
  %v714 = vadd.f32 %v586, 1.0
  %v715 = vadd.f32 %v587, 1.0
  %v716 = vadd.f32 %v588, 1.0
  %v717 = vadd.f32 %v589, 1.0
  %v718 = vadd.f32 %v590, 1.0
  %v719 = vadd.f32 %v591, 1.0
  %v720 = vadd.f32 %v592, 1.0
  %v721 = vadd.f32 %v593, 1.0
  %v722 = vadd.f32 %v594, 1.0
  %v723 = vadd.f32 %v595, 1.0
  %v724 = vadd.f32 %v596, 1.0
  %v725 = vadd.f32 %v597, 1.0
  %v726 = vadd.f32 %v598, 1.0
  %v727 = vadd.f32 %v599, 1.0
  %v728 = vadd.f32 %v600, 1.0
  %v729 = vadd.f32 %v601, 1.0
  %v730 = vadd.f32 %v602, 1.0
  %v731 = vadd.f32 %v603, 1.0
  %v732 = vadd.f32 %v604, 1.0
  %v733 = vadd.f32 %v605, 1.0
  %v734 = vadd.f32 %v606, 1.0
  %v735 = vadd.f32 %v607, 1.0
  %v736 = vrcp.pop %v672
  %v737 = vmul.f32 %v608, %v736
  %v738 = vrcp.pop %v673
  %v739 = vmul.f32 %v609, %v738
  %v740 = vrcp.pop %v674
  %v741 = vmul.f32 %v610, %v740
  %v742 = vrcp.pop %v675
  %v743 = vmul.f32 %v611, %v742
  %v744 = vrcp.pop %v676
  %v745 = vmul.f32 %v612, %v744
  %v746 = vrcp.pop %v677
  %v747 = vmul.f32 %v613, %v746
  %v748 = vrcp.pop %v678
  %v749 = vmul.f32 %v614, %v748
  %v750 = vrcp.pop %v679
  %v751 = vmul.f32 %v615, %v750
  %v752 = vrcp.pop %v680
  %v753 = vmul.f32 %v616, %v752
  %v754 = vrcp.pop %v681
  %v755 = vmul.f32 %v617, %v754
  %v756 = vrcp.pop %v682
  %v757 = vmul.f32 %v618, %v756
  %v758 = vrcp.pop %v683
  %v759 = vmul.f32 %v619, %v758
  %v760 = vrcp.pop %v684
  %v761 = vmul.f32 %v620, %v760
  %v762 = vrcp.pop %v685
  %v763 = vmul.f32 %v621, %v762
  %v764 = vrcp.pop %v686
  %v765 = vmul.f32 %v622, %v764
  %v766 = vrcp.pop %v687
  %v767 = vmul.f32 %v623, %v766
  %v768 = vrcp.pop %v688
  %v769 = vmul.f32 %v624, %v768
  %v770 = vrcp.pop %v689
  %v771 = vmul.f32 %v625, %v770
  %v772 = vrcp.pop %v690
  %v773 = vmul.f32 %v626, %v772
  %v774 = vrcp.pop %v691
  %v775 = vmul.f32 %v627, %v774
  %v776 = vrcp.pop %v692
  %v777 = vmul.f32 %v628, %v776
  %v778 = vrcp.pop %v693
  %v779 = vmul.f32 %v629, %v778
  %v780 = vrcp.pop %v694
  %v781 = vmul.f32 %v630, %v780
  %v782 = vrcp.pop %v695
  %v783 = vmul.f32 %v631, %v782
  %v784 = vrcp.pop %v696
  %v785 = vmul.f32 %v632, %v784
  %v786 = vrcp.pop %v697
  %v787 = vmul.f32 %v633, %v786
  %v788 = vrcp.pop %v698
  %v789 = vmul.f32 %v634, %v788
  %v790 = vrcp.pop %v699
  %v791 = vmul.f32 %v635, %v790
  %v792 = vrcp.pop %v700
  %v793 = vmul.f32 %v636, %v792
  %v794 = vrcp.pop %v701
  %v795 = vmul.f32 %v637, %v794
  %v796 = vrcp.pop %v702
  %v797 = vmul.f32 %v638, %v796
  %v798 = vrcp.pop %v703
  %v799 = vmul.f32 %v639, %v798
  %v800 = vrcp.pop %v704
  %v801 = vmul.f32 %v640, %v800
  %v802 = vrcp.pop %v705
  %v803 = vmul.f32 %v641, %v802
  %v804 = vrcp.pop %v706
  %v805 = vmul.f32 %v642, %v804
  %v806 = vrcp.pop %v707
  %v807 = vmul.f32 %v643, %v806
  %v808 = vrcp.pop %v708
  %v809 = vmul.f32 %v644, %v808
  %v810 = vrcp.pop %v709
  %v811 = vmul.f32 %v645, %v810
  %v812 = vrcp.pop %v710
  %v813 = vmul.f32 %v646, %v812
  %v814 = vrcp.pop %v711
  %v815 = vmul.f32 %v647, %v814
  %v816 = vrcp.pop %v712
  %v817 = vmul.f32 %v648, %v816
  %v818 = vrcp.pop %v713
  %v819 = vmul.f32 %v649, %v818
  %v820 = vrcp.pop %v714
  %v821 = vmul.f32 %v650, %v820
  %v822 = vrcp.pop %v715
  %v823 = vmul.f32 %v651, %v822
  %v824 = vrcp.pop %v716
  %v825 = vmul.f32 %v652, %v824
  %v826 = vrcp.pop %v717
  %v827 = vmul.f32 %v653, %v826
  %v828 = vrcp.pop %v718
  %v829 = vmul.f32 %v654, %v828
  %v830 = vrcp.pop %v719
  %v831 = vmul.f32 %v655, %v830
  %v832 = vrcp.pop %v720
  %v833 = vmul.f32 %v656, %v832
  %v834 = vrcp.pop %v721
  %v835 = vmul.f32 %v657, %v834
  %v836 = vrcp.pop %v722
  %v837 = vmul.f32 %v658, %v836
  %v838 = vrcp.pop %v723
  %v839 = vmul.f32 %v659, %v838
  %v840 = vrcp.pop %v724
  %v841 = vmul.f32 %v660, %v840
  %v842 = vrcp.pop %v725
  %v843 = vmul.f32 %v661, %v842
  %v844 = vrcp.pop %v726
  %v845 = vmul.f32 %v662, %v844
  %v846 = vrcp.pop %v727
  %v847 = vmul.f32 %v663, %v846
  %v848 = vrcp.pop %v728
  %v849 = vmul.f32 %v664, %v848
  %v850 = vrcp.pop %v729
  %v851 = vmul.f32 %v665, %v850
  %v852 = vrcp.pop %v730
  %v853 = vmul.f32 %v666, %v852
  %v854 = vrcp.pop %v731
  %v855 = vmul.f32 %v667, %v854
  %v856 = vrcp.pop %v732
  %v857 = vmul.f32 %v668, %v856
  %v858 = vrcp.pop %v733
  %v859 = vmul.f32 %v669, %v858
  %v860 = vrcp.pop %v734
  %v861 = vmul.f32 %v670, %v860
  %v862 = vrcp.pop %v735
  %v863 = vmul.f32 %v671, %v862
  %v864 = vmul.f32 %v224, %v737
  %v865 = vmul.f32 %v225, %v739
  %v866 = vmul.f32 %v226, %v741
  %v867 = vmul.f32 %v227, %v743
  %v868 = vmul.f32 %v228, %v745
  %v869 = vmul.f32 %v229, %v747
  %v870 = vmul.f32 %v230, %v749
  %v871 = vmul.f32 %v231, %v751
  %v872 = vmul.f32 %v232, %v753
  %v873 = vmul.f32 %v233, %v755
  %v874 = vmul.f32 %v234, %v757
  %v875 = vmul.f32 %v235, %v759
  %v876 = vmul.f32 %v236, %v761
  %v877 = vmul.f32 %v237, %v763
  %v878 = vmul.f32 %v238, %v765
  %v879 = vmul.f32 %v239, %v767
  %v880 = vmul.f32 %v240, %v769
  %v881 = vmul.f32 %v241, %v771
  %v882 = vmul.f32 %v242, %v773
  %v883 = vmul.f32 %v243, %v775
  %v884 = vmul.f32 %v244, %v777
  %v885 = vmul.f32 %v245, %v779
  %v886 = vmul.f32 %v246, %v781
  %v887 = vmul.f32 %v247, %v783
  %v888 = vmul.f32 %v248, %v785
  %v889 = vmul.f32 %v249, %v787
  %v890 = vmul.f32 %v250, %v789
  %v891 = vmul.f32 %v251, %v791
  %v892 = vmul.f32 %v252, %v793
  %v893 = vmul.f32 %v253, %v795
  %v894 = vmul.f32 %v254, %v797
  %v895 = vmul.f32 %v255, %v799
  %v896 = vmul.f32 %v256, %v801
  %v897 = vmul.f32 %v257, %v803
  %v898 = vmul.f32 %v258, %v805
  %v899 = vmul.f32 %v259, %v807
  %v900 = vmul.f32 %v260, %v809
  %v901 = vmul.f32 %v261, %v811
  %v902 = vmul.f32 %v262, %v813
  %v903 = vmul.f32 %v263, %v815
  %v904 = vmul.f32 %v264, %v817
  %v905 = vmul.f32 %v265, %v819
  %v906 = vmul.f32 %v266, %v821
  %v907 = vmul.f32 %v267, %v823
  %v908 = vmul.f32 %v268, %v825
  %v909 = vmul.f32 %v269, %v827
  %v910 = vmul.f32 %v270, %v829
  %v911 = vmul.f32 %v271, %v831
  %v912 = vmul.f32 %v272, %v833
  %v913 = vmul.f32 %v273, %v835
  %v914 = vmul.f32 %v274, %v837
  %v915 = vmul.f32 %v275, %v839
  %v916 = vmul.f32 %v276, %v841
  %v917 = vmul.f32 %v277, %v843
  %v918 = vmul.f32 %v278, %v845
  %v919 = vmul.f32 %v279, %v847
  %v920 = vmul.f32 %v280, %v849
  %v921 = vmul.f32 %v281, %v851
  %v922 = vmul.f32 %v282, %v853
  %v923 = vmul.f32 %v283, %v855
  %v924 = vmul.f32 %v284, %v857
  %v925 = vmul.f32 %v285, %v859
  %v926 = vmul.f32 %v286, %v861
  %v927 = vmul.f32 %v287, %v863
  %v928 = vpack.c.bf16 %v865, %v864
  %v929 = vpack.c.bf16 %v867, %v866
  %v930 = vpack.c.bf16 %v869, %v868
  %v931 = vpack.c.bf16 %v871, %v870
  %v932 = vpack.c.bf16 %v873, %v872
  %v933 = vpack.c.bf16 %v875, %v874
  %v934 = vpack.c.bf16 %v877, %v876
  %v935 = vpack.c.bf16 %v879, %v878
  %v936 = vpack.c.bf16 %v881, %v880
  %v937 = vpack.c.bf16 %v883, %v882
  %v938 = vpack.c.bf16 %v885, %v884
  %v939 = vpack.c.bf16 %v887, %v886
  %v940 = vpack.c.bf16 %v889, %v888
  %v941 = vpack.c.bf16 %v891, %v890
  %v942 = vpack.c.bf16 %v893, %v892
  %v943 = vpack.c.bf16 %v895, %v894
  %v944 = vpack.c.bf16 %v897, %v896
  %v945 = vpack.c.bf16 %v899, %v898
  %v946 = vpack.c.bf16 %v901, %v900
  %v947 = vpack.c.bf16 %v903, %v902
  %v948 = vpack.c.bf16 %v905, %v904
  %v949 = vpack.c.bf16 %v907, %v906
  %v950 = vpack.c.bf16 %v909, %v908
  %v951 = vpack.c.bf16 %v911, %v910
  %v952 = vpack.c.bf16 %v913, %v912
  %v953 = vpack.c.bf16 %v915, %v914
  %v954 = vpack.c.bf16 %v917, %v916
  %v955 = vpack.c.bf16 %v919, %v918
  %v956 = vpack.c.bf16 %v921, %v920
  %v957 = vpack.c.bf16 %v923, %v922
  %v958 = vpack.c.bf16 %v925, %v924
  %v959 = vpack.c.bf16 %v927, %v926
  %v960 = vld [vmem:[%s0] sm:$0xf]
  %v961 = vld [vmem:[%s0 + $0x4] sm:$0xf]
  %v962 = vld [vmem:[%s0 + $0x8] sm:$0xf]
  %v963 = vld [vmem:[%s0 + $0xc] sm:$0xf]
  %v964 = vld [vmem:[%s0 + $0x10] sm:$0xf]
  %v965 = vld [vmem:[%s0 + $0x14] sm:$0xf]
  %v966 = vld [vmem:[%s0 + $0x18] sm:$0xf]
  %v967 = vld [vmem:[%s0 + $0x1c] sm:$0xf]
  %v968 = vld [vmem:[%s0 + $0x20] sm:$0xf]
  %v969 = vld [vmem:[%s0 + $0x24] sm:$0xf]
  %v970 = vld [vmem:[%s0 + $0x28] sm:$0xf]
  %v971 = vld [vmem:[%s0 + $0x2c] sm:$0xf]
  %v972 = vld [vmem:[%s0 + $0x30] sm:$0xf]
  %v973 = vld [vmem:[%s0 + $0x34] sm:$0xf]
  %v974 = vld [vmem:[%s0 + $0x38] sm:$0xf]
  %v975 = vld [vmem:[%s0 + $0x3c] sm:$0xf]
  %v976 = vld [vmem:[%s0 + $0x40] sm:$0xf]
  %v977 = vld [vmem:[%s0 + $0x44] sm:$0xf]
  %v978 = vld [vmem:[%s0 + $0x48] sm:$0xf]
  %v979 = vld [vmem:[%s0 + $0x4c] sm:$0xf]
  %v980 = vld [vmem:[%s0 + $0x50] sm:$0xf]
  %v981 = vld [vmem:[%s0 + $0x54] sm:$0xf]
  %v982 = vld [vmem:[%s0 + $0x58] sm:$0xf]
  %v983 = vld [vmem:[%s0 + $0x5c] sm:$0xf]
  %v984 = vld [vmem:[%s0 + $0x60] sm:$0xf]
  %v985 = vld [vmem:[%s0 + $0x64] sm:$0xf]
  %v986 = vld [vmem:[%s0 + $0x68] sm:$0xf]
  %v987 = vld [vmem:[%s0 + $0x6c] sm:$0xf]
  %v988 = vld [vmem:[%s0 + $0x70] sm:$0xf]
  %v989 = vld [vmem:[%s0 + $0x74] sm:$0xf]
  %v990 = vld [vmem:[%s0 + $0x78] sm:$0xf]
  %v991 = vld [vmem:[%s0 + $0x7c] sm:$0xf]
  %v992 = vld [vmem:[%s0 + $0x80] sm:$0xf]
  %v993 = vld [vmem:[%s0 + $0x84] sm:$0xf]
  %v994 = vld [vmem:[%s0 + $0x88] sm:$0xf]
  %v995 = vld [vmem:[%s0 + $0x8c] sm:$0xf]
  %v996 = vld [vmem:[%s0 + $0x90] sm:$0xf]
  %v997 = vld [vmem:[%s0 + $0x94] sm:$0xf]
  %v998 = vld [vmem:[%s0 + $0x98] sm:$0xf]
  %v999 = vld [vmem:[%s0 + $0x9c] sm:$0xf]
  %v1000 = vld [vmem:[%s0 + $0xa0] sm:$0xf]
  %v1001 = vld [vmem:[%s0 + $0xa4] sm:$0xf]
  %v1002 = vld [vmem:[%s0 + $0xa8] sm:$0xf]
  %v1003 = vld [vmem:[%s0 + $0xac] sm:$0xf]
  %v1004 = vld [vmem:[%s0 + $0xb0] sm:$0xf]
  %v1005 = vld [vmem:[%s0 + $0xb4] sm:$0xf]
  %v1006 = vld [vmem:[%s0 + $0xb8] sm:$0xf]
  %v1007 = vld [vmem:[%s0 + $0xbc] sm:$0xf]
  %v1008 = vld [vmem:[%s0 + $0xc0] sm:$0xf]
  %v1009 = vld [vmem:[%s0 + $0xc4] sm:$0xf]
  %v1010 = vld [vmem:[%s0 + $0xc8] sm:$0xf]
  %v1011 = vld [vmem:[%s0 + $0xcc] sm:$0xf]
  %v1012 = vld [vmem:[%s0 + $0xd0] sm:$0xf]
  %v1013 = vld [vmem:[%s0 + $0xd4] sm:$0xf]
  %v1014 = vld [vmem:[%s0 + $0xd8] sm:$0xf]
  %v1015 = vld [vmem:[%s0 + $0xdc] sm:$0xf]
  %v1016 = vld [vmem:[%s0 + $0xe0] sm:$0xf]
  %v1017 = vld [vmem:[%s0 + $0xe4] sm:$0xf]
  %v1018 = vld [vmem:[%s0 + $0xe8] sm:$0xf]
  %v1019 = vld [vmem:[%s0 + $0xec] sm:$0xf]
  %v1020 = vld [vmem:[%s0 + $0xf0] sm:$0xf]
  %v1021 = vld [vmem:[%s0 + $0xf4] sm:$0xf]
  %v1022 = vld [vmem:[%s0 + $0xf8] sm:$0xf]
  %v1023 = vld [vmem:[%s0 + $0xfc] sm:$0xf]
  %v1024 = vld [vmem:[%s3] sm:$0xf]
  %v1025 = vld [vmem:[%s3 + $0x4] sm:$0xf]
  %v1026 = vld [vmem:[%s3 + $0x8] sm:$0xf]
  %v1027 = vld [vmem:[%s3 + $0xc] sm:$0xf]
  %v1028 = vld [vmem:[%s3 + $0x10] sm:$0xf]
  %v1029 = vld [vmem:[%s3 + $0x14] sm:$0xf]
  %v1030 = vld [vmem:[%s3 + $0x18] sm:$0xf]
  %v1031 = vld [vmem:[%s3 + $0x1c] sm:$0xf]
  %v1032 = vld [vmem:[%s3 + $0x20] sm:$0xf]
  %v1033 = vld [vmem:[%s3 + $0x24] sm:$0xf]
  %v1034 = vld [vmem:[%s3 + $0x28] sm:$0xf]
  %v1035 = vld [vmem:[%s3 + $0x2c] sm:$0xf]
  %v1036 = vld [vmem:[%s3 + $0x30] sm:$0xf]
  %v1037 = vld [vmem:[%s3 + $0x34] sm:$0xf]
  %v1038 = vld [vmem:[%s3 + $0x38] sm:$0xf]
  %v1039 = vld [vmem:[%s3 + $0x3c] sm:$0xf]
  %v1040 = vld [vmem:[%s4] sm:$0xf]
  %v1041 = vld [vmem:[%s4 + $0x4] sm:$0xf]
  %v1042 = vld [vmem:[%s4 + $0x8] sm:$0xf]
  %v1043 = vld [vmem:[%s4 + $0xc] sm:$0xf]
  %v1044 = vld [vmem:[%s4 + $0x10] sm:$0xf]
  %v1045 = vld [vmem:[%s4 + $0x14] sm:$0xf]
  %v1046 = vld [vmem:[%s4 + $0x18] sm:$0xf]
  %v1047 = vld [vmem:[%s4 + $0x1c] sm:$0xf]
  %v1048 = vld [vmem:[%s4 + $0x20] sm:$0xf]
  %v1049 = vld [vmem:[%s4 + $0x24] sm:$0xf]
  %v1050 = vld [vmem:[%s4 + $0x28] sm:$0xf]
  %v1051 = vld [vmem:[%s4 + $0x2c] sm:$0xf]
  %v1052 = vld [vmem:[%s4 + $0x30] sm:$0xf]
  %v1053 = vld [vmem:[%s4 + $0x34] sm:$0xf]
  %v1054 = vld [vmem:[%s4 + $0x38] sm:$0xf]
  %v1055 = vld [vmem:[%s4 + $0x3c] sm:$0xf]
  %v1072 = vunpack.c.l.b16 %v1040
  %v1073 = vunpack.c.l.b16 %v1041
  %v1074 = vunpack.c.l.b16 %v1042
  %v1075 = vunpack.c.l.b16 %v1043
  %v1076 = vunpack.c.l.b16 %v1044
  %v1077 = vunpack.c.l.b16 %v1045
  %v1078 = vunpack.c.l.b16 %v1046
  %v1079 = vunpack.c.l.b16 %v1047
  %v1080 = vunpack.c.l.b16 %v1048
  %v1081 = vunpack.c.l.b16 %v1049
  %v1082 = vunpack.c.l.b16 %v1050
  %v1083 = vunpack.c.l.b16 %v1051
  %v1084 = vunpack.c.l.b16 %v1052
  %v1085 = vunpack.c.l.b16 %v1053
  %v1086 = vunpack.c.l.b16 %v1054
  %v1087 = vunpack.c.l.b16 %v1055
  %v1088 = vpack.c.b16 %v1073, %v1072
  %v1089 = vpack.c.b16 %v1075, %v1074
  %v1090 = vpack.c.b16 %v1077, %v1076
  %v1091 = vpack.c.b16 %v1079, %v1078
  %v1092 = vpack.c.b16 %v1081, %v1080
  %v1093 = vpack.c.b16 %v1083, %v1082
  %v1094 = vpack.c.b16 %v1085, %v1084
  %v1095 = vpack.c.b16 %v1087, %v1086
  %1104 = vmatprep.subr.bf16.mxu0 0
  %1105 = vmatpush1.bf16.msra.mxu0 %v1088
  %1106 = vmatprep.subr.bf16.mxu0 0
  %1107 = vmatpush1.bf16.msra.mxu0 %v1089
  %1108 = vmatprep.subr.bf16.mxu0 0
  %1109 = vmatpush1.bf16.msra.mxu0 %v1090
  %1110 = vmatprep.subr.bf16.mxu0 0
  %1111 = vmatpush1.bf16.msra.mxu0 %v1091
  %1112 = vmatprep.subr.bf16.mxu0 0
  %1113 = vmatpush1.bf16.msra.mxu0 %v1092
  %1114 = vmatprep.subr.bf16.mxu0 0
  %1115 = vmatpush1.bf16.msra.mxu0 %v1093
  %1116 = vmatprep.subr.bf16.mxu0 0
  %1117 = vmatpush1.bf16.msra.mxu0 %v1094
  %1118 = vmatprep.subr.bf16.mxu0 0
  %1119 = vmatpush1.bf16.msra.mxu0 %v1095
  %1120 = vmatprep.subr.bf16.mxu0 0
  %1121 = vmatpush1.bf16.msra.mxu0 0
  %1122 = vmatprep.subr.bf16.mxu0 0
  %1123 = vmatpush1.bf16.msra.mxu0 0
  %1124 = vmatprep.subr.bf16.mxu0 0
  %1125 = vmatpush1.bf16.msra.mxu0 0
  %1126 = vmatprep.subr.bf16.mxu0 0
  %1127 = vmatpush1.bf16.msra.mxu0 0
  %1128 = vmatprep.subr.bf16.mxu0 0
  %1129 = vmatpush1.bf16.msra.mxu0 0
  %1130 = vmatprep.subr.bf16.mxu0 0
  %1131 = vmatpush1.bf16.msra.mxu0 0
  %1132 = vmatprep.subr.bf16.mxu0 0
  %1133 = vmatpush1.bf16.msra.mxu0 0
  %1134 = vmatprep.subr.bf16.mxu0 0
  %1135 = vmatpush1.bf16.msra.mxu0 0
  %1136 = vmatprep.mubr.bf16.mxu0 0
  %1137 = vmatmul.mubr.bf16.gmra.mrb[0].mxu0 %v928
  %v1138 = vpop.f32.mrb[0].mxu0
  %v1139 = vadd.f32 0.0, %v1138
  %v1140 = vpop.f32.mrb[0].mxu0
  %v1141 = vpop.f32.mrb[0].mxu0
  %v1142 = vadd.f32 0.0, %v1141
  %v1143 = vpop.f32.mrb[0].mxu0
  %1144 = vmatprep.mubr.bf16.mxu0 0
  %1145 = vmatmul.mubr.bf16.gmra.mrb[0].mxu0 %v929
  %v1146 = vpop.f32.mrb[0].mxu0
  %v1147 = vadd.f32 0.0, %v1146
  %v1148 = vpop.f32.mrb[0].mxu0
  %v1149 = vpop.f32.mrb[0].mxu0
  %v1150 = vadd.f32 0.0, %v1149
  %v1151 = vpop.f32.mrb[0].mxu0
  %1152 = vmatprep.mubr.bf16.mxu0 0
  %1153 = vmatmul.mubr.bf16.gmra.mrb[0].mxu0 %v930
  %v1154 = vpop.f32.mrb[0].mxu0
  %v1155 = vadd.f32 0.0, %v1154
  %v1156 = vpop.f32.mrb[0].mxu0
  %v1157 = vpop.f32.mrb[0].mxu0
  %v1158 = vadd.f32 0.0, %v1157
  %v1159 = vpop.f32.mrb[0].mxu0
  %1160 = vmatprep.mubr.bf16.mxu0 0
  %1161 = vmatmul.mubr.bf16.gmra.mrb[0].mxu0 %v931
  %v1162 = vpop.f32.mrb[0].mxu0
  %v1163 = vadd.f32 0.0, %v1162
  %v1164 = vpop.f32.mrb[0].mxu0
  %v1165 = vpop.f32.mrb[0].mxu0
  %v1166 = vadd.f32 0.0, %v1165
  %v1167 = vpop.f32.mrb[0].mxu0
  %1168 = vmatprep.mubr.bf16.mxu0 0
  %1169 = vmatmul.mubr.bf16.gmra.mrb[0].mxu0 %v932
  %v1170 = vpop.f32.mrb[0].mxu0
  %v1171 = vadd.f32 0.0, %v1170
  %v1172 = vpop.f32.mrb[0].mxu0
  %v1173 = vpop.f32.mrb[0].mxu0
  %v1174 = vadd.f32 0.0, %v1173
  %v1175 = vpop.f32.mrb[0].mxu0
  %1176 = vmatprep.mubr.bf16.mxu0 0
  %1177 = vmatmul.mubr.bf16.gmra.mrb[0].mxu0 %v933
  %v1178 = vpop.f32.mrb[0].mxu0
  %v1179 = vadd.f32 0.0, %v1178
  %v1180 = vpop.f32.mrb[0].mxu0
  %v1181 = vpop.f32.mrb[0].mxu0
  %v1182 = vadd.f32 0.0, %v1181
  %v1183 = vpop.f32.mrb[0].mxu0
  %1184 = vmatprep.mubr.bf16.mxu0 0
  %1185 = vmatmul.mubr.bf16.gmra.mrb[0].mxu0 %v934
  %v1186 = vpop.f32.mrb[0].mxu0
  %v1187 = vadd.f32 0.0, %v1186
  %v1188 = vpop.f32.mrb[0].mxu0
  %v1189 = vpop.f32.mrb[0].mxu0
  %v1190 = vadd.f32 0.0, %v1189
  %v1191 = vpop.f32.mrb[0].mxu0
  %1192 = vmatprep.mubr.bf16.mxu0 0
  %1193 = vmatmul.mubr.bf16.gmra.mrb[0].mxu0 %v935
  %v1194 = vpop.f32.mrb[0].mxu0
  %v1195 = vadd.f32 0.0, %v1194
  %v1196 = vpop.f32.mrb[0].mxu0
  %v1197 = vpop.f32.mrb[0].mxu0
  %v1198 = vadd.f32 0.0, %v1197
  %v1199 = vpop.f32.mrb[0].mxu0
  %1200 = vmatprep.mubr.bf16.mxu0 0
  %1201 = vmatmul.mubr.bf16.gmra.mrb[0].mxu0 %v936
  %v1202 = vpop.f32.mrb[0].mxu0
  %v1203 = vadd.f32 0.0, %v1202
  %v1204 = vpop.f32.mrb[0].mxu0
  %v1205 = vpop.f32.mrb[0].mxu0
  %v1206 = vadd.f32 0.0, %v1205
  %v1207 = vpop.f32.mrb[0].mxu0
  %1208 = vmatprep.mubr.bf16.mxu0 0
  %1209 = vmatmul.mubr.bf16.gmra.mrb[0].mxu0 %v937
  %v1210 = vpop.f32.mrb[0].mxu0
  %v1211 = vadd.f32 0.0, %v1210
  %v1212 = vpop.f32.mrb[0].mxu0
  %v1213 = vpop.f32.mrb[0].mxu0
  %v1214 = vadd.f32 0.0, %v1213
  %v1215 = vpop.f32.mrb[0].mxu0
  %1216 = vmatprep.mubr.bf16.mxu0 0
  %1217 = vmatmul.mubr.bf16.gmra.mrb[0].mxu0 %v938
  %v1218 = vpop.f32.mrb[0].mxu0
  %v1219 = vadd.f32 0.0, %v1218
  %v1220 = vpop.f32.mrb[0].mxu0
  %v1221 = vpop.f32.mrb[0].mxu0
  %v1222 = vadd.f32 0.0, %v1221
  %v1223 = vpop.f32.mrb[0].mxu0
  %1224 = vmatprep.mubr.bf16.mxu0 0
  %1225 = vmatmul.mubr.bf16.gmra.mrb[0].mxu0 %v939
  %v1226 = vpop.f32.mrb[0].mxu0
  %v1227 = vadd.f32 0.0, %v1226
  %v1228 = vpop.f32.mrb[0].mxu0
  %v1229 = vpop.f32.mrb[0].mxu0
  %v1230 = vadd.f32 0.0, %v1229
  %v1231 = vpop.f32.mrb[0].mxu0
  %1232 = vmatprep.mubr.bf16.mxu0 0
  %1233 = vmatmul.mubr.bf16.gmra.mrb[0].mxu0 %v940
  %v1234 = vpop.f32.mrb[0].mxu0
  %v1235 = vadd.f32 0.0, %v1234
  %v1236 = vpop.f32.mrb[0].mxu0
  %v1237 = vpop.f32.mrb[0].mxu0
  %v1238 = vadd.f32 0.0, %v1237
  %v1239 = vpop.f32.mrb[0].mxu0
  %1240 = vmatprep.mubr.bf16.mxu0 0
  %1241 = vmatmul.mubr.bf16.gmra.mrb[0].mxu0 %v941
  %v1242 = vpop.f32.mrb[0].mxu0
  %v1243 = vadd.f32 0.0, %v1242
  %v1244 = vpop.f32.mrb[0].mxu0
  %v1245 = vpop.f32.mrb[0].mxu0
  %v1246 = vadd.f32 0.0, %v1245
  %v1247 = vpop.f32.mrb[0].mxu0
  %1248 = vmatprep.mubr.bf16.mxu0 0
  %1249 = vmatmul.mubr.bf16.gmra.mrb[0].mxu0 %v942
  %v1250 = vpop.f32.mrb[0].mxu0
  %v1251 = vadd.f32 0.0, %v1250
  %v1252 = vpop.f32.mrb[0].mxu0
  %v1253 = vpop.f32.mrb[0].mxu0
  %v1254 = vadd.f32 0.0, %v1253
  %v1255 = vpop.f32.mrb[0].mxu0
  %1256 = vmatprep.mubr.bf16.mxu0 0
  %1257 = vmatmul.mubr.bf16.gmra.mrb[0].mxu0 %v943
  %v1258 = vpop.f32.mrb[0].mxu0
  %v1259 = vadd.f32 0.0, %v1258
  %v1260 = vpop.f32.mrb[0].mxu0
  %v1261 = vpop.f32.mrb[0].mxu0
  %v1262 = vadd.f32 0.0, %v1261
  %v1263 = vpop.f32.mrb[0].mxu0
  %1264 = vmatprep.mubr.bf16.mxu0 0
  %1265 = vmatmul.mubr.bf16.gmra.mrb[0].mxu0 %v944
  %v1266 = vpop.f32.mrb[0].mxu0
  %v1267 = vadd.f32 0.0, %v1266
  %v1268 = vpop.f32.mrb[0].mxu0
  %v1269 = vpop.f32.mrb[0].mxu0
  %v1270 = vadd.f32 0.0, %v1269
  %v1271 = vpop.f32.mrb[0].mxu0
  %1272 = vmatprep.mubr.bf16.mxu0 0
  %1273 = vmatmul.mubr.bf16.gmra.mrb[0].mxu0 %v945
  %v1274 = vpop.f32.mrb[0].mxu0
  %v1275 = vadd.f32 0.0, %v1274
  %v1276 = vpop.f32.mrb[0].mxu0
  %v1277 = vpop.f32.mrb[0].mxu0
  %v1278 = vadd.f32 0.0, %v1277
  %v1279 = vpop.f32.mrb[0].mxu0
  %1280 = vmatprep.mubr.bf16.mxu0 0
  %1281 = vmatmul.mubr.bf16.gmra.mrb[0].mxu0 %v946
  %v1282 = vpop.f32.mrb[0].mxu0
  %v1283 = vadd.f32 0.0, %v1282
  %v1284 = vpop.f32.mrb[0].mxu0
  %v1285 = vpop.f32.mrb[0].mxu0
  %v1286 = vadd.f32 0.0, %v1285
  %v1287 = vpop.f32.mrb[0].mxu0
  %1288 = vmatprep.mubr.bf16.mxu0 0
  %1289 = vmatmul.mubr.bf16.gmra.mrb[0].mxu0 %v947
  %v1290 = vpop.f32.mrb[0].mxu0
  %v1291 = vadd.f32 0.0, %v1290
  %v1292 = vpop.f32.mrb[0].mxu0
  %v1293 = vpop.f32.mrb[0].mxu0
  %v1294 = vadd.f32 0.0, %v1293
  %v1295 = vpop.f32.mrb[0].mxu0
  %1296 = vmatprep.mubr.bf16.mxu0 0
  %1297 = vmatmul.mubr.bf16.gmra.mrb[0].mxu0 %v948
  %v1298 = vpop.f32.mrb[0].mxu0
  %v1299 = vadd.f32 0.0, %v1298
  %v1300 = vpop.f32.mrb[0].mxu0
  %v1301 = vpop.f32.mrb[0].mxu0
  %v1302 = vadd.f32 0.0, %v1301
  %v1303 = vpop.f32.mrb[0].mxu0
  %1304 = vmatprep.mubr.bf16.mxu0 0
  %1305 = vmatmul.mubr.bf16.gmra.mrb[0].mxu0 %v949
  %v1306 = vpop.f32.mrb[0].mxu0
  %v1307 = vadd.f32 0.0, %v1306
  %v1308 = vpop.f32.mrb[0].mxu0
  %v1309 = vpop.f32.mrb[0].mxu0
  %v1310 = vadd.f32 0.0, %v1309
  %v1311 = vpop.f32.mrb[0].mxu0
  %1312 = vmatprep.mubr.bf16.mxu0 0
  %1313 = vmatmul.mubr.bf16.gmra.mrb[0].mxu0 %v950
  %v1314 = vpop.f32.mrb[0].mxu0
  %v1315 = vadd.f32 0.0, %v1314
  %v1316 = vpop.f32.mrb[0].mxu0
  %v1317 = vpop.f32.mrb[0].mxu0
  %v1318 = vadd.f32 0.0, %v1317
  %v1319 = vpop.f32.mrb[0].mxu0
  %1320 = vmatprep.mubr.bf16.mxu0 0
  %1321 = vmatmul.mubr.bf16.gmra.mrb[0].mxu0 %v951
  %v1322 = vpop.f32.mrb[0].mxu0
  %v1323 = vadd.f32 0.0, %v1322
  %v1324 = vpop.f32.mrb[0].mxu0
  %v1325 = vpop.f32.mrb[0].mxu0
  %v1326 = vadd.f32 0.0, %v1325
  %v1327 = vpop.f32.mrb[0].mxu0
  %1328 = vmatprep.mubr.bf16.mxu0 0
  %1329 = vmatmul.mubr.bf16.gmra.mrb[0].mxu0 %v952
  %v1330 = vpop.f32.mrb[0].mxu0
  %v1331 = vadd.f32 0.0, %v1330
  %v1332 = vpop.f32.mrb[0].mxu0
  %v1333 = vpop.f32.mrb[0].mxu0
  %v1334 = vadd.f32 0.0, %v1333
  %v1335 = vpop.f32.mrb[0].mxu0
  %1336 = vmatprep.mubr.bf16.mxu0 0
  %1337 = vmatmul.mubr.bf16.gmra.mrb[0].mxu0 %v953
  %v1338 = vpop.f32.mrb[0].mxu0
  %v1339 = vadd.f32 0.0, %v1338
  %v1340 = vpop.f32.mrb[0].mxu0
  %v1341 = vpop.f32.mrb[0].mxu0
  %v1342 = vadd.f32 0.0, %v1341
  %v1343 = vpop.f32.mrb[0].mxu0
  %1344 = vmatprep.mubr.bf16.mxu0 0
  %1345 = vmatmul.mubr.bf16.gmra.mrb[0].mxu0 %v954
  %v1346 = vpop.f32.mrb[0].mxu0
  %v1347 = vadd.f32 0.0, %v1346
  %v1348 = vpop.f32.mrb[0].mxu0
  %v1349 = vpop.f32.mrb[0].mxu0
  %v1350 = vadd.f32 0.0, %v1349
  %v1351 = vpop.f32.mrb[0].mxu0
  %1352 = vmatprep.mubr.bf16.mxu0 0
  %1353 = vmatmul.mubr.bf16.gmra.mrb[0].mxu0 %v955
  %v1354 = vpop.f32.mrb[0].mxu0
  %v1355 = vadd.f32 0.0, %v1354
  %v1356 = vpop.f32.mrb[0].mxu0
  %v1357 = vpop.f32.mrb[0].mxu0
  %v1358 = vadd.f32 0.0, %v1357
  %v1359 = vpop.f32.mrb[0].mxu0
  %1360 = vmatprep.mubr.bf16.mxu0 0
  %1361 = vmatmul.mubr.bf16.gmra.mrb[0].mxu0 %v956
  %v1362 = vpop.f32.mrb[0].mxu0
  %v1363 = vadd.f32 0.0, %v1362
  %v1364 = vpop.f32.mrb[0].mxu0
  %v1365 = vpop.f32.mrb[0].mxu0
  %v1366 = vadd.f32 0.0, %v1365
  %v1367 = vpop.f32.mrb[0].mxu0
  %1368 = vmatprep.mubr.bf16.mxu0 0
  %1369 = vmatmul.mubr.bf16.gmra.mrb[0].mxu0 %v957
  %v1370 = vpop.f32.mrb[0].mxu0
  %v1371 = vadd.f32 0.0, %v1370
  %v1372 = vpop.f32.mrb[0].mxu0
  %v1373 = vpop.f32.mrb[0].mxu0
  %v1374 = vadd.f32 0.0, %v1373
  %v1375 = vpop.f32.mrb[0].mxu0
  %1376 = vmatprep.mubr.bf16.mxu0 0
  %1377 = vmatmul.mubr.bf16.gmra.mrb[0].mxu0 %v958
  %v1378 = vpop.f32.mrb[0].mxu0
  %v1379 = vadd.f32 0.0, %v1378
  %v1380 = vpop.f32.mrb[0].mxu0
  %v1381 = vpop.f32.mrb[0].mxu0
  %v1382 = vadd.f32 0.0, %v1381
  %v1383 = vpop.f32.mrb[0].mxu0
  %1384 = vmatprep.mubr.bf16.mxu0 0
  %1385 = vmatmul.mubr.bf16.gmra.mrb[0].mxu0 %v959
  %v1386 = vpop.f32.mrb[0].mxu0
  %v1387 = vadd.f32 0.0, %v1386
  %v1388 = vpop.f32.mrb[0].mxu0
  %v1389 = vpop.f32.mrb[0].mxu0
  %v1390 = vadd.f32 0.0, %v1389
  %v1391 = vpop.f32.mrb[0].mxu0
  %1392 = vdwg.mxu0
  %v1457 = vunpack.c.l.b16 %v960
  %v1458 = vunpack.c.l.b16 %v961
  %v1459 = vunpack.c.l.b16 %v962
  %v1460 = vunpack.c.l.b16 %v963
  %v1461 = vunpack.c.l.b16 %v964
  %v1462 = vunpack.c.l.b16 %v965
  %v1463 = vunpack.c.l.b16 %v966
  %v1464 = vunpack.c.l.b16 %v967
  %v1465 = vunpack.c.l.b16 %v968
  %v1466 = vunpack.c.l.b16 %v969
  %v1467 = vunpack.c.l.b16 %v970
  %v1468 = vunpack.c.l.b16 %v971
  %v1469 = vunpack.c.l.b16 %v972
  %v1470 = vunpack.c.l.b16 %v973
  %v1471 = vunpack.c.l.b16 %v974
  %v1472 = vunpack.c.l.b16 %v975
  %v1473 = vunpack.c.l.b16 %v976
  %v1474 = vunpack.c.l.b16 %v977
  %v1475 = vunpack.c.l.b16 %v978
  %v1476 = vunpack.c.l.b16 %v979
  %v1477 = vunpack.c.l.b16 %v980
  %v1478 = vunpack.c.l.b16 %v981
  %v1479 = vunpack.c.l.b16 %v982
  %v1480 = vunpack.c.l.b16 %v983
  %v1481 = vunpack.c.l.b16 %v984
  %v1482 = vunpack.c.l.b16 %v985
  %v1483 = vunpack.c.l.b16 %v986
  %v1484 = vunpack.c.l.b16 %v987
  %v1485 = vunpack.c.l.b16 %v988
  %v1486 = vunpack.c.l.b16 %v989
  %v1487 = vunpack.c.l.b16 %v990
  %v1488 = vunpack.c.l.b16 %v991
  %v1489 = vunpack.c.l.b16 %v992
  %v1490 = vunpack.c.l.b16 %v993
  %v1491 = vunpack.c.l.b16 %v994
  %v1492 = vunpack.c.l.b16 %v995
  %v1493 = vunpack.c.l.b16 %v996
  %v1494 = vunpack.c.l.b16 %v997
  %v1495 = vunpack.c.l.b16 %v998
  %v1496 = vunpack.c.l.b16 %v999
  %v1497 = vunpack.c.l.b16 %v1000
  %v1498 = vunpack.c.l.b16 %v1001
  %v1499 = vunpack.c.l.b16 %v1002
  %v1500 = vunpack.c.l.b16 %v1003
  %v1501 = vunpack.c.l.b16 %v1004
  %v1502 = vunpack.c.l.b16 %v1005
  %v1503 = vunpack.c.l.b16 %v1006
  %v1504 = vunpack.c.l.b16 %v1007
  %v1505 = vunpack.c.l.b16 %v1008
  %v1506 = vunpack.c.l.b16 %v1009
  %v1507 = vunpack.c.l.b16 %v1010
  %v1508 = vunpack.c.l.b16 %v1011
  %v1509 = vunpack.c.l.b16 %v1012
  %v1510 = vunpack.c.l.b16 %v1013
  %v1511 = vunpack.c.l.b16 %v1014
  %v1512 = vunpack.c.l.b16 %v1015
  %v1513 = vunpack.c.l.b16 %v1016
  %v1514 = vunpack.c.l.b16 %v1017
  %v1515 = vunpack.c.l.b16 %v1018
  %v1516 = vunpack.c.l.b16 %v1019
  %v1517 = vunpack.c.l.b16 %v1020
  %v1518 = vunpack.c.l.b16 %v1021
  %v1519 = vunpack.c.l.b16 %v1022
  %v1520 = vunpack.c.l.b16 %v1023
  %v1521 = vpack.c.b16 %v1458, %v1457
  %v1522 = vpack.c.b16 %v1460, %v1459
  %v1523 = vpack.c.b16 %v1462, %v1461
  %v1524 = vpack.c.b16 %v1464, %v1463
  %v1525 = vpack.c.b16 %v1466, %v1465
  %v1526 = vpack.c.b16 %v1468, %v1467
  %v1527 = vpack.c.b16 %v1470, %v1469
  %v1528 = vpack.c.b16 %v1472, %v1471
  %v1529 = vpack.c.b16 %v1474, %v1473
  %v1530 = vpack.c.b16 %v1476, %v1475
  %v1531 = vpack.c.b16 %v1478, %v1477
  %v1532 = vpack.c.b16 %v1480, %v1479
  %v1533 = vpack.c.b16 %v1482, %v1481
  %v1534 = vpack.c.b16 %v1484, %v1483
  %v1535 = vpack.c.b16 %v1486, %v1485
  %v1536 = vpack.c.b16 %v1488, %v1487
  %v1537 = vpack.c.b16 %v1490, %v1489
  %v1538 = vpack.c.b16 %v1492, %v1491
  %v1539 = vpack.c.b16 %v1494, %v1493
  %v1540 = vpack.c.b16 %v1496, %v1495
  %v1541 = vpack.c.b16 %v1498, %v1497
  %v1542 = vpack.c.b16 %v1500, %v1499
  %v1543 = vpack.c.b16 %v1502, %v1501
  %v1544 = vpack.c.b16 %v1504, %v1503
  %v1545 = vpack.c.b16 %v1506, %v1505
  %v1546 = vpack.c.b16 %v1508, %v1507
  %v1547 = vpack.c.b16 %v1510, %v1509
  %v1548 = vpack.c.b16 %v1512, %v1511
  %v1549 = vpack.c.b16 %v1514, %v1513
  %v1550 = vpack.c.b16 %v1516, %v1515
  %v1551 = vpack.c.b16 %v1518, %v1517
  %v1552 = vpack.c.b16 %v1520, %v1519
  %v1601 = vunpack.c.l.b16 %v1024
  %v1602 = vunpack.c.l.b16 %v1025
  %v1603 = vunpack.c.l.b16 %v1026
  %v1604 = vunpack.c.l.b16 %v1027
  %v1605 = vunpack.c.l.b16 %v1028
  %v1606 = vunpack.c.l.b16 %v1029
  %v1607 = vunpack.c.l.b16 %v1030
  %v1608 = vunpack.c.l.b16 %v1031
  %v1609 = vunpack.c.l.b16 %v1032
  %v1610 = vunpack.c.l.b16 %v1033
  %v1611 = vunpack.c.l.b16 %v1034
  %v1612 = vunpack.c.l.b16 %v1035
  %v1613 = vunpack.c.l.b16 %v1036
  %v1614 = vunpack.c.l.b16 %v1037
  %v1615 = vunpack.c.l.b16 %v1038
  %v1616 = vunpack.c.l.b16 %v1039
  %v1617 = vpack.c.b16 %v1602, %v1601
  %v1618 = vpack.c.b16 %v1604, %v1603
  %v1619 = vpack.c.b16 %v1606, %v1605
  %v1620 = vpack.c.b16 %v1608, %v1607
  %v1621 = vpack.c.b16 %v1610, %v1609
  %v1622 = vpack.c.b16 %v1612, %v1611
  %v1623 = vpack.c.b16 %v1614, %v1613
  %v1624 = vpack.c.b16 %v1616, %v1615
  %1633 = vmatprep.subr.bf16.mxu0 0
  %1634 = vmatpush1.bf16.msra.mxu0 %v1617
  %1635 = vmatprep.subr.bf16.mxu0 0
  %1636 = vmatpush1.bf16.msra.mxu0 %v1618
  %1637 = vmatprep.subr.bf16.mxu0 0
  %1638 = vmatpush1.bf16.msra.mxu0 %v1619
  %1639 = vmatprep.subr.bf16.mxu0 0
  %1640 = vmatpush1.bf16.msra.mxu0 %v1620
  %1641 = vmatprep.subr.bf16.mxu0 0
  %1642 = vmatpush1.bf16.msra.mxu0 %v1621
  %1643 = vmatprep.subr.bf16.mxu0 0
  %1644 = vmatpush1.bf16.msra.mxu0 %v1622
  %1645 = vmatprep.subr.bf16.mxu0 0
  %1646 = vmatpush1.bf16.msra.mxu0 %v1623
  %1647 = vmatprep.subr.bf16.mxu0 0
  %1648 = vmatpush1.bf16.msra.mxu0 %v1624
  %1649 = vmatprep.subr.bf16.mxu0 0
  %1650 = vmatpush1.bf16.msra.mxu0 0
  %1651 = vmatprep.subr.bf16.mxu0 0
  %1652 = vmatpush1.bf16.msra.mxu0 0
  %1653 = vmatprep.subr.bf16.mxu0 0
  %1654 = vmatpush1.bf16.msra.mxu0 0
  %1655 = vmatprep.subr.bf16.mxu0 0
  %1656 = vmatpush1.bf16.msra.mxu0 0
  %1657 = vmatprep.subr.bf16.mxu0 0
  %1658 = vmatpush1.bf16.msra.mxu0 0
  %1659 = vmatprep.subr.bf16.mxu0 0
  %1660 = vmatpush1.bf16.msra.mxu0 0
  %1661 = vmatprep.subr.bf16.mxu0 0
  %1662 = vmatpush1.bf16.msra.mxu0 0
  %1663 = vmatprep.subr.bf16.mxu0 0
  %1664 = vmatpush1.bf16.msra.mxu0 0
  %1665 = vmatprep.mubr.bf16.mxu0 0
  %1666 = vmatmul.mubr.bf16.gmra.mrb[0].mxu0 %v1521
  %v1667 = vpop.f32.mrb[0].mxu0
  %v1668 = vadd.f32 %v1139, %v1667
  %v1669 = vpop.f32.mrb[0].mxu0
  %v1670 = vpop.f32.mrb[0].mxu0
  %v1671 = vadd.f32 %v1142, %v1670
  %v1672 = vpop.f32.mrb[0].mxu0
  %1673 = vmatprep.mubr.bf16.mxu0 0
  %1674 = vmatmul.mubr.bf16.gmra.mrb[0].mxu0 %v1522
  %v1675 = vpop.f32.mrb[0].mxu0
  %v1676 = vadd.f32 %v1147, %v1675
  %v1677 = vpop.f32.mrb[0].mxu0
  %v1678 = vpop.f32.mrb[0].mxu0
  %v1679 = vadd.f32 %v1150, %v1678
  %v1680 = vpop.f32.mrb[0].mxu0
  %1681 = vmatprep.mubr.bf16.mxu0 0
  %1682 = vmatmul.mubr.bf16.gmra.mrb[0].mxu0 %v1523
  %v1683 = vpop.f32.mrb[0].mxu0
  %v1684 = vadd.f32 %v1155, %v1683
  %v1685 = vpop.f32.mrb[0].mxu0
  %v1686 = vpop.f32.mrb[0].mxu0
  %v1687 = vadd.f32 %v1158, %v1686
  %v1688 = vpop.f32.mrb[0].mxu0
  %1689 = vmatprep.mubr.bf16.mxu0 0
  %1690 = vmatmul.mubr.bf16.gmra.mrb[0].mxu0 %v1524
  %v1691 = vpop.f32.mrb[0].mxu0
  %v1692 = vadd.f32 %v1163, %v1691
  %v1693 = vpop.f32.mrb[0].mxu0
  %v1694 = vpop.f32.mrb[0].mxu0
  %v1695 = vadd.f32 %v1166, %v1694
  %v1696 = vpop.f32.mrb[0].mxu0
  %1697 = vmatprep.mubr.bf16.mxu0 0
  %1698 = vmatmul.mubr.bf16.gmra.mrb[0].mxu0 %v1525
  %v1699 = vpop.f32.mrb[0].mxu0
  %v1700 = vadd.f32 %v1171, %v1699
  %v1701 = vpop.f32.mrb[0].mxu0
  %v1702 = vpop.f32.mrb[0].mxu0
  %v1703 = vadd.f32 %v1174, %v1702
  %v1704 = vpop.f32.mrb[0].mxu0
  %1705 = vmatprep.mubr.bf16.mxu0 0
  %1706 = vmatmul.mubr.bf16.gmra.mrb[0].mxu0 %v1526
  %v1707 = vpop.f32.mrb[0].mxu0
  %v1708 = vadd.f32 %v1179, %v1707
  %v1709 = vpop.f32.mrb[0].mxu0
  %v1710 = vpop.f32.mrb[0].mxu0
  %v1711 = vadd.f32 %v1182, %v1710
  %v1712 = vpop.f32.mrb[0].mxu0
  %1713 = vmatprep.mubr.bf16.mxu0 0
  %1714 = vmatmul.mubr.bf16.gmra.mrb[0].mxu0 %v1527
  %v1715 = vpop.f32.mrb[0].mxu0
  %v1716 = vadd.f32 %v1187, %v1715
  %v1717 = vpop.f32.mrb[0].mxu0
  %v1718 = vpop.f32.mrb[0].mxu0
  %v1719 = vadd.f32 %v1190, %v1718
  %v1720 = vpop.f32.mrb[0].mxu0
  %1721 = vmatprep.mubr.bf16.mxu0 0
  %1722 = vmatmul.mubr.bf16.gmra.mrb[0].mxu0 %v1528
  %v1723 = vpop.f32.mrb[0].mxu0
  %v1724 = vadd.f32 %v1195, %v1723
  %v1725 = vpop.f32.mrb[0].mxu0
  %v1726 = vpop.f32.mrb[0].mxu0
  %v1727 = vadd.f32 %v1198, %v1726
  %v1728 = vpop.f32.mrb[0].mxu0
  %1729 = vmatprep.mubr.bf16.mxu0 0
  %1730 = vmatmul.mubr.bf16.gmra.mrb[0].mxu0 %v1529
  %v1731 = vpop.f32.mrb[0].mxu0
  %v1732 = vadd.f32 %v1203, %v1731
  %v1733 = vpop.f32.mrb[0].mxu0
  %v1734 = vpop.f32.mrb[0].mxu0
  %v1735 = vadd.f32 %v1206, %v1734
  %v1736 = vpop.f32.mrb[0].mxu0
  %1737 = vmatprep.mubr.bf16.mxu0 0
  %1738 = vmatmul.mubr.bf16.gmra.mrb[0].mxu0 %v1530
  %v1739 = vpop.f32.mrb[0].mxu0
  %v1740 = vadd.f32 %v1211, %v1739
  %v1741 = vpop.f32.mrb[0].mxu0
  %v1742 = vpop.f32.mrb[0].mxu0
  %v1743 = vadd.f32 %v1214, %v1742
  %v1744 = vpop.f32.mrb[0].mxu0
  %1745 = vmatprep.mubr.bf16.mxu0 0
  %1746 = vmatmul.mubr.bf16.gmra.mrb[0].mxu0 %v1531
  %v1747 = vpop.f32.mrb[0].mxu0
  %v1748 = vadd.f32 %v1219, %v1747
  %v1749 = vpop.f32.mrb[0].mxu0
  %v1750 = vpop.f32.mrb[0].mxu0
  %v1751 = vadd.f32 %v1222, %v1750
  %v1752 = vpop.f32.mrb[0].mxu0
  %1753 = vmatprep.mubr.bf16.mxu0 0
  %1754 = vmatmul.mubr.bf16.gmra.mrb[0].mxu0 %v1532
  %v1755 = vpop.f32.mrb[0].mxu0
  %v1756 = vadd.f32 %v1227, %v1755
  %v1757 = vpop.f32.mrb[0].mxu0
  %v1758 = vpop.f32.mrb[0].mxu0
  %v1759 = vadd.f32 %v1230, %v1758
  %v1760 = vpop.f32.mrb[0].mxu0
  %1761 = vmatprep.mubr.bf16.mxu0 0
  %1762 = vmatmul.mubr.bf16.gmra.mrb[0].mxu0 %v1533
  %v1763 = vpop.f32.mrb[0].mxu0
  %v1764 = vadd.f32 %v1235, %v1763
  %v1765 = vpop.f32.mrb[0].mxu0
  %v1766 = vpop.f32.mrb[0].mxu0
  %v1767 = vadd.f32 %v1238, %v1766
  %v1768 = vpop.f32.mrb[0].mxu0
  %1769 = vmatprep.mubr.bf16.mxu0 0
  %1770 = vmatmul.mubr.bf16.gmra.mrb[0].mxu0 %v1534
  %v1771 = vpop.f32.mrb[0].mxu0
  %v1772 = vadd.f32 %v1243, %v1771
  %v1773 = vpop.f32.mrb[0].mxu0
  %v1774 = vpop.f32.mrb[0].mxu0
  %v1775 = vadd.f32 %v1246, %v1774
  %v1776 = vpop.f32.mrb[0].mxu0
  %1777 = vmatprep.mubr.bf16.mxu0 0
  %1778 = vmatmul.mubr.bf16.gmra.mrb[0].mxu0 %v1535
  %v1779 = vpop.f32.mrb[0].mxu0
  %v1780 = vadd.f32 %v1251, %v1779
  %v1781 = vpop.f32.mrb[0].mxu0
  %v1782 = vpop.f32.mrb[0].mxu0
  %v1783 = vadd.f32 %v1254, %v1782
  %v1784 = vpop.f32.mrb[0].mxu0
  %1785 = vmatprep.mubr.bf16.mxu0 0
  %1786 = vmatmul.mubr.bf16.gmra.mrb[0].mxu0 %v1536
  %v1787 = vpop.f32.mrb[0].mxu0
  %v1788 = vadd.f32 %v1259, %v1787
  %v1789 = vpop.f32.mrb[0].mxu0
  %v1790 = vpop.f32.mrb[0].mxu0
  %v1791 = vadd.f32 %v1262, %v1790
  %v1792 = vpop.f32.mrb[0].mxu0
  %1793 = vmatprep.mubr.bf16.mxu0 0
  %1794 = vmatmul.mubr.bf16.gmra.mrb[0].mxu0 %v1537
  %v1795 = vpop.f32.mrb[0].mxu0
  %v1796 = vadd.f32 %v1267, %v1795
  %v1797 = vpop.f32.mrb[0].mxu0
  %v1798 = vpop.f32.mrb[0].mxu0
  %v1799 = vadd.f32 %v1270, %v1798
  %v1800 = vpop.f32.mrb[0].mxu0
  %1801 = vmatprep.mubr.bf16.mxu0 0
  %1802 = vmatmul.mubr.bf16.gmra.mrb[0].mxu0 %v1538
  %v1803 = vpop.f32.mrb[0].mxu0
  %v1804 = vadd.f32 %v1275, %v1803
  %v1805 = vpop.f32.mrb[0].mxu0
  %v1806 = vpop.f32.mrb[0].mxu0
  %v1807 = vadd.f32 %v1278, %v1806
  %v1808 = vpop.f32.mrb[0].mxu0
  %1809 = vmatprep.mubr.bf16.mxu0 0
  %1810 = vmatmul.mubr.bf16.gmra.mrb[0].mxu0 %v1539
  %v1811 = vpop.f32.mrb[0].mxu0
  %v1812 = vadd.f32 %v1283, %v1811
  %v1813 = vpop.f32.mrb[0].mxu0
  %v1814 = vpop.f32.mrb[0].mxu0
  %v1815 = vadd.f32 %v1286, %v1814
  %v1816 = vpop.f32.mrb[0].mxu0
  %1817 = vmatprep.mubr.bf16.mxu0 0
  %1818 = vmatmul.mubr.bf16.gmra.mrb[0].mxu0 %v1540
  %v1819 = vpop.f32.mrb[0].mxu0
  %v1820 = vadd.f32 %v1291, %v1819
  %v1821 = vpop.f32.mrb[0].mxu0
  %v1822 = vpop.f32.mrb[0].mxu0
  %v1823 = vadd.f32 %v1294, %v1822
  %v1824 = vpop.f32.mrb[0].mxu0
  %1825 = vmatprep.mubr.bf16.mxu0 0
  %1826 = vmatmul.mubr.bf16.gmra.mrb[0].mxu0 %v1541
  %v1827 = vpop.f32.mrb[0].mxu0
  %v1828 = vadd.f32 %v1299, %v1827
  %v1829 = vpop.f32.mrb[0].mxu0
  %v1830 = vpop.f32.mrb[0].mxu0
  %v1831 = vadd.f32 %v1302, %v1830
  %v1832 = vpop.f32.mrb[0].mxu0
  %1833 = vmatprep.mubr.bf16.mxu0 0
  %1834 = vmatmul.mubr.bf16.gmra.mrb[0].mxu0 %v1542
  %v1835 = vpop.f32.mrb[0].mxu0
  %v1836 = vadd.f32 %v1307, %v1835
  %v1837 = vpop.f32.mrb[0].mxu0
  %v1838 = vpop.f32.mrb[0].mxu0
  %v1839 = vadd.f32 %v1310, %v1838
  %v1840 = vpop.f32.mrb[0].mxu0
  %1841 = vmatprep.mubr.bf16.mxu0 0
  %1842 = vmatmul.mubr.bf16.gmra.mrb[0].mxu0 %v1543
  %v1843 = vpop.f32.mrb[0].mxu0
  %v1844 = vadd.f32 %v1315, %v1843
  %v1845 = vpop.f32.mrb[0].mxu0
  %v1846 = vpop.f32.mrb[0].mxu0
  %v1847 = vadd.f32 %v1318, %v1846
  %v1848 = vpop.f32.mrb[0].mxu0
  %1849 = vmatprep.mubr.bf16.mxu0 0
  %1850 = vmatmul.mubr.bf16.gmra.mrb[0].mxu0 %v1544
  %v1851 = vpop.f32.mrb[0].mxu0
  %v1852 = vadd.f32 %v1323, %v1851
  %v1853 = vpop.f32.mrb[0].mxu0
  %v1854 = vpop.f32.mrb[0].mxu0
  %v1855 = vadd.f32 %v1326, %v1854
  %v1856 = vpop.f32.mrb[0].mxu0
  %1857 = vmatprep.mubr.bf16.mxu0 0
  %1858 = vmatmul.mubr.bf16.gmra.mrb[0].mxu0 %v1545
  %v1859 = vpop.f32.mrb[0].mxu0
  %v1860 = vadd.f32 %v1331, %v1859
  %v1861 = vpop.f32.mrb[0].mxu0
  %v1862 = vpop.f32.mrb[0].mxu0
  %v1863 = vadd.f32 %v1334, %v1862
  %v1864 = vpop.f32.mrb[0].mxu0
  %1865 = vmatprep.mubr.bf16.mxu0 0
  %1866 = vmatmul.mubr.bf16.gmra.mrb[0].mxu0 %v1546
  %v1867 = vpop.f32.mrb[0].mxu0
  %v1868 = vadd.f32 %v1339, %v1867
  %v1869 = vpop.f32.mrb[0].mxu0
  %v1870 = vpop.f32.mrb[0].mxu0
  %v1871 = vadd.f32 %v1342, %v1870
  %v1872 = vpop.f32.mrb[0].mxu0
  %1873 = vmatprep.mubr.bf16.mxu0 0
  %1874 = vmatmul.mubr.bf16.gmra.mrb[0].mxu0 %v1547
  %v1875 = vpop.f32.mrb[0].mxu0
  %v1876 = vadd.f32 %v1347, %v1875
  %v1877 = vpop.f32.mrb[0].mxu0
  %v1878 = vpop.f32.mrb[0].mxu0
  %v1879 = vadd.f32 %v1350, %v1878
  %v1880 = vpop.f32.mrb[0].mxu0
  %1881 = vmatprep.mubr.bf16.mxu0 0
  %1882 = vmatmul.mubr.bf16.gmra.mrb[0].mxu0 %v1548
  %v1883 = vpop.f32.mrb[0].mxu0
  %v1884 = vadd.f32 %v1355, %v1883
  %v1885 = vpop.f32.mrb[0].mxu0
  %v1886 = vpop.f32.mrb[0].mxu0
  %v1887 = vadd.f32 %v1358, %v1886
  %v1888 = vpop.f32.mrb[0].mxu0
  %1889 = vmatprep.mubr.bf16.mxu0 0
  %1890 = vmatmul.mubr.bf16.gmra.mrb[0].mxu0 %v1549
  %v1891 = vpop.f32.mrb[0].mxu0
  %v1892 = vadd.f32 %v1363, %v1891
  %v1893 = vpop.f32.mrb[0].mxu0
  %v1894 = vpop.f32.mrb[0].mxu0
  %v1895 = vadd.f32 %v1366, %v1894
  %v1896 = vpop.f32.mrb[0].mxu0
  %1897 = vmatprep.mubr.bf16.mxu0 0
  %1898 = vmatmul.mubr.bf16.gmra.mrb[0].mxu0 %v1550
  %v1899 = vpop.f32.mrb[0].mxu0
  %v1900 = vadd.f32 %v1371, %v1899
  %v1901 = vpop.f32.mrb[0].mxu0
  %v1902 = vpop.f32.mrb[0].mxu0
  %v1903 = vadd.f32 %v1374, %v1902
  %v1904 = vpop.f32.mrb[0].mxu0
  %1905 = vmatprep.mubr.bf16.mxu0 0
  %1906 = vmatmul.mubr.bf16.gmra.mrb[0].mxu0 %v1551
  %v1907 = vpop.f32.mrb[0].mxu0
  %v1908 = vadd.f32 %v1379, %v1907
  %v1909 = vpop.f32.mrb[0].mxu0
  %v1910 = vpop.f32.mrb[0].mxu0
  %v1911 = vadd.f32 %v1382, %v1910
  %v1912 = vpop.f32.mrb[0].mxu0
  %1913 = vmatprep.mubr.bf16.mxu0 0
  %1914 = vmatmul.mubr.bf16.gmra.mrb[0].mxu0 %v1552
  %v1915 = vpop.f32.mrb[0].mxu0
  %v1916 = vadd.f32 %v1387, %v1915
  %v1917 = vpop.f32.mrb[0].mxu0
  %v1918 = vpop.f32.mrb[0].mxu0
  %v1919 = vadd.f32 %v1390, %v1918
  %v1920 = vpop.f32.mrb[0].mxu0
  %1921 = vdwg.mxu0
  %v1922 = vpack.c.bf16 %v1671, %v1668
  %v1923 = vpack.c.bf16 %v1679, %v1676
  %v1924 = vpack.c.bf16 %v1687, %v1684
  %v1925 = vpack.c.bf16 %v1695, %v1692
  %v1926 = vpack.c.bf16 %v1703, %v1700
  %v1927 = vpack.c.bf16 %v1711, %v1708
  %v1928 = vpack.c.bf16 %v1719, %v1716
  %v1929 = vpack.c.bf16 %v1727, %v1724
  %v1930 = vpack.c.bf16 %v1735, %v1732
  %v1931 = vpack.c.bf16 %v1743, %v1740
  %v1932 = vpack.c.bf16 %v1751, %v1748
  %v1933 = vpack.c.bf16 %v1759, %v1756
  %v1934 = vpack.c.bf16 %v1767, %v1764
  %v1935 = vpack.c.bf16 %v1775, %v1772
  %v1936 = vpack.c.bf16 %v1783, %v1780
  %v1937 = vpack.c.bf16 %v1791, %v1788
  %v1938 = vpack.c.bf16 %v1799, %v1796
  %v1939 = vpack.c.bf16 %v1807, %v1804
  %v1940 = vpack.c.bf16 %v1815, %v1812
  %v1941 = vpack.c.bf16 %v1823, %v1820
  %v1942 = vpack.c.bf16 %v1831, %v1828
  %v1943 = vpack.c.bf16 %v1839, %v1836
  %v1944 = vpack.c.bf16 %v1847, %v1844
  %v1945 = vpack.c.bf16 %v1855, %v1852
  %v1946 = vpack.c.bf16 %v1863, %v1860
  %v1947 = vpack.c.bf16 %v1871, %v1868
  %v1948 = vpack.c.bf16 %v1879, %v1876
  %v1949 = vpack.c.bf16 %v1887, %v1884
  %v1950 = vpack.c.bf16 %v1895, %v1892
  %v1951 = vpack.c.bf16 %v1903, %v1900
  %v1952 = vpack.c.bf16 %v1911, %v1908
  %v1953 = vpack.c.bf16 %v1919, %v1916
  %v1986 = vunpack.c.l.b16 %v1922
  %v1987 = vunpack.c.h.b16 %v1922
  %v1988 = vunpack.c.l.b16 %v1923
  %v1989 = vunpack.c.h.b16 %v1923
  %v1990 = vunpack.c.l.b16 %v1924
  %v1991 = vunpack.c.h.b16 %v1924
  %v1992 = vunpack.c.l.b16 %v1925
  %v1993 = vunpack.c.h.b16 %v1925
  %v1994 = vunpack.c.l.b16 %v1926
  %v1995 = vunpack.c.h.b16 %v1926
  %v1996 = vunpack.c.l.b16 %v1927
  %v1997 = vunpack.c.h.b16 %v1927
  %v1998 = vunpack.c.l.b16 %v1928
  %v1999 = vunpack.c.h.b16 %v1928
  %v2000 = vunpack.c.l.b16 %v1929
  %v2001 = vunpack.c.h.b16 %v1929
  %v2002 = vunpack.c.l.b16 %v1930
  %v2003 = vunpack.c.h.b16 %v1930
  %v2004 = vunpack.c.l.b16 %v1931
  %v2005 = vunpack.c.h.b16 %v1931
  %v2006 = vunpack.c.l.b16 %v1932
  %v2007 = vunpack.c.h.b16 %v1932
  %v2008 = vunpack.c.l.b16 %v1933
  %v2009 = vunpack.c.h.b16 %v1933
  %v2010 = vunpack.c.l.b16 %v1934
  %v2011 = vunpack.c.h.b16 %v1934
  %v2012 = vunpack.c.l.b16 %v1935
  %v2013 = vunpack.c.h.b16 %v1935
  %v2014 = vunpack.c.l.b16 %v1936
  %v2015 = vunpack.c.h.b16 %v1936
  %v2016 = vunpack.c.l.b16 %v1937
  %v2017 = vunpack.c.h.b16 %v1937
  %v2018 = vunpack.c.l.b16 %v1938
  %v2019 = vunpack.c.h.b16 %v1938
  %v2020 = vunpack.c.l.b16 %v1939
  %v2021 = vunpack.c.h.b16 %v1939
  %v2022 = vunpack.c.l.b16 %v1940
  %v2023 = vunpack.c.h.b16 %v1940
  %v2024 = vunpack.c.l.b16 %v1941
  %v2025 = vunpack.c.h.b16 %v1941
  %v2026 = vunpack.c.l.b16 %v1942
  %v2027 = vunpack.c.h.b16 %v1942
  %v2028 = vunpack.c.l.b16 %v1943
  %v2029 = vunpack.c.h.b16 %v1943
  %v2030 = vunpack.c.l.b16 %v1944
  %v2031 = vunpack.c.h.b16 %v1944
  %v2032 = vunpack.c.l.b16 %v1945
  %v2033 = vunpack.c.h.b16 %v1945
  %v2034 = vunpack.c.l.b16 %v1946
  %v2035 = vunpack.c.h.b16 %v1946
  %v2036 = vunpack.c.l.b16 %v1947
  %v2037 = vunpack.c.h.b16 %v1947
  %v2038 = vunpack.c.l.b16 %v1948
  %v2039 = vunpack.c.h.b16 %v1948
  %v2040 = vunpack.c.l.b16 %v1949
  %v2041 = vunpack.c.h.b16 %v1949
  %v2042 = vunpack.c.l.b16 %v1950
  %v2043 = vunpack.c.h.b16 %v1950
  %v2044 = vunpack.c.l.b16 %v1951
  %v2045 = vunpack.c.h.b16 %v1951
  %v2046 = vunpack.c.l.b16 %v1952
  %v2047 = vunpack.c.h.b16 %v1952
  %v2048 = vunpack.c.l.b16 %v1953
  %v2049 = vunpack.c.h.b16 %v1953
  %v2050 = vpack.c.b16 %v1986, %v1986
  %v2051 = vpack.c.b16 %v1987, %v1987
  %v2052 = vpack.c.b16 %v1988, %v1988
  %v2053 = vpack.c.b16 %v1989, %v1989
  %v2054 = vpack.c.b16 %v1990, %v1990
  %v2055 = vpack.c.b16 %v1991, %v1991
  %v2056 = vpack.c.b16 %v1992, %v1992
  %v2057 = vpack.c.b16 %v1993, %v1993
  %v2058 = vpack.c.b16 %v1994, %v1994
  %v2059 = vpack.c.b16 %v1995, %v1995
  %v2060 = vpack.c.b16 %v1996, %v1996
  %v2061 = vpack.c.b16 %v1997, %v1997
  %v2062 = vpack.c.b16 %v1998, %v1998
  %v2063 = vpack.c.b16 %v1999, %v1999
  %v2064 = vpack.c.b16 %v2000, %v2000
  %v2065 = vpack.c.b16 %v2001, %v2001
  %v2066 = vpack.c.b16 %v2002, %v2002
  %v2067 = vpack.c.b16 %v2003, %v2003
  %v2068 = vpack.c.b16 %v2004, %v2004
  %v2069 = vpack.c.b16 %v2005, %v2005
  %v2070 = vpack.c.b16 %v2006, %v2006
  %v2071 = vpack.c.b16 %v2007, %v2007
  %v2072 = vpack.c.b16 %v2008, %v2008
  %v2073 = vpack.c.b16 %v2009, %v2009
  %v2074 = vpack.c.b16 %v2010, %v2010
  %v2075 = vpack.c.b16 %v2011, %v2011
  %v2076 = vpack.c.b16 %v2012, %v2012
  %v2077 = vpack.c.b16 %v2013, %v2013
  %v2078 = vpack.c.b16 %v2014, %v2014
  %v2079 = vpack.c.b16 %v2015, %v2015
  %v2080 = vpack.c.b16 %v2016, %v2016
  %v2081 = vpack.c.b16 %v2017, %v2017
  %v2082 = vpack.c.b16 %v2018, %v2018
  %v2083 = vpack.c.b16 %v2019, %v2019
  %v2084 = vpack.c.b16 %v2020, %v2020
  %v2085 = vpack.c.b16 %v2021, %v2021
  %v2086 = vpack.c.b16 %v2022, %v2022
  %v2087 = vpack.c.b16 %v2023, %v2023
  %v2088 = vpack.c.b16 %v2024, %v2024
  %v2089 = vpack.c.b16 %v2025, %v2025
  %v2090 = vpack.c.b16 %v2026, %v2026
  %v2091 = vpack.c.b16 %v2027, %v2027
  %v2092 = vpack.c.b16 %v2028, %v2028
  %v2093 = vpack.c.b16 %v2029, %v2029
  %v2094 = vpack.c.b16 %v2030, %v2030
  %v2095 = vpack.c.b16 %v2031, %v2031
  %v2096 = vpack.c.b16 %v2032, %v2032
  %v2097 = vpack.c.b16 %v2033, %v2033
  %v2098 = vpack.c.b16 %v2034, %v2034
  %v2099 = vpack.c.b16 %v2035, %v2035
  %v2100 = vpack.c.b16 %v2036, %v2036
  %v2101 = vpack.c.b16 %v2037, %v2037
  %v2102 = vpack.c.b16 %v2038, %v2038
  %v2103 = vpack.c.b16 %v2039, %v2039
  %v2104 = vpack.c.b16 %v2040, %v2040
  %v2105 = vpack.c.b16 %v2041, %v2041
  %v2106 = vpack.c.b16 %v2042, %v2042
  %v2107 = vpack.c.b16 %v2043, %v2043
  %v2108 = vpack.c.b16 %v2044, %v2044
  %v2109 = vpack.c.b16 %v2045, %v2045
  %v2110 = vpack.c.b16 %v2046, %v2046
  %v2111 = vpack.c.b16 %v2047, %v2047
  %v2112 = vpack.c.b16 %v2048, %v2048
  %v2113 = vpack.c.b16 %v2049, %v2049
  %2178 = vst [vmem:[%s5] sm:$0xf] %v2050
  %2179 = vst [vmem:[%s5 + $0x4] sm:$0xf] %v2051
  %2180 = vst [vmem:[%s5 + $0x8] sm:$0xf] %v2052
  %2181 = vst [vmem:[%s5 + $0xc] sm:$0xf] %v2053
  %2182 = vst [vmem:[%s5 + $0x10] sm:$0xf] %v2054
  %2183 = vst [vmem:[%s5 + $0x14] sm:$0xf] %v2055
  %2184 = vst [vmem:[%s5 + $0x18] sm:$0xf] %v2056
  %2185 = vst [vmem:[%s5 + $0x1c] sm:$0xf] %v2057
  %2186 = vst [vmem:[%s5 + $0x20] sm:$0xf] %v2058
  %2187 = vst [vmem:[%s5 + $0x24] sm:$0xf] %v2059
  %2188 = vst [vmem:[%s5 + $0x28] sm:$0xf] %v2060
  %2189 = vst [vmem:[%s5 + $0x2c] sm:$0xf] %v2061
  %2190 = vst [vmem:[%s5 + $0x30] sm:$0xf] %v2062
  %2191 = vst [vmem:[%s5 + $0x34] sm:$0xf] %v2063
  %2192 = vst [vmem:[%s5 + $0x38] sm:$0xf] %v2064
  %2193 = vst [vmem:[%s5 + $0x3c] sm:$0xf] %v2065
  %2194 = vst [vmem:[%s5 + $0x40] sm:$0xf] %v2066
  %2195 = vst [vmem:[%s5 + $0x44] sm:$0xf] %v2067
  %2196 = vst [vmem:[%s5 + $0x48] sm:$0xf] %v2068
  %2197 = vst [vmem:[%s5 + $0x4c] sm:$0xf] %v2069
  %2198 = vst [vmem:[%s5 + $0x50] sm:$0xf] %v2070
  %2199 = vst [vmem:[%s5 + $0x54] sm:$0xf] %v2071
  %2200 = vst [vmem:[%s5 + $0x58] sm:$0xf] %v2072
  %2201 = vst [vmem:[%s5 + $0x5c] sm:$0xf] %v2073
  %2202 = vst [vmem:[%s5 + $0x60] sm:$0xf] %v2074
  %2203 = vst [vmem:[%s5 + $0x64] sm:$0xf] %v2075
  %2204 = vst [vmem:[%s5 + $0x68] sm:$0xf] %v2076
  %2205 = vst [vmem:[%s5 + $0x6c] sm:$0xf] %v2077
  %2206 = vst [vmem:[%s5 + $0x70] sm:$0xf] %v2078
  %2207 = vst [vmem:[%s5 + $0x74] sm:$0xf] %v2079
  %2208 = vst [vmem:[%s5 + $0x78] sm:$0xf] %v2080
  %2209 = vst [vmem:[%s5 + $0x7c] sm:$0xf] %v2081
  %2210 = vst [vmem:[%s5 + $0x80] sm:$0xf] %v2082
  %2211 = vst [vmem:[%s5 + $0x84] sm:$0xf] %v2083
  %2212 = vst [vmem:[%s5 + $0x88] sm:$0xf] %v2084
  %2213 = vst [vmem:[%s5 + $0x8c] sm:$0xf] %v2085
  %2214 = vst [vmem:[%s5 + $0x90] sm:$0xf] %v2086
  %2215 = vst [vmem:[%s5 + $0x94] sm:$0xf] %v2087
  %2216 = vst [vmem:[%s5 + $0x98] sm:$0xf] %v2088
  %2217 = vst [vmem:[%s5 + $0x9c] sm:$0xf] %v2089
  %2218 = vst [vmem:[%s5 + $0xa0] sm:$0xf] %v2090
  %2219 = vst [vmem:[%s5 + $0xa4] sm:$0xf] %v2091
  %2220 = vst [vmem:[%s5 + $0xa8] sm:$0xf] %v2092
  %2221 = vst [vmem:[%s5 + $0xac] sm:$0xf] %v2093
  %2222 = vst [vmem:[%s5 + $0xb0] sm:$0xf] %v2094
  %2223 = vst [vmem:[%s5 + $0xb4] sm:$0xf] %v2095
  %2224 = vst [vmem:[%s5 + $0xb8] sm:$0xf] %v2096
  %2225 = vst [vmem:[%s5 + $0xbc] sm:$0xf] %v2097
  %2226 = vst [vmem:[%s5 + $0xc0] sm:$0xf] %v2098
  %2227 = vst [vmem:[%s5 + $0xc4] sm:$0xf] %v2099
  %2228 = vst [vmem:[%s5 + $0xc8] sm:$0xf] %v2100
  %2229 = vst [vmem:[%s5 + $0xcc] sm:$0xf] %v2101
  %2230 = vst [vmem:[%s5 + $0xd0] sm:$0xf] %v2102
  %2231 = vst [vmem:[%s5 + $0xd4] sm:$0xf] %v2103
  %2232 = vst [vmem:[%s5 + $0xd8] sm:$0xf] %v2104
  %2233 = vst [vmem:[%s5 + $0xdc] sm:$0xf] %v2105
  %2234 = vst [vmem:[%s5 + $0xe0] sm:$0xf] %v2106
  %2235 = vst [vmem:[%s5 + $0xe4] sm:$0xf] %v2107
  %2236 = vst [vmem:[%s5 + $0xe8] sm:$0xf] %v2108
  %2237 = vst [vmem:[%s5 + $0xec] sm:$0xf] %v2109
  %2238 = vst [vmem:[%s5 + $0xf0] sm:$0xf] %v2110
  %2239 = vst [vmem:[%s5 + $0xf4] sm:$0xf] %v2111
  %2240 = vst [vmem:[%s5 + $0xf8] sm:$0xf] %v2112
  %2241 = vst [vmem:[%s5 + $0xfc] sm:$0xf] %v2113
  %v2242 = vadd.f32 %v1668, %v1671
  %v2243 = vadd.f32 %v2242, %v1676
  %v2244 = vadd.f32 %v2243, %v1679
  %v2245 = vadd.f32 %v2244, %v1684
  %v2246 = vadd.f32 %v2245, %v1687
  %v2247 = vadd.f32 %v2246, %v1692
  %v2248 = vadd.f32 %v2247, %v1695
  %v2249 = vadd.f32 %v2248, %v1700
  %v2250 = vadd.f32 %v2249, %v1703
  %v2251 = vadd.f32 %v2250, %v1708
  %v2252 = vadd.f32 %v2251, %v1711
  %v2253 = vadd.f32 %v2252, %v1716
  %v2254 = vadd.f32 %v2253, %v1719
  %v2255 = vadd.f32 %v2254, %v1724
  %v2256 = vadd.f32 %v2255, %v1727
  %v2257 = vadd.f32 %v2256, %v1732
  %v2258 = vadd.f32 %v2257, %v1735
  %v2259 = vadd.f32 %v2258, %v1740
  %v2260 = vadd.f32 %v2259, %v1743
  %v2261 = vadd.f32 %v2260, %v1748
  %v2262 = vadd.f32 %v2261, %v1751
  %v2263 = vadd.f32 %v2262, %v1756
  %v2264 = vadd.f32 %v2263, %v1759
  %v2265 = vadd.f32 %v2264, %v1764
  %v2266 = vadd.f32 %v2265, %v1767
  %v2267 = vadd.f32 %v2266, %v1772
  %v2268 = vadd.f32 %v2267, %v1775
  %v2269 = vadd.f32 %v2268, %v1780
  %v2270 = vadd.f32 %v2269, %v1783
  %v2271 = vadd.f32 %v2270, %v1788
  %v2272 = vadd.f32 %v2271, %v1791
  %v2273 = vadd.f32 %v2272, %v1796
  %v2274 = vadd.f32 %v2273, %v1799
  %v2275 = vadd.f32 %v2274, %v1804
  %v2276 = vadd.f32 %v2275, %v1807
  %v2277 = vadd.f32 %v2276, %v1812
  %v2278 = vadd.f32 %v2277, %v1815
  %v2279 = vadd.f32 %v2278, %v1820
  %v2280 = vadd.f32 %v2279, %v1823
  %v2281 = vadd.f32 %v2280, %v1828
  %v2282 = vadd.f32 %v2281, %v1831
  %v2283 = vadd.f32 %v2282, %v1836
  %v2284 = vadd.f32 %v2283, %v1839
  %v2285 = vadd.f32 %v2284, %v1844
  %v2286 = vadd.f32 %v2285, %v1847
  %v2287 = vadd.f32 %v2286, %v1852
  %v2288 = vadd.f32 %v2287, %v1855
  %v2289 = vadd.f32 %v2288, %v1860
  %v2290 = vadd.f32 %v2289, %v1863
  %v2291 = vadd.f32 %v2290, %v1868
  %v2292 = vadd.f32 %v2291, %v1871
  %v2293 = vadd.f32 %v2292, %v1876
  %v2294 = vadd.f32 %v2293, %v1879
  %v2295 = vadd.f32 %v2294, %v1884
  %v2296 = vadd.f32 %v2295, %v1887
  %v2297 = vadd.f32 %v2296, %v1892
  %v2298 = vadd.f32 %v2297, %v1895
  %v2299 = vadd.f32 %v2298, %v1900
  %v2300 = vadd.f32 %v2299, %v1903
  %v2301 = vadd.f32 %v2300, %v1908
  %v2302 = vadd.f32 %v2301, %v1911
  %v2303 = vadd.f32 %v2302, %v1916
  %v2304 = vadd.f32 %v2303, %v1919
  %v2305 = vrot.slane %v2304, 4
  %v2306 = vadd.f32 %v2304, %v2305
  %v2307 = vrot.slane %v2306, 2
  %v2308 = vadd.f32 %v2306, %v2307
  %v2309 = vrot.slane %v2308, 1
  %v2310 = vadd.f32 %v2308, %v2309
  %2311 = vst [vmem:[%s6] sm:$0x1] %v2310
  %v2312 = vmul.f32 %v1668, %v1668
  %v2313 = vmul.f32 %v1671, %v1671
  %v2314 = vmul.f32 %v1676, %v1676
  %v2315 = vmul.f32 %v1679, %v1679
  %v2316 = vmul.f32 %v1684, %v1684
  %v2317 = vmul.f32 %v1687, %v1687
  %v2318 = vmul.f32 %v1692, %v1692
  %v2319 = vmul.f32 %v1695, %v1695
  %v2320 = vmul.f32 %v1700, %v1700
  %v2321 = vmul.f32 %v1703, %v1703
  %v2322 = vmul.f32 %v1708, %v1708
  %v2323 = vmul.f32 %v1711, %v1711
  %v2324 = vmul.f32 %v1716, %v1716
  %v2325 = vmul.f32 %v1719, %v1719
  %v2326 = vmul.f32 %v1724, %v1724
  %v2327 = vmul.f32 %v1727, %v1727
  %v2328 = vmul.f32 %v1732, %v1732
  %v2329 = vmul.f32 %v1735, %v1735
  %v2330 = vmul.f32 %v1740, %v1740
  %v2331 = vmul.f32 %v1743, %v1743
  %v2332 = vmul.f32 %v1748, %v1748
  %v2333 = vmul.f32 %v1751, %v1751
  %v2334 = vmul.f32 %v1756, %v1756
  %v2335 = vmul.f32 %v1759, %v1759
  %v2336 = vmul.f32 %v1764, %v1764
  %v2337 = vmul.f32 %v1767, %v1767
  %v2338 = vmul.f32 %v1772, %v1772
  %v2339 = vmul.f32 %v1775, %v1775
  %v2340 = vmul.f32 %v1780, %v1780
  %v2341 = vmul.f32 %v1783, %v1783
  %v2342 = vmul.f32 %v1788, %v1788
  %v2343 = vmul.f32 %v1791, %v1791
  %v2344 = vmul.f32 %v1796, %v1796
  %v2345 = vmul.f32 %v1799, %v1799
  %v2346 = vmul.f32 %v1804, %v1804
  %v2347 = vmul.f32 %v1807, %v1807
  %v2348 = vmul.f32 %v1812, %v1812
  %v2349 = vmul.f32 %v1815, %v1815
  %v2350 = vmul.f32 %v1820, %v1820
  %v2351 = vmul.f32 %v1823, %v1823
  %v2352 = vmul.f32 %v1828, %v1828
  %v2353 = vmul.f32 %v1831, %v1831
  %v2354 = vmul.f32 %v1836, %v1836
  %v2355 = vmul.f32 %v1839, %v1839
  %v2356 = vmul.f32 %v1844, %v1844
  %v2357 = vmul.f32 %v1847, %v1847
  %v2358 = vmul.f32 %v1852, %v1852
  %v2359 = vmul.f32 %v1855, %v1855
  %v2360 = vmul.f32 %v1860, %v1860
  %v2361 = vmul.f32 %v1863, %v1863
  %v2362 = vmul.f32 %v1868, %v1868
  %v2363 = vmul.f32 %v1871, %v1871
  %v2364 = vmul.f32 %v1876, %v1876
  %v2365 = vmul.f32 %v1879, %v1879
  %v2366 = vmul.f32 %v1884, %v1884
  %v2367 = vmul.f32 %v1887, %v1887
  %v2368 = vmul.f32 %v1892, %v1892
  %v2369 = vmul.f32 %v1895, %v1895
  %v2370 = vmul.f32 %v1900, %v1900
  %v2371 = vmul.f32 %v1903, %v1903
  %v2372 = vmul.f32 %v1908, %v1908
  %v2373 = vmul.f32 %v1911, %v1911
  %v2374 = vmul.f32 %v1916, %v1916
  %v2375 = vmul.f32 %v1919, %v1919
  %v2376 = vadd.f32 %v2312, %v2313
  %v2377 = vadd.f32 %v2376, %v2314
  %v2378 = vadd.f32 %v2377, %v2315
  %v2379 = vadd.f32 %v2378, %v2316
  %v2380 = vadd.f32 %v2379, %v2317
  %v2381 = vadd.f32 %v2380, %v2318
  %v2382 = vadd.f32 %v2381, %v2319
  %v2383 = vadd.f32 %v2382, %v2320
  %v2384 = vadd.f32 %v2383, %v2321
  %v2385 = vadd.f32 %v2384, %v2322
  %v2386 = vadd.f32 %v2385, %v2323
  %v2387 = vadd.f32 %v2386, %v2324
  %v2388 = vadd.f32 %v2387, %v2325
  %v2389 = vadd.f32 %v2388, %v2326
  %v2390 = vadd.f32 %v2389, %v2327
  %v2391 = vadd.f32 %v2390, %v2328
  %v2392 = vadd.f32 %v2391, %v2329
  %v2393 = vadd.f32 %v2392, %v2330
  %v2394 = vadd.f32 %v2393, %v2331
  %v2395 = vadd.f32 %v2394, %v2332
  %v2396 = vadd.f32 %v2395, %v2333
  %v2397 = vadd.f32 %v2396, %v2334
  %v2398 = vadd.f32 %v2397, %v2335
  %v2399 = vadd.f32 %v2398, %v2336
  %v2400 = vadd.f32 %v2399, %v2337
  %v2401 = vadd.f32 %v2400, %v2338
  %v2402 = vadd.f32 %v2401, %v2339
  %v2403 = vadd.f32 %v2402, %v2340
  %v2404 = vadd.f32 %v2403, %v2341
  %v2405 = vadd.f32 %v2404, %v2342
  %v2406 = vadd.f32 %v2405, %v2343
  %v2407 = vadd.f32 %v2406, %v2344
  %v2408 = vadd.f32 %v2407, %v2345
  %v2409 = vadd.f32 %v2408, %v2346
  %v2410 = vadd.f32 %v2409, %v2347
  %v2411 = vadd.f32 %v2410, %v2348
  %v2412 = vadd.f32 %v2411, %v2349
  %v2413 = vadd.f32 %v2412, %v2350
  %v2414 = vadd.f32 %v2413, %v2351
  %v2415 = vadd.f32 %v2414, %v2352
  %v2416 = vadd.f32 %v2415, %v2353
  %v2417 = vadd.f32 %v2416, %v2354
  %v2418 = vadd.f32 %v2417, %v2355
  %v2419 = vadd.f32 %v2418, %v2356
  %v2420 = vadd.f32 %v2419, %v2357
  %v2421 = vadd.f32 %v2420, %v2358
  %v2422 = vadd.f32 %v2421, %v2359
  %v2423 = vadd.f32 %v2422, %v2360
  %v2424 = vadd.f32 %v2423, %v2361
  %v2425 = vadd.f32 %v2424, %v2362
  %v2426 = vadd.f32 %v2425, %v2363
  %v2427 = vadd.f32 %v2426, %v2364
  %v2428 = vadd.f32 %v2427, %v2365
  %v2429 = vadd.f32 %v2428, %v2366
  %v2430 = vadd.f32 %v2429, %v2367
  %v2431 = vadd.f32 %v2430, %v2368
  %v2432 = vadd.f32 %v2431, %v2369
  %v2433 = vadd.f32 %v2432, %v2370
  %v2434 = vadd.f32 %v2433, %v2371
  %v2435 = vadd.f32 %v2434, %v2372
  %v2436 = vadd.f32 %v2435, %v2373
  %v2437 = vadd.f32 %v2436, %v2374
  %v2438 = vadd.f32 %v2437, %v2375
  %v2439 = vrot.slane %v2438, 4
  %v2440 = vadd.f32 %v2438, %v2439
  %v2441 = vrot.slane %v2440, 2
  %v2442 = vadd.f32 %v2440, %v2441
  %v2443 = vrot.slane %v2442, 1
  %v2444 = vadd.f32 %v2442, %v2443
  %2445 = vst [vmem:[%s6 + $0x1] sm:$0x1] %v2444
  // Predicated region
  $region22: #{csp_forward.12} parent=0 // pred_check
    _
  $region23: #{csp_forward.12} parent=0 // pred_check_branch
    %2447 = sbr.rel (0) target = $region25
  $region24: #{csp_forward.12} parent=0 // pred_region
    _
  $region25: #{csp_forward.12} parent=0 // pred_fallthru
    _
  // Predicated region
  $region26: #{csp_forward.12} parent=0 // pred_check
    _
  $region27: #{csp_forward.12} parent=0 // pred_check_branch
    %2449 = sbr.rel (0) target = $region29
  $region28: #{csp_forward.12} parent=0 // pred_region
    _
  $region29: #{csp_forward.12} parent=0 // pred_fallthru
    _
  // Predicated region
  $region30: #{csp_forward.12} parent=0 // pred_check
    _
  $region31: #{csp_forward.12} parent=0 // pred_check_branch
    %2451 = sbr.rel (0) target = $region33
  $region32: #{csp_forward.12} parent=0 // pred_region
    _
  $region33: #{csp_forward.12} parent=0 // pred_fallthru
    _
  // Predicated region
  $region34: #{csp_forward.12} parent=0 // pred_check
    _
  $region35: #{csp_forward.12} parent=0 // pred_check_branch
    %2453 = sbr.rel (0) target = $region37
  $region36: #{csp_forward.12} parent=0 // pred_region
    _
  $region37: #{csp_forward.12} parent=0 // pred_fallthru
    _

// kernel: csp_forward.7
$region0: #{csp_forward.7}
  #allocation0 [shape = 'u32[]', space=smem, size = 0x4, offset = 0x4, fixed_abs, tag = 'smem constant byte address 0x4 - core index']
  #allocation1 [shape = 'u32[144,128]{1,0:T(1,128)}', space=vmem, size = 0x12000, scoped, tag = 'internal scratch']
  %s0 = inlined_call_operand.vmem [shape: bf16[2,16,16,128], index: 0, kind: input, shape index: {}]
  %s1 = inlined_call_operand.vmem [shape: bf16[3,384,128], index: 1, kind: input, shape index: {}]
  %s2 = inlined_call_operand.vmem [shape: bf16[2,256,128], index: 2, kind: output, shape index: {0}]
  %s3 = inlined_call_operand.vmem [shape: f32[2,2,128], index: 3, kind: output, shape index: {1}]
  %4 = xla_tuple %s2, %s3
  %s5 = sld [smem:[#allocation0]]
  $region49: #{csp_forward.7} parent=0
    _
  %s7 = ssub.s32 1, %s5
  %s8 = scalar_select 0, %s7, %s5
  loop: start=0, step=1, limit=4
  $region2: #{csp_forward.7} parent=0 // loop_pre_header
    _
  $region3: #{csp_forward.7} parent=0 // loop_header
    %s10 = sphi 0, %s14
    %p11 = scmp.ge.s32.totalorder %s10, 4
    %s20 = sphi 0, %s22
    %s23 = sphi 0, %s20
    %s24 = sphi 0, %s23
    %s40 = sphi 0, %s24
    %s44 = sphi 0, %s44
    %s46 = sphi 0, %s44
    %s47 = sphi 0, %s46
    %s61 = sphi 0, %s47
    %s67 = sphi 0, %s69
    %s70 = sphi 0, %s67
    %s71 = sphi 0, %s70
    %s87 = sphi 0, %s71
    %s93 = sphi 0, %s95
    %s96 = sphi 0, %s93
    %s97 = sphi 0, %s96
    %s113 = sphi 0, %s97
  $region4: #{csp_forward.7} parent=0 // loop_header_branch
    %13 = sbr.rel (%p11) target = $region8
  $region5: #{csp_forward.7} parent=0 // loop_body
    %s15 = ssub.s32 %s10, 1
    %s16 = ssub.s32 %s10, 2
    %s17 = sadd.s32 %s10, 1
    %s18 = ssub.s32 %s10, %s17
    %p19 = scmp.eq.s32.totalorder %s18, 0
    %s21 = sadd.s32 %s20, 1
    %s22 = scalar_select %p19, %s20, %s21
    %p25 = pneg %p19
    %p26 = scmp.eq.s32.totalorder %s10, 1
    %p27 = por %p25, %p26
    %p28 = scmp.ne.s32.totalorder %s20, %s23
    %p29 = scmp.eq.s32.totalorder %s10, 0
    %p30 = por %p28, %p29
    %p31 = scmp.ne.s32.totalorder %s20, %s23
    %p32 = scmp.eq.s32.totalorder %s15, 1
    %p33 = por %p31, %p32
    %p34 = scmp.ne.s32.totalorder %s23, %s24
    %p35 = scmp.eq.s32.totalorder %s15, 0
    %p36 = por %p34, %p35
    %p37 = scmp.ne.s32.totalorder %s23, %s24
    %p38 = scmp.eq.s32.totalorder %s16, 1
    %p39 = por %p37, %p38
    %p41 = scmp.ne.s32.totalorder %s24, %s40
    %p42 = scmp.eq.s32.totalorder %s16, 0
    %p43 = por %p41, %p42
    %s45 = sadd.s32 %s44, 1
    %p48 = scmp.eq.s32.totalorder %s10, 1
    %p49 = scmp.ne.s32.totalorder %s44, %s46
    %p50 = scmp.eq.s32.totalorder %s10, 0
    %p51 = por %p49, %p50
    %p52 = scmp.ne.s32.totalorder %s44, %s46
    %p53 = scmp.eq.s32.totalorder %s15, 1
    %p54 = por %p52, %p53
    %p55 = scmp.ne.s32.totalorder %s46, %s47
    %p56 = scmp.eq.s32.totalorder %s15, 0
    %p57 = por %p55, %p56
    %p58 = scmp.ne.s32.totalorder %s46, %s47
    %p59 = scmp.eq.s32.totalorder %s16, 1
    %p60 = por %p58, %p59
    %p62 = scmp.ne.s32.totalorder %s47, %s61
    %p63 = scmp.eq.s32.totalorder %s16, 0
    %p64 = por %p62, %p63
    %s65 = ssub.s32 %s10, %s17
    %p66 = scmp.eq.s32.totalorder %s65, 0
    %s68 = sadd.s32 %s67, 1
    %s69 = scalar_select %p66, %s67, %s68
    %p72 = pneg %p66
    %p73 = scmp.eq.s32.totalorder %s10, 1
    %p74 = por %p72, %p73
    %p75 = scmp.ne.s32.totalorder %s67, %s70
    %p76 = scmp.eq.s32.totalorder %s10, 0
    %p77 = por %p75, %p76
    %p78 = scmp.ne.s32.totalorder %s67, %s70
    %p79 = scmp.eq.s32.totalorder %s15, 1
    %p80 = por %p78, %p79
    %p81 = scmp.ne.s32.totalorder %s70, %s71
    %p82 = scmp.eq.s32.totalorder %s15, 0
    %p83 = por %p81, %p82
    %p84 = scmp.ne.s32.totalorder %s70, %s71
    %p85 = scmp.eq.s32.totalorder %s16, 1
    %p86 = por %p84, %p85
    %p88 = scmp.ne.s32.totalorder %s71, %s87
    %p89 = scmp.eq.s32.totalorder %s16, 0
    %p90 = por %p88, %p89
    %s91 = ssub.s32 %s10, %s17
    %p92 = scmp.eq.s32.totalorder %s91, 0
    %s94 = sadd.s32 %s93, 1
    %s95 = scalar_select %p92, %s93, %s94
    %p98 = pneg %p92
    %p99 = scmp.eq.s32.totalorder %s10, 1
    %p100 = por %p98, %p99
    %p101 = scmp.ne.s32.totalorder %s93, %s96
    %p102 = scmp.eq.s32.totalorder %s10, 0
    %p103 = por %p101, %p102
    %p104 = scmp.ne.s32.totalorder %s93, %s96
    %p105 = scmp.eq.s32.totalorder %s15, 1
    %p106 = por %p104, %p105
    %p107 = scmp.ne.s32.totalorder %s96, %s97
    %p108 = scmp.eq.s32.totalorder %s15, 0
    %p109 = por %p107, %p108
    %p110 = scmp.ne.s32.totalorder %s96, %s97
    %p111 = scmp.eq.s32.totalorder %s16, 1
    %p112 = por %p110, %p111
    %p114 = scmp.ne.s32.totalorder %s97, %s113
    %p115 = scmp.eq.s32.totalorder %s16, 0
    %p116 = por %p114, %p115
    %p117 = scmp.le.s32.totalorder 1, %s10
    %p118 = scmp.lt.s32.totalorder %s10, 3
    %p119 = pnand %p117, %p118
    %p120 = pneg %p119
    // Predicated region
    $region9: #{csp_forward.7} parent=5 // pred_check
      _
    $region10: #{csp_forward.7} parent=5 // pred_check_branch
      %122 = sbr.rel (%p119) target = $region12
    $region11: #{csp_forward.7} parent=5 // pred_region
      %s123 = ssub.s32 %s10, 1
      // Predicated region
      $region13: #{csp_forward.7} parent=11 // pred_check
        %p124 = pneg %p57
      $region14: #{csp_forward.7} parent=11 // pred_check_branch
        %126 = sbr.rel (%p124) target = $region16
      $region15: #{csp_forward.7} parent=11 // pred_region
        _
      $region16: #{csp_forward.7} parent=11 // pred_fallthru
        _
    $region12: #{csp_forward.7} parent=5 // pred_fallthru
      _
    %p127 = scmp.lt.s32.totalorder %s10, 2
    // Predicated region
    $region17: #{csp_forward.7} parent=5 // pred_check
      %p128 = pneg %p127
    $region18: #{csp_forward.7} parent=5 // pred_check_branch
      %130 = sbr.rel (%p128) target = $region20
    $region19: #{csp_forward.7} parent=5 // pred_region
      // Predicated region
      $region21: #{csp_forward.7} parent=19 // pred_check
        %p131 = pneg %p30
      $region22: #{csp_forward.7} parent=19 // pred_check_branch
        %133 = sbr.rel (%p131) target = $region24
      $region23: #{csp_forward.7} parent=19 // pred_region
        %p134 = scmp.lt.s32.totalorder %s10, 1
        %s135 = scalar_select %p134, %s10, 1
        %s136 = smul.addr %s135, 32
        %s137 = smul.addr %s136, 4
        %s138 = scalar_lea.vmem %s0, %s137
      $region24: #{csp_forward.7} parent=19 // pred_fallthru
        _
    $region20: #{csp_forward.7} parent=5 // pred_fallthru
      _
    %p139 = scmp.le.s32.totalorder 1, %s10
    %p140 = scmp.lt.s32.totalorder %s10, 3
    %p141 = pnand %p139, %p140
    %p142 = pneg %p141
    // Predicated region
    $region25: #{csp_forward.7} parent=5 // pred_check
      _
    $region26: #{csp_forward.7} parent=5 // pred_check_branch
      %144 = sbr.rel (%p141) target = $region28
    $region27: #{csp_forward.7} parent=5 // pred_region
      %s145 = ssub.s32 %s10, 1
      %p146 = scmp.lt.s32.totalorder %s15, 1
      %s147 = scalar_select %p146, %s15, 1
      %s148 = smul.addr %s147, 32
      %s149 = smul.addr %s148, 4
      %s150 = scalar_lea.vmem %s0, %s149
      %p151 = pneg %p36
      %p152 = pneg %p33
      %p153 = pneg %p57
      %p154 = pneg %p54
      %p155 = pneg %p83
      %p156 = pneg %p80
      %p157 = scmp.lt.s32.totalorder %s15, 1
      %s158 = scalar_select %p157, %s15, 1
      %s159 = smul.addr %s158, 32
      %s160 = smul.addr %s159, 4
      %s161 = scalar_lea.vmem %s2, %s160
      %p162 = pneg %p109
      %p163 = pneg %p106
      %p164 = scmp.lt.s32.totalorder %s15, 1
      %s165 = scalar_select %p164, %s15, 1
      %s166 = smul.addr %s165, 2
      %s167 = scalar_lea.vmem %s3, %s166
      %p168 = scmp.lt.s32.totalorder %s15, 1
      %s169 = scalar_select %p168, %s15, 1
      %s170 = smul.addr %s169, 32
      %s171 = smul.addr %s170, 4
      %s172 = scalar_lea.vmem %s0, %s171
      %p173 = scmp.lt.s32.totalorder %s15, 1
      %s174 = scalar_select %p173, %s15, 1
      %s175 = smul.addr %s174, 32
      %s176 = smul.addr %s175, 4
      %s177 = scalar_lea.vmem %s2, %s176
      %p178 = scmp.lt.s32.totalorder %s15, 1
      %s179 = scalar_select %p178, %s15, 1
      %s180 = smul.addr %s179, 2
      %s181 = scalar_lea.vmem %s3, %s180
      %v183 = vld [vmem:[%s172] sm:$0xf]
      %v184 = vld [vmem:[%s172 + $0x4] sm:$0xf]
      %v185 = vld [vmem:[%s172 + $0x8] sm:$0xf]
      %v186 = vld [vmem:[%s172 + $0xc] sm:$0xf]
      %v187 = vld [vmem:[%s172 + $0x10] sm:$0xf]
      %v188 = vld [vmem:[%s172 + $0x14] sm:$0xf]
      %v189 = vld [vmem:[%s172 + $0x18] sm:$0xf]
      %v190 = vld [vmem:[%s172 + $0x1c] sm:$0xf]
      %v191 = vld [vmem:[%s172 + $0x20] sm:$0xf]
      %v192 = vld [vmem:[%s172 + $0x24] sm:$0xf]
      %v193 = vld [vmem:[%s172 + $0x28] sm:$0xf]
      %v194 = vld [vmem:[%s172 + $0x2c] sm:$0xf]
      %v195 = vld [vmem:[%s172 + $0x30] sm:$0xf]
      %v196 = vld [vmem:[%s172 + $0x34] sm:$0xf]
      %v197 = vld [vmem:[%s172 + $0x38] sm:$0xf]
      %v198 = vld [vmem:[%s172 + $0x3c] sm:$0xf]
      %v199 = vld [vmem:[%s172 + $0x40] sm:$0xf]
      %v200 = vld [vmem:[%s172 + $0x44] sm:$0xf]
      %v201 = vld [vmem:[%s172 + $0x48] sm:$0xf]
      %v202 = vld [vmem:[%s172 + $0x4c] sm:$0xf]
      %v203 = vld [vmem:[%s172 + $0x50] sm:$0xf]
      %v204 = vld [vmem:[%s172 + $0x54] sm:$0xf]
      %v205 = vld [vmem:[%s172 + $0x58] sm:$0xf]
      %v206 = vld [vmem:[%s172 + $0x5c] sm:$0xf]
      %v207 = vld [vmem:[%s172 + $0x60] sm:$0xf]
      %v208 = vld [vmem:[%s172 + $0x64] sm:$0xf]
      %v209 = vld [vmem:[%s172 + $0x68] sm:$0xf]
      %v210 = vld [vmem:[%s172 + $0x6c] sm:$0xf]
      %v211 = vld [vmem:[%s172 + $0x70] sm:$0xf]
      %v212 = vld [vmem:[%s172 + $0x74] sm:$0xf]
      %v213 = vld [vmem:[%s172 + $0x78] sm:$0xf]
      %v214 = vld [vmem:[%s172 + $0x7c] sm:$0xf]
      %v247 = vunpack.c.l.b16 %v183
      %v248 = vunpack.c.l.b16 %v184
      %v249 = vunpack.c.l.b16 %v185
      %v250 = vunpack.c.l.b16 %v186
      %v251 = vunpack.c.l.b16 %v187
      %v252 = vunpack.c.l.b16 %v188
      %v253 = vunpack.c.l.b16 %v189
      %v254 = vunpack.c.l.b16 %v190
      %v255 = vunpack.c.l.b16 %v191
      %v256 = vunpack.c.l.b16 %v192
      %v257 = vunpack.c.l.b16 %v193
      %v258 = vunpack.c.l.b16 %v194
      %v259 = vunpack.c.l.b16 %v195
      %v260 = vunpack.c.l.b16 %v196
      %v261 = vunpack.c.l.b16 %v197
      %v262 = vunpack.c.l.b16 %v198
      %v263 = vunpack.c.l.b16 %v199
      %v264 = vunpack.c.l.b16 %v200
      %v265 = vunpack.c.l.b16 %v201
      %v266 = vunpack.c.l.b16 %v202
      %v267 = vunpack.c.l.b16 %v203
      %v268 = vunpack.c.l.b16 %v204
      %v269 = vunpack.c.l.b16 %v205
      %v270 = vunpack.c.l.b16 %v206
      %v271 = vunpack.c.l.b16 %v207
      %v272 = vunpack.c.l.b16 %v208
      %v273 = vunpack.c.l.b16 %v209
      %v274 = vunpack.c.l.b16 %v210
      %v275 = vunpack.c.l.b16 %v211
      %v276 = vunpack.c.l.b16 %v212
      %v277 = vunpack.c.l.b16 %v213
      %v278 = vunpack.c.l.b16 %v214
      %v279 = vpack.c.b16 %v248, %v247
      %v280 = vpack.c.b16 %v250, %v249
      %v281 = vpack.c.b16 %v252, %v251
      %v282 = vpack.c.b16 %v254, %v253
      %v283 = vpack.c.b16 %v256, %v255
      %v284 = vpack.c.b16 %v258, %v257
      %v285 = vpack.c.b16 %v260, %v259
      %v286 = vpack.c.b16 %v262, %v261
      %v287 = vpack.c.b16 %v264, %v263
      %v288 = vpack.c.b16 %v266, %v265
      %v289 = vpack.c.b16 %v268, %v267
      %v290 = vpack.c.b16 %v270, %v269
      %v291 = vpack.c.b16 %v272, %v271
      %v292 = vpack.c.b16 %v274, %v273
      %v293 = vpack.c.b16 %v276, %v275
      %v294 = vpack.c.b16 %v278, %v277
      %v296 = vshrl.u32 0, 16
      %v298 = vrot.slane %v296, 7
      %v299 = vshll.u32 0, 16
      %v301 = vor.u32 %v298, %v299
      %v303 = vshrl.u32 %v279, 16
      %v305 = vrot.slane %v303, 7
      %v306 = vshll.u32 %v279, 16
      %v308 = vor.u32 %v305, %v306
      %v310 = vshrl.u32 %v280, 16
      %v312 = vrot.slane %v310, 7
      %v313 = vshll.u32 %v280, 16
      %v315 = vor.u32 %v312, %v313
      %v317 = vshrl.u32 %v281, 16
      %v319 = vrot.slane %v317, 7
      %v320 = vshll.u32 %v281, 16
      %v322 = vor.u32 %v319, %v320
      %v324 = vshrl.u32 %v282, 16
      %v326 = vrot.slane %v324, 7
      %v327 = vshll.u32 %v282, 16
      %v329 = vor.u32 %v326, %v327
      %v331 = vshrl.u32 %v283, 16
      %v333 = vrot.slane %v331, 7
      %v334 = vshll.u32 %v283, 16
      %v336 = vor.u32 %v333, %v334
      %v338 = vshrl.u32 %v284, 16
      %v340 = vrot.slane %v338, 7
      %v341 = vshll.u32 %v284, 16
      %v343 = vor.u32 %v340, %v341
      %v345 = vshrl.u32 %v285, 16
      %v347 = vrot.slane %v345, 7
      %v348 = vshll.u32 %v285, 16
      %v350 = vor.u32 %v347, %v348
      %v352 = vshrl.u32 %v286, 16
      %v354 = vrot.slane %v352, 7
      %v355 = vshll.u32 %v286, 16
      %v357 = vor.u32 %v354, %v355
      %v359 = vshrl.u32 %v287, 16
      %v361 = vrot.slane %v359, 7
      %v362 = vshll.u32 %v287, 16
      %v364 = vor.u32 %v361, %v362
      %v366 = vshrl.u32 %v288, 16
      %v368 = vrot.slane %v366, 7
      %v369 = vshll.u32 %v288, 16
      %v371 = vor.u32 %v368, %v369
      %v373 = vshrl.u32 %v289, 16
      %v375 = vrot.slane %v373, 7
      %v376 = vshll.u32 %v289, 16
      %v378 = vor.u32 %v375, %v376
      %v380 = vshrl.u32 %v290, 16
      %v382 = vrot.slane %v380, 7
      %v383 = vshll.u32 %v290, 16
      %v385 = vor.u32 %v382, %v383
      %v387 = vshrl.u32 %v291, 16
      %v389 = vrot.slane %v387, 7
      %v390 = vshll.u32 %v291, 16
      %v392 = vor.u32 %v389, %v390
      %v394 = vshrl.u32 %v292, 16
      %v396 = vrot.slane %v394, 7
      %v397 = vshll.u32 %v292, 16
      %v399 = vor.u32 %v396, %v397
      %v401 = vshrl.u32 %v293, 16
      %v403 = vrot.slane %v401, 7
      %v404 = vshll.u32 %v293, 16
      %v406 = vor.u32 %v403, %v404
      %v408 = vshrl.u32 %v294, 16
      %v410 = vrot.slane %v408, 7
      %v411 = vshll.u32 %v294, 16
      %v413 = vor.u32 %v410, %v411
      %vm448 = vcmask 1040384
      %vm449 = vsmask.f32 256
      %vm450 = vmand %vm448, %vm449
      %v451 = vsel %vm450, 0, %v301
      %v452 = vsel %vm450, 0, %v308
      %v453 = vsel %vm450, 0, %v315
      %v454 = vsel %vm450, 0, %v322
      %v455 = vsel %vm450, 0, %v329
      %v456 = vsel %vm450, 0, %v336
      %v457 = vsel %vm450, 0, %v343
      %v458 = vsel %vm450, 0, %v350
      %v459 = vsel %vm450, 0, %v357
      %v460 = vsel %vm450, 0, %v364
      %v461 = vsel %vm450, 0, %v371
      %v462 = vsel %vm450, 0, %v378
      %v463 = vsel %vm450, 0, %v385
      %v464 = vsel %vm450, 0, %v392
      %v465 = vsel %vm450, 0, %v399
      %v466 = vsel %vm450, 0, %v406
      %v467 = vsel %vm450, 0, %v413
      %v468 = vsel %vm450, %v298, 0
      %v469 = vsel %vm450, %v305, 0
      %v470 = vsel %vm450, %v312, 0
      %v471 = vsel %vm450, %v319, 0
      %v472 = vsel %vm450, %v326, 0
      %v473 = vsel %vm450, %v333, 0
      %v474 = vsel %vm450, %v340, 0
      %v475 = vsel %vm450, %v347, 0
      %v476 = vsel %vm450, %v354, 0
      %v477 = vsel %vm450, %v361, 0
      %v478 = vsel %vm450, %v368, 0
      %v479 = vsel %vm450, %v375, 0
      %v480 = vsel %vm450, %v382, 0
      %v481 = vsel %vm450, %v389, 0
      %v482 = vsel %vm450, %v396, 0
      %v483 = vsel %vm450, %v403, 0
      %v484 = vsel %vm450, %v410, 0
      %vm485 = vsmask.f32 7424
      %v487 = vshrl.u32 %v451, 16
      %v489 = vshll.u32 %v451, 16
      %v491 = vrot.slane %v489, 1
      %v492 = vor.u32 %v487, %v491
      %v494 = vshll.u32 %v468, 16
      %v496 = vrot.slane %v494, 1
      %v497 = vsel %vm485, %v492, %v496
      %v499 = vshrl.u32 %v452, 16
      %v501 = vshll.u32 %v452, 16
      %v503 = vrot.slane %v501, 1
      %v504 = vor.u32 %v499, %v503
      %v506 = vshll.u32 %v469, 16
      %v508 = vrot.slane %v506, 1
      %v509 = vsel %vm485, %v504, %v508
      %v511 = vshrl.u32 %v453, 16
      %v513 = vshll.u32 %v453, 16
      %v515 = vrot.slane %v513, 1
      %v516 = vor.u32 %v511, %v515
      %v518 = vshll.u32 %v470, 16
      %v520 = vrot.slane %v518, 1
      %v521 = vsel %vm485, %v516, %v520
      %v523 = vshrl.u32 %v454, 16
      %v525 = vshll.u32 %v454, 16
      %v527 = vrot.slane %v525, 1
      %v528 = vor.u32 %v523, %v527
      %v530 = vshll.u32 %v471, 16
      %v532 = vrot.slane %v530, 1
      %v533 = vsel %vm485, %v528, %v532
      %v535 = vshrl.u32 %v455, 16
      %v537 = vshll.u32 %v455, 16
      %v539 = vrot.slane %v537, 1
      %v540 = vor.u32 %v535, %v539
      %v542 = vshll.u32 %v472, 16
      %v544 = vrot.slane %v542, 1
      %v545 = vsel %vm485, %v540, %v544
      %v547 = vshrl.u32 %v456, 16
      %v549 = vshll.u32 %v456, 16
      %v551 = vrot.slane %v549, 1
      %v552 = vor.u32 %v547, %v551
      %v554 = vshll.u32 %v473, 16
      %v556 = vrot.slane %v554, 1
      %v557 = vsel %vm485, %v552, %v556
      %v559 = vshrl.u32 %v457, 16
      %v561 = vshll.u32 %v457, 16
      %v563 = vrot.slane %v561, 1
      %v564 = vor.u32 %v559, %v563
      %v566 = vshll.u32 %v474, 16
      %v568 = vrot.slane %v566, 1
      %v569 = vsel %vm485, %v564, %v568
      %v571 = vshrl.u32 %v458, 16
      %v573 = vshll.u32 %v458, 16
      %v575 = vrot.slane %v573, 1
      %v576 = vor.u32 %v571, %v575
      %v578 = vshll.u32 %v475, 16
      %v580 = vrot.slane %v578, 1
      %v581 = vsel %vm485, %v576, %v580
      %v583 = vshrl.u32 %v459, 16
      %v585 = vshll.u32 %v459, 16
      %v587 = vrot.slane %v585, 1
      %v588 = vor.u32 %v583, %v587
      %v590 = vshll.u32 %v476, 16
      %v592 = vrot.slane %v590, 1
      %v593 = vsel %vm485, %v588, %v592
      %v595 = vshrl.u32 %v460, 16
      %v597 = vshll.u32 %v460, 16
      %v599 = vrot.slane %v597, 1
      %v600 = vor.u32 %v595, %v599
      %v602 = vshll.u32 %v477, 16
      %v604 = vrot.slane %v602, 1
      %v605 = vsel %vm485, %v600, %v604
      %v607 = vshrl.u32 %v461, 16
      %v609 = vshll.u32 %v461, 16
      %v611 = vrot.slane %v609, 1
      %v612 = vor.u32 %v607, %v611
      %v614 = vshll.u32 %v478, 16
      %v616 = vrot.slane %v614, 1
      %v617 = vsel %vm485, %v612, %v616
      %v619 = vshrl.u32 %v462, 16
      %v621 = vshll.u32 %v462, 16
      %v623 = vrot.slane %v621, 1
      %v624 = vor.u32 %v619, %v623
      %v626 = vshll.u32 %v479, 16
      %v628 = vrot.slane %v626, 1
      %v629 = vsel %vm485, %v624, %v628
      %v631 = vshrl.u32 %v463, 16
      %v633 = vshll.u32 %v463, 16
      %v635 = vrot.slane %v633, 1
      %v636 = vor.u32 %v631, %v635
      %v638 = vshll.u32 %v480, 16
      %v640 = vrot.slane %v638, 1
      %v641 = vsel %vm485, %v636, %v640
      %v643 = vshrl.u32 %v464, 16
      %v645 = vshll.u32 %v464, 16
      %v647 = vrot.slane %v645, 1
      %v648 = vor.u32 %v643, %v647
      %v650 = vshll.u32 %v481, 16
      %v652 = vrot.slane %v650, 1
      %v653 = vsel %vm485, %v648, %v652
      %v655 = vshrl.u32 %v465, 16
      %v657 = vshll.u32 %v465, 16
      %v659 = vrot.slane %v657, 1
      %v660 = vor.u32 %v655, %v659
      %v662 = vshll.u32 %v482, 16
      %v664 = vrot.slane %v662, 1
      %v665 = vsel %vm485, %v660, %v664
      %v667 = vshrl.u32 %v466, 16
      %v669 = vshll.u32 %v466, 16
      %v671 = vrot.slane %v669, 1
      %v672 = vor.u32 %v667, %v671
      %v674 = vshll.u32 %v483, 16
      %v676 = vrot.slane %v674, 1
      %v677 = vsel %vm485, %v672, %v676
      %vm726 = vcmask 1046528
      %v727 = vrot.slane %v451, 1
      %v728 = vrot.slane %v468, 1
      %v729 = vsel %vm726, %v727, %v728
      %v730 = vrot.slane %v452, 1
      %v731 = vrot.slane %v469, 1
      %v732 = vsel %vm726, %v730, %v731
      %v733 = vrot.slane %v453, 1
      %v734 = vrot.slane %v470, 1
      %v735 = vsel %vm726, %v733, %v734
      %v736 = vrot.slane %v454, 1
      %v737 = vrot.slane %v471, 1
      %v738 = vsel %vm726, %v736, %v737
      %v739 = vrot.slane %v455, 1
      %v740 = vrot.slane %v472, 1
      %v741 = vsel %vm726, %v739, %v740
      %v742 = vrot.slane %v456, 1
      %v743 = vrot.slane %v473, 1
      %v744 = vsel %vm726, %v742, %v743
      %v745 = vrot.slane %v457, 1
      %v746 = vrot.slane %v474, 1
      %v747 = vsel %vm726, %v745, %v746
      %v748 = vrot.slane %v458, 1
      %v749 = vrot.slane %v475, 1
      %v750 = vsel %vm726, %v748, %v749
      %v751 = vrot.slane %v459, 1
      %v752 = vrot.slane %v476, 1
      %v753 = vsel %vm726, %v751, %v752
      %v754 = vrot.slane %v460, 1
      %v755 = vrot.slane %v477, 1
      %v756 = vsel %vm726, %v754, %v755
      %v757 = vrot.slane %v461, 1
      %v758 = vrot.slane %v478, 1
      %v759 = vsel %vm726, %v757, %v758
      %v760 = vrot.slane %v462, 1
      %v761 = vrot.slane %v479, 1
      %v762 = vsel %vm726, %v760, %v761
      %v763 = vrot.slane %v463, 1
      %v764 = vrot.slane %v480, 1
      %v765 = vsel %vm726, %v763, %v764
      %v766 = vrot.slane %v464, 1
      %v767 = vrot.slane %v481, 1
      %v768 = vsel %vm726, %v766, %v767
      %v769 = vrot.slane %v465, 1
      %v770 = vrot.slane %v482, 1
      %v771 = vsel %vm726, %v769, %v770
      %v772 = vrot.slane %v466, 1
      %v773 = vrot.slane %v483, 1
      %v774 = vsel %vm726, %v772, %v773
      %v791 = vld [vmem:[%s1] sm:$0xf]
      %v792 = vld [vmem:[%s1 + $0x4] sm:$0xf]
      %v793 = vld [vmem:[%s1 + $0x8] sm:$0xf]
      %v794 = vld [vmem:[%s1 + $0xc] sm:$0xf]
      %v795 = vld [vmem:[%s1 + $0x10] sm:$0xf]
      %v796 = vld [vmem:[%s1 + $0x14] sm:$0xf]
      %v797 = vld [vmem:[%s1 + $0x18] sm:$0xf]
      %v798 = vld [vmem:[%s1 + $0x1c] sm:$0xf]
      %v799 = vld [vmem:[%s1 + $0x20] sm:$0xf]
      %v800 = vld [vmem:[%s1 + $0x24] sm:$0xf]
      %v801 = vld [vmem:[%s1 + $0x28] sm:$0xf]
      %v802 = vld [vmem:[%s1 + $0x2c] sm:$0xf]
      %v803 = vld [vmem:[%s1 + $0x30] sm:$0xf]
      %v804 = vld [vmem:[%s1 + $0x34] sm:$0xf]
      %v805 = vld [vmem:[%s1 + $0x38] sm:$0xf]
      %v806 = vld [vmem:[%s1 + $0x3c] sm:$0xf]
      %v807 = vld [vmem:[%s1 + $0x40] sm:$0xf]
      %v808 = vld [vmem:[%s1 + $0x44] sm:$0xf]
      %v809 = vld [vmem:[%s1 + $0x48] sm:$0xf]
      %v810 = vld [vmem:[%s1 + $0x4c] sm:$0xf]
      %v811 = vld [vmem:[%s1 + $0x50] sm:$0xf]
      %v812 = vld [vmem:[%s1 + $0x54] sm:$0xf]
      %v813 = vld [vmem:[%s1 + $0x58] sm:$0xf]
      %v814 = vld [vmem:[%s1 + $0x5c] sm:$0xf]
      %v815 = vld [vmem:[%s1 + $0x60] sm:$0xf]
      %v816 = vld [vmem:[%s1 + $0x64] sm:$0xf]
      %v817 = vld [vmem:[%s1 + $0x68] sm:$0xf]
      %v818 = vld [vmem:[%s1 + $0x6c] sm:$0xf]
      %v819 = vld [vmem:[%s1 + $0x70] sm:$0xf]
      %v820 = vld [vmem:[%s1 + $0x74] sm:$0xf]
      %v821 = vld [vmem:[%s1 + $0x78] sm:$0xf]
      %v822 = vld [vmem:[%s1 + $0x7c] sm:$0xf]
      %v823 = vld [vmem:[%s1 + $0x80] sm:$0xf]
      %v824 = vld [vmem:[%s1 + $0x84] sm:$0xf]
      %v825 = vld [vmem:[%s1 + $0x88] sm:$0xf]
      %v826 = vld [vmem:[%s1 + $0x8c] sm:$0xf]
      %v827 = vld [vmem:[%s1 + $0x90] sm:$0xf]
      %v828 = vld [vmem:[%s1 + $0x94] sm:$0xf]
      %v829 = vld [vmem:[%s1 + $0x98] sm:$0xf]
      %v830 = vld [vmem:[%s1 + $0x9c] sm:$0xf]
      %v831 = vld [vmem:[%s1 + $0xa0] sm:$0xf]
      %v832 = vld [vmem:[%s1 + $0xa4] sm:$0xf]
      %v833 = vld [vmem:[%s1 + $0xa8] sm:$0xf]
      %v834 = vld [vmem:[%s1 + $0xac] sm:$0xf]
      %v835 = vld [vmem:[%s1 + $0xb0] sm:$0xf]
      %v836 = vld [vmem:[%s1 + $0xb4] sm:$0xf]
      %v837 = vld [vmem:[%s1 + $0xb8] sm:$0xf]
      %v838 = vld [vmem:[%s1 + $0xbc] sm:$0xf]
      %v840 = vshrl.u32 %v467, 16
      %v842 = vshll.u32 %v467, 16
      %v844 = vrot.slane %v842, 1
      %v845 = vor.u32 %v840, %v844
      %v847 = vshll.u32 %v484, 16
      %v849 = vrot.slane %v847, 1
      %v850 = vsel %vm485, %v845, %v849
      %v854 = vrot.slane %v467, 1
      %v855 = vrot.slane %v484, 1
      %v856 = vsel %vm726, %v854, %v855
      %s858 = scalar_lea.vmem %s1, 192
      %v859 = vld [vmem:[%s858] sm:$0xf]
      %v860 = vld [vmem:[%s858 + $0x4] sm:$0xf]
      %v861 = vld [vmem:[%s858 + $0x8] sm:$0xf]
      %v862 = vld [vmem:[%s858 + $0xc] sm:$0xf]
      %v863 = vld [vmem:[%s858 + $0x10] sm:$0xf]
      %v864 = vld [vmem:[%s858 + $0x14] sm:$0xf]
      %v865 = vld [vmem:[%s858 + $0x18] sm:$0xf]
      %v866 = vld [vmem:[%s858 + $0x1c] sm:$0xf]
      %v867 = vld [vmem:[%s858 + $0x20] sm:$0xf]
      %v868 = vld [vmem:[%s858 + $0x24] sm:$0xf]
      %v869 = vld [vmem:[%s858 + $0x28] sm:$0xf]
      %v870 = vld [vmem:[%s858 + $0x2c] sm:$0xf]
      %v871 = vld [vmem:[%s858 + $0x30] sm:$0xf]
      %v872 = vld [vmem:[%s858 + $0x34] sm:$0xf]
      %v873 = vld [vmem:[%s858 + $0x38] sm:$0xf]
      %v874 = vld [vmem:[%s858 + $0x3c] sm:$0xf]
      %v875 = vld [vmem:[%s858 + $0x40] sm:$0xf]
      %v876 = vld [vmem:[%s858 + $0x44] sm:$0xf]
      %v877 = vld [vmem:[%s858 + $0x48] sm:$0xf]
      %v878 = vld [vmem:[%s858 + $0x4c] sm:$0xf]
      %v879 = vld [vmem:[%s858 + $0x50] sm:$0xf]
      %v880 = vld [vmem:[%s858 + $0x54] sm:$0xf]
      %v881 = vld [vmem:[%s858 + $0x58] sm:$0xf]
      %v882 = vld [vmem:[%s858 + $0x5c] sm:$0xf]
      %v883 = vld [vmem:[%s858 + $0x60] sm:$0xf]
      %v884 = vld [vmem:[%s858 + $0x64] sm:$0xf]
      %v885 = vld [vmem:[%s858 + $0x68] sm:$0xf]
      %v886 = vld [vmem:[%s858 + $0x6c] sm:$0xf]
      %v887 = vld [vmem:[%s858 + $0x70] sm:$0xf]
      %v888 = vld [vmem:[%s858 + $0x74] sm:$0xf]
      %v889 = vld [vmem:[%s858 + $0x78] sm:$0xf]
      %v890 = vld [vmem:[%s858 + $0x7c] sm:$0xf]
      %v891 = vld [vmem:[%s858 + $0x80] sm:$0xf]
      %v892 = vld [vmem:[%s858 + $0x84] sm:$0xf]
      %v893 = vld [vmem:[%s858 + $0x88] sm:$0xf]
      %v894 = vld [vmem:[%s858 + $0x8c] sm:$0xf]
      %v895 = vld [vmem:[%s858 + $0x90] sm:$0xf]
      %v896 = vld [vmem:[%s858 + $0x94] sm:$0xf]
      %v897 = vld [vmem:[%s858 + $0x98] sm:$0xf]
      %v898 = vld [vmem:[%s858 + $0x9c] sm:$0xf]
      %v899 = vld [vmem:[%s858 + $0xa0] sm:$0xf]
      %v900 = vld [vmem:[%s858 + $0xa4] sm:$0xf]
      %v901 = vld [vmem:[%s858 + $0xa8] sm:$0xf]
      %v902 = vld [vmem:[%s858 + $0xac] sm:$0xf]
      %v903 = vld [vmem:[%s858 + $0xb0] sm:$0xf]
      %v904 = vld [vmem:[%s858 + $0xb4] sm:$0xf]
      %v905 = vld [vmem:[%s858 + $0xb8] sm:$0xf]
      %v906 = vld [vmem:[%s858 + $0xbc] sm:$0xf]
      %v955 = vunpack.c.l.b16 %v859
      %v956 = vunpack.c.l.b16 %v860
      %v957 = vunpack.c.l.b16 %v861
      %v958 = vunpack.c.l.b16 %v862
      %v959 = vunpack.c.l.b16 %v863
      %v960 = vunpack.c.l.b16 %v864
      %v961 = vunpack.c.l.b16 %v865
      %v962 = vunpack.c.l.b16 %v866
      %v963 = vunpack.c.l.b16 %v867
      %v964 = vunpack.c.l.b16 %v868
      %v965 = vunpack.c.l.b16 %v869
      %v966 = vunpack.c.l.b16 %v870
      %v967 = vunpack.c.l.b16 %v871
      %v968 = vunpack.c.l.b16 %v872
      %v969 = vunpack.c.l.b16 %v873
      %v970 = vunpack.c.l.b16 %v874
      %v971 = vunpack.c.l.b16 %v875
      %v972 = vunpack.c.l.b16 %v876
      %v973 = vunpack.c.l.b16 %v877
      %v974 = vunpack.c.l.b16 %v878
      %v975 = vunpack.c.l.b16 %v879
      %v976 = vunpack.c.l.b16 %v880
      %v977 = vunpack.c.l.b16 %v881
      %v978 = vunpack.c.l.b16 %v882
      %v979 = vunpack.c.l.b16 %v883
      %v980 = vunpack.c.l.b16 %v884
      %v981 = vunpack.c.l.b16 %v885
      %v982 = vunpack.c.l.b16 %v886
      %v983 = vunpack.c.l.b16 %v887
      %v984 = vunpack.c.l.b16 %v888
      %v985 = vunpack.c.l.b16 %v889
      %v986 = vunpack.c.l.b16 %v890
      %v987 = vunpack.c.l.b16 %v891
      %v988 = vunpack.c.l.b16 %v892
      %v989 = vunpack.c.l.b16 %v893
      %v990 = vunpack.c.l.b16 %v894
      %v991 = vunpack.c.l.b16 %v895
      %v992 = vunpack.c.l.b16 %v896
      %v993 = vunpack.c.l.b16 %v897
      %v994 = vunpack.c.l.b16 %v898
      %v995 = vunpack.c.l.b16 %v899
      %v996 = vunpack.c.l.b16 %v900
      %v997 = vunpack.c.l.b16 %v901
      %v998 = vunpack.c.l.b16 %v902
      %v999 = vunpack.c.l.b16 %v903
      %v1000 = vunpack.c.l.b16 %v904
      %v1001 = vunpack.c.l.b16 %v905
      %v1002 = vunpack.c.l.b16 %v906
      %v1003 = vpack.c.b16 %v956, %v955
      %v1004 = vpack.c.b16 %v958, %v957
      %v1005 = vpack.c.b16 %v960, %v959
      %v1006 = vpack.c.b16 %v962, %v961
      %v1007 = vpack.c.b16 %v964, %v963
      %v1008 = vpack.c.b16 %v966, %v965
      %v1009 = vpack.c.b16 %v968, %v967
      %v1010 = vpack.c.b16 %v970, %v969
      %v1011 = vpack.c.b16 %v972, %v971
      %v1012 = vpack.c.b16 %v974, %v973
      %v1013 = vpack.c.b16 %v976, %v975
      %v1014 = vpack.c.b16 %v978, %v977
      %v1015 = vpack.c.b16 %v980, %v979
      %v1016 = vpack.c.b16 %v982, %v981
      %v1017 = vpack.c.b16 %v984, %v983
      %v1018 = vpack.c.b16 %v986, %v985
      %v1019 = vpack.c.b16 %v988, %v987
      %v1020 = vpack.c.b16 %v990, %v989
      %v1021 = vpack.c.b16 %v992, %v991
      %v1022 = vpack.c.b16 %v994, %v993
      %v1023 = vpack.c.b16 %v996, %v995
      %v1024 = vpack.c.b16 %v998, %v997
      %v1025 = vpack.c.b16 %v1000, %v999
      %v1026 = vpack.c.b16 %v1002, %v1001
      %1051 = vmatprep.subr.bf16.mxu0 0
      %1052 = vmatpush1.bf16.msra.mxu0 %v1003
      %1053 = vmatprep.subr.bf16.mxu0 0
      %1054 = vmatpush1.bf16.msra.mxu0 %v1004
      %1055 = vmatprep.subr.bf16.mxu0 0
      %1056 = vmatpush1.bf16.msra.mxu0 %v1005
      %1057 = vmatprep.subr.bf16.mxu0 0
      %1058 = vmatpush1.bf16.msra.mxu0 %v1006
      %1059 = vmatprep.subr.bf16.mxu0 0
      %1060 = vmatpush1.bf16.msra.mxu0 %v1007
      %1061 = vmatprep.subr.bf16.mxu0 0
      %1062 = vmatpush1.bf16.msra.mxu0 %v1008
      %1063 = vmatprep.subr.bf16.mxu0 0
      %1064 = vmatpush1.bf16.msra.mxu0 %v1009
      %1065 = vmatprep.subr.bf16.mxu0 0
      %1066 = vmatpush1.bf16.msra.mxu0 %v1010
      %1067 = vmatprep.subr.bf16.mxu0 0
      %1068 = vmatpush1.bf16.msra.mxu0 %v1011
      %1069 = vmatprep.subr.bf16.mxu0 0
      %1070 = vmatpush1.bf16.msra.mxu0 %v1012
      %1071 = vmatprep.subr.bf16.mxu0 0
      %1072 = vmatpush1.bf16.msra.mxu0 %v1013
      %1073 = vmatprep.subr.bf16.mxu0 0
      %1074 = vmatpush1.bf16.msra.mxu0 %v1014
      %1075 = vmatprep.subr.bf16.mxu0 0
      %1076 = vmatpush1.bf16.msra.mxu0 %v1015
      %1077 = vmatprep.subr.bf16.mxu0 0
      %1078 = vmatpush1.bf16.msra.mxu0 %v1016
      %1079 = vmatprep.subr.bf16.mxu0 0
      %1080 = vmatpush1.bf16.msra.mxu0 %v1017
      %1081 = vmatprep.subr.bf16.mxu0 0
      %1082 = vmatpush1.bf16.msra.mxu0 %v1018
      %1083 = vmatprep.mubr.bf16.mxu0 %v509
      %1084 = vmatmul.mubr.bf16.gmra.mrb[0].mxu0 %v452
      %v1085 = vpop.f32.mrb[0].mxu0
      %v1086 = vadd.f32 0.0, %v1085
      %v1087 = vpop.f32.mrb[0].mxu0
      %v1088 = vpop.f32.mrb[0].mxu0
      %v1089 = vadd.f32 0.0, %v1088
      %v1090 = vpop.f32.mrb[0].mxu0
      %1091 = vmatprep.mubr.bf16.mxu0 %v521
      %1092 = vmatmul.mubr.bf16.gmra.mrb[0].mxu0 %v453
      %v1093 = vpop.f32.mrb[0].mxu0
      %v1094 = vadd.f32 0.0, %v1093
      %v1095 = vpop.f32.mrb[0].mxu0
      %v1096 = vpop.f32.mrb[0].mxu0
      %v1097 = vadd.f32 0.0, %v1096
      %v1098 = vpop.f32.mrb[0].mxu0
      %1099 = vmatprep.mubr.bf16.mxu0 %v533
      %1100 = vmatmul.mubr.bf16.gmra.mrb[0].mxu0 %v454
      %v1101 = vpop.f32.mrb[0].mxu0
      %v1102 = vadd.f32 0.0, %v1101
      %v1103 = vpop.f32.mrb[0].mxu0
      %v1104 = vpop.f32.mrb[0].mxu0
      %v1105 = vadd.f32 0.0, %v1104
      %v1106 = vpop.f32.mrb[0].mxu0
      %1107 = vmatprep.mubr.bf16.mxu0 %v545
      %1108 = vmatmul.mubr.bf16.gmra.mrb[0].mxu0 %v455
      %v1109 = vpop.f32.mrb[0].mxu0
      %v1110 = vadd.f32 0.0, %v1109
      %v1111 = vpop.f32.mrb[0].mxu0
      %v1112 = vpop.f32.mrb[0].mxu0
      %v1113 = vadd.f32 0.0, %v1112
      %v1114 = vpop.f32.mrb[0].mxu0
      %1115 = vmatprep.mubr.bf16.mxu0 %v557
      %1116 = vmatmul.mubr.bf16.gmra.mrb[0].mxu0 %v456
      %v1117 = vpop.f32.mrb[0].mxu0
      %v1118 = vadd.f32 0.0, %v1117
      %v1119 = vpop.f32.mrb[0].mxu0
      %v1120 = vpop.f32.mrb[0].mxu0
      %v1121 = vadd.f32 0.0, %v1120
      %v1122 = vpop.f32.mrb[0].mxu0
      %1123 = vmatprep.mubr.bf16.mxu0 %v569
      %1124 = vmatmul.mubr.bf16.gmra.mrb[0].mxu0 %v457
      %v1125 = vpop.f32.mrb[0].mxu0
      %v1126 = vadd.f32 0.0, %v1125
      %v1127 = vpop.f32.mrb[0].mxu0
      %v1128 = vpop.f32.mrb[0].mxu0
      %v1129 = vadd.f32 0.0, %v1128
      %v1130 = vpop.f32.mrb[0].mxu0
      %1131 = vmatprep.mubr.bf16.mxu0 %v581
      %1132 = vmatmul.mubr.bf16.gmra.mrb[0].mxu0 %v458
      %v1133 = vpop.f32.mrb[0].mxu0
      %v1134 = vadd.f32 0.0, %v1133
      %v1135 = vpop.f32.mrb[0].mxu0
      %v1136 = vpop.f32.mrb[0].mxu0
      %v1137 = vadd.f32 0.0, %v1136
      %v1138 = vpop.f32.mrb[0].mxu0
      %1139 = vmatprep.mubr.bf16.mxu0 %v593
      %1140 = vmatmul.mubr.bf16.gmra.mrb[0].mxu0 %v459
      %v1141 = vpop.f32.mrb[0].mxu0
      %v1142 = vadd.f32 0.0, %v1141
      %v1143 = vpop.f32.mrb[0].mxu0
      %v1144 = vpop.f32.mrb[0].mxu0
      %v1145 = vadd.f32 0.0, %v1144
      %v1146 = vpop.f32.mrb[0].mxu0
      %1147 = vmatprep.mubr.bf16.mxu0 %v605
      %1148 = vmatmul.mubr.bf16.gmra.mrb[0].mxu0 %v460
      %v1149 = vpop.f32.mrb[0].mxu0
      %v1150 = vadd.f32 0.0, %v1149
      %v1151 = vpop.f32.mrb[0].mxu0
      %v1152 = vpop.f32.mrb[0].mxu0
      %v1153 = vadd.f32 0.0, %v1152
      %v1154 = vpop.f32.mrb[0].mxu0
      %1155 = vmatprep.mubr.bf16.mxu0 %v617
      %1156 = vmatmul.mubr.bf16.gmra.mrb[0].mxu0 %v461
      %v1157 = vpop.f32.mrb[0].mxu0
      %v1158 = vadd.f32 0.0, %v1157
      %v1159 = vpop.f32.mrb[0].mxu0
      %v1160 = vpop.f32.mrb[0].mxu0
      %v1161 = vadd.f32 0.0, %v1160
      %v1162 = vpop.f32.mrb[0].mxu0
      %1163 = vmatprep.mubr.bf16.mxu0 %v629
      %1164 = vmatmul.mubr.bf16.gmra.mrb[0].mxu0 %v462
      %v1165 = vpop.f32.mrb[0].mxu0
      %v1166 = vadd.f32 0.0, %v1165
      %v1167 = vpop.f32.mrb[0].mxu0
      %v1168 = vpop.f32.mrb[0].mxu0
      %v1169 = vadd.f32 0.0, %v1168
      %v1170 = vpop.f32.mrb[0].mxu0
      %1171 = vmatprep.mubr.bf16.mxu0 %v641
      %1172 = vmatmul.mubr.bf16.gmra.mrb[0].mxu0 %v463
      %v1173 = vpop.f32.mrb[0].mxu0
      %v1174 = vadd.f32 0.0, %v1173
      %v1175 = vpop.f32.mrb[0].mxu0
      %v1176 = vpop.f32.mrb[0].mxu0
      %v1177 = vadd.f32 0.0, %v1176
      %v1178 = vpop.f32.mrb[0].mxu0
      %1179 = vmatprep.mubr.bf16.mxu0 %v653
      %1180 = vmatmul.mubr.bf16.gmra.mrb[0].mxu0 %v464
      %v1181 = vpop.f32.mrb[0].mxu0
      %v1182 = vadd.f32 0.0, %v1181
      %v1183 = vpop.f32.mrb[0].mxu0
      %v1184 = vpop.f32.mrb[0].mxu0
      %v1185 = vadd.f32 0.0, %v1184
      %v1186 = vpop.f32.mrb[0].mxu0
      %1187 = vmatprep.mubr.bf16.mxu0 %v665
      %1188 = vmatmul.mubr.bf16.gmra.mrb[0].mxu0 %v465
      %v1189 = vpop.f32.mrb[0].mxu0
      %v1190 = vadd.f32 0.0, %v1189
      %v1191 = vpop.f32.mrb[0].mxu0
      %v1192 = vpop.f32.mrb[0].mxu0
      %v1193 = vadd.f32 0.0, %v1192
      %v1194 = vpop.f32.mrb[0].mxu0
      %1195 = vmatprep.mubr.bf16.mxu0 %v677
      %1196 = vmatmul.mubr.bf16.gmra.mrb[0].mxu0 %v466
      %v1197 = vpop.f32.mrb[0].mxu0
      %v1198 = vadd.f32 0.0, %v1197
      %v1199 = vpop.f32.mrb[0].mxu0
      %v1200 = vpop.f32.mrb[0].mxu0
      %v1201 = vadd.f32 0.0, %v1200
      %v1202 = vpop.f32.mrb[0].mxu0
      %1203 = vmatprep.mubr.bf16.mxu0 %v850
      %1204 = vmatmul.mubr.bf16.gmra.mrb[0].mxu0 %v467
      %v1205 = vpop.f32.mrb[0].mxu0
      %v1206 = vadd.f32 0.0, %v1205
      %v1207 = vpop.f32.mrb[0].mxu0
      %v1208 = vpop.f32.mrb[0].mxu0
      %v1209 = vadd.f32 0.0, %v1208
      %v1210 = vpop.f32.mrb[0].mxu0
      %1211 = vdwg.mxu0
      %1212 = vmatprep.subr.bf16.mxu0 0
      %1213 = vmatpush1.bf16.msra.mxu0 %v1019
      %1214 = vmatprep.subr.bf16.mxu0 0
      %1215 = vmatpush1.bf16.msra.mxu0 %v1020
      %1216 = vmatprep.subr.bf16.mxu0 0
      %1217 = vmatpush1.bf16.msra.mxu0 %v1021
      %1218 = vmatprep.subr.bf16.mxu0 0
      %1219 = vmatpush1.bf16.msra.mxu0 %v1022
      %1220 = vmatprep.subr.bf16.mxu0 0
      %1221 = vmatpush1.bf16.msra.mxu0 %v1023
      %1222 = vmatprep.subr.bf16.mxu0 0
      %1223 = vmatpush1.bf16.msra.mxu0 %v1024
      %1224 = vmatprep.subr.bf16.mxu0 0
      %1225 = vmatpush1.bf16.msra.mxu0 %v1025
      %1226 = vmatprep.subr.bf16.mxu0 0
      %1227 = vmatpush1.bf16.msra.mxu0 %v1026
      %1228 = vmatprep.subr.bf16.mxu0 0
      %1229 = vmatpush1.bf16.msra.mxu0 0
      %1230 = vmatprep.subr.bf16.mxu0 0
      %1231 = vmatpush1.bf16.msra.mxu0 0
      %1232 = vmatprep.subr.bf16.mxu0 0
      %1233 = vmatpush1.bf16.msra.mxu0 0
      %1234 = vmatprep.subr.bf16.mxu0 0
      %1235 = vmatpush1.bf16.msra.mxu0 0
      %1236 = vmatprep.subr.bf16.mxu0 0
      %1237 = vmatpush1.bf16.msra.mxu0 0
      %1238 = vmatprep.subr.bf16.mxu0 0
      %1239 = vmatpush1.bf16.msra.mxu0 0
      %1240 = vmatprep.subr.bf16.mxu0 0
      %1241 = vmatpush1.bf16.msra.mxu0 0
      %1242 = vmatprep.subr.bf16.mxu0 0
      %1243 = vmatpush1.bf16.msra.mxu0 0
      %1244 = vmatprep.mubr.bf16.mxu0 0
      %1245 = vmatmul.mubr.bf16.gmra.mrb[0].mxu0 %v732
      %v1246 = vpop.f32.mrb[0].mxu0
      %v1247 = vadd.f32 %v1086, %v1246
      %v1248 = vpop.f32.mrb[0].mxu0
      %v1249 = vpop.f32.mrb[0].mxu0
      %v1250 = vadd.f32 %v1089, %v1249
      %v1251 = vpop.f32.mrb[0].mxu0
      %1252 = vmatprep.mubr.bf16.mxu0 0
      %1253 = vmatmul.mubr.bf16.gmra.mrb[0].mxu0 %v735
      %v1254 = vpop.f32.mrb[0].mxu0
      %v1255 = vadd.f32 %v1094, %v1254
      %v1256 = vpop.f32.mrb[0].mxu0
      %v1257 = vpop.f32.mrb[0].mxu0
      %v1258 = vadd.f32 %v1097, %v1257
      %v1259 = vpop.f32.mrb[0].mxu0
      %1260 = vmatprep.mubr.bf16.mxu0 0
      %1261 = vmatmul.mubr.bf16.gmra.mrb[0].mxu0 %v738
      %v1262 = vpop.f32.mrb[0].mxu0
      %v1263 = vadd.f32 %v1102, %v1262
      %v1264 = vpop.f32.mrb[0].mxu0
      %v1265 = vpop.f32.mrb[0].mxu0
      %v1266 = vadd.f32 %v1105, %v1265
      %v1267 = vpop.f32.mrb[0].mxu0
      %1268 = vmatprep.mubr.bf16.mxu0 0
      %1269 = vmatmul.mubr.bf16.gmra.mrb[0].mxu0 %v741
      %v1270 = vpop.f32.mrb[0].mxu0
      %v1271 = vadd.f32 %v1110, %v1270
      %v1272 = vpop.f32.mrb[0].mxu0
      %v1273 = vpop.f32.mrb[0].mxu0
      %v1274 = vadd.f32 %v1113, %v1273
      %v1275 = vpop.f32.mrb[0].mxu0
      %1276 = vmatprep.mubr.bf16.mxu0 0
      %1277 = vmatmul.mubr.bf16.gmra.mrb[0].mxu0 %v744
      %v1278 = vpop.f32.mrb[0].mxu0
      %v1279 = vadd.f32 %v1118, %v1278
      %v1280 = vpop.f32.mrb[0].mxu0
      %v1281 = vpop.f32.mrb[0].mxu0
      %v1282 = vadd.f32 %v1121, %v1281
      %v1283 = vpop.f32.mrb[0].mxu0
      %1284 = vmatprep.mubr.bf16.mxu0 0
      %1285 = vmatmul.mubr.bf16.gmra.mrb[0].mxu0 %v747
      %v1286 = vpop.f32.mrb[0].mxu0
      %v1287 = vadd.f32 %v1126, %v1286
      %v1288 = vpop.f32.mrb[0].mxu0
      %v1289 = vpop.f32.mrb[0].mxu0
      %v1290 = vadd.f32 %v1129, %v1289
      %v1291 = vpop.f32.mrb[0].mxu0
      %1292 = vmatprep.mubr.bf16.mxu0 0
      %1293 = vmatmul.mubr.bf16.gmra.mrb[0].mxu0 %v750
      %v1294 = vpop.f32.mrb[0].mxu0
      %v1295 = vadd.f32 %v1134, %v1294
      %v1296 = vpop.f32.mrb[0].mxu0
      %v1297 = vpop.f32.mrb[0].mxu0
      %v1298 = vadd.f32 %v1137, %v1297
      %v1299 = vpop.f32.mrb[0].mxu0
      %1300 = vmatprep.mubr.bf16.mxu0 0
      %1301 = vmatmul.mubr.bf16.gmra.mrb[0].mxu0 %v753
      %v1302 = vpop.f32.mrb[0].mxu0
      %v1303 = vadd.f32 %v1142, %v1302
      %v1304 = vpop.f32.mrb[0].mxu0
      %v1305 = vpop.f32.mrb[0].mxu0
      %v1306 = vadd.f32 %v1145, %v1305
      %v1307 = vpop.f32.mrb[0].mxu0
      %1308 = vmatprep.mubr.bf16.mxu0 0
      %1309 = vmatmul.mubr.bf16.gmra.mrb[0].mxu0 %v756
      %v1310 = vpop.f32.mrb[0].mxu0
      %v1311 = vadd.f32 %v1150, %v1310
      %v1312 = vpop.f32.mrb[0].mxu0
      %v1313 = vpop.f32.mrb[0].mxu0
      %v1314 = vadd.f32 %v1153, %v1313
      %v1315 = vpop.f32.mrb[0].mxu0
      %1316 = vmatprep.mubr.bf16.mxu0 0
      %1317 = vmatmul.mubr.bf16.gmra.mrb[0].mxu0 %v759
      %v1318 = vpop.f32.mrb[0].mxu0
      %v1319 = vadd.f32 %v1158, %v1318
      %v1320 = vpop.f32.mrb[0].mxu0
      %v1321 = vpop.f32.mrb[0].mxu0
      %v1322 = vadd.f32 %v1161, %v1321
      %v1323 = vpop.f32.mrb[0].mxu0
      %1324 = vmatprep.mubr.bf16.mxu0 0
      %1325 = vmatmul.mubr.bf16.gmra.mrb[0].mxu0 %v762
      %v1326 = vpop.f32.mrb[0].mxu0
      %v1327 = vadd.f32 %v1166, %v1326
      %v1328 = vpop.f32.mrb[0].mxu0
      %v1329 = vpop.f32.mrb[0].mxu0
      %v1330 = vadd.f32 %v1169, %v1329
      %v1331 = vpop.f32.mrb[0].mxu0
      %1332 = vmatprep.mubr.bf16.mxu0 0
      %1333 = vmatmul.mubr.bf16.gmra.mrb[0].mxu0 %v765
      %v1334 = vpop.f32.mrb[0].mxu0
      %v1335 = vadd.f32 %v1174, %v1334
      %v1336 = vpop.f32.mrb[0].mxu0
      %v1337 = vpop.f32.mrb[0].mxu0
      %v1338 = vadd.f32 %v1177, %v1337
      %v1339 = vpop.f32.mrb[0].mxu0
      %1340 = vmatprep.mubr.bf16.mxu0 0
      %1341 = vmatmul.mubr.bf16.gmra.mrb[0].mxu0 %v768
      %v1342 = vpop.f32.mrb[0].mxu0
      %v1343 = vadd.f32 %v1182, %v1342
      %v1344 = vpop.f32.mrb[0].mxu0
      %v1345 = vpop.f32.mrb[0].mxu0
      %v1346 = vadd.f32 %v1185, %v1345
      %v1347 = vpop.f32.mrb[0].mxu0
      %1348 = vmatprep.mubr.bf16.mxu0 0
      %1349 = vmatmul.mubr.bf16.gmra.mrb[0].mxu0 %v771
      %v1350 = vpop.f32.mrb[0].mxu0
      %v1351 = vadd.f32 %v1190, %v1350
      %v1352 = vpop.f32.mrb[0].mxu0
      %v1353 = vpop.f32.mrb[0].mxu0
      %v1354 = vadd.f32 %v1193, %v1353
      %v1355 = vpop.f32.mrb[0].mxu0
      %1356 = vmatprep.mubr.bf16.mxu0 0
      %1357 = vmatmul.mubr.bf16.gmra.mrb[0].mxu0 %v774
      %v1358 = vpop.f32.mrb[0].mxu0
      %v1359 = vadd.f32 %v1198, %v1358
      %v1360 = vpop.f32.mrb[0].mxu0
      %v1361 = vpop.f32.mrb[0].mxu0
      %v1362 = vadd.f32 %v1201, %v1361
      %v1363 = vpop.f32.mrb[0].mxu0
      %1364 = vmatprep.mubr.bf16.mxu0 0
      %1365 = vmatmul.mubr.bf16.gmra.mrb[0].mxu0 %v856
      %v1366 = vpop.f32.mrb[0].mxu0
      %v1367 = vadd.f32 %v1206, %v1366
      %v1368 = vpop.f32.mrb[0].mxu0
      %v1369 = vpop.f32.mrb[0].mxu0
      %v1370 = vadd.f32 %v1209, %v1369
      %v1371 = vpop.f32.mrb[0].mxu0
      %1372 = vdwg.mxu0
      %v1421 = vunpack.c.l.b16 %v791
      %v1422 = vunpack.c.l.b16 %v792
      %v1423 = vunpack.c.l.b16 %v793
      %v1424 = vunpack.c.l.b16 %v794
      %v1425 = vunpack.c.l.b16 %v795
      %v1426 = vunpack.c.l.b16 %v796
      %v1427 = vunpack.c.l.b16 %v797
      %v1428 = vunpack.c.l.b16 %v798
      %v1429 = vunpack.c.l.b16 %v799
      %v1430 = vunpack.c.l.b16 %v800
      %v1431 = vunpack.c.l.b16 %v801
      %v1432 = vunpack.c.l.b16 %v802
      %v1433 = vunpack.c.l.b16 %v803
      %v1434 = vunpack.c.l.b16 %v804
      %v1435 = vunpack.c.l.b16 %v805
      %v1436 = vunpack.c.l.b16 %v806
      %v1437 = vunpack.c.l.b16 %v807
      %v1438 = vunpack.c.l.b16 %v808
      %v1439 = vunpack.c.l.b16 %v809
      %v1440 = vunpack.c.l.b16 %v810
      %v1441 = vunpack.c.l.b16 %v811
      %v1442 = vunpack.c.l.b16 %v812
      %v1443 = vunpack.c.l.b16 %v813
      %v1444 = vunpack.c.l.b16 %v814
      %v1445 = vunpack.c.l.b16 %v815
      %v1446 = vunpack.c.l.b16 %v816
      %v1447 = vunpack.c.l.b16 %v817
      %v1448 = vunpack.c.l.b16 %v818
      %v1449 = vunpack.c.l.b16 %v819
      %v1450 = vunpack.c.l.b16 %v820
      %v1451 = vunpack.c.l.b16 %v821
      %v1452 = vunpack.c.l.b16 %v822
      %v1453 = vunpack.c.l.b16 %v823
      %v1454 = vunpack.c.l.b16 %v824
      %v1455 = vunpack.c.l.b16 %v825
      %v1456 = vunpack.c.l.b16 %v826
      %v1457 = vunpack.c.l.b16 %v827
      %v1458 = vunpack.c.l.b16 %v828
      %v1459 = vunpack.c.l.b16 %v829
      %v1460 = vunpack.c.l.b16 %v830
      %v1461 = vunpack.c.l.b16 %v831
      %v1462 = vunpack.c.l.b16 %v832
      %v1463 = vunpack.c.l.b16 %v833
      %v1464 = vunpack.c.l.b16 %v834
      %v1465 = vunpack.c.l.b16 %v835
      %v1466 = vunpack.c.l.b16 %v836
      %v1467 = vunpack.c.l.b16 %v837
      %v1468 = vunpack.c.l.b16 %v838
      %v1469 = vpack.c.b16 %v1422, %v1421
      %v1470 = vpack.c.b16 %v1424, %v1423
      %v1471 = vpack.c.b16 %v1426, %v1425
      %v1472 = vpack.c.b16 %v1428, %v1427
      %v1473 = vpack.c.b16 %v1430, %v1429
      %v1474 = vpack.c.b16 %v1432, %v1431
      %v1475 = vpack.c.b16 %v1434, %v1433
      %v1476 = vpack.c.b16 %v1436, %v1435
      %v1477 = vpack.c.b16 %v1438, %v1437
      %v1478 = vpack.c.b16 %v1440, %v1439
      %v1479 = vpack.c.b16 %v1442, %v1441
      %v1480 = vpack.c.b16 %v1444, %v1443
      %v1481 = vpack.c.b16 %v1446, %v1445
      %v1482 = vpack.c.b16 %v1448, %v1447
      %v1483 = vpack.c.b16 %v1450, %v1449
      %v1484 = vpack.c.b16 %v1452, %v1451
      %v1485 = vpack.c.b16 %v1454, %v1453
      %v1486 = vpack.c.b16 %v1456, %v1455
      %v1487 = vpack.c.b16 %v1458, %v1457
      %v1488 = vpack.c.b16 %v1460, %v1459
      %v1489 = vpack.c.b16 %v1462, %v1461
      %v1490 = vpack.c.b16 %v1464, %v1463
      %v1491 = vpack.c.b16 %v1466, %v1465
      %v1492 = vpack.c.b16 %v1468, %v1467
      %1517 = vmatprep.subr.bf16.mxu0 0
      %1518 = vmatpush1.bf16.msra.mxu0 %v1469
      %1519 = vmatprep.subr.bf16.mxu0 0
      %1520 = vmatpush1.bf16.msra.mxu0 %v1470
      %1521 = vmatprep.subr.bf16.mxu0 0
      %1522 = vmatpush1.bf16.msra.mxu0 %v1471
      %1523 = vmatprep.subr.bf16.mxu0 0
      %1524 = vmatpush1.bf16.msra.mxu0 %v1472
      %1525 = vmatprep.subr.bf16.mxu0 0
      %1526 = vmatpush1.bf16.msra.mxu0 %v1473
      %1527 = vmatprep.subr.bf16.mxu0 0
      %1528 = vmatpush1.bf16.msra.mxu0 %v1474
      %1529 = vmatprep.subr.bf16.mxu0 0
      %1530 = vmatpush1.bf16.msra.mxu0 %v1475
      %1531 = vmatprep.subr.bf16.mxu0 0
      %1532 = vmatpush1.bf16.msra.mxu0 %v1476
      %1533 = vmatprep.subr.bf16.mxu0 0
      %1534 = vmatpush1.bf16.msra.mxu0 %v1477
      %1535 = vmatprep.subr.bf16.mxu0 0
      %1536 = vmatpush1.bf16.msra.mxu0 %v1478
      %1537 = vmatprep.subr.bf16.mxu0 0
      %1538 = vmatpush1.bf16.msra.mxu0 %v1479
      %1539 = vmatprep.subr.bf16.mxu0 0
      %1540 = vmatpush1.bf16.msra.mxu0 %v1480
      %1541 = vmatprep.subr.bf16.mxu0 0
      %1542 = vmatpush1.bf16.msra.mxu0 %v1481
      %1543 = vmatprep.subr.bf16.mxu0 0
      %1544 = vmatpush1.bf16.msra.mxu0 %v1482
      %1545 = vmatprep.subr.bf16.mxu0 0
      %1546 = vmatpush1.bf16.msra.mxu0 %v1483
      %1547 = vmatprep.subr.bf16.mxu0 0
      %1548 = vmatpush1.bf16.msra.mxu0 %v1484
      %1549 = vmatprep.mubr.bf16.mxu0 %v497
      %1550 = vmatmul.mubr.bf16.gmra.mrb[0].mxu0 %v451
      %v1551 = vpop.f32.mrb[0].mxu0
      %v1552 = vadd.f32 %v1247, %v1551
      %v1553 = vpop.f32.mrb[0].mxu0
      %v1554 = vpop.f32.mrb[0].mxu0
      %v1555 = vadd.f32 %v1250, %v1554
      %v1556 = vpop.f32.mrb[0].mxu0
      %1557 = vmatprep.mubr.bf16.mxu0 %v509
      %1558 = vmatmul.mubr.bf16.gmra.mrb[0].mxu0 %v452
      %v1559 = vpop.f32.mrb[0].mxu0
      %v1560 = vadd.f32 %v1255, %v1559
      %v1561 = vpop.f32.mrb[0].mxu0
      %v1562 = vpop.f32.mrb[0].mxu0
      %v1563 = vadd.f32 %v1258, %v1562
      %v1564 = vpop.f32.mrb[0].mxu0
      %1565 = vmatprep.mubr.bf16.mxu0 %v521
      %1566 = vmatmul.mubr.bf16.gmra.mrb[0].mxu0 %v453
      %v1567 = vpop.f32.mrb[0].mxu0
      %v1568 = vadd.f32 %v1263, %v1567
      %v1569 = vpop.f32.mrb[0].mxu0
      %v1570 = vpop.f32.mrb[0].mxu0
      %v1571 = vadd.f32 %v1266, %v1570
      %v1572 = vpop.f32.mrb[0].mxu0
      %1573 = vmatprep.mubr.bf16.mxu0 %v533
      %1574 = vmatmul.mubr.bf16.gmra.mrb[0].mxu0 %v454
      %v1575 = vpop.f32.mrb[0].mxu0
      %v1576 = vadd.f32 %v1271, %v1575
      %v1577 = vpop.f32.mrb[0].mxu0
      %v1578 = vpop.f32.mrb[0].mxu0
      %v1579 = vadd.f32 %v1274, %v1578
      %v1580 = vpop.f32.mrb[0].mxu0
      %1581 = vmatprep.mubr.bf16.mxu0 %v545
      %1582 = vmatmul.mubr.bf16.gmra.mrb[0].mxu0 %v455
      %v1583 = vpop.f32.mrb[0].mxu0
      %v1584 = vadd.f32 %v1279, %v1583
      %v1585 = vpop.f32.mrb[0].mxu0
      %v1586 = vpop.f32.mrb[0].mxu0
      %v1587 = vadd.f32 %v1282, %v1586
      %v1588 = vpop.f32.mrb[0].mxu0
      %1589 = vmatprep.mubr.bf16.mxu0 %v557
      %1590 = vmatmul.mubr.bf16.gmra.mrb[0].mxu0 %v456
      %v1591 = vpop.f32.mrb[0].mxu0
      %v1592 = vadd.f32 %v1287, %v1591
      %v1593 = vpop.f32.mrb[0].mxu0
      %v1594 = vpop.f32.mrb[0].mxu0
      %v1595 = vadd.f32 %v1290, %v1594
      %v1596 = vpop.f32.mrb[0].mxu0
      %1597 = vmatprep.mubr.bf16.mxu0 %v569
      %1598 = vmatmul.mubr.bf16.gmra.mrb[0].mxu0 %v457
      %v1599 = vpop.f32.mrb[0].mxu0
      %v1600 = vadd.f32 %v1295, %v1599
      %v1601 = vpop.f32.mrb[0].mxu0
      %v1602 = vpop.f32.mrb[0].mxu0
      %v1603 = vadd.f32 %v1298, %v1602
      %v1604 = vpop.f32.mrb[0].mxu0
      %1605 = vmatprep.mubr.bf16.mxu0 %v581
      %1606 = vmatmul.mubr.bf16.gmra.mrb[0].mxu0 %v458
      %v1607 = vpop.f32.mrb[0].mxu0
      %v1608 = vadd.f32 %v1303, %v1607
      %v1609 = vpop.f32.mrb[0].mxu0
      %v1610 = vpop.f32.mrb[0].mxu0
      %v1611 = vadd.f32 %v1306, %v1610
      %v1612 = vpop.f32.mrb[0].mxu0
      %1613 = vmatprep.mubr.bf16.mxu0 %v593
      %1614 = vmatmul.mubr.bf16.gmra.mrb[0].mxu0 %v459
      %v1615 = vpop.f32.mrb[0].mxu0
      %v1616 = vadd.f32 %v1311, %v1615
      %v1617 = vpop.f32.mrb[0].mxu0
      %v1618 = vpop.f32.mrb[0].mxu0
      %v1619 = vadd.f32 %v1314, %v1618
      %v1620 = vpop.f32.mrb[0].mxu0
      %1621 = vmatprep.mubr.bf16.mxu0 %v605
      %1622 = vmatmul.mubr.bf16.gmra.mrb[0].mxu0 %v460
      %v1623 = vpop.f32.mrb[0].mxu0
      %v1624 = vadd.f32 %v1319, %v1623
      %v1625 = vpop.f32.mrb[0].mxu0
      %v1626 = vpop.f32.mrb[0].mxu0
      %v1627 = vadd.f32 %v1322, %v1626
      %v1628 = vpop.f32.mrb[0].mxu0
      %1629 = vmatprep.mubr.bf16.mxu0 %v617
      %1630 = vmatmul.mubr.bf16.gmra.mrb[0].mxu0 %v461
      %v1631 = vpop.f32.mrb[0].mxu0
      %v1632 = vadd.f32 %v1327, %v1631
      %v1633 = vpop.f32.mrb[0].mxu0
      %v1634 = vpop.f32.mrb[0].mxu0
      %v1635 = vadd.f32 %v1330, %v1634
      %v1636 = vpop.f32.mrb[0].mxu0
      %1637 = vmatprep.mubr.bf16.mxu0 %v629
      %1638 = vmatmul.mubr.bf16.gmra.mrb[0].mxu0 %v462
      %v1639 = vpop.f32.mrb[0].mxu0
      %v1640 = vadd.f32 %v1335, %v1639
      %v1641 = vpop.f32.mrb[0].mxu0
      %v1642 = vpop.f32.mrb[0].mxu0
      %v1643 = vadd.f32 %v1338, %v1642
      %v1644 = vpop.f32.mrb[0].mxu0
      %1645 = vmatprep.mubr.bf16.mxu0 %v641
      %1646 = vmatmul.mubr.bf16.gmra.mrb[0].mxu0 %v463
      %v1647 = vpop.f32.mrb[0].mxu0
      %v1648 = vadd.f32 %v1343, %v1647
      %v1649 = vpop.f32.mrb[0].mxu0
      %v1650 = vpop.f32.mrb[0].mxu0
      %v1651 = vadd.f32 %v1346, %v1650
      %v1652 = vpop.f32.mrb[0].mxu0
      %1653 = vmatprep.mubr.bf16.mxu0 %v653
      %1654 = vmatmul.mubr.bf16.gmra.mrb[0].mxu0 %v464
      %v1655 = vpop.f32.mrb[0].mxu0
      %v1656 = vadd.f32 %v1351, %v1655
      %v1657 = vpop.f32.mrb[0].mxu0
      %v1658 = vpop.f32.mrb[0].mxu0
      %v1659 = vadd.f32 %v1354, %v1658
      %v1660 = vpop.f32.mrb[0].mxu0
      %1661 = vmatprep.mubr.bf16.mxu0 %v665
      %1662 = vmatmul.mubr.bf16.gmra.mrb[0].mxu0 %v465
      %v1663 = vpop.f32.mrb[0].mxu0
      %v1664 = vadd.f32 %v1359, %v1663
      %v1665 = vpop.f32.mrb[0].mxu0
      %v1666 = vpop.f32.mrb[0].mxu0
      %v1667 = vadd.f32 %v1362, %v1666
      %v1668 = vpop.f32.mrb[0].mxu0
      %1669 = vmatprep.mubr.bf16.mxu0 %v677
      %1670 = vmatmul.mubr.bf16.gmra.mrb[0].mxu0 %v466
      %v1671 = vpop.f32.mrb[0].mxu0
      %v1672 = vadd.f32 %v1367, %v1671
      %v1673 = vpop.f32.mrb[0].mxu0
      %v1674 = vpop.f32.mrb[0].mxu0
      %v1675 = vadd.f32 %v1370, %v1674
      %v1676 = vpop.f32.mrb[0].mxu0
      %1677 = vdwg.mxu0
      %1678 = vmatprep.subr.bf16.mxu0 0
      %1679 = vmatpush1.bf16.msra.mxu0 %v1485
      %1680 = vmatprep.subr.bf16.mxu0 0
      %1681 = vmatpush1.bf16.msra.mxu0 %v1486
      %1682 = vmatprep.subr.bf16.mxu0 0
      %1683 = vmatpush1.bf16.msra.mxu0 %v1487
      %1684 = vmatprep.subr.bf16.mxu0 0
      %1685 = vmatpush1.bf16.msra.mxu0 %v1488
      %1686 = vmatprep.subr.bf16.mxu0 0
      %1687 = vmatpush1.bf16.msra.mxu0 %v1489
      %1688 = vmatprep.subr.bf16.mxu0 0
      %1689 = vmatpush1.bf16.msra.mxu0 %v1490
      %1690 = vmatprep.subr.bf16.mxu0 0
      %1691 = vmatpush1.bf16.msra.mxu0 %v1491
      %1692 = vmatprep.subr.bf16.mxu0 0
      %1693 = vmatpush1.bf16.msra.mxu0 %v1492
      %1694 = vmatprep.subr.bf16.mxu0 0
      %1695 = vmatpush1.bf16.msra.mxu0 0
      %1696 = vmatprep.subr.bf16.mxu0 0
      %1697 = vmatpush1.bf16.msra.mxu0 0
      %1698 = vmatprep.subr.bf16.mxu0 0
      %1699 = vmatpush1.bf16.msra.mxu0 0
      %1700 = vmatprep.subr.bf16.mxu0 0
      %1701 = vmatpush1.bf16.msra.mxu0 0
      %1702 = vmatprep.subr.bf16.mxu0 0
      %1703 = vmatpush1.bf16.msra.mxu0 0
      %1704 = vmatprep.subr.bf16.mxu0 0
      %1705 = vmatpush1.bf16.msra.mxu0 0
      %1706 = vmatprep.subr.bf16.mxu0 0
      %1707 = vmatpush1.bf16.msra.mxu0 0
      %1708 = vmatprep.subr.bf16.mxu0 0
      %1709 = vmatpush1.bf16.msra.mxu0 0
      %1710 = vmatprep.mubr.bf16.mxu0 0
      %1711 = vmatmul.mubr.bf16.gmra.mrb[0].mxu0 %v729
      %v1712 = vpop.f32.mrb[0].mxu0
      %v1713 = vadd.f32 %v1552, %v1712
      %v1714 = vpop.f32.mrb[0].mxu0
      %v1715 = vpop.f32.mrb[0].mxu0
      %v1716 = vadd.f32 %v1555, %v1715
      %v1717 = vpop.f32.mrb[0].mxu0
      %1718 = vmatprep.mubr.bf16.mxu0 0
      %1719 = vmatmul.mubr.bf16.gmra.mrb[0].mxu0 %v732
      %v1720 = vpop.f32.mrb[0].mxu0
      %v1721 = vadd.f32 %v1560, %v1720
      %v1722 = vpop.f32.mrb[0].mxu0
      %v1723 = vpop.f32.mrb[0].mxu0
      %v1724 = vadd.f32 %v1563, %v1723
      %v1725 = vpop.f32.mrb[0].mxu0
      %1726 = vmatprep.mubr.bf16.mxu0 0
      %1727 = vmatmul.mubr.bf16.gmra.mrb[0].mxu0 %v735
      %v1728 = vpop.f32.mrb[0].mxu0
      %v1729 = vadd.f32 %v1568, %v1728
      %v1730 = vpop.f32.mrb[0].mxu0
      %v1731 = vpop.f32.mrb[0].mxu0
      %v1732 = vadd.f32 %v1571, %v1731
      %v1733 = vpop.f32.mrb[0].mxu0
      %1734 = vmatprep.mubr.bf16.mxu0 0
      %1735 = vmatmul.mubr.bf16.gmra.mrb[0].mxu0 %v738
      %v1736 = vpop.f32.mrb[0].mxu0
      %v1737 = vadd.f32 %v1576, %v1736
      %v1738 = vpop.f32.mrb[0].mxu0
      %v1739 = vpop.f32.mrb[0].mxu0
      %v1740 = vadd.f32 %v1579, %v1739
      %v1741 = vpop.f32.mrb[0].mxu0
      %1742 = vmatprep.mubr.bf16.mxu0 0
      %1743 = vmatmul.mubr.bf16.gmra.mrb[0].mxu0 %v741
      %v1744 = vpop.f32.mrb[0].mxu0
      %v1745 = vadd.f32 %v1584, %v1744
      %v1746 = vpop.f32.mrb[0].mxu0
      %v1747 = vpop.f32.mrb[0].mxu0
      %v1748 = vadd.f32 %v1587, %v1747
      %v1749 = vpop.f32.mrb[0].mxu0
      %1750 = vmatprep.mubr.bf16.mxu0 0
      %1751 = vmatmul.mubr.bf16.gmra.mrb[0].mxu0 %v744
      %v1752 = vpop.f32.mrb[0].mxu0
      %v1753 = vadd.f32 %v1592, %v1752
      %v1754 = vpop.f32.mrb[0].mxu0
      %v1755 = vpop.f32.mrb[0].mxu0
      %v1756 = vadd.f32 %v1595, %v1755
      %v1757 = vpop.f32.mrb[0].mxu0
      %1758 = vmatprep.mubr.bf16.mxu0 0
      %1759 = vmatmul.mubr.bf16.gmra.mrb[0].mxu0 %v747
      %v1760 = vpop.f32.mrb[0].mxu0
      %v1761 = vadd.f32 %v1600, %v1760
      %v1762 = vpop.f32.mrb[0].mxu0
      %v1763 = vpop.f32.mrb[0].mxu0
      %v1764 = vadd.f32 %v1603, %v1763
      %v1765 = vpop.f32.mrb[0].mxu0
      %1766 = vmatprep.mubr.bf16.mxu0 0
      %1767 = vmatmul.mubr.bf16.gmra.mrb[0].mxu0 %v750
      %v1768 = vpop.f32.mrb[0].mxu0
      %v1769 = vadd.f32 %v1608, %v1768
      %v1770 = vpop.f32.mrb[0].mxu0
      %v1771 = vpop.f32.mrb[0].mxu0
      %v1772 = vadd.f32 %v1611, %v1771
      %v1773 = vpop.f32.mrb[0].mxu0
      %1774 = vmatprep.mubr.bf16.mxu0 0
      %1775 = vmatmul.mubr.bf16.gmra.mrb[0].mxu0 %v753
      %v1776 = vpop.f32.mrb[0].mxu0
      %v1777 = vadd.f32 %v1616, %v1776
      %v1778 = vpop.f32.mrb[0].mxu0
      %v1779 = vpop.f32.mrb[0].mxu0
      %v1780 = vadd.f32 %v1619, %v1779
      %v1781 = vpop.f32.mrb[0].mxu0
      %1782 = vmatprep.mubr.bf16.mxu0 0
      %1783 = vmatmul.mubr.bf16.gmra.mrb[0].mxu0 %v756
      %v1784 = vpop.f32.mrb[0].mxu0
      %v1785 = vadd.f32 %v1624, %v1784
      %v1786 = vpop.f32.mrb[0].mxu0
      %v1787 = vpop.f32.mrb[0].mxu0
      %v1788 = vadd.f32 %v1627, %v1787
      %v1789 = vpop.f32.mrb[0].mxu0
      %1790 = vmatprep.mubr.bf16.mxu0 0
      %1791 = vmatmul.mubr.bf16.gmra.mrb[0].mxu0 %v759
      %v1792 = vpop.f32.mrb[0].mxu0
      %v1793 = vadd.f32 %v1632, %v1792
      %v1794 = vpop.f32.mrb[0].mxu0
      %v1795 = vpop.f32.mrb[0].mxu0
      %v1796 = vadd.f32 %v1635, %v1795
      %v1797 = vpop.f32.mrb[0].mxu0
      %1798 = vmatprep.mubr.bf16.mxu0 0
      %1799 = vmatmul.mubr.bf16.gmra.mrb[0].mxu0 %v762
      %v1800 = vpop.f32.mrb[0].mxu0
      %v1801 = vadd.f32 %v1640, %v1800
      %v1802 = vpop.f32.mrb[0].mxu0
      %v1803 = vpop.f32.mrb[0].mxu0
      %v1804 = vadd.f32 %v1643, %v1803
      %v1805 = vpop.f32.mrb[0].mxu0
      %1806 = vmatprep.mubr.bf16.mxu0 0
      %1807 = vmatmul.mubr.bf16.gmra.mrb[0].mxu0 %v765
      %v1808 = vpop.f32.mrb[0].mxu0
      %v1809 = vadd.f32 %v1648, %v1808
      %v1810 = vpop.f32.mrb[0].mxu0
      %v1811 = vpop.f32.mrb[0].mxu0
      %v1812 = vadd.f32 %v1651, %v1811
      %v1813 = vpop.f32.mrb[0].mxu0
      %1814 = vmatprep.mubr.bf16.mxu0 0
      %1815 = vmatmul.mubr.bf16.gmra.mrb[0].mxu0 %v768
      %v1816 = vpop.f32.mrb[0].mxu0
      %v1817 = vadd.f32 %v1656, %v1816
      %v1818 = vpop.f32.mrb[0].mxu0
      %v1819 = vpop.f32.mrb[0].mxu0
      %v1820 = vadd.f32 %v1659, %v1819
      %v1821 = vpop.f32.mrb[0].mxu0
      %1822 = vmatprep.mubr.bf16.mxu0 0
      %1823 = vmatmul.mubr.bf16.gmra.mrb[0].mxu0 %v771
      %v1824 = vpop.f32.mrb[0].mxu0
      %v1825 = vadd.f32 %v1664, %v1824
      %v1826 = vpop.f32.mrb[0].mxu0
      %v1827 = vpop.f32.mrb[0].mxu0
      %v1828 = vadd.f32 %v1667, %v1827
      %v1829 = vpop.f32.mrb[0].mxu0
      %1830 = vmatprep.mubr.bf16.mxu0 0
      %1831 = vmatmul.mubr.bf16.gmra.mrb[0].mxu0 %v774
      %v1832 = vpop.f32.mrb[0].mxu0
      %v1833 = vadd.f32 %v1672, %v1832
      %v1834 = vpop.f32.mrb[0].mxu0
      %v1835 = vpop.f32.mrb[0].mxu0
      %v1836 = vadd.f32 %v1675, %v1835
      %v1837 = vpop.f32.mrb[0].mxu0
      %1838 = vdwg.mxu0
      %s1839 = scalar_lea.vmem %s1, 384
      %v1840 = vld [vmem:[%s1839] sm:$0xf]
      %v1841 = vld [vmem:[%s1839 + $0x4] sm:$0xf]
      %v1842 = vld [vmem:[%s1839 + $0x8] sm:$0xf]
      %v1843 = vld [vmem:[%s1839 + $0xc] sm:$0xf]
      %v1844 = vld [vmem:[%s1839 + $0x10] sm:$0xf]
      %v1845 = vld [vmem:[%s1839 + $0x14] sm:$0xf]
      %v1846 = vld [vmem:[%s1839 + $0x18] sm:$0xf]
      %v1847 = vld [vmem:[%s1839 + $0x1c] sm:$0xf]
      %v1848 = vld [vmem:[%s1839 + $0x20] sm:$0xf]
      %v1849 = vld [vmem:[%s1839 + $0x24] sm:$0xf]
      %v1850 = vld [vmem:[%s1839 + $0x28] sm:$0xf]
      %v1851 = vld [vmem:[%s1839 + $0x2c] sm:$0xf]
      %v1852 = vld [vmem:[%s1839 + $0x30] sm:$0xf]
      %v1853 = vld [vmem:[%s1839 + $0x34] sm:$0xf]
      %v1854 = vld [vmem:[%s1839 + $0x38] sm:$0xf]
      %v1855 = vld [vmem:[%s1839 + $0x3c] sm:$0xf]
      %v1856 = vld [vmem:[%s1839 + $0x40] sm:$0xf]
      %v1857 = vld [vmem:[%s1839 + $0x44] sm:$0xf]
      %v1858 = vld [vmem:[%s1839 + $0x48] sm:$0xf]
      %v1859 = vld [vmem:[%s1839 + $0x4c] sm:$0xf]
      %v1860 = vld [vmem:[%s1839 + $0x50] sm:$0xf]
      %v1861 = vld [vmem:[%s1839 + $0x54] sm:$0xf]
      %v1862 = vld [vmem:[%s1839 + $0x58] sm:$0xf]
      %v1863 = vld [vmem:[%s1839 + $0x5c] sm:$0xf]
      %v1864 = vld [vmem:[%s1839 + $0x60] sm:$0xf]
      %v1865 = vld [vmem:[%s1839 + $0x64] sm:$0xf]
      %v1866 = vld [vmem:[%s1839 + $0x68] sm:$0xf]
      %v1867 = vld [vmem:[%s1839 + $0x6c] sm:$0xf]
      %v1868 = vld [vmem:[%s1839 + $0x70] sm:$0xf]
      %v1869 = vld [vmem:[%s1839 + $0x74] sm:$0xf]
      %v1870 = vld [vmem:[%s1839 + $0x78] sm:$0xf]
      %v1871 = vld [vmem:[%s1839 + $0x7c] sm:$0xf]
      %v1872 = vld [vmem:[%s1839 + $0x80] sm:$0xf]
      %v1873 = vld [vmem:[%s1839 + $0x84] sm:$0xf]
      %v1874 = vld [vmem:[%s1839 + $0x88] sm:$0xf]
      %v1875 = vld [vmem:[%s1839 + $0x8c] sm:$0xf]
      %v1876 = vld [vmem:[%s1839 + $0x90] sm:$0xf]
      %v1877 = vld [vmem:[%s1839 + $0x94] sm:$0xf]
      %v1878 = vld [vmem:[%s1839 + $0x98] sm:$0xf]
      %v1879 = vld [vmem:[%s1839 + $0x9c] sm:$0xf]
      %v1880 = vld [vmem:[%s1839 + $0xa0] sm:$0xf]
      %v1881 = vld [vmem:[%s1839 + $0xa4] sm:$0xf]
      %v1882 = vld [vmem:[%s1839 + $0xa8] sm:$0xf]
      %v1883 = vld [vmem:[%s1839 + $0xac] sm:$0xf]
      %v1884 = vld [vmem:[%s1839 + $0xb0] sm:$0xf]
      %v1885 = vld [vmem:[%s1839 + $0xb4] sm:$0xf]
      %v1886 = vld [vmem:[%s1839 + $0xb8] sm:$0xf]
      %v1887 = vld [vmem:[%s1839 + $0xbc] sm:$0xf]
      %v1936 = vunpack.c.l.b16 %v1840
      %v1937 = vunpack.c.l.b16 %v1841
      %v1938 = vunpack.c.l.b16 %v1842
      %v1939 = vunpack.c.l.b16 %v1843
      %v1940 = vunpack.c.l.b16 %v1844
      %v1941 = vunpack.c.l.b16 %v1845
      %v1942 = vunpack.c.l.b16 %v1846
      %v1943 = vunpack.c.l.b16 %v1847
      %v1944 = vunpack.c.l.b16 %v1848
      %v1945 = vunpack.c.l.b16 %v1849
      %v1946 = vunpack.c.l.b16 %v1850
      %v1947 = vunpack.c.l.b16 %v1851
      %v1948 = vunpack.c.l.b16 %v1852
      %v1949 = vunpack.c.l.b16 %v1853
      %v1950 = vunpack.c.l.b16 %v1854
      %v1951 = vunpack.c.l.b16 %v1855
      %v1952 = vunpack.c.l.b16 %v1856
      %v1953 = vunpack.c.l.b16 %v1857
      %v1954 = vunpack.c.l.b16 %v1858
      %v1955 = vunpack.c.l.b16 %v1859
      %v1956 = vunpack.c.l.b16 %v1860
      %v1957 = vunpack.c.l.b16 %v1861
      %v1958 = vunpack.c.l.b16 %v1862
      %v1959 = vunpack.c.l.b16 %v1863
      %v1960 = vunpack.c.l.b16 %v1864
      %v1961 = vunpack.c.l.b16 %v1865
      %v1962 = vunpack.c.l.b16 %v1866
      %v1963 = vunpack.c.l.b16 %v1867
      %v1964 = vunpack.c.l.b16 %v1868
      %v1965 = vunpack.c.l.b16 %v1869
      %v1966 = vunpack.c.l.b16 %v1870
      %v1967 = vunpack.c.l.b16 %v1871
      %v1968 = vunpack.c.l.b16 %v1872
      %v1969 = vunpack.c.l.b16 %v1873
      %v1970 = vunpack.c.l.b16 %v1874
      %v1971 = vunpack.c.l.b16 %v1875
      %v1972 = vunpack.c.l.b16 %v1876
      %v1973 = vunpack.c.l.b16 %v1877
      %v1974 = vunpack.c.l.b16 %v1878
      %v1975 = vunpack.c.l.b16 %v1879
      %v1976 = vunpack.c.l.b16 %v1880
      %v1977 = vunpack.c.l.b16 %v1881
      %v1978 = vunpack.c.l.b16 %v1882
      %v1979 = vunpack.c.l.b16 %v1883
      %v1980 = vunpack.c.l.b16 %v1884
      %v1981 = vunpack.c.l.b16 %v1885
      %v1982 = vunpack.c.l.b16 %v1886
      %v1983 = vunpack.c.l.b16 %v1887
      %v1984 = vpack.c.b16 %v1937, %v1936
      %v1985 = vpack.c.b16 %v1939, %v1938
      %v1986 = vpack.c.b16 %v1941, %v1940
      %v1987 = vpack.c.b16 %v1943, %v1942
      %v1988 = vpack.c.b16 %v1945, %v1944
      %v1989 = vpack.c.b16 %v1947, %v1946
      %v1990 = vpack.c.b16 %v1949, %v1948
      %v1991 = vpack.c.b16 %v1951, %v1950
      %v1992 = vpack.c.b16 %v1953, %v1952
      %v1993 = vpack.c.b16 %v1955, %v1954
      %v1994 = vpack.c.b16 %v1957, %v1956
      %v1995 = vpack.c.b16 %v1959, %v1958
      %v1996 = vpack.c.b16 %v1961, %v1960
      %v1997 = vpack.c.b16 %v1963, %v1962
      %v1998 = vpack.c.b16 %v1965, %v1964
      %v1999 = vpack.c.b16 %v1967, %v1966
      %v2000 = vpack.c.b16 %v1969, %v1968
      %v2001 = vpack.c.b16 %v1971, %v1970
      %v2002 = vpack.c.b16 %v1973, %v1972
      %v2003 = vpack.c.b16 %v1975, %v1974
      %v2004 = vpack.c.b16 %v1977, %v1976
      %v2005 = vpack.c.b16 %v1979, %v1978
      %v2006 = vpack.c.b16 %v1981, %v1980
      %v2007 = vpack.c.b16 %v1983, %v1982
      %2032 = vmatprep.subr.bf16.mxu0 0
      %2033 = vmatpush1.bf16.msra.mxu0 %v1984
      %2034 = vmatprep.subr.bf16.mxu0 0
      %2035 = vmatpush1.bf16.msra.mxu0 %v1985
      %2036 = vmatprep.subr.bf16.mxu0 0
      %2037 = vmatpush1.bf16.msra.mxu0 %v1986
      %2038 = vmatprep.subr.bf16.mxu0 0
      %2039 = vmatpush1.bf16.msra.mxu0 %v1987
      %2040 = vmatprep.subr.bf16.mxu0 0
      %2041 = vmatpush1.bf16.msra.mxu0 %v1988
      %2042 = vmatprep.subr.bf16.mxu0 0
      %2043 = vmatpush1.bf16.msra.mxu0 %v1989
      %2044 = vmatprep.subr.bf16.mxu0 0
      %2045 = vmatpush1.bf16.msra.mxu0 %v1990
      %2046 = vmatprep.subr.bf16.mxu0 0
      %2047 = vmatpush1.bf16.msra.mxu0 %v1991
      %2048 = vmatprep.subr.bf16.mxu0 0
      %2049 = vmatpush1.bf16.msra.mxu0 %v1992
      %2050 = vmatprep.subr.bf16.mxu0 0
      %2051 = vmatpush1.bf16.msra.mxu0 %v1993
      %2052 = vmatprep.subr.bf16.mxu0 0
      %2053 = vmatpush1.bf16.msra.mxu0 %v1994
      %2054 = vmatprep.subr.bf16.mxu0 0
      %2055 = vmatpush1.bf16.msra.mxu0 %v1995
      %2056 = vmatprep.subr.bf16.mxu0 0
      %2057 = vmatpush1.bf16.msra.mxu0 %v1996
      %2058 = vmatprep.subr.bf16.mxu0 0
      %2059 = vmatpush1.bf16.msra.mxu0 %v1997
      %2060 = vmatprep.subr.bf16.mxu0 0
      %2061 = vmatpush1.bf16.msra.mxu0 %v1998
      %2062 = vmatprep.subr.bf16.mxu0 0
      %2063 = vmatpush1.bf16.msra.mxu0 %v1999
      %2064 = vmatprep.mubr.bf16.mxu0 %v521
      %2065 = vmatmul.mubr.bf16.gmra.mrb[0].mxu0 %v453
      %v2066 = vpop.f32.mrb[0].mxu0
      %v2067 = vadd.f32 0.0, %v2066
      %v2068 = vpop.f32.mrb[0].mxu0
      %v2069 = vpop.f32.mrb[0].mxu0
      %v2070 = vadd.f32 0.0, %v2069
      %v2071 = vpop.f32.mrb[0].mxu0
      %2072 = vmatprep.mubr.bf16.mxu0 %v533
      %2073 = vmatmul.mubr.bf16.gmra.mrb[0].mxu0 %v454
      %v2074 = vpop.f32.mrb[0].mxu0
      %v2075 = vadd.f32 0.0, %v2074
      %v2076 = vpop.f32.mrb[0].mxu0
      %v2077 = vpop.f32.mrb[0].mxu0
      %v2078 = vadd.f32 0.0, %v2077
      %v2079 = vpop.f32.mrb[0].mxu0
      %2080 = vmatprep.mubr.bf16.mxu0 %v545
      %2081 = vmatmul.mubr.bf16.gmra.mrb[0].mxu0 %v455
      %v2082 = vpop.f32.mrb[0].mxu0
      %v2083 = vadd.f32 0.0, %v2082
      %v2084 = vpop.f32.mrb[0].mxu0
      %v2085 = vpop.f32.mrb[0].mxu0
      %v2086 = vadd.f32 0.0, %v2085
      %v2087 = vpop.f32.mrb[0].mxu0
      %2088 = vmatprep.mubr.bf16.mxu0 %v557
      %2089 = vmatmul.mubr.bf16.gmra.mrb[0].mxu0 %v456
      %v2090 = vpop.f32.mrb[0].mxu0
      %v2091 = vadd.f32 0.0, %v2090
      %v2092 = vpop.f32.mrb[0].mxu0
      %v2093 = vpop.f32.mrb[0].mxu0
      %v2094 = vadd.f32 0.0, %v2093
      %v2095 = vpop.f32.mrb[0].mxu0
      %2096 = vmatprep.mubr.bf16.mxu0 %v569
      %2097 = vmatmul.mubr.bf16.gmra.mrb[0].mxu0 %v457
      %v2098 = vpop.f32.mrb[0].mxu0
      %v2099 = vadd.f32 0.0, %v2098
      %v2100 = vpop.f32.mrb[0].mxu0
      %v2101 = vpop.f32.mrb[0].mxu0
      %v2102 = vadd.f32 0.0, %v2101
      %v2103 = vpop.f32.mrb[0].mxu0
      %2104 = vmatprep.mubr.bf16.mxu0 %v581
      %2105 = vmatmul.mubr.bf16.gmra.mrb[0].mxu0 %v458
      %v2106 = vpop.f32.mrb[0].mxu0
      %v2107 = vadd.f32 0.0, %v2106
      %v2108 = vpop.f32.mrb[0].mxu0
      %v2109 = vpop.f32.mrb[0].mxu0
      %v2110 = vadd.f32 0.0, %v2109
      %v2111 = vpop.f32.mrb[0].mxu0
      %2112 = vmatprep.mubr.bf16.mxu0 %v593
      %2113 = vmatmul.mubr.bf16.gmra.mrb[0].mxu0 %v459
      %v2114 = vpop.f32.mrb[0].mxu0
      %v2115 = vadd.f32 0.0, %v2114
      %v2116 = vpop.f32.mrb[0].mxu0
      %v2117 = vpop.f32.mrb[0].mxu0
      %v2118 = vadd.f32 0.0, %v2117
      %v2119 = vpop.f32.mrb[0].mxu0
      %2120 = vmatprep.mubr.bf16.mxu0 %v605
      %2121 = vmatmul.mubr.bf16.gmra.mrb[0].mxu0 %v460
      %v2122 = vpop.f32.mrb[0].mxu0
      %v2123 = vadd.f32 0.0, %v2122
      %v2124 = vpop.f32.mrb[0].mxu0
      %v2125 = vpop.f32.mrb[0].mxu0
      %v2126 = vadd.f32 0.0, %v2125
      %v2127 = vpop.f32.mrb[0].mxu0
      %2128 = vmatprep.mubr.bf16.mxu0 %v617
      %2129 = vmatmul.mubr.bf16.gmra.mrb[0].mxu0 %v461
      %v2130 = vpop.f32.mrb[0].mxu0
      %v2131 = vadd.f32 0.0, %v2130
      %v2132 = vpop.f32.mrb[0].mxu0
      %v2133 = vpop.f32.mrb[0].mxu0
      %v2134 = vadd.f32 0.0, %v2133
      %v2135 = vpop.f32.mrb[0].mxu0
      %2136 = vmatprep.mubr.bf16.mxu0 %v629
      %2137 = vmatmul.mubr.bf16.gmra.mrb[0].mxu0 %v462
      %v2138 = vpop.f32.mrb[0].mxu0
      %v2139 = vadd.f32 0.0, %v2138
      %v2140 = vpop.f32.mrb[0].mxu0
      %v2141 = vpop.f32.mrb[0].mxu0
      %v2142 = vadd.f32 0.0, %v2141
      %v2143 = vpop.f32.mrb[0].mxu0
      %2144 = vmatprep.mubr.bf16.mxu0 %v641
      %2145 = vmatmul.mubr.bf16.gmra.mrb[0].mxu0 %v463
      %v2146 = vpop.f32.mrb[0].mxu0
      %v2147 = vadd.f32 0.0, %v2146
      %v2148 = vpop.f32.mrb[0].mxu0
      %v2149 = vpop.f32.mrb[0].mxu0
      %v2150 = vadd.f32 0.0, %v2149
      %v2151 = vpop.f32.mrb[0].mxu0
      %2152 = vmatprep.mubr.bf16.mxu0 %v653
      %2153 = vmatmul.mubr.bf16.gmra.mrb[0].mxu0 %v464
      %v2154 = vpop.f32.mrb[0].mxu0
      %v2155 = vadd.f32 0.0, %v2154
      %v2156 = vpop.f32.mrb[0].mxu0
      %v2157 = vpop.f32.mrb[0].mxu0
      %v2158 = vadd.f32 0.0, %v2157
      %v2159 = vpop.f32.mrb[0].mxu0
      %2160 = vmatprep.mubr.bf16.mxu0 %v665
      %2161 = vmatmul.mubr.bf16.gmra.mrb[0].mxu0 %v465
      %v2162 = vpop.f32.mrb[0].mxu0
      %v2163 = vadd.f32 0.0, %v2162
      %v2164 = vpop.f32.mrb[0].mxu0
      %v2165 = vpop.f32.mrb[0].mxu0
      %v2166 = vadd.f32 0.0, %v2165
      %v2167 = vpop.f32.mrb[0].mxu0
      %2168 = vmatprep.mubr.bf16.mxu0 %v677
      %2169 = vmatmul.mubr.bf16.gmra.mrb[0].mxu0 %v466
      %v2170 = vpop.f32.mrb[0].mxu0
      %v2171 = vadd.f32 0.0, %v2170
      %v2172 = vpop.f32.mrb[0].mxu0
      %v2173 = vpop.f32.mrb[0].mxu0
      %v2174 = vadd.f32 0.0, %v2173
      %v2175 = vpop.f32.mrb[0].mxu0
      %2176 = vmatprep.mubr.bf16.mxu0 %v850
      %2177 = vmatmul.mubr.bf16.gmra.mrb[0].mxu0 %v467
      %v2178 = vpop.f32.mrb[0].mxu0
      %v2179 = vadd.f32 0.0, %v2178
      %v2180 = vpop.f32.mrb[0].mxu0
      %v2181 = vpop.f32.mrb[0].mxu0
      %v2182 = vadd.f32 0.0, %v2181
      %v2183 = vpop.f32.mrb[0].mxu0
      %2184 = vmatprep.mubr.bf16.mxu0 %v497
      %2185 = vmatmul.mubr.bf16.gmra.mrb[0].mxu0 %v451
      %v2186 = vpop.f32.mrb[0].mxu0
      %v2187 = vadd.f32 0.0, %v2186
      %v2188 = vpop.f32.mrb[0].mxu0
      %v2189 = vpop.f32.mrb[0].mxu0
      %v2190 = vadd.f32 0.0, %v2189
      %v2191 = vpop.f32.mrb[0].mxu0
      %2192 = vdwg.mxu0
      %2193 = vmatprep.subr.bf16.mxu0 0
      %2194 = vmatpush1.bf16.msra.mxu0 %v2000
      %2195 = vmatprep.subr.bf16.mxu0 0
      %2196 = vmatpush1.bf16.msra.mxu0 %v2001
      %2197 = vmatprep.subr.bf16.mxu0 0
      %2198 = vmatpush1.bf16.msra.mxu0 %v2002
      %2199 = vmatprep.subr.bf16.mxu0 0
      %2200 = vmatpush1.bf16.msra.mxu0 %v2003
      %2201 = vmatprep.subr.bf16.mxu0 0
      %2202 = vmatpush1.bf16.msra.mxu0 %v2004
      %2203 = vmatprep.subr.bf16.mxu0 0
      %2204 = vmatpush1.bf16.msra.mxu0 %v2005
      %2205 = vmatprep.subr.bf16.mxu0 0
      %2206 = vmatpush1.bf16.msra.mxu0 %v2006
      %2207 = vmatprep.subr.bf16.mxu0 0
      %2208 = vmatpush1.bf16.msra.mxu0 %v2007
      %2209 = vmatprep.subr.bf16.mxu0 0
      %2210 = vmatpush1.bf16.msra.mxu0 0
      %2211 = vmatprep.subr.bf16.mxu0 0
      %2212 = vmatpush1.bf16.msra.mxu0 0
      %2213 = vmatprep.subr.bf16.mxu0 0
      %2214 = vmatpush1.bf16.msra.mxu0 0
      %2215 = vmatprep.subr.bf16.mxu0 0
      %2216 = vmatpush1.bf16.msra.mxu0 0
      %2217 = vmatprep.subr.bf16.mxu0 0
      %2218 = vmatpush1.bf16.msra.mxu0 0
      %2219 = vmatprep.subr.bf16.mxu0 0
      %2220 = vmatpush1.bf16.msra.mxu0 0
      %2221 = vmatprep.subr.bf16.mxu0 0
      %2222 = vmatpush1.bf16.msra.mxu0 0
      %2223 = vmatprep.subr.bf16.mxu0 0
      %2224 = vmatpush1.bf16.msra.mxu0 0
      %2225 = vmatprep.mubr.bf16.mxu0 0
      %2226 = vmatmul.mubr.bf16.gmra.mrb[0].mxu0 %v735
      %v2227 = vpop.f32.mrb[0].mxu0
      %v2228 = vadd.f32 %v2067, %v2227
      %v2229 = vpop.f32.mrb[0].mxu0
      %v2230 = vpop.f32.mrb[0].mxu0
      %v2231 = vadd.f32 %v2070, %v2230
      %v2232 = vpop.f32.mrb[0].mxu0
      %2233 = vmatprep.mubr.bf16.mxu0 0
      %2234 = vmatmul.mubr.bf16.gmra.mrb[0].mxu0 %v738
      %v2235 = vpop.f32.mrb[0].mxu0
      %v2236 = vadd.f32 %v2075, %v2235
      %v2237 = vpop.f32.mrb[0].mxu0
      %v2238 = vpop.f32.mrb[0].mxu0
      %v2239 = vadd.f32 %v2078, %v2238
      %v2240 = vpop.f32.mrb[0].mxu0
      %2241 = vmatprep.mubr.bf16.mxu0 0
      %2242 = vmatmul.mubr.bf16.gmra.mrb[0].mxu0 %v741
      %v2243 = vpop.f32.mrb[0].mxu0
      %v2244 = vadd.f32 %v2083, %v2243
      %v2245 = vpop.f32.mrb[0].mxu0
      %v2246 = vpop.f32.mrb[0].mxu0
      %v2247 = vadd.f32 %v2086, %v2246
      %v2248 = vpop.f32.mrb[0].mxu0
      %2249 = vmatprep.mubr.bf16.mxu0 0
      %2250 = vmatmul.mubr.bf16.gmra.mrb[0].mxu0 %v744
      %v2251 = vpop.f32.mrb[0].mxu0
      %v2252 = vadd.f32 %v2091, %v2251
      %v2253 = vpop.f32.mrb[0].mxu0
      %v2254 = vpop.f32.mrb[0].mxu0
      %v2255 = vadd.f32 %v2094, %v2254
      %v2256 = vpop.f32.mrb[0].mxu0
      %2257 = vmatprep.mubr.bf16.mxu0 0
      %2258 = vmatmul.mubr.bf16.gmra.mrb[0].mxu0 %v747
      %v2259 = vpop.f32.mrb[0].mxu0
      %v2260 = vadd.f32 %v2099, %v2259
      %v2261 = vpop.f32.mrb[0].mxu0
      %v2262 = vpop.f32.mrb[0].mxu0
      %v2263 = vadd.f32 %v2102, %v2262
      %v2264 = vpop.f32.mrb[0].mxu0
      %2265 = vmatprep.mubr.bf16.mxu0 0
      %2266 = vmatmul.mubr.bf16.gmra.mrb[0].mxu0 %v750
      %v2267 = vpop.f32.mrb[0].mxu0
      %v2268 = vadd.f32 %v2107, %v2267
      %v2269 = vpop.f32.mrb[0].mxu0
      %v2270 = vpop.f32.mrb[0].mxu0
      %v2271 = vadd.f32 %v2110, %v2270
      %v2272 = vpop.f32.mrb[0].mxu0
      %2273 = vmatprep.mubr.bf16.mxu0 0
      %2274 = vmatmul.mubr.bf16.gmra.mrb[0].mxu0 %v753
      %v2275 = vpop.f32.mrb[0].mxu0
      %v2276 = vadd.f32 %v2115, %v2275
      %v2277 = vpop.f32.mrb[0].mxu0
      %v2278 = vpop.f32.mrb[0].mxu0
      %v2279 = vadd.f32 %v2118, %v2278
      %v2280 = vpop.f32.mrb[0].mxu0
      %2281 = vmatprep.mubr.bf16.mxu0 0
      %2282 = vmatmul.mubr.bf16.gmra.mrb[0].mxu0 %v756
      %v2283 = vpop.f32.mrb[0].mxu0
      %v2284 = vadd.f32 %v2123, %v2283
      %v2285 = vpop.f32.mrb[0].mxu0
      %v2286 = vpop.f32.mrb[0].mxu0
      %v2287 = vadd.f32 %v2126, %v2286
      %v2288 = vpop.f32.mrb[0].mxu0
      %2289 = vmatprep.mubr.bf16.mxu0 0
      %2290 = vmatmul.mubr.bf16.gmra.mrb[0].mxu0 %v759
      %v2291 = vpop.f32.mrb[0].mxu0
      %v2292 = vadd.f32 %v2131, %v2291
      %v2293 = vpop.f32.mrb[0].mxu0
      %v2294 = vpop.f32.mrb[0].mxu0
      %v2295 = vadd.f32 %v2134, %v2294
      %v2296 = vpop.f32.mrb[0].mxu0
      %2297 = vmatprep.mubr.bf16.mxu0 0
      %2298 = vmatmul.mubr.bf16.gmra.mrb[0].mxu0 %v762
      %v2299 = vpop.f32.mrb[0].mxu0
      %v2300 = vadd.f32 %v2139, %v2299
      %v2301 = vpop.f32.mrb[0].mxu0
      %v2302 = vpop.f32.mrb[0].mxu0
      %v2303 = vadd.f32 %v2142, %v2302
      %v2304 = vpop.f32.mrb[0].mxu0
      %2305 = vmatprep.mubr.bf16.mxu0 0
      %2306 = vmatmul.mubr.bf16.gmra.mrb[0].mxu0 %v765
      %v2307 = vpop.f32.mrb[0].mxu0
      %v2308 = vadd.f32 %v2147, %v2307
      %v2309 = vpop.f32.mrb[0].mxu0
      %v2310 = vpop.f32.mrb[0].mxu0
      %v2311 = vadd.f32 %v2150, %v2310
      %v2312 = vpop.f32.mrb[0].mxu0
      %2313 = vmatprep.mubr.bf16.mxu0 0
      %2314 = vmatmul.mubr.bf16.gmra.mrb[0].mxu0 %v768
      %v2315 = vpop.f32.mrb[0].mxu0
      %v2316 = vadd.f32 %v2155, %v2315
      %v2317 = vpop.f32.mrb[0].mxu0
      %v2318 = vpop.f32.mrb[0].mxu0
      %v2319 = vadd.f32 %v2158, %v2318
      %v2320 = vpop.f32.mrb[0].mxu0
      %2321 = vmatprep.mubr.bf16.mxu0 0
      %2322 = vmatmul.mubr.bf16.gmra.mrb[0].mxu0 %v771
      %v2323 = vpop.f32.mrb[0].mxu0
      %v2324 = vadd.f32 %v2163, %v2323
      %v2325 = vpop.f32.mrb[0].mxu0
      %v2326 = vpop.f32.mrb[0].mxu0
      %v2327 = vadd.f32 %v2166, %v2326
      %v2328 = vpop.f32.mrb[0].mxu0
      %2329 = vmatprep.mubr.bf16.mxu0 0
      %2330 = vmatmul.mubr.bf16.gmra.mrb[0].mxu0 %v774
      %v2331 = vpop.f32.mrb[0].mxu0
      %v2332 = vadd.f32 %v2171, %v2331
      %v2333 = vpop.f32.mrb[0].mxu0
      %v2334 = vpop.f32.mrb[0].mxu0
      %v2335 = vadd.f32 %v2174, %v2334
      %v2336 = vpop.f32.mrb[0].mxu0
      %2337 = vmatprep.mubr.bf16.mxu0 0
      %2338 = vmatmul.mubr.bf16.gmra.mrb[0].mxu0 %v856
      %v2339 = vpop.f32.mrb[0].mxu0
      %v2340 = vadd.f32 %v2179, %v2339
      %v2341 = vpop.f32.mrb[0].mxu0
      %v2342 = vpop.f32.mrb[0].mxu0
      %v2343 = vadd.f32 %v2182, %v2342
      %v2344 = vpop.f32.mrb[0].mxu0
      %2345 = vmatprep.mubr.bf16.mxu0 0
      %2346 = vmatmul.mubr.bf16.gmra.mrb[0].mxu0 %v729
      %v2347 = vpop.f32.mrb[0].mxu0
      %v2348 = vadd.f32 %v2187, %v2347
      %v2349 = vpop.f32.mrb[0].mxu0
      %v2350 = vpop.f32.mrb[0].mxu0
      %v2351 = vadd.f32 %v2190, %v2350
      %v2352 = vpop.f32.mrb[0].mxu0
      %2353 = vdwg.mxu0
      %v2354 = vadd.f32 %v1713, %v2228
      %v2355 = vadd.f32 %v1716, %v2231
      %v2356 = vadd.f32 %v1721, %v2236
      %v2357 = vadd.f32 %v1724, %v2239
      %v2358 = vadd.f32 %v1729, %v2244
      %v2359 = vadd.f32 %v1732, %v2247
      %v2360 = vadd.f32 %v1737, %v2252
      %v2361 = vadd.f32 %v1740, %v2255
      %v2362 = vadd.f32 %v1745, %v2260
      %v2363 = vadd.f32 %v1748, %v2263
      %v2364 = vadd.f32 %v1753, %v2268
      %v2365 = vadd.f32 %v1756, %v2271
      %v2366 = vadd.f32 %v1761, %v2276
      %v2367 = vadd.f32 %v1764, %v2279
      %v2368 = vadd.f32 %v1769, %v2284
      %v2369 = vadd.f32 %v1772, %v2287
      %v2370 = vadd.f32 %v1777, %v2292
      %v2371 = vadd.f32 %v1780, %v2295
      %v2372 = vadd.f32 %v1785, %v2300
      %v2373 = vadd.f32 %v1788, %v2303
      %v2374 = vadd.f32 %v1793, %v2308
      %v2375 = vadd.f32 %v1796, %v2311
      %v2376 = vadd.f32 %v1801, %v2316
      %v2377 = vadd.f32 %v1804, %v2319
      %v2378 = vadd.f32 %v1809, %v2324
      %v2379 = vadd.f32 %v1812, %v2327
      %v2380 = vadd.f32 %v1817, %v2332
      %v2381 = vadd.f32 %v1820, %v2335
      %v2382 = vadd.f32 %v1825, %v2340
      %v2383 = vadd.f32 %v1828, %v2343
      %v2384 = vadd.f32 %v1833, %v2348
      %v2385 = vadd.f32 %v1836, %v2351
      %v2386 = vpack.c.bf16 %v2355, %v2354
      %v2387 = vpack.c.bf16 %v2357, %v2356
      %v2388 = vpack.c.bf16 %v2359, %v2358
      %v2389 = vpack.c.bf16 %v2361, %v2360
      %v2390 = vpack.c.bf16 %v2363, %v2362
      %v2391 = vpack.c.bf16 %v2365, %v2364
      %v2392 = vpack.c.bf16 %v2367, %v2366
      %v2393 = vpack.c.bf16 %v2369, %v2368
      %v2394 = vpack.c.bf16 %v2371, %v2370
      %v2395 = vpack.c.bf16 %v2373, %v2372
      %v2396 = vpack.c.bf16 %v2375, %v2374
      %v2397 = vpack.c.bf16 %v2377, %v2376
      %v2398 = vpack.c.bf16 %v2379, %v2378
      %v2399 = vpack.c.bf16 %v2381, %v2380
      %v2400 = vpack.c.bf16 %v2383, %v2382
      %v2401 = vpack.c.bf16 %v2385, %v2384
      %v2418 = vunpack.c.l.b16 %v2386
      %v2419 = vunpack.c.h.b16 %v2386
      %v2420 = vunpack.c.l.b16 %v2387
      %v2421 = vunpack.c.h.b16 %v2387
      %v2422 = vunpack.c.l.b16 %v2388
      %v2423 = vunpack.c.h.b16 %v2388
      %v2424 = vunpack.c.l.b16 %v2389
      %v2425 = vunpack.c.h.b16 %v2389
      %v2426 = vunpack.c.l.b16 %v2390
      %v2427 = vunpack.c.h.b16 %v2390
      %v2428 = vunpack.c.l.b16 %v2391
      %v2429 = vunpack.c.h.b16 %v2391
      %v2430 = vunpack.c.l.b16 %v2392
      %v2431 = vunpack.c.h.b16 %v2392
      %v2432 = vunpack.c.l.b16 %v2393
      %v2433 = vunpack.c.h.b16 %v2393
      %v2434 = vunpack.c.l.b16 %v2394
      %v2435 = vunpack.c.h.b16 %v2394
      %v2436 = vunpack.c.l.b16 %v2395
      %v2437 = vunpack.c.h.b16 %v2395
      %v2438 = vunpack.c.l.b16 %v2396
      %v2439 = vunpack.c.h.b16 %v2396
      %v2440 = vunpack.c.l.b16 %v2397
      %v2441 = vunpack.c.h.b16 %v2397
      %v2442 = vunpack.c.l.b16 %v2398
      %v2443 = vunpack.c.h.b16 %v2398
      %v2444 = vunpack.c.l.b16 %v2399
      %v2445 = vunpack.c.h.b16 %v2399
      %v2446 = vunpack.c.l.b16 %v2400
      %v2447 = vunpack.c.h.b16 %v2400
      %v2448 = vunpack.c.l.b16 %v2401
      %v2449 = vunpack.c.h.b16 %v2401
      %v2450 = vpack.c.b16 %v2418, %v2418
      %v2451 = vpack.c.b16 %v2419, %v2419
      %v2452 = vpack.c.b16 %v2420, %v2420
      %v2453 = vpack.c.b16 %v2421, %v2421
      %v2454 = vpack.c.b16 %v2422, %v2422
      %v2455 = vpack.c.b16 %v2423, %v2423
      %v2456 = vpack.c.b16 %v2424, %v2424
      %v2457 = vpack.c.b16 %v2425, %v2425
      %v2458 = vpack.c.b16 %v2426, %v2426
      %v2459 = vpack.c.b16 %v2427, %v2427
      %v2460 = vpack.c.b16 %v2428, %v2428
      %v2461 = vpack.c.b16 %v2429, %v2429
      %v2462 = vpack.c.b16 %v2430, %v2430
      %v2463 = vpack.c.b16 %v2431, %v2431
      %v2464 = vpack.c.b16 %v2432, %v2432
      %v2465 = vpack.c.b16 %v2433, %v2433
      %v2466 = vpack.c.b16 %v2434, %v2434
      %v2467 = vpack.c.b16 %v2435, %v2435
      %v2468 = vpack.c.b16 %v2436, %v2436
      %v2469 = vpack.c.b16 %v2437, %v2437
      %v2470 = vpack.c.b16 %v2438, %v2438
      %v2471 = vpack.c.b16 %v2439, %v2439
      %v2472 = vpack.c.b16 %v2440, %v2440
      %v2473 = vpack.c.b16 %v2441, %v2441
      %v2474 = vpack.c.b16 %v2442, %v2442
      %v2475 = vpack.c.b16 %v2443, %v2443
      %v2476 = vpack.c.b16 %v2444, %v2444
      %v2477 = vpack.c.b16 %v2445, %v2445
      %v2478 = vpack.c.b16 %v2446, %v2446
      %v2479 = vpack.c.b16 %v2447, %v2447
      %v2480 = vpack.c.b16 %v2448, %v2448
      %v2481 = vpack.c.b16 %v2449, %v2449
      %2514 = vst [vmem:[%s177] sm:$0xf] %v2450
      %2515 = vst [vmem:[%s177 + $0x4] sm:$0xf] %v2451
      %2516 = vst [vmem:[%s177 + $0x8] sm:$0xf] %v2452
      %2517 = vst [vmem:[%s177 + $0xc] sm:$0xf] %v2453
      %2518 = vst [vmem:[%s177 + $0x10] sm:$0xf] %v2454
      %2519 = vst [vmem:[%s177 + $0x14] sm:$0xf] %v2455
      %2520 = vst [vmem:[%s177 + $0x18] sm:$0xf] %v2456
      %2521 = vst [vmem:[%s177 + $0x1c] sm:$0xf] %v2457
      %2522 = vst [vmem:[%s177 + $0x20] sm:$0xf] %v2458
      %2523 = vst [vmem:[%s177 + $0x24] sm:$0xf] %v2459
      %2524 = vst [vmem:[%s177 + $0x28] sm:$0xf] %v2460
      %2525 = vst [vmem:[%s177 + $0x2c] sm:$0xf] %v2461
      %2526 = vst [vmem:[%s177 + $0x30] sm:$0xf] %v2462
      %2527 = vst [vmem:[%s177 + $0x34] sm:$0xf] %v2463
      %2528 = vst [vmem:[%s177 + $0x38] sm:$0xf] %v2464
      %2529 = vst [vmem:[%s177 + $0x3c] sm:$0xf] %v2465
      %2530 = vst [vmem:[%s177 + $0x40] sm:$0xf] %v2466
      %2531 = vst [vmem:[%s177 + $0x44] sm:$0xf] %v2467
      %2532 = vst [vmem:[%s177 + $0x48] sm:$0xf] %v2468
      %2533 = vst [vmem:[%s177 + $0x4c] sm:$0xf] %v2469
      %2534 = vst [vmem:[%s177 + $0x50] sm:$0xf] %v2470
      %2535 = vst [vmem:[%s177 + $0x54] sm:$0xf] %v2471
      %2536 = vst [vmem:[%s177 + $0x58] sm:$0xf] %v2472
      %2537 = vst [vmem:[%s177 + $0x5c] sm:$0xf] %v2473
      %2538 = vst [vmem:[%s177 + $0x60] sm:$0xf] %v2474
      %2539 = vst [vmem:[%s177 + $0x64] sm:$0xf] %v2475
      %2540 = vst [vmem:[%s177 + $0x68] sm:$0xf] %v2476
      %2541 = vst [vmem:[%s177 + $0x6c] sm:$0xf] %v2477
      %2542 = vst [vmem:[%s177 + $0x70] sm:$0xf] %v2478
      %2543 = vst [vmem:[%s177 + $0x74] sm:$0xf] %v2479
      %2544 = vst [vmem:[%s177 + $0x78] sm:$0xf] %v2480
      %2545 = vst [vmem:[%s177 + $0x7c] sm:$0xf] %v2481
      %v2546 = vadd.f32 %v2354, %v2355
      %v2547 = vadd.f32 %v2546, %v2356
      %v2548 = vadd.f32 %v2547, %v2357
      %v2549 = vadd.f32 %v2548, %v2358
      %v2550 = vadd.f32 %v2549, %v2359
      %v2551 = vadd.f32 %v2550, %v2360
      %v2552 = vadd.f32 %v2551, %v2361
      %v2553 = vadd.f32 %v2552, %v2362
      %v2554 = vadd.f32 %v2553, %v2363
      %v2555 = vadd.f32 %v2554, %v2364
      %v2556 = vadd.f32 %v2555, %v2365
      %v2557 = vadd.f32 %v2556, %v2366
      %v2558 = vadd.f32 %v2557, %v2367
      %v2559 = vadd.f32 %v2558, %v2368
      %v2560 = vadd.f32 %v2559, %v2369
      %v2561 = vadd.f32 %v2560, %v2370
      %v2562 = vadd.f32 %v2561, %v2371
      %v2563 = vadd.f32 %v2562, %v2372
      %v2564 = vadd.f32 %v2563, %v2373
      %v2565 = vadd.f32 %v2564, %v2374
      %v2566 = vadd.f32 %v2565, %v2375
      %v2567 = vadd.f32 %v2566, %v2376
      %v2568 = vadd.f32 %v2567, %v2377
      %v2569 = vadd.f32 %v2568, %v2378
      %v2570 = vadd.f32 %v2569, %v2379
      %v2571 = vadd.f32 %v2570, %v2380
      %v2572 = vadd.f32 %v2571, %v2381
      %v2573 = vadd.f32 %v2572, %v2382
      %v2574 = vadd.f32 %v2573, %v2383
      %v2575 = vadd.f32 %v2574, %v2384
      %v2576 = vadd.f32 %v2575, %v2385
      %v2577 = vrot.slane %v2576, 4
      %v2578 = vadd.f32 %v2576, %v2577
      %v2579 = vrot.slane %v2578, 2
      %v2580 = vadd.f32 %v2578, %v2579
      %v2581 = vrot.slane %v2580, 1
      %v2582 = vadd.f32 %v2580, %v2581
      %2583 = vst [vmem:[%s181] sm:$0x1] %v2582
      %v2584 = vmul.f32 %v2354, %v2354
      %v2585 = vmul.f32 %v2355, %v2355
      %v2586 = vmul.f32 %v2356, %v2356
      %v2587 = vmul.f32 %v2357, %v2357
      %v2588 = vmul.f32 %v2358, %v2358
      %v2589 = vmul.f32 %v2359, %v2359
      %v2590 = vmul.f32 %v2360, %v2360
      %v2591 = vmul.f32 %v2361, %v2361
      %v2592 = vmul.f32 %v2362, %v2362
      %v2593 = vmul.f32 %v2363, %v2363
      %v2594 = vmul.f32 %v2364, %v2364
      %v2595 = vmul.f32 %v2365, %v2365
      %v2596 = vmul.f32 %v2366, %v2366
      %v2597 = vmul.f32 %v2367, %v2367
      %v2598 = vmul.f32 %v2368, %v2368
      %v2599 = vmul.f32 %v2369, %v2369
      %v2600 = vmul.f32 %v2370, %v2370
      %v2601 = vmul.f32 %v2371, %v2371
      %v2602 = vmul.f32 %v2372, %v2372
      %v2603 = vmul.f32 %v2373, %v2373
      %v2604 = vmul.f32 %v2374, %v2374
      %v2605 = vmul.f32 %v2375, %v2375
      %v2606 = vmul.f32 %v2376, %v2376
      %v2607 = vmul.f32 %v2377, %v2377
      %v2608 = vmul.f32 %v2378, %v2378
      %v2609 = vmul.f32 %v2379, %v2379
      %v2610 = vmul.f32 %v2380, %v2380
      %v2611 = vmul.f32 %v2381, %v2381
      %v2612 = vmul.f32 %v2382, %v2382
      %v2613 = vmul.f32 %v2383, %v2383
      %v2614 = vmul.f32 %v2384, %v2384
      %v2615 = vmul.f32 %v2385, %v2385
      %v2616 = vadd.f32 %v2584, %v2585
      %v2617 = vadd.f32 %v2616, %v2586
      %v2618 = vadd.f32 %v2617, %v2587
      %v2619 = vadd.f32 %v2618, %v2588
      %v2620 = vadd.f32 %v2619, %v2589
      %v2621 = vadd.f32 %v2620, %v2590
      %v2622 = vadd.f32 %v2621, %v2591
      %v2623 = vadd.f32 %v2622, %v2592
      %v2624 = vadd.f32 %v2623, %v2593
      %v2625 = vadd.f32 %v2624, %v2594
      %v2626 = vadd.f32 %v2625, %v2595
      %v2627 = vadd.f32 %v2626, %v2596
      %v2628 = vadd.f32 %v2627, %v2597
      %v2629 = vadd.f32 %v2628, %v2598
      %v2630 = vadd.f32 %v2629, %v2599
      %v2631 = vadd.f32 %v2630, %v2600
      %v2632 = vadd.f32 %v2631, %v2601
      %v2633 = vadd.f32 %v2632, %v2602
      %v2634 = vadd.f32 %v2633, %v2603
      %v2635 = vadd.f32 %v2634, %v2604
      %v2636 = vadd.f32 %v2635, %v2605
      %v2637 = vadd.f32 %v2636, %v2606
      %v2638 = vadd.f32 %v2637, %v2607
      %v2639 = vadd.f32 %v2638, %v2608
      %v2640 = vadd.f32 %v2639, %v2609
      %v2641 = vadd.f32 %v2640, %v2610
      %v2642 = vadd.f32 %v2641, %v2611
      %v2643 = vadd.f32 %v2642, %v2612
      %v2644 = vadd.f32 %v2643, %v2613
      %v2645 = vadd.f32 %v2644, %v2614
      %v2646 = vadd.f32 %v2645, %v2615
      %v2647 = vrot.slane %v2646, 4
      %v2648 = vadd.f32 %v2646, %v2647
      %v2649 = vrot.slane %v2648, 2
      %v2650 = vadd.f32 %v2648, %v2649
      %v2651 = vrot.slane %v2650, 1
      %v2652 = vadd.f32 %v2650, %v2651
      %2653 = vst [vmem:[%s181 + $0x1] sm:$0x1] %v2652
      %p2654 = scmp.lt.s32.totalorder %s15, 1
      %s2655 = scalar_select %p2654, %s15, 1
      %s2656 = smul.addr %s2655, 32
      %s2657 = smul.addr %s2656, 4
      %s2658 = scalar_lea.vmem %s2, %s2657
      %p2659 = scmp.lt.s32.totalorder %s15, 1
      %s2660 = scalar_select %p2659, %s15, 1
      %s2661 = smul.addr %s2660, 2
      %s2662 = scalar_lea.vmem %s3, %s2661
      // Predicated region
      $region29: #{csp_forward.7} parent=27 // pred_check
        %p2663 = pneg %p80
      $region30: #{csp_forward.7} parent=27 // pred_check_branch
        %2665 = sbr.rel (%p2663) target = $region32
      $region31: #{csp_forward.7} parent=27 // pred_region
        _
      $region32: #{csp_forward.7} parent=27 // pred_fallthru
        _
      // Predicated region
      $region33: #{csp_forward.7} parent=27 // pred_check
        %p2666 = pneg %p106
      $region34: #{csp_forward.7} parent=27 // pred_check_branch
        %2668 = sbr.rel (%p2666) target = $region36
      $region35: #{csp_forward.7} parent=27 // pred_region
        _
      $region36: #{csp_forward.7} parent=27 // pred_fallthru
        _
    $region28: #{csp_forward.7} parent=5 // pred_fallthru
      _
    %p2669 = scmp.le.s32.totalorder 2, %s10
    // Predicated region
    $region37: #{csp_forward.7} parent=5 // pred_check
      %p2670 = pneg %p2669
    $region38: #{csp_forward.7} parent=5 // pred_check_branch
      %2672 = sbr.rel (%p2670) target = $region40
    $region39: #{csp_forward.7} parent=5 // pred_region
      %s2673 = ssub.s32 %s10, 2
      // Predicated region
      $region41: #{csp_forward.7} parent=39 // pred_check
        %p2674 = pneg %p86
      $region42: #{csp_forward.7} parent=39 // pred_check_branch
        %2676 = sbr.rel (%p2674) target = $region44
      $region43: #{csp_forward.7} parent=39 // pred_region
        %p2677 = scmp.lt.s32.totalorder %s16, 1
        %s2678 = scalar_select %p2677, %s16, 1
        %s2679 = smul.addr %s2678, 32
        %s2680 = smul.addr %s2679, 4
        %s2681 = scalar_lea.vmem %s2, %s2680
      $region44: #{csp_forward.7} parent=39 // pred_fallthru
        _
      // Predicated region
      $region45: #{csp_forward.7} parent=39 // pred_check
        %p2682 = pneg %p112
      $region46: #{csp_forward.7} parent=39 // pred_check_branch
        %2684 = sbr.rel (%p2682) target = $region48
      $region47: #{csp_forward.7} parent=39 // pred_region
        %p2685 = scmp.lt.s32.totalorder %s16, 1
        %s2686 = scalar_select %p2685, %s16, 1
        %s2687 = smul.addr %s2686, 2
        %s2688 = scalar_lea.vmem %s3, %s2687
      $region48: #{csp_forward.7} parent=39 // pred_fallthru
        _
    $region40: #{csp_forward.7} parent=5 // pred_fallthru
      _
  $region6: #{csp_forward.7} parent=0 // loop_footer
    %s14 = sadd.s32 1, %s10
  $region7: #{csp_forward.7} parent=0 // loop_footer_branch
    %9 = sbr.rel target = $region3
  $region8: #{csp_forward.7} parent=0 // loop_exit
    _

</llo_original>
